<compile_context>
chip_gen: v7x
topology: tpu7x:2x2x1
jax: 0.10.0
libtpu: 0.0.40
codegen_flags: <defaults>
</compile_context>

<pallas_src>
import numpy as np
import jax
import jax.numpy as jnp
from jax.experimental import pallas as pl
from jax.experimental.pallas import tpu as pltpu

W_DIM = 256
_EPS = 1e-5
_LRELU = 0.2


# ----------------------------------------------------------------------------
# Static layout helpers
# ----------------------------------------------------------------------------
def _upsample_matrix(n):
    """(2n, n) matrix reproducing PyTorch bilinear x2 upsample (align_corners=False)."""
    U = np.zeros((2 * n, n), dtype=np.float32)
    for k in range(n):
        U[2 * k, max(k - 1, 0)] += 0.25
        U[2 * k, k] += 0.75
        U[2 * k + 1, k] += 0.75
        U[2 * k + 1, min(k + 1, n - 1)] += 0.25
    return U


def _conv_layout(k, p, w_g, g):
    """Offsets for the shifted-matmul conv on the padded flat buffer.

    The activation (flattened (Ho, w_g) grid, pad columns zeroed) is stored at a
    sublane-aligned offset `s0`; tap t of the k*k conv reads rows
    [taps[t], taps[t] + g).  Everything not written stays zero and supplies the
    spatial zero-padding of the conv.
    """
    base = p * (w_g + 1)
    s0 = ((base + 7) // 8) * 8          # sublane-aligned store offset
    delta = s0 - base
    taps = tuple(delta + (t // k) * w_g + (t % k) for t in range(k * k))
    padlen = ((max((s0,) + taps) + g + 7) // 8) * 8
    return s0, taps, padlen


# ----------------------------------------------------------------------------
# Fused Pallas kernel (one grid step == one batch item)
# ----------------------------------------------------------------------------
def _make_fused_kernel(*, upsample, g, n_valid, s0_1, taps1, s0_2, taps2):
    inv_n = 1.0 / float(n_valid)

    def _shift_conv(pbuf, w_ref, taps):
        """sum_t pbuf[taps[t]:taps[t]+g, :] @ w_ref[t]  (EqualLR conv as MXU matmuls)."""
        cout = w_ref.shape[2]
        acc = jnp.zeros((g, cout), jnp.float32)
        for t, off in enumerate(taps):
            acc = acc + jnp.dot(pbuf[pl.ds(off, g), :], w_ref[t],
                                preferred_element_type=jnp.float32)
        return acc

    def _noise_adain_lrelu(y, noise_col, nw_row, scale_row, shift_row, mask):
        # NoiseLayer: x + weight[c] * noise(B, 1, H, W)
        y = y + noise_col * nw_row
        # AdaIN: InstanceNorm2d (biased var, eps=1e-5) over the valid pixels only
        mean = jnp.sum(y * mask, axis=0, keepdims=True) * inv_n
        d = (y - mean) * mask
        var = jnp.sum(d * d, axis=0, keepdims=True) * inv_n
        y = (y - mean) * jax.lax.rsqrt(var + _EPS)
        y = scale_row * y + shift_row
        # LeakyReLU(0.2); then zero the pad columns (they become conv padding)
        y = jnp.where(y >= 0.0, y, _LRELU * y)
        return y * mask

    if upsample:
        def kernel(x_ref, ukp_ref, w1_ref, b1_ref, n1_ref, nw1_ref, s1_ref, t1_ref,
                   w2_ref, b2_ref, n2_ref, nw2_ref, s2_ref, t2_ref, mask_ref,
                   out_ref, pbuf1, pbuf2):
            mask = mask_ref[...]
            # bilinear x2 upsample -> channels-last image on the padded-width grid
            xu = jnp.dot(ukp_ref[...], x_ref[0], preferred_element_type=jnp.float32)
            # conv1 (EqualLRConv2d) as shifted matmuls from a zero-padded VMEM buffer
            pbuf1[...] = jnp.zeros_like(pbuf1)
            pbuf1[pl.ds(s0_1, g), :] = xu
            y = _shift_conv(pbuf1, w1_ref, taps1) + b1_ref[...]
            y = _noise_adain_lrelu(y, n1_ref[0], nw1_ref[...],
                                   s1_ref[0], t1_ref[0], mask)
            # conv2
            pbuf2[...] = jnp.zeros_like(pbuf2)
            pbuf2[pl.ds(s0_2, g), :] = y
            z = _shift_conv(pbuf2, w2_ref, taps2) + b2_ref[...]
            z = _noise_adain_lrelu(z, n2_ref[0], nw2_ref[...],
                                   s2_ref[0], t2_ref[0], mask)
            out_ref[0] = z
        return kernel

    def kernel(c_ref, n1_ref, nw1_ref, s1_ref, t1_ref,
               w2_ref, b2_ref, n2_ref, nw2_ref, s2_ref, t2_ref, mask_ref,
               out_ref, pbuf2):
        mask = mask_ref[...]
        # LearnedConstant -> Noise -> AdaIN -> LeakyReLU (no conv in stage 1)
        y = _noise_adain_lrelu(c_ref[...], n1_ref[0], nw1_ref[...],
                               s1_ref[0], t1_ref[0], mask)
        pbuf2[...] = jnp.zeros_like(pbuf2)
        pbuf2[pl.ds(s0_2, g), :] = y
        z = _shift_conv(pbuf2, w2_ref, taps2) + b2_ref[...]
        z = _noise_adain_lrelu(z, n2_ref[0], nw2_ref[...],
                               s2_ref[0], t2_ref[0], mask)
        out_ref[0] = z
    return kernel


# ----------------------------------------------------------------------------
# Parameters
# ----------------------------------------------------------------------------
def init_g_conv_block_params(key, in_c, out_c, ksize1, ksize2, upsample=True):
    ks = jax.random.split(key, 8)
    p = {}
    if upsample:
        p["conv1_w"] = jax.random.normal(ks[0], (out_c, in_c, ksize1, ksize1), jnp.float32)
        p["conv1_b"] = 0.1 * jax.random.normal(ks[1], (out_c,), jnp.float32)
        c1 = out_c
    else:
        p["learned_const"] = jax.random.normal(ks[0], (1, in_c, 4, 4), jnp.float32)
        c1 = in_c
    p["noise1_w"] = 0.1 * jax.random.normal(ks[2], (c1,), jnp.float32)
    p["ada1_w"] = jax.random.normal(ks[3], (W_DIM, 2 * c1), jnp.float32)
    p["ada1_b"] = jnp.concatenate(
        [jnp.ones((c1,), jnp.float32), jnp.zeros((c1,), jnp.float32)])
    p["conv2_w"] = jax.random.normal(ks[4], (out_c, out_c, ksize2, ksize2), jnp.float32)
    p["conv2_b"] = 0.1 * jax.random.normal(ks[5], (out_c,), jnp.float32)
    p["noise2_w"] = 0.1 * jax.random.normal(ks[6], (out_c,), jnp.float32)
    p["ada2_w"] = jax.random.normal(ks[7], (W_DIM, 2 * out_c), jnp.float32)
    p["ada2_b"] = jnp.concatenate(
        [jnp.ones((out_c,), jnp.float32), jnp.zeros((out_c,), jnp.float32)])
    return p


# ----------------------------------------------------------------------------
# Forward wrapper
# ----------------------------------------------------------------------------
def g_conv_block_forward(params, w_lat, x, noise1, noise2, *,
                         ksize1=3, padding1=1, ksize2=3, padding2=1,
                         upsample=True):
    """Pallas forward of G_ConvBlock.  w_lat: (B, 256); x: (B, in_c, H, W) NCHW
    (ignored when upsample=False); noise1/noise2: (B, 1, H_out, W_out)."""
    B = w_lat.shape[0]
    sty_scale = float(np.sqrt(2.0 / W_DIM))       # equalized-LR scale of the style Linear
    C2 = params["conv2_w"].shape[0]

    if upsample:
        Cin = x.shape[1]
        H, W = x.shape[2], x.shape[3]
        Ho, Wo = 2 * H, 2 * W
        C1 = params["conv1_w"].shape[0]
        pmax = max(padding1, padding2)
    else:
        const = params["learned_const"]
        C1 = const.shape[1]
        Ho, Wo = const.shape[2], const.shape[3]
        pmax = padding2
    assert params["conv2_w"].shape[1] == C1        # same constraint as the PyTorch module

    w_g = Wo + 2 * pmax                            # common padded-row width for both convs
    g = Ho * w_g
    n_valid = Ho * Wo

    # --- hoisted per-batch style Linear (EqualLR 256 -> 2C), done once ---
    def style(ada_w, ada_b, c):
        s = jnp.dot(w_lat, ada_w * sty_scale,
                    precision=jax.lax.Precision.HIGHEST) + ada_b
        return s[:, :c].reshape(B, 1, c), s[:, c:].reshape(B, 1, c)

    s1, t1 = style(params["ada1_w"], params["ada1_b"], C1)
    s2, t2 = style(params["ada2_w"], params["ada2_b"], C2)

    # --- noise laid out on the padded-width grid (zeros in pad columns) ---
    def noise_grid(nz):
        nzp = jnp.pad(nz.reshape(B, Ho, Wo), ((0, 0), (0, 0), (0, w_g - Wo)))
        return nzp.reshape(B, g, 1)

    n1 = noise_grid(noise1)
    n2 = noise_grid(noise2)

    mask = jnp.asarray(((np.arange(g) % w_g) < Wo).astype(np.float32).reshape(g, 1))

    # --- equalized-LR conv weights as per-tap (Cin, Cout) matrices ---
    def taps_matrix(wgt, scale):                   # (Cout, Cin, k, k) -> (k*k, Cin, Cout)
        cout, cin_w, k, _ = wgt.shape
        return jnp.transpose(wgt * scale, (2, 3, 1, 0)).reshape(k * k, cin_w, cout)

    scale2 = float(np.sqrt(2.0 / (params["conv2_w"].shape[1] * ksize2 * ksize2)))
    w2t = taps_matrix(params["conv2_w"], scale2)
    b2 = params["conv2_b"].reshape(1, C2)
    nw1 = params["noise1_w"].reshape(1, C1)
    nw2 = params["noise2_w"].reshape(1, C2)

    s0_2, taps2, padlen2 = _conv_layout(ksize2, padding2, w_g, g)

    cparams = pltpu.CompilerParams(dimension_semantics=("parallel",),
                                   vmem_limit_bytes=32 * 1024 * 1024)
    out_shape = jax.ShapeDtypeStruct((B, g, C2), jnp.float32)
    out_spec = pl.BlockSpec((1, g, C2), lambda b: (b, 0, 0))

    if upsample:
        scale1 = float(np.sqrt(2.0 / (Cin * ksize1 * ksize1)))
        w1t = taps_matrix(params["conv1_w"], scale1)
        b1 = params["conv1_b"].reshape(1, C1)
        s0_1, taps1, padlen1 = _conv_layout(ksize1, padding1, w_g, g)

        # bilinear x2 upsample matrix emitted directly on the padded-width grid
        Uh = _upsample_matrix(H)
        Uw = _upsample_matrix(W)
        kr = np.kron(Uh, Uw).reshape(Ho, Wo, H * W)
        kg = np.zeros((Ho, w_g, H * W), np.float32)
        kg[:, :Wo, :] = kr
        ukp = jnp.asarray(kg.reshape(g, H * W))

        xcl = jnp.transpose(x.reshape(B, Cin, H * W), (0, 2, 1))   # (B, HW, Cin)

        kernel = _make_fused_kernel(upsample=True, g=g, n_valid=n_valid,
                                    s0_1=s0_1, taps1=taps1, s0_2=s0_2, taps2=taps2)
        out = pl.pallas_call(
            kernel,
            out_shape=out_shape,
            grid=(B,),
            in_specs=[
                pl.BlockSpec((1, H * W, Cin), lambda b: (b, 0, 0)),          # x (channels-last)
                pl.BlockSpec((g, H * W), lambda b: (0, 0)),                  # upsample matrix
                pl.BlockSpec((ksize1 * ksize1, Cin, C1), lambda b: (0, 0, 0)),  # conv1 taps
                pl.BlockSpec((1, C1), lambda b: (0, 0)),                     # conv1 bias
                pl.BlockSpec((1, g, 1), lambda b: (b, 0, 0)),                # noise1
                pl.BlockSpec((1, C1), lambda b: (0, 0)),                     # noise1 weight
                pl.BlockSpec((1, 1, C1), lambda b: (b, 0, 0)),               # style1 scale
                pl.BlockSpec((1, 1, C1), lambda b: (b, 0, 0)),               # style1 shift
                pl.BlockSpec((ksize2 * ksize2, C1, C2), lambda b: (0, 0, 0)),   # conv2 taps
                pl.BlockSpec((1, C2), lambda b: (0, 0)),                     # conv2 bias
                pl.BlockSpec((1, g, 1), lambda b: (b, 0, 0)),                # noise2
                pl.BlockSpec((1, C2), lambda b: (0, 0)),                     # noise2 weight
                pl.BlockSpec((1, 1, C2), lambda b: (b, 0, 0)),               # style2 scale
                pl.BlockSpec((1, 1, C2), lambda b: (b, 0, 0)),               # style2 shift
                pl.BlockSpec((g, 1), lambda b: (0, 0)),                      # valid-column mask
            ],
            out_specs=out_spec,
            scratch_shapes=[pltpu.VMEM((padlen1, Cin), jnp.float32),
                            pltpu.VMEM((padlen2, C1), jnp.float32)],
            compiler_params=cparams,
        )(xcl, ukp, w1t, b1, n1, nw1, s1, t1, w2t, b2, n2, nw2, s2, t2, mask)
    else:
        cst = jnp.transpose(params["learned_const"][0], (1, 2, 0))   # (Ho, Wo, C1)
        cstg = jnp.pad(cst, ((0, 0), (0, w_g - Wo), (0, 0))).reshape(g, C1)

        kernel = _make_fused_kernel(upsample=False, g=g, n_valid=n_valid,
                                    s0_1=None, taps1=None, s0_2=s0_2, taps2=taps2)
        out = pl.pallas_call(
            kernel,
            out_shape=out_shape,
            grid=(B,),
            in_specs=[
                pl.BlockSpec((g, C1), lambda b: (0, 0)),                     # learned constant
                pl.BlockSpec((1, g, 1), lambda b: (b, 0, 0)),                # noise1
                pl.BlockSpec((1, C1), lambda b: (0, 0)),                     # noise1 weight
                pl.BlockSpec((1, 1, C1), lambda b: (b, 0, 0)),               # style1 scale
                pl.BlockSpec((1, 1, C1), lambda b: (b, 0, 0)),               # style1 shift
                pl.BlockSpec((ksize2 * ksize2, C1, C2), lambda b: (0, 0, 0)),   # conv2 taps
                pl.BlockSpec((1, C2), lambda b: (0, 0)),                     # conv2 bias
                pl.BlockSpec((1, g, 1), lambda b: (b, 0, 0)),                # noise2
                pl.BlockSpec((1, C2), lambda b: (0, 0)),                     # noise2 weight
                pl.BlockSpec((1, 1, C2), lambda b: (b, 0, 0)),               # style2 scale
                pl.BlockSpec((1, 1, C2), lambda b: (b, 0, 0)),               # style2 shift
                pl.BlockSpec((g, 1), lambda b: (0, 0)),                      # valid-column mask
            ],
            out_specs=out_spec,
            scratch_shapes=[pltpu.VMEM((padlen2, C1), jnp.float32)],
            compiler_params=cparams,
        )(cstg, n1, nw1, s1, t1, w2t, b2, n2, nw2, s2, t2, mask)

    out = out.reshape(B, Ho, w_g, C2)[:, :, :Wo, :]
    return jnp.transpose(out, (0, 3, 1, 2))


# ----------------------------------------------------------------------------
# Pure-JAX reference (for verification only)
# ----------------------------------------------------------------------------
def reference_forward(params, w_lat, x, noise1, noise2, *,
                      ksize1=3, padding1=1, ksize2=3, padding2=1, upsample=True):
    B = w_lat.shape[0]
    sty_scale = np.sqrt(2.0 / W_DIM)

    def adain(w, y, sw, sb, c):
        mean = y.mean(axis=(2, 3), keepdims=True)
        var = ((y - mean) ** 2).mean(axis=(2, 3), keepdims=True)
        yn = (y - mean) * jax.lax.rsqrt(var + 1e-5)
        style = w @ (sw * sty_scale) + sb
        return style[:, :c, None, None] * yn + style[:, c:, None, None]

    def leaky(y):
        return jnp.where(y >= 0.0, y, 0.2 * y)

    def conv(y, wgt, b, k, pad):
        s = np.sqrt(2.0 / (y.shape[1] * k * k))
        out = jax.lax.conv_general_dilated(
            y, wgt * s, (1, 1), [(pad, pad), (pad, pad)],
            dimension_numbers=("NCHW", "OIHW", "NCHW"),
            precision=jax.lax.Precision.HIGHEST)
        return out + b[None, :, None, None]

    if upsample:
        _, _, H, W = x.shape
        Uh, Uw = _upsample_matrix(H), _upsample_matrix(W)
        xu = jnp.einsum("oh,bchw->bcow", Uh, x, precision=jax.lax.Precision.HIGHEST)
        xu = jnp.einsum("pw,bchw->bchp", Uw, xu, precision=jax.lax.Precision.HIGHEST)
        y = conv(xu, params["conv1_w"], params["conv1_b"], ksize1, padding1)
        c1 = params["conv1_w"].shape[0]
    else:
        const = params["learned_const"]
        y = jnp.broadcast_to(const, (B,) + const.shape[1:])
        c1 = const.shape[1]

    y = y + params["noise1_w"][None, :, None, None] * noise1
    y = leaky(adain(w_lat, y, params["ada1_w"], params["ada1_b"], c1))
    y = conv(y, params["conv2_w"], params["conv2_b"], ksize2, padding2)
    out_c = params["conv2_w"].shape[0]
    y = y + params["noise2_w"][None, :, None, None] * noise2
    return leaky(adain(w_lat, y, params["ada2_w"], params["ada2_b"], out_c))


# ----------------------------------------------------------------------------
if __name__ == "__main__":
    key = jax.random.PRNGKey(0)
    kp, kw, kx, kn1, kn2, kp0, kn3, kn4 = jax.random.split(key, 8)

    B, in_c, out_c, H, W = 2, 4, 4, 8, 8

    # ---- upsample=True block: x (B, in_c, 8, 8) -> (B, out_c, 16, 16) ----
    params = init_g_conv_block_params(kp, in_c, out_c, 3, 3, upsample=True)
    w_lat = jax.random.normal(kw, (B, W_DIM), jnp.float32)
    x = jax.random.normal(kx, (B, in_c, H, W), jnp.float32)
    noise1 = jax.random.normal(kn1, (B, 1, 2 * H, 2 * W), jnp.float32)
    noise2 = jax.random.normal(kn2, (B, 1, 2 * H, 2 * W), jnp.float32)

    out = g_conv_block_forward(params, w_lat, x, noise1, noise2, upsample=True)
    out = jax.block_until_ready(out)
    assert out.shape == (B, out_c, 2 * H, 2 * W)

    with jax.default_matmul_precision("float32"):
        ref = reference_forward(params, w_lat, x, noise1, noise2, upsample=True)
    np.testing.assert_allclose(np.asarray(out), np.asarray(ref), rtol=5e-3, atol=5e-3)

    # ---- upsample=False block: LearnedConstant 4x4 start ----
    params0 = init_g_conv_block_params(kp0, in_c, out_c, 3, 3, upsample=False)
    n3 = jax.random.normal(kn3, (B, 1, 4, 4), jnp.float32)
    n4 = jax.random.normal(kn4, (B, 1, 4, 4), jnp.float32)
    out0 = g_conv_block_forward(params0, w_lat, None, n3, n4, upsample=False)
    out0 = jax.block_until_ready(out0)
    assert out0.shape == (B, out_c, 4, 4)

    with jax.default_matmul_precision("float32"):
        ref0 = reference_forward(params0, w_lat, None, n3, n4, upsample=False)
    np.testing.assert_allclose(np.asarray(out0), np.asarray(ref0), rtol=5e-3, atol=5e-3)

    print("KERNEL_OK")
</pallas_src>

<mosaic_0001>
module attributes {stable_mosaic.version = 11 : i64} {
  func.func @kernel(%arg0: i32, %arg1: memref<1x64x4xf32, #tpu.memory_space<vmem>>, %arg2: memref<288x64xf32, #tpu.memory_space<vmem>>, %arg3: memref<9x4x4xf32, #tpu.memory_space<vmem>>, %arg4: memref<1x4xf32, #tpu.memory_space<vmem>>, %arg5: memref<1x288x1xf32, #tpu.memory_space<vmem>>, %arg6: memref<1x4xf32, #tpu.memory_space<vmem>>, %arg7: memref<1x1x4xf32, #tpu.memory_space<vmem>>, %arg8: memref<1x1x4xf32, #tpu.memory_space<vmem>>, %arg9: memref<9x4x4xf32, #tpu.memory_space<vmem>>, %arg10: memref<1x4xf32, #tpu.memory_space<vmem>>, %arg11: memref<1x288x1xf32, #tpu.memory_space<vmem>>, %arg12: memref<1x4xf32, #tpu.memory_space<vmem>>, %arg13: memref<1x1x4xf32, #tpu.memory_space<vmem>>, %arg14: memref<1x1x4xf32, #tpu.memory_space<vmem>>, %arg15: memref<288x1xf32, #tpu.memory_space<vmem>>, %arg16: memref<1x288x4xf32, #tpu.memory_space<vmem>>, %arg17: memref<336x4xf32, #tpu.memory_space<vmem>>, %arg18: memref<336x4xf32, #tpu.memory_space<vmem>>) attributes {dimension_semantics = [#tpu.dimension_semantics<parallel>], iteration_bounds = array<i64: 2>, scalar_prefetch = 0 : i64, scratch_operands = 2 : i64, tpu.core_type = #tpu.core_type<tc>, window_params = [{transform_indices = @transform_0, window_bounds = array<i64: 1, 64, 4>}, {pipeline_mode = #tpu.pipeline_mode<synchronous>, transform_indices = @transform_1, window_bounds = array<i64: 288, 64>}, {pipeline_mode = #tpu.pipeline_mode<synchronous>, transform_indices = @transform_2, window_bounds = array<i64: 9, 4, 4>}, {pipeline_mode = #tpu.pipeline_mode<synchronous>, transform_indices = @transform_3, window_bounds = array<i64: 1, 4>}, {transform_indices = @transform_4, window_bounds = array<i64: 1, 288, 1>}, {pipeline_mode = #tpu.pipeline_mode<synchronous>, transform_indices = @transform_5, window_bounds = array<i64: 1, 4>}, {transform_indices = @transform_6, window_bounds = array<i64: 1, 1, 4>}, {transform_indices = @transform_7, window_bounds = array<i64: 1, 1, 4>}, {pipeline_mode = #tpu.pipeline_mode<synchronous>, transform_indices = @transform_8, window_bounds = array<i64: 9, 4, 4>}, {pipeline_mode = #tpu.pipeline_mode<synchronous>, transform_indices = @transform_9, window_bounds = array<i64: 1, 4>}, {transform_indices = @transform_10, window_bounds = array<i64: 1, 288, 1>}, {pipeline_mode = #tpu.pipeline_mode<synchronous>, transform_indices = @transform_11, window_bounds = array<i64: 1, 4>}, {transform_indices = @transform_12, window_bounds = array<i64: 1, 1, 4>}, {transform_indices = @transform_13, window_bounds = array<i64: 1, 1, 4>}, {pipeline_mode = #tpu.pipeline_mode<synchronous>, transform_indices = @transform_14, window_bounds = array<i64: 288, 1>}, {transform_indices = @transform_15, window_bounds = array<i64: 1, 288, 4>}]} {
    %c0 = arith.constant 0 : index
    %c0_0 = arith.constant 0 : index
    %0 = vector.load %arg15[%c0, %c0_0] : memref<288x1xf32, #tpu.memory_space<vmem>>, vector<288x1xf32>
    %c0_1 = arith.constant 0 : index
    %c0_2 = arith.constant 0 : index
    %1 = vector.load %arg2[%c0_1, %c0_2] : memref<288x64xf32, #tpu.memory_space<vmem>>, vector<288x64xf32>
    %c0_3 = arith.constant 0 : index
    %c0_4 = arith.constant 0 : index
    %c0_5 = arith.constant 0 : index
    %2 = vector.load %arg1[%c0_3, %c0_4, %c0_5] : memref<1x64x4xf32, #tpu.memory_space<vmem>>, vector<1x64x4xf32>
    %3 = vector.shape_cast %2 : vector<1x64x4xf32> to vector<64x4xf32>
    %cst = arith.constant dense<0.000000e+00> : vector<288x4xf32>
    %4 = tpu.matmul %1, %3, %cst {dimension_numbers = #tpu.dot_dimension_numbers<[1], [0], [0], [1], [0, 0, 1, 1], [], []>} : vector<288x64xf32>, vector<64x4xf32>, vector<288x4xf32> -> vector<288x4xf32>
    %cst_6 = arith.constant 0.000000e+00 : f32
    %5 = vector.broadcast %cst_6 : f32 to vector<336x4xf32>
    %c0_7 = arith.constant 0 : index
    %c0_8 = arith.constant 0 : index
    %6 = vector.load %arg17[%c0_7, %c0_8] : memref<336x4xf32, #tpu.memory_space<vmem>>, vector<336x4xf32>
    tpu.vector_store %arg17[%c0_7, %c0_8], %5 {strides = array<i32>} : memref<336x4xf32, #tpu.memory_space<vmem>>, vector<336x4xf32>,
    %c24 = arith.constant 24 : index
    %c0_9 = arith.constant 0 : index
    %7 = vector.load %arg17[%c24, %c0_9] : memref<336x4xf32, #tpu.memory_space<vmem>>, vector<288x4xf32>
    tpu.vector_store %arg17[%c24, %c0_9], %4 {strides = array<i32>} : memref<336x4xf32, #tpu.memory_space<vmem>>, vector<288x4xf32>,
    %cst_10 = arith.constant 0.000000e+00 : f32
    %8 = vector.broadcast %cst_10 : f32 to vector<288x4xf32>
    %c5 = arith.constant 5 : index
    %c0_11 = arith.constant 0 : index
    %9 = vector.load %arg17[%c5, %c0_11] : memref<336x4xf32, #tpu.memory_space<vmem>>, vector<288x4xf32>
    %c0_12 = arith.constant 0 : index
    %c0_13 = arith.constant 0 : index
    %c0_14 = arith.constant 0 : index
    %10 = vector.load %arg3[%c0_12, %c0_13, %c0_14] : memref<9x4x4xf32, #tpu.memory_space<vmem>>, vector<1x4x4xf32>
    %11 = vector.shape_cast %10 : vector<1x4x4xf32> to vector<4x4xf32>
    %cst_15 = arith.constant dense<0.000000e+00> : vector<288x4xf32>
    %12 = tpu.matmul %9, %11, %cst_15 {dimension_numbers = #tpu.dot_dimension_numbers<[1], [0], [0], [1], [0, 0, 1, 1], [], []>} : vector<288x4xf32>, vector<4x4xf32>, vector<288x4xf32> -> vector<288x4xf32>
    %13 = arith.addf %8, %12 : vector<288x4xf32>
    %c6 = arith.constant 6 : index
    %c0_16 = arith.constant 0 : index
    %14 = vector.load %arg17[%c6, %c0_16] : memref<336x4xf32, #tpu.memory_space<vmem>>, vector<288x4xf32>
    %c1 = arith.constant 1 : index
    %c0_17 = arith.constant 0 : index
    %c0_18 = arith.constant 0 : index
    %15 = vector.load %arg3[%c1, %c0_17, %c0_18] : memref<9x4x4xf32, #tpu.memory_space<vmem>>, vector<1x4x4xf32>
    %16 = vector.shape_cast %15 : vector<1x4x4xf32> to vector<4x4xf32>
    %cst_19 = arith.constant dense<0.000000e+00> : vector<288x4xf32>
    %17 = tpu.matmul %14, %16, %cst_19 {dimension_numbers = #tpu.dot_dimension_numbers<[1], [0], [0], [1], [0, 0, 1, 1], [], []>} : vector<288x4xf32>, vector<4x4xf32>, vector<288x4xf32> -> vector<288x4xf32>
    %18 = arith.addf %13, %17 : vector<288x4xf32>
    %c7 = arith.constant 7 : index
    %c0_20 = arith.constant 0 : index
    %19 = vector.load %arg17[%c7, %c0_20] : memref<336x4xf32, #tpu.memory_space<vmem>>, vector<288x4xf32>
    %c2 = arith.constant 2 : index
    %c0_21 = arith.constant 0 : index
    %c0_22 = arith.constant 0 : index
    %20 = vector.load %arg3[%c2, %c0_21, %c0_22] : memref<9x4x4xf32, #tpu.memory_space<vmem>>, vector<1x4x4xf32>
    %21 = vector.shape_cast %20 : vector<1x4x4xf32> to vector<4x4xf32>
    %cst_23 = arith.constant dense<0.000000e+00> : vector<288x4xf32>
    %22 = tpu.matmul %19, %21, %cst_23 {dimension_numbers = #tpu.dot_dimension_numbers<[1], [0], [0], [1], [0, 0, 1, 1], [], []>} : vector<288x4xf32>, vector<4x4xf32>, vector<288x4xf32> -> vector<288x4xf32>
    %23 = arith.addf %18, %22 : vector<288x4xf32>
    %c23 = arith.constant 23 : index
    %c0_24 = arith.constant 0 : index
    %24 = vector.load %arg17[%c23, %c0_24] : memref<336x4xf32, #tpu.memory_space<vmem>>, vector<288x4xf32>
    %c3 = arith.constant 3 : index
    %c0_25 = arith.constant 0 : index
    %c0_26 = arith.constant 0 : index
    %25 = vector.load %arg3[%c3, %c0_25, %c0_26] : memref<9x4x4xf32, #tpu.memory_space<vmem>>, vector<1x4x4xf32>
    %26 = vector.shape_cast %25 : vector<1x4x4xf32> to vector<4x4xf32>
    %cst_27 = arith.constant dense<0.000000e+00> : vector<288x4xf32>
    %27 = tpu.matmul %24, %26, %cst_27 {dimension_numbers = #tpu.dot_dimension_numbers<[1], [0], [0], [1], [0, 0, 1, 1], [], []>} : vector<288x4xf32>, vector<4x4xf32>, vector<288x4xf32> -> vector<288x4xf32>
    %28 = arith.addf %23, %27 : vector<288x4xf32>
    %c24_28 = arith.constant 24 : index
    %c0_29 = arith.constant 0 : index
    %29 = vector.load %arg17[%c24_28, %c0_29] : memref<336x4xf32, #tpu.memory_space<vmem>>, vector<288x4xf32>
    %c4 = arith.constant 4 : index
    %c0_30 = arith.constant 0 : index
    %c0_31 = arith.constant 0 : index
    %30 = vector.load %arg3[%c4, %c0_30, %c0_31] : memref<9x4x4xf32, #tpu.memory_space<vmem>>, vector<1x4x4xf32>
    %31 = vector.shape_cast %30 : vector<1x4x4xf32> to vector<4x4xf32>
    %cst_32 = arith.constant dense<0.000000e+00> : vector<288x4xf32>
    %32 = tpu.matmul %29, %31, %cst_32 {dimension_numbers = #tpu.dot_dimension_numbers<[1], [0], [0], [1], [0, 0, 1, 1], [], []>} : vector<288x4xf32>, vector<4x4xf32>, vector<288x4xf32> -> vector<288x4xf32>
    %33 = arith.addf %28, %32 : vector<288x4xf32>
    %c25 = arith.constant 25 : index
    %c0_33 = arith.constant 0 : index
    %34 = vector.load %arg17[%c25, %c0_33] : memref<336x4xf32, #tpu.memory_space<vmem>>, vector<288x4xf32>
    %c5_34 = arith.constant 5 : index
    %c0_35 = arith.constant 0 : index
    %c0_36 = arith.constant 0 : index
    %35 = vector.load %arg3[%c5_34, %c0_35, %c0_36] : memref<9x4x4xf32, #tpu.memory_space<vmem>>, vector<1x4x4xf32>
    %36 = vector.shape_cast %35 : vector<1x4x4xf32> to vector<4x4xf32>
    %cst_37 = arith.constant dense<0.000000e+00> : vector<288x4xf32>
    %37 = tpu.matmul %34, %36, %cst_37 {dimension_numbers = #tpu.dot_dimension_numbers<[1], [0], [0], [1], [0, 0, 1, 1], [], []>} : vector<288x4xf32>, vector<4x4xf32>, vector<288x4xf32> -> vector<288x4xf32>
    %38 = arith.addf %33, %37 : vector<288x4xf32>
    %c41 = arith.constant 41 : index
    %c0_38 = arith.constant 0 : index
    %39 = vector.load %arg17[%c41, %c0_38] : memref<336x4xf32, #tpu.memory_space<vmem>>, vector<288x4xf32>
    %c6_39 = arith.constant 6 : index
    %c0_40 = arith.constant 0 : index
    %c0_41 = arith.constant 0 : index
    %40 = vector.load %arg3[%c6_39, %c0_40, %c0_41] : memref<9x4x4xf32, #tpu.memory_space<vmem>>, vector<1x4x4xf32>
    %41 = vector.shape_cast %40 : vector<1x4x4xf32> to vector<4x4xf32>
    %cst_42 = arith.constant dense<0.000000e+00> : vector<288x4xf32>
    %42 = tpu.matmul %39, %41, %cst_42 {dimension_numbers = #tpu.dot_dimension_numbers<[1], [0], [0], [1], [0, 0, 1, 1], [], []>} : vector<288x4xf32>, vector<4x4xf32>, vector<288x4xf32> -> vector<288x4xf32>
    %43 = arith.addf %38, %42 : vector<288x4xf32>
    %c42 = arith.constant 42 : index
    %c0_43 = arith.constant 0 : index
    %44 = vector.load %arg17[%c42, %c0_43] : memref<336x4xf32, #tpu.memory_space<vmem>>, vector<288x4xf32>
    %c7_44 = arith.constant 7 : index
    %c0_45 = arith.constant 0 : index
    %c0_46 = arith.constant 0 : index
    %45 = vector.load %arg3[%c7_44, %c0_45, %c0_46] : memref<9x4x4xf32, #tpu.memory_space<vmem>>, vector<1x4x4xf32>
    %46 = vector.shape_cast %45 : vector<1x4x4xf32> to vector<4x4xf32>
    %cst_47 = arith.constant dense<0.000000e+00> : vector<288x4xf32>
    %47 = tpu.matmul %44, %46, %cst_47 {dimension_numbers = #tpu.dot_dimension_numbers<[1], [0], [0], [1], [0, 0, 1, 1], [], []>} : vector<288x4xf32>, vector<4x4xf32>, vector<288x4xf32> -> vector<288x4xf32>
    %48 = arith.addf %43, %47 : vector<288x4xf32>
    %c43 = arith.constant 43 : index
    %c0_48 = arith.constant 0 : index
    %49 = vector.load %arg17[%c43, %c0_48] : memref<336x4xf32, #tpu.memory_space<vmem>>, vector<288x4xf32>
    %c8 = arith.constant 8 : index
    %c0_49 = arith.constant 0 : index
    %c0_50 = arith.constant 0 : index
    %50 = vector.load %arg3[%c8, %c0_49, %c0_50] : memref<9x4x4xf32, #tpu.memory_space<vmem>>, vector<1x4x4xf32>
    %51 = vector.shape_cast %50 : vector<1x4x4xf32> to vector<4x4xf32>
    %cst_51 = arith.constant dense<0.000000e+00> : vector<288x4xf32>
    %52 = tpu.matmul %49, %51, %cst_51 {dimension_numbers = #tpu.dot_dimension_numbers<[1], [0], [0], [1], [0, 0, 1, 1], [], []>} : vector<288x4xf32>, vector<4x4xf32>, vector<288x4xf32> -> vector<288x4xf32>
    %53 = arith.addf %48, %52 : vector<288x4xf32>
    %c0_52 = arith.constant 0 : index
    %c0_53 = arith.constant 0 : index
    %54 = vector.load %arg4[%c0_52, %c0_53] : memref<1x4xf32, #tpu.memory_space<vmem>>, vector<1x4xf32>
    %55 = vector.broadcast %54 : vector<1x4xf32> to vector<288x4xf32>
    %56 = arith.addf %53, %55 : vector<288x4xf32>
    %c0_54 = arith.constant 0 : index
    %c0_55 = arith.constant 0 : index
    %c0_56 = arith.constant 0 : index
    %57 = vector.load %arg5[%c0_54, %c0_55, %c0_56] : memref<1x288x1xf32, #tpu.memory_space<vmem>>, vector<1x288x1xf32>
    %58 = vector.shape_cast %57 : vector<1x288x1xf32> to vector<288x1xf32>
    %c0_57 = arith.constant 0 : index
    %c0_58 = arith.constant 0 : index
    %59 = vector.load %arg6[%c0_57, %c0_58] : memref<1x4xf32, #tpu.memory_space<vmem>>, vector<1x4xf32>
    %c0_59 = arith.constant 0 : index
    %c0_60 = arith.constant 0 : index
    %c0_61 = arith.constant 0 : index
    %60 = vector.load %arg7[%c0_59, %c0_60, %c0_61] : memref<1x1x4xf32, #tpu.memory_space<vmem>>, vector<1x1x4xf32>
    %61 = vector.shape_cast %60 : vector<1x1x4xf32> to vector<1x4xf32>
    %c0_62 = arith.constant 0 : index
    %c0_63 = arith.constant 0 : index
    %c0_64 = arith.constant 0 : index
    %62 = vector.load %arg8[%c0_62, %c0_63, %c0_64] : memref<1x1x4xf32, #tpu.memory_space<vmem>>, vector<1x1x4xf32>
    %63 = vector.shape_cast %62 : vector<1x1x4xf32> to vector<1x4xf32>
    %64 = vector.broadcast %58 : vector<288x1xf32> to vector<288x4xf32>
    %65 = vector.broadcast %59 : vector<1x4xf32> to vector<288x4xf32>
    %66 = arith.mulf %64, %65 : vector<288x4xf32>
    %67 = arith.addf %56, %66 : vector<288x4xf32>
    %68 = vector.broadcast %0 : vector<288x1xf32> to vector<288x4xf32>
    %69 = arith.mulf %67, %68 : vector<288x4xf32>
    %cst_65 = arith.constant dense<0.000000e+00> : vector<4xf32>
    %70 = vector.multi_reduction <add>, %69, %cst_65 [0] : vector<288x4xf32> to vector<4xf32>
    %71 = vector.shape_cast %70 : vector<4xf32> to vector<1x4xf32>
    %cst_66 = arith.constant 3.906250e-03 : f32
    %72 = vector.broadcast %cst_66 : f32 to vector<1x4xf32>
    %73 = arith.mulf %71, %72 : vector<1x4xf32>
    %74 = vector.broadcast %73 : vector<1x4xf32> to vector<288x4xf32>
    %75 = arith.subf %67, %74 : vector<288x4xf32>
    %76 = vector.broadcast %0 : vector<288x1xf32> to vector<288x4xf32>
    %77 = arith.mulf %75, %76 : vector<288x4xf32>
    %78 = arith.mulf %77, %77 : vector<288x4xf32>
    %cst_67 = arith.constant dense<0.000000e+00> : vector<4xf32>
    %79 = vector.multi_reduction <add>, %78, %cst_67 [0] : vector<288x4xf32> to vector<4xf32>
    %80 = vector.shape_cast %79 : vector<4xf32> to vector<1x4xf32>
    %cst_68 = arith.constant 3.906250e-03 : f32
    %81 = vector.broadcast %cst_68 : f32 to vector<1x4xf32>
    %82 = arith.mulf %80, %81 : vector<1x4xf32>
    %83 = vector.broadcast %73 : vector<1x4xf32> to vector<288x4xf32>
    %84 = arith.subf %67, %83 : vector<288x4xf32>
    %cst_69 = arith.constant 9.99999974E-6 : f32
    %85 = vector.broadcast %cst_69 : f32 to vector<1x4xf32>
    %86 = arith.addf %82, %85 : vector<1x4xf32>
    %87 = math.rsqrt %86 : vector<1x4xf32>
    %88 = vector.broadcast %87 : vector<1x4xf32> to vector<288x4xf32>
    %89 = arith.mulf %84, %88 : vector<288x4xf32>
    %90 = vector.broadcast %61 : vector<1x4xf32> to vector<288x4xf32>
    %91 = arith.mulf %90, %89 : vector<288x4xf32>
    %92 = vector.broadcast %63 : vector<1x4xf32> to vector<288x4xf32>
    %93 = arith.addf %91, %92 : vector<288x4xf32>
    %cst_70 = arith.constant 0.000000e+00 : f32
    %94 = vector.broadcast %cst_70 : f32 to vector<288x4xf32>
    %95 = arith.cmpf oge, %93, %94 : vector<288x4xf32>
    %cst_71 = arith.constant 2.000000e-01 : f32
    %96 = vector.broadcast %cst_71 : f32 to vector<288x4xf32>
    %97 = arith.mulf %96, %93 : vector<288x4xf32>
    %98 = arith.select %95, %93, %97 : vector<288x4xi1>, vector<288x4xf32>
    %99 = vector.broadcast %0 : vector<288x1xf32> to vector<288x4xf32>
    %100 = arith.mulf %98, %99 : vector<288x4xf32>
    %cst_72 = arith.constant 0.000000e+00 : f32
    %101 = vector.broadcast %cst_72 : f32 to vector<336x4xf32>
    %c0_73 = arith.constant 0 : index
    %c0_74 = arith.constant 0 : index
    %102 = vector.load %arg18[%c0_73, %c0_74] : memref<336x4xf32, #tpu.memory_space<vmem>>, vector<336x4xf32>
    tpu.vector_store %arg18[%c0_73, %c0_74], %101 {strides = array<i32>} : memref<336x4xf32, #tpu.memory_space<vmem>>, vector<336x4xf32>,
    %c24_75 = arith.constant 24 : index
    %c0_76 = arith.constant 0 : index
    %103 = vector.load %arg18[%c24_75, %c0_76] : memref<336x4xf32, #tpu.memory_space<vmem>>, vector<288x4xf32>
    tpu.vector_store %arg18[%c24_75, %c0_76], %100 {strides = array<i32>} : memref<336x4xf32, #tpu.memory_space<vmem>>, vector<288x4xf32>,
    %cst_77 = arith.constant 0.000000e+00 : f32
    %104 = vector.broadcast %cst_77 : f32 to vector<288x4xf32>
    %c5_78 = arith.constant 5 : index
    %c0_79 = arith.constant 0 : index
    %105 = vector.load %arg18[%c5_78, %c0_79] : memref<336x4xf32, #tpu.memory_space<vmem>>, vector<288x4xf32>
    %c0_80 = arith.constant 0 : index
    %c0_81 = arith.constant 0 : index
    %c0_82 = arith.constant 0 : index
    %106 = vector.load %arg9[%c0_80, %c0_81, %c0_82] : memref<9x4x4xf32, #tpu.memory_space<vmem>>, vector<1x4x4xf32>
    %107 = vector.shape_cast %106 : vector<1x4x4xf32> to vector<4x4xf32>
    %cst_83 = arith.constant dense<0.000000e+00> : vector<288x4xf32>
    %108 = tpu.matmul %105, %107, %cst_83 {dimension_numbers = #tpu.dot_dimension_numbers<[1], [0], [0], [1], [0, 0, 1, 1], [], []>} : vector<288x4xf32>, vector<4x4xf32>, vector<288x4xf32> -> vector<288x4xf32>
    %109 = arith.addf %104, %108 : vector<288x4xf32>
    %c6_84 = arith.constant 6 : index
    %c0_85 = arith.constant 0 : index
    %110 = vector.load %arg18[%c6_84, %c0_85] : memref<336x4xf32, #tpu.memory_space<vmem>>, vector<288x4xf32>
    %c1_86 = arith.constant 1 : index
    %c0_87 = arith.constant 0 : index
    %c0_88 = arith.constant 0 : index
    %111 = vector.load %arg9[%c1_86, %c0_87, %c0_88] : memref<9x4x4xf32, #tpu.memory_space<vmem>>, vector<1x4x4xf32>
    %112 = vector.shape_cast %111 : vector<1x4x4xf32> to vector<4x4xf32>
    %cst_89 = arith.constant dense<0.000000e+00> : vector<288x4xf32>
    %113 = tpu.matmul %110, %112, %cst_89 {dimension_numbers = #tpu.dot_dimension_numbers<[1], [0], [0], [1], [0, 0, 1, 1], [], []>} : vector<288x4xf32>, vector<4x4xf32>, vector<288x4xf32> -> vector<288x4xf32>
    %114 = arith.addf %109, %113 : vector<288x4xf32>
    %c7_90 = arith.constant 7 : index
    %c0_91 = arith.constant 0 : index
    %115 = vector.load %arg18[%c7_90, %c0_91] : memref<336x4xf32, #tpu.memory_space<vmem>>, vector<288x4xf32>
    %c2_92 = arith.constant 2 : index
    %c0_93 = arith.constant 0 : index
    %c0_94 = arith.constant 0 : index
    %116 = vector.load %arg9[%c2_92, %c0_93, %c0_94] : memref<9x4x4xf32, #tpu.memory_space<vmem>>, vector<1x4x4xf32>
    %117 = vector.shape_cast %116 : vector<1x4x4xf32> to vector<4x4xf32>
    %cst_95 = arith.constant dense<0.000000e+00> : vector<288x4xf32>
    %118 = tpu.matmul %115, %117, %cst_95 {dimension_numbers = #tpu.dot_dimension_numbers<[1], [0], [0], [1], [0, 0, 1, 1], [], []>} : vector<288x4xf32>, vector<4x4xf32>, vector<288x4xf32> -> vector<288x4xf32>
    %119 = arith.addf %114, %118 : vector<288x4xf32>
    %c23_96 = arith.constant 23 : index
    %c0_97 = arith.constant 0 : index
    %120 = vector.load %arg18[%c23_96, %c0_97] : memref<336x4xf32, #tpu.memory_space<vmem>>, vector<288x4xf32>
    %c3_98 = arith.constant 3 : index
    %c0_99 = arith.constant 0 : index
    %c0_100 = arith.constant 0 : index
    %121 = vector.load %arg9[%c3_98, %c0_99, %c0_100] : memref<9x4x4xf32, #tpu.memory_space<vmem>>, vector<1x4x4xf32>
    %122 = vector.shape_cast %121 : vector<1x4x4xf32> to vector<4x4xf32>
    %cst_101 = arith.constant dense<0.000000e+00> : vector<288x4xf32>
    %123 = tpu.matmul %120, %122, %cst_101 {dimension_numbers = #tpu.dot_dimension_numbers<[1], [0], [0], [1], [0, 0, 1, 1], [], []>} : vector<288x4xf32>, vector<4x4xf32>, vector<288x4xf32> -> vector<288x4xf32>
    %124 = arith.addf %119, %123 : vector<288x4xf32>
    %c24_102 = arith.constant 24 : index
    %c0_103 = arith.constant 0 : index
    %125 = vector.load %arg18[%c24_102, %c0_103] : memref<336x4xf32, #tpu.memory_space<vmem>>, vector<288x4xf32>
    %c4_104 = arith.constant 4 : index
    %c0_105 = arith.constant 0 : index
    %c0_106 = arith.constant 0 : index
    %126 = vector.load %arg9[%c4_104, %c0_105, %c0_106] : memref<9x4x4xf32, #tpu.memory_space<vmem>>, vector<1x4x4xf32>
    %127 = vector.shape_cast %126 : vector<1x4x4xf32> to vector<4x4xf32>
    %cst_107 = arith.constant dense<0.000000e+00> : vector<288x4xf32>
    %128 = tpu.matmul %125, %127, %cst_107 {dimension_numbers = #tpu.dot_dimension_numbers<[1], [0], [0], [1], [0, 0, 1, 1], [], []>} : vector<288x4xf32>, vector<4x4xf32>, vector<288x4xf32> -> vector<288x4xf32>
    %129 = arith.addf %124, %128 : vector<288x4xf32>
    %c25_108 = arith.constant 25 : index
    %c0_109 = arith.constant 0 : index
    %130 = vector.load %arg18[%c25_108, %c0_109] : memref<336x4xf32, #tpu.memory_space<vmem>>, vector<288x4xf32>
    %c5_110 = arith.constant 5 : index
    %c0_111 = arith.constant 0 : index
    %c0_112 = arith.constant 0 : index
    %131 = vector.load %arg9[%c5_110, %c0_111, %c0_112] : memref<9x4x4xf32, #tpu.memory_space<vmem>>, vector<1x4x4xf32>
    %132 = vector.shape_cast %131 : vector<1x4x4xf32> to vector<4x4xf32>
    %cst_113 = arith.constant dense<0.000000e+00> : vector<288x4xf32>
    %133 = tpu.matmul %130, %132, %cst_113 {dimension_numbers = #tpu.dot_dimension_numbers<[1], [0], [0], [1], [0, 0, 1, 1], [], []>} : vector<288x4xf32>, vector<4x4xf32>, vector<288x4xf32> -> vector<288x4xf32>
    %134 = arith.addf %129, %133 : vector<288x4xf32>
    %c41_114 = arith.constant 41 : index
    %c0_115 = arith.constant 0 : index
    %135 = vector.load %arg18[%c41_114, %c0_115] : memref<336x4xf32, #tpu.memory_space<vmem>>, vector<288x4xf32>
    %c6_116 = arith.constant 6 : index
    %c0_117 = arith.constant 0 : index
    %c0_118 = arith.constant 0 : index
    %136 = vector.load %arg9[%c6_116, %c0_117, %c0_118] : memref<9x4x4xf32, #tpu.memory_space<vmem>>, vector<1x4x4xf32>
    %137 = vector.shape_cast %136 : vector<1x4x4xf32> to vector<4x4xf32>
    %cst_119 = arith.constant dense<0.000000e+00> : vector<288x4xf32>
    %138 = tpu.matmul %135, %137, %cst_119 {dimension_numbers = #tpu.dot_dimension_numbers<[1], [0], [0], [1], [0, 0, 1, 1], [], []>} : vector<288x4xf32>, vector<4x4xf32>, vector<288x4xf32> -> vector<288x4xf32>
    %139 = arith.addf %134, %138 : vector<288x4xf32>
    %c42_120 = arith.constant 42 : index
    %c0_121 = arith.constant 0 : index
    %140 = vector.load %arg18[%c42_120, %c0_121] : memref<336x4xf32, #tpu.memory_space<vmem>>, vector<288x4xf32>
    %c7_122 = arith.constant 7 : index
    %c0_123 = arith.constant 0 : index
    %c0_124 = arith.constant 0 : index
    %141 = vector.load %arg9[%c7_122, %c0_123, %c0_124] : memref<9x4x4xf32, #tpu.memory_space<vmem>>, vector<1x4x4xf32>
    %142 = vector.shape_cast %141 : vector<1x4x4xf32> to vector<4x4xf32>
    %cst_125 = arith.constant dense<0.000000e+00> : vector<288x4xf32>
    %143 = tpu.matmul %140, %142, %cst_125 {dimension_numbers = #tpu.dot_dimension_numbers<[1], [0], [0], [1], [0, 0, 1, 1], [], []>} : vector<288x4xf32>, vector<4x4xf32>, vector<288x4xf32> -> vector<288x4xf32>
    %144 = arith.addf %139, %143 : vector<288x4xf32>
    %c43_126 = arith.constant 43 : index
    %c0_127 = arith.constant 0 : index
    %145 = vector.load %arg18[%c43_126, %c0_127] : memref<336x4xf32, #tpu.memory_space<vmem>>, vector<288x4xf32>
    %c8_128 = arith.constant 8 : index
    %c0_129 = arith.constant 0 : index
    %c0_130 = arith.constant 0 : index
    %146 = vector.load %arg9[%c8_128, %c0_129, %c0_130] : memref<9x4x4xf32, #tpu.memory_space<vmem>>, vector<1x4x4xf32>
    %147 = vector.shape_cast %146 : vector<1x4x4xf32> to vector<4x4xf32>
    %cst_131 = arith.constant dense<0.000000e+00> : vector<288x4xf32>
    %148 = tpu.matmul %145, %147, %cst_131 {dimension_numbers = #tpu.dot_dimension_numbers<[1], [0], [0], [1], [0, 0, 1, 1], [], []>} : vector<288x4xf32>, vector<4x4xf32>, vector<288x4xf32> -> vector<288x4xf32>
    %149 = arith.addf %144, %148 : vector<288x4xf32>
    %c0_132 = arith.constant 0 : index
    %c0_133 = arith.constant 0 : index
    %150 = vector.load %arg10[%c0_132, %c0_133] : memref<1x4xf32, #tpu.memory_space<vmem>>, vector<1x4xf32>
    %151 = vector.broadcast %150 : vector<1x4xf32> to vector<288x4xf32>
    %152 = arith.addf %149, %151 : vector<288x4xf32>
    %c0_134 = arith.constant 0 : index
    %c0_135 = arith.constant 0 : index
    %c0_136 = arith.constant 0 : index
    %153 = vector.load %arg11[%c0_134, %c0_135, %c0_136] : memref<1x288x1xf32, #tpu.memory_space<vmem>>, vector<1x288x1xf32>
    %154 = vector.shape_cast %153 : vector<1x288x1xf32> to vector<288x1xf32>
    %c0_137 = arith.constant 0 : index
    %c0_138 = arith.constant 0 : index
    %155 = vector.load %arg12[%c0_137, %c0_138] : memref<1x4xf32, #tpu.memory_space<vmem>>, vector<1x4xf32>
    %c0_139 = arith.constant 0 : index
    %c0_140 = arith.constant 0 : index
    %c0_141 = arith.constant 0 : index
    %156 = vector.load %arg13[%c0_139, %c0_140, %c0_141] : memref<1x1x4xf32, #tpu.memory_space<vmem>>, vector<1x1x4xf32>
    %157 = vector.shape_cast %156 : vector<1x1x4xf32> to vector<1x4xf32>
    %c0_142 = arith.constant 0 : index
    %c0_143 = arith.constant 0 : index
    %c0_144 = arith.constant 0 : index
    %158 = vector.load %arg14[%c0_142, %c0_143, %c0_144] : memref<1x1x4xf32, #tpu.memory_space<vmem>>, vector<1x1x4xf32>
    %159 = vector.shape_cast %158 : vector<1x1x4xf32> to vector<1x4xf32>
    %160 = vector.broadcast %154 : vector<288x1xf32> to vector<288x4xf32>
    %161 = vector.broadcast %155 : vector<1x4xf32> to vector<288x4xf32>
    %162 = arith.mulf %160, %161 : vector<288x4xf32>
    %163 = arith.addf %152, %162 : vector<288x4xf32>
    %164 = vector.broadcast %0 : vector<288x1xf32> to vector<288x4xf32>
    %165 = arith.mulf %163, %164 : vector<288x4xf32>
    %cst_145 = arith.constant dense<0.000000e+00> : vector<4xf32>
    %166 = vector.multi_reduction <add>, %165, %cst_145 [0] : vector<288x4xf32> to vector<4xf32>
    %167 = vector.shape_cast %166 : vector<4xf32> to vector<1x4xf32>
    %cst_146 = arith.constant 3.906250e-03 : f32
    %168 = vector.broadcast %cst_146 : f32 to vector<1x4xf32>
    %169 = arith.mulf %167, %168 : vector<1x4xf32>
    %170 = vector.broadcast %169 : vector<1x4xf32> to vector<288x4xf32>
    %171 = arith.subf %163, %170 : vector<288x4xf32>
    %172 = vector.broadcast %0 : vector<288x1xf32> to vector<288x4xf32>
    %173 = arith.mulf %171, %172 : vector<288x4xf32>
    %174 = arith.mulf %173, %173 : vector<288x4xf32>
    %cst_147 = arith.constant dense<0.000000e+00> : vector<4xf32>
    %175 = vector.multi_reduction <add>, %174, %cst_147 [0] : vector<288x4xf32> to vector<4xf32>
    %176 = vector.shape_cast %175 : vector<4xf32> to vector<1x4xf32>
    %cst_148 = arith.constant 3.906250e-03 : f32
    %177 = vector.broadcast %cst_148 : f32 to vector<1x4xf32>
    %178 = arith.mulf %176, %177 : vector<1x4xf32>
    %179 = vector.broadcast %169 : vector<1x4xf32> to vector<288x4xf32>
    %180 = arith.subf %163, %179 : vector<288x4xf32>
    %cst_149 = arith.constant 9.99999974E-6 : f32
    %181 = vector.broadcast %cst_149 : f32 to vector<1x4xf32>
    %182 = arith.addf %178, %181 : vector<1x4xf32>
    %183 = math.rsqrt %182 : vector<1x4xf32>
    %184 = vector.broadcast %183 : vector<1x4xf32> to vector<288x4xf32>
    %185 = arith.mulf %180, %184 : vector<288x4xf32>
    %186 = vector.broadcast %157 : vector<1x4xf32> to vector<288x4xf32>
    %187 = arith.mulf %186, %185 : vector<288x4xf32>
    %188 = vector.broadcast %159 : vector<1x4xf32> to vector<288x4xf32>
    %189 = arith.addf %187, %188 : vector<288x4xf32>
    %cst_150 = arith.constant 0.000000e+00 : f32
    %190 = vector.broadcast %cst_150 : f32 to vector<288x4xf32>
    %191 = arith.cmpf oge, %189, %190 : vector<288x4xf32>
    %cst_151 = arith.constant 2.000000e-01 : f32
    %192 = vector.broadcast %cst_151 : f32 to vector<288x4xf32>
    %193 = arith.mulf %192, %189 : vector<288x4xf32>
    %194 = arith.select %191, %189, %193 : vector<288x4xi1>, vector<288x4xf32>
    %195 = vector.broadcast %0 : vector<288x1xf32> to vector<288x4xf32>
    %196 = arith.mulf %194, %195 : vector<288x4xf32>
    %c0_152 = arith.constant 0 : index
    %c0_153 = arith.constant 0 : index
    %c0_154 = arith.constant 0 : index
    %197 = vector.load %arg16[%c0_152, %c0_153, %c0_154] : memref<1x288x4xf32, #tpu.memory_space<vmem>>, vector<1x288x4xf32>
    %198 = vector.shape_cast %197 : vector<1x288x4xf32> to vector<288x4xf32>
    %199 = vector.shape_cast %196 : vector<288x4xf32> to vector<1x288x4xf32>
    tpu.vector_store %arg16[%c0_152, %c0_153, %c0_154], %199 {strides = array<i32>} : memref<1x288x4xf32, #tpu.memory_space<vmem>>, vector<1x288x4xf32>,
    return
  }
  func.func @transform_0(%arg0: i32) -> (i32, i32, i32) {
    %c0_i32 = arith.constant 0 : i32
    %c0_i32_0 = arith.constant 0 : i32
    %c0_i32_1 = arith.constant 0 : i32
    return %arg0, %c0_i32, %c0_i32_0 : i32, i32, i32
  }
  func.func @transform_1(%arg0: i32) -> (i32, i32) {
    %c0_i32 = arith.constant 0 : i32
    %c0_i32_0 = arith.constant 0 : i32
    %c0_i32_1 = arith.constant 0 : i32
    return %c0_i32, %c0_i32_0 : i32, i32
  }
  func.func @transform_2(%arg0: i32) -> (i32, i32, i32) {
    %c0_i32 = arith.constant 0 : i32
    %c0_i32_0 = arith.constant 0 : i32
    %c0_i32_1 = arith.constant 0 : i32
    %c0_i32_2 = arith.constant 0 : i32
    return %c0_i32, %c0_i32_0, %c0_i32_1 : i32, i32, i32
  }
  func.func @transform_3(%arg0: i32) -> (i32, i32) {
    %c0_i32 = arith.constant 0 : i32
    %c0_i32_0 = arith.constant 0 : i32
    %c0_i32_1 = arith.constant 0 : i32
    return %c0_i32, %c0_i32_0 : i32, i32
  }
  func.func @transform_4(%arg0: i32) -> (i32, i32, i32) {
    %c0_i32 = arith.constant 0 : i32
    %c0_i32_0 = arith.constant 0 : i32
    %c0_i32_1 = arith.constant 0 : i32
    return %arg0, %c0_i32, %c0_i32_0 : i32, i32, i32
  }
  func.func @transform_5(%arg0: i32) -> (i32, i32) {
    %c0_i32 = arith.constant 0 : i32
    %c0_i32_0 = arith.constant 0 : i32
    %c0_i32_1 = arith.constant 0 : i32
    return %c0_i32, %c0_i32_0 : i32, i32
  }
  func.func @transform_6(%arg0: i32) -> (i32, i32, i32) {
    %c0_i32 = arith.constant 0 : i32
    %c0_i32_0 = arith.constant 0 : i32
    %c0_i32_1 = arith.constant 0 : i32
    return %arg0, %c0_i32, %c0_i32_0 : i32, i32, i32
  }
  func.func @transform_7(%arg0: i32) -> (i32, i32, i32) {
    %c0_i32 = arith.constant 0 : i32
    %c0_i32_0 = arith.constant 0 : i32
    %c0_i32_1 = arith.constant 0 : i32
    return %arg0, %c0_i32, %c0_i32_0 : i32, i32, i32
  }
  func.func @transform_8(%arg0: i32) -> (i32, i32, i32) {
    %c0_i32 = arith.constant 0 : i32
    %c0_i32_0 = arith.constant 0 : i32
    %c0_i32_1 = arith.constant 0 : i32
    %c0_i32_2 = arith.constant 0 : i32
    return %c0_i32, %c0_i32_0, %c0_i32_1 : i32, i32, i32
  }
  func.func @transform_9(%arg0: i32) -> (i32, i32) {
    %c0_i32 = arith.constant 0 : i32
    %c0_i32_0 = arith.constant 0 : i32
    %c0_i32_1 = arith.constant 0 : i32
    return %c0_i32, %c0_i32_0 : i32, i32
  }
  func.func @transform_10(%arg0: i32) -> (i32, i32, i32) {
    %c0_i32 = arith.constant 0 : i32
    %c0_i32_0 = arith.constant 0 : i32
    %c0_i32_1 = arith.constant 0 : i32
    return %arg0, %c0_i32, %c0_i32_0 : i32, i32, i32
  }
  func.func @transform_11(%arg0: i32) -> (i32, i32) {
    %c0_i32 = arith.constant 0 : i32
    %c0_i32_0 = arith.constant 0 : i32
    %c0_i32_1 = arith.constant 0 : i32
    return %c0_i32, %c0_i32_0 : i32, i32
  }
  func.func @transform_12(%arg0: i32) -> (i32, i32, i32) {
    %c0_i32 = arith.constant 0 : i32
    %c0_i32_0 = arith.constant 0 : i32
    %c0_i32_1 = arith.constant 0 : i32
    return %arg0, %c0_i32, %c0_i32_0 : i32, i32, i32
  }
  func.func @transform_13(%arg0: i32) -> (i32, i32, i32) {
    %c0_i32 = arith.constant 0 : i32
    %c0_i32_0 = arith.constant 0 : i32
    %c0_i32_1 = arith.constant 0 : i32
    return %arg0, %c0_i32, %c0_i32_0 : i32, i32, i32
  }
  func.func @transform_14(%arg0: i32) -> (i32, i32) {
    %c0_i32 = arith.constant 0 : i32
    %c0_i32_0 = arith.constant 0 : i32
    %c0_i32_1 = arith.constant 0 : i32
    return %c0_i32, %c0_i32_0 : i32, i32
  }
  func.func @transform_15(%arg0: i32) -> (i32, i32, i32) {
    %c0_i32 = arith.constant 0 : i32
    %c0_i32_0 = arith.constant 0 : i32
    %c0_i32_1 = arith.constant 0 : i32
    return %arg0, %c0_i32, %c0_i32_0 : i32, i32, i32
  }
}

</mosaic_0001>

<llo_original>
// kernel: tpu_custom_call.1
$region0: #{tpu_custom_call.1}
  #allocation0 [shape = 'u32[]', space=smem, size = 0x4, offset = 0x4, fixed_abs, tag = 'smem constant byte address 0x4 - core index']
  #allocation1 [shape = 'u32[144,128]{1,0:T(1,128)}', space=vmem, size = 0x12000, scoped, tag = 'internal scratch']
  #allocation2 [shape = 'f32[336,4]{1,0:T(8,128)}', space=vmem, size = 0x2a000, scoped, tag = 'scratch operand']
  #allocation3 [shape = 'f32[336,4]{1,0:T(8,128)}', space=vmem, size = 0x2a000, scoped, tag = 'scratch operand']
  %s0 = inlined_call_operand.vmem [shape: f32[2,64,4], index: 0, kind: input, shape index: {}]
  %s1 = inlined_call_operand.vmem [shape: f32[288,64], index: 1, kind: input, shape index: {}]
  %s2 = inlined_call_operand.vmem [shape: f32[9,4,4], index: 2, kind: input, shape index: {}]
  %s3 = inlined_call_operand.vmem [shape: f32[1,4], index: 3, kind: input, shape index: {}]
  %s4 = inlined_call_operand.vmem [shape: f32[2,288,1], index: 4, kind: input, shape index: {}]
  %s5 = inlined_call_operand.vmem [shape: f32[1,4], index: 5, kind: input, shape index: {}]
  %s6 = inlined_call_operand.vmem [shape: f32[2,1,4], index: 6, kind: input, shape index: {}]
  %s7 = inlined_call_operand.vmem [shape: f32[2,1,4], index: 7, kind: input, shape index: {}]
  %s8 = inlined_call_operand.vmem [shape: f32[9,4,4], index: 8, kind: input, shape index: {}]
  %s9 = inlined_call_operand.vmem [shape: f32[1,4], index: 9, kind: input, shape index: {}]
  %s10 = inlined_call_operand.vmem [shape: f32[2,288,1], index: 10, kind: input, shape index: {}]
  %s11 = inlined_call_operand.vmem [shape: f32[1,4], index: 11, kind: input, shape index: {}]
  %s12 = inlined_call_operand.vmem [shape: f32[2,1,4], index: 12, kind: input, shape index: {}]
  %s13 = inlined_call_operand.vmem [shape: f32[2,1,4], index: 13, kind: input, shape index: {}]
  %s14 = inlined_call_operand.vmem [shape: f32[288,1], index: 14, kind: input, shape index: {}]
  %s15 = inlined_call_operand.vmem [shape: f32[2,288,4], index: 15, kind: output, shape index: {}]
  %s16 = sld [smem:[#allocation0]]
  $region93: #{tpu_custom_call.1} parent=0
    _
  %s18 = ssub.s32 1, %s16
  %s19 = scalar_select 0, %s18, %s16
  loop: start=0, step=1, limit=4
  $region2: #{tpu_custom_call.1} parent=0 // loop_pre_header
    _
  $region3: #{tpu_custom_call.1} parent=0 // loop_header
    %s21 = sphi 0, %s25
    %p22 = scmp.ge.s32.totalorder %s21, 4
    %s31 = sphi 0, %s33
    %s34 = sphi 0, %s31
    %s35 = sphi 0, %s34
    %s51 = sphi 0, %s35
    %s55 = sphi 0, %s55
    %s57 = sphi 0, %s55
    %s58 = sphi 0, %s57
    %s72 = sphi 0, %s58
    %s76 = sphi 0, %s76
    %s78 = sphi 0, %s76
    %s79 = sphi 0, %s78
    %s93 = sphi 0, %s79
    %s97 = sphi 0, %s97
    %s99 = sphi 0, %s97
    %s100 = sphi 0, %s99
    %s114 = sphi 0, %s100
    %s120 = sphi 0, %s122
    %s123 = sphi 0, %s120
    %s124 = sphi 0, %s123
    %s140 = sphi 0, %s124
    %s144 = sphi 0, %s144
    %s146 = sphi 0, %s144
    %s147 = sphi 0, %s146
    %s161 = sphi 0, %s147
    %s167 = sphi 0, %s169
    %s170 = sphi 0, %s167
    %s171 = sphi 0, %s170
    %s187 = sphi 0, %s171
    %s193 = sphi 0, %s195
    %s196 = sphi 0, %s193
    %s197 = sphi 0, %s196
    %s213 = sphi 0, %s197
    %s217 = sphi 0, %s217
    %s219 = sphi 0, %s217
    %s220 = sphi 0, %s219
    %s234 = sphi 0, %s220
    %s238 = sphi 0, %s238
    %s240 = sphi 0, %s238
    %s241 = sphi 0, %s240
    %s255 = sphi 0, %s241
    %s261 = sphi 0, %s263
    %s264 = sphi 0, %s261
    %s265 = sphi 0, %s264
    %s281 = sphi 0, %s265
    %s285 = sphi 0, %s285
    %s287 = sphi 0, %s285
    %s288 = sphi 0, %s287
    %s302 = sphi 0, %s288
    %s308 = sphi 0, %s310
    %s311 = sphi 0, %s308
    %s312 = sphi 0, %s311
    %s328 = sphi 0, %s312
    %s334 = sphi 0, %s336
    %s337 = sphi 0, %s334
    %s338 = sphi 0, %s337
    %s354 = sphi 0, %s338
    %s358 = sphi 0, %s358
    %s360 = sphi 0, %s358
    %s361 = sphi 0, %s360
    %s375 = sphi 0, %s361
    %s381 = sphi 0, %s383
    %s384 = sphi 0, %s381
    %s385 = sphi 0, %s384
    %s401 = sphi 0, %s385
  $region4: #{tpu_custom_call.1} parent=0 // loop_header_branch
    %24 = sbr.rel (%p22) target = $region8
  $region5: #{tpu_custom_call.1} parent=0 // loop_body
    %s26 = ssub.s32 %s21, 1
    %s27 = ssub.s32 %s21, 2
    %s28 = sadd.s32 %s21, 1
    %s29 = ssub.s32 %s21, %s28
    %p30 = scmp.eq.s32.totalorder %s29, 0
    %s32 = sadd.s32 %s31, 1
    %s33 = scalar_select %p30, %s31, %s32
    %p36 = pneg %p30
    %p37 = scmp.eq.s32.totalorder %s21, 1
    %p38 = por %p36, %p37
    %p39 = scmp.ne.s32.totalorder %s31, %s34
    %p40 = scmp.eq.s32.totalorder %s21, 0
    %p41 = por %p39, %p40
    %p42 = scmp.ne.s32.totalorder %s31, %s34
    %p43 = scmp.eq.s32.totalorder %s26, 1
    %p44 = por %p42, %p43
    %p45 = scmp.ne.s32.totalorder %s34, %s35
    %p46 = scmp.eq.s32.totalorder %s26, 0
    %p47 = por %p45, %p46
    %p48 = scmp.ne.s32.totalorder %s34, %s35
    %p49 = scmp.eq.s32.totalorder %s27, 1
    %p50 = por %p48, %p49
    %p52 = scmp.ne.s32.totalorder %s35, %s51
    %p53 = scmp.eq.s32.totalorder %s27, 0
    %p54 = por %p52, %p53
    %s56 = sadd.s32 %s55, 1
    %p59 = scmp.eq.s32.totalorder %s21, 1
    %p60 = scmp.ne.s32.totalorder %s55, %s57
    %p61 = scmp.eq.s32.totalorder %s21, 0
    %p62 = por %p60, %p61
    %p63 = scmp.ne.s32.totalorder %s55, %s57
    %p64 = scmp.eq.s32.totalorder %s26, 1
    %p65 = por %p63, %p64
    %p66 = scmp.ne.s32.totalorder %s57, %s58
    %p67 = scmp.eq.s32.totalorder %s26, 0
    %p68 = por %p66, %p67
    %p69 = scmp.ne.s32.totalorder %s57, %s58
    %p70 = scmp.eq.s32.totalorder %s27, 1
    %p71 = por %p69, %p70
    %p73 = scmp.ne.s32.totalorder %s58, %s72
    %p74 = scmp.eq.s32.totalorder %s27, 0
    %p75 = por %p73, %p74
    %s77 = sadd.s32 %s76, 1
    %p80 = scmp.eq.s32.totalorder %s21, 1
    %p81 = scmp.ne.s32.totalorder %s76, %s78
    %p82 = scmp.eq.s32.totalorder %s21, 0
    %p83 = por %p81, %p82
    %p84 = scmp.ne.s32.totalorder %s76, %s78
    %p85 = scmp.eq.s32.totalorder %s26, 1
    %p86 = por %p84, %p85
    %p87 = scmp.ne.s32.totalorder %s78, %s79
    %p88 = scmp.eq.s32.totalorder %s26, 0
    %p89 = por %p87, %p88
    %p90 = scmp.ne.s32.totalorder %s78, %s79
    %p91 = scmp.eq.s32.totalorder %s27, 1
    %p92 = por %p90, %p91
    %p94 = scmp.ne.s32.totalorder %s79, %s93
    %p95 = scmp.eq.s32.totalorder %s27, 0
    %p96 = por %p94, %p95
    %s98 = sadd.s32 %s97, 1
    %p101 = scmp.eq.s32.totalorder %s21, 1
    %p102 = scmp.ne.s32.totalorder %s97, %s99
    %p103 = scmp.eq.s32.totalorder %s21, 0
    %p104 = por %p102, %p103
    %p105 = scmp.ne.s32.totalorder %s97, %s99
    %p106 = scmp.eq.s32.totalorder %s26, 1
    %p107 = por %p105, %p106
    %p108 = scmp.ne.s32.totalorder %s99, %s100
    %p109 = scmp.eq.s32.totalorder %s26, 0
    %p110 = por %p108, %p109
    %p111 = scmp.ne.s32.totalorder %s99, %s100
    %p112 = scmp.eq.s32.totalorder %s27, 1
    %p113 = por %p111, %p112
    %p115 = scmp.ne.s32.totalorder %s100, %s114
    %p116 = scmp.eq.s32.totalorder %s27, 0
    %p117 = por %p115, %p116
    %s118 = ssub.s32 %s21, %s28
    %p119 = scmp.eq.s32.totalorder %s118, 0
    %s121 = sadd.s32 %s120, 1
    %s122 = scalar_select %p119, %s120, %s121
    %p125 = pneg %p119
    %p126 = scmp.eq.s32.totalorder %s21, 1
    %p127 = por %p125, %p126
    %p128 = scmp.ne.s32.totalorder %s120, %s123
    %p129 = scmp.eq.s32.totalorder %s21, 0
    %p130 = por %p128, %p129
    %p131 = scmp.ne.s32.totalorder %s120, %s123
    %p132 = scmp.eq.s32.totalorder %s26, 1
    %p133 = por %p131, %p132
    %p134 = scmp.ne.s32.totalorder %s123, %s124
    %p135 = scmp.eq.s32.totalorder %s26, 0
    %p136 = por %p134, %p135
    %p137 = scmp.ne.s32.totalorder %s123, %s124
    %p138 = scmp.eq.s32.totalorder %s27, 1
    %p139 = por %p137, %p138
    %p141 = scmp.ne.s32.totalorder %s124, %s140
    %p142 = scmp.eq.s32.totalorder %s27, 0
    %p143 = por %p141, %p142
    %s145 = sadd.s32 %s144, 1
    %p148 = scmp.eq.s32.totalorder %s21, 1
    %p149 = scmp.ne.s32.totalorder %s144, %s146
    %p150 = scmp.eq.s32.totalorder %s21, 0
    %p151 = por %p149, %p150
    %p152 = scmp.ne.s32.totalorder %s144, %s146
    %p153 = scmp.eq.s32.totalorder %s26, 1
    %p154 = por %p152, %p153
    %p155 = scmp.ne.s32.totalorder %s146, %s147
    %p156 = scmp.eq.s32.totalorder %s26, 0
    %p157 = por %p155, %p156
    %p158 = scmp.ne.s32.totalorder %s146, %s147
    %p159 = scmp.eq.s32.totalorder %s27, 1
    %p160 = por %p158, %p159
    %p162 = scmp.ne.s32.totalorder %s147, %s161
    %p163 = scmp.eq.s32.totalorder %s27, 0
    %p164 = por %p162, %p163
    %s165 = ssub.s32 %s21, %s28
    %p166 = scmp.eq.s32.totalorder %s165, 0
    %s168 = sadd.s32 %s167, 1
    %s169 = scalar_select %p166, %s167, %s168
    %p172 = pneg %p166
    %p173 = scmp.eq.s32.totalorder %s21, 1
    %p174 = por %p172, %p173
    %p175 = scmp.ne.s32.totalorder %s167, %s170
    %p176 = scmp.eq.s32.totalorder %s21, 0
    %p177 = por %p175, %p176
    %p178 = scmp.ne.s32.totalorder %s167, %s170
    %p179 = scmp.eq.s32.totalorder %s26, 1
    %p180 = por %p178, %p179
    %p181 = scmp.ne.s32.totalorder %s170, %s171
    %p182 = scmp.eq.s32.totalorder %s26, 0
    %p183 = por %p181, %p182
    %p184 = scmp.ne.s32.totalorder %s170, %s171
    %p185 = scmp.eq.s32.totalorder %s27, 1
    %p186 = por %p184, %p185
    %p188 = scmp.ne.s32.totalorder %s171, %s187
    %p189 = scmp.eq.s32.totalorder %s27, 0
    %p190 = por %p188, %p189
    %s191 = ssub.s32 %s21, %s28
    %p192 = scmp.eq.s32.totalorder %s191, 0
    %s194 = sadd.s32 %s193, 1
    %s195 = scalar_select %p192, %s193, %s194
    %p198 = pneg %p192
    %p199 = scmp.eq.s32.totalorder %s21, 1
    %p200 = por %p198, %p199
    %p201 = scmp.ne.s32.totalorder %s193, %s196
    %p202 = scmp.eq.s32.totalorder %s21, 0
    %p203 = por %p201, %p202
    %p204 = scmp.ne.s32.totalorder %s193, %s196
    %p205 = scmp.eq.s32.totalorder %s26, 1
    %p206 = por %p204, %p205
    %p207 = scmp.ne.s32.totalorder %s196, %s197
    %p208 = scmp.eq.s32.totalorder %s26, 0
    %p209 = por %p207, %p208
    %p210 = scmp.ne.s32.totalorder %s196, %s197
    %p211 = scmp.eq.s32.totalorder %s27, 1
    %p212 = por %p210, %p211
    %p214 = scmp.ne.s32.totalorder %s197, %s213
    %p215 = scmp.eq.s32.totalorder %s27, 0
    %p216 = por %p214, %p215
    %s218 = sadd.s32 %s217, 1
    %p221 = scmp.eq.s32.totalorder %s21, 1
    %p222 = scmp.ne.s32.totalorder %s217, %s219
    %p223 = scmp.eq.s32.totalorder %s21, 0
    %p224 = por %p222, %p223
    %p225 = scmp.ne.s32.totalorder %s217, %s219
    %p226 = scmp.eq.s32.totalorder %s26, 1
    %p227 = por %p225, %p226
    %p228 = scmp.ne.s32.totalorder %s219, %s220
    %p229 = scmp.eq.s32.totalorder %s26, 0
    %p230 = por %p228, %p229
    %p231 = scmp.ne.s32.totalorder %s219, %s220
    %p232 = scmp.eq.s32.totalorder %s27, 1
    %p233 = por %p231, %p232
    %p235 = scmp.ne.s32.totalorder %s220, %s234
    %p236 = scmp.eq.s32.totalorder %s27, 0
    %p237 = por %p235, %p236
    %s239 = sadd.s32 %s238, 1
    %p242 = scmp.eq.s32.totalorder %s21, 1
    %p243 = scmp.ne.s32.totalorder %s238, %s240
    %p244 = scmp.eq.s32.totalorder %s21, 0
    %p245 = por %p243, %p244
    %p246 = scmp.ne.s32.totalorder %s238, %s240
    %p247 = scmp.eq.s32.totalorder %s26, 1
    %p248 = por %p246, %p247
    %p249 = scmp.ne.s32.totalorder %s240, %s241
    %p250 = scmp.eq.s32.totalorder %s26, 0
    %p251 = por %p249, %p250
    %p252 = scmp.ne.s32.totalorder %s240, %s241
    %p253 = scmp.eq.s32.totalorder %s27, 1
    %p254 = por %p252, %p253
    %p256 = scmp.ne.s32.totalorder %s241, %s255
    %p257 = scmp.eq.s32.totalorder %s27, 0
    %p258 = por %p256, %p257
    %s259 = ssub.s32 %s21, %s28
    %p260 = scmp.eq.s32.totalorder %s259, 0
    %s262 = sadd.s32 %s261, 1
    %s263 = scalar_select %p260, %s261, %s262
    %p266 = pneg %p260
    %p267 = scmp.eq.s32.totalorder %s21, 1
    %p268 = por %p266, %p267
    %p269 = scmp.ne.s32.totalorder %s261, %s264
    %p270 = scmp.eq.s32.totalorder %s21, 0
    %p271 = por %p269, %p270
    %p272 = scmp.ne.s32.totalorder %s261, %s264
    %p273 = scmp.eq.s32.totalorder %s26, 1
    %p274 = por %p272, %p273
    %p275 = scmp.ne.s32.totalorder %s264, %s265
    %p276 = scmp.eq.s32.totalorder %s26, 0
    %p277 = por %p275, %p276
    %p278 = scmp.ne.s32.totalorder %s264, %s265
    %p279 = scmp.eq.s32.totalorder %s27, 1
    %p280 = por %p278, %p279
    %p282 = scmp.ne.s32.totalorder %s265, %s281
    %p283 = scmp.eq.s32.totalorder %s27, 0
    %p284 = por %p282, %p283
    %s286 = sadd.s32 %s285, 1
    %p289 = scmp.eq.s32.totalorder %s21, 1
    %p290 = scmp.ne.s32.totalorder %s285, %s287
    %p291 = scmp.eq.s32.totalorder %s21, 0
    %p292 = por %p290, %p291
    %p293 = scmp.ne.s32.totalorder %s285, %s287
    %p294 = scmp.eq.s32.totalorder %s26, 1
    %p295 = por %p293, %p294
    %p296 = scmp.ne.s32.totalorder %s287, %s288
    %p297 = scmp.eq.s32.totalorder %s26, 0
    %p298 = por %p296, %p297
    %p299 = scmp.ne.s32.totalorder %s287, %s288
    %p300 = scmp.eq.s32.totalorder %s27, 1
    %p301 = por %p299, %p300
    %p303 = scmp.ne.s32.totalorder %s288, %s302
    %p304 = scmp.eq.s32.totalorder %s27, 0
    %p305 = por %p303, %p304
    %s306 = ssub.s32 %s21, %s28
    %p307 = scmp.eq.s32.totalorder %s306, 0
    %s309 = sadd.s32 %s308, 1
    %s310 = scalar_select %p307, %s308, %s309
    %p313 = pneg %p307
    %p314 = scmp.eq.s32.totalorder %s21, 1
    %p315 = por %p313, %p314
    %p316 = scmp.ne.s32.totalorder %s308, %s311
    %p317 = scmp.eq.s32.totalorder %s21, 0
    %p318 = por %p316, %p317
    %p319 = scmp.ne.s32.totalorder %s308, %s311
    %p320 = scmp.eq.s32.totalorder %s26, 1
    %p321 = por %p319, %p320
    %p322 = scmp.ne.s32.totalorder %s311, %s312
    %p323 = scmp.eq.s32.totalorder %s26, 0
    %p324 = por %p322, %p323
    %p325 = scmp.ne.s32.totalorder %s311, %s312
    %p326 = scmp.eq.s32.totalorder %s27, 1
    %p327 = por %p325, %p326
    %p329 = scmp.ne.s32.totalorder %s312, %s328
    %p330 = scmp.eq.s32.totalorder %s27, 0
    %p331 = por %p329, %p330
    %s332 = ssub.s32 %s21, %s28
    %p333 = scmp.eq.s32.totalorder %s332, 0
    %s335 = sadd.s32 %s334, 1
    %s336 = scalar_select %p333, %s334, %s335
    %p339 = pneg %p333
    %p340 = scmp.eq.s32.totalorder %s21, 1
    %p341 = por %p339, %p340
    %p342 = scmp.ne.s32.totalorder %s334, %s337
    %p343 = scmp.eq.s32.totalorder %s21, 0
    %p344 = por %p342, %p343
    %p345 = scmp.ne.s32.totalorder %s334, %s337
    %p346 = scmp.eq.s32.totalorder %s26, 1
    %p347 = por %p345, %p346
    %p348 = scmp.ne.s32.totalorder %s337, %s338
    %p349 = scmp.eq.s32.totalorder %s26, 0
    %p350 = por %p348, %p349
    %p351 = scmp.ne.s32.totalorder %s337, %s338
    %p352 = scmp.eq.s32.totalorder %s27, 1
    %p353 = por %p351, %p352
    %p355 = scmp.ne.s32.totalorder %s338, %s354
    %p356 = scmp.eq.s32.totalorder %s27, 0
    %p357 = por %p355, %p356
    %s359 = sadd.s32 %s358, 1
    %p362 = scmp.eq.s32.totalorder %s21, 1
    %p363 = scmp.ne.s32.totalorder %s358, %s360
    %p364 = scmp.eq.s32.totalorder %s21, 0
    %p365 = por %p363, %p364
    %p366 = scmp.ne.s32.totalorder %s358, %s360
    %p367 = scmp.eq.s32.totalorder %s26, 1
    %p368 = por %p366, %p367
    %p369 = scmp.ne.s32.totalorder %s360, %s361
    %p370 = scmp.eq.s32.totalorder %s26, 0
    %p371 = por %p369, %p370
    %p372 = scmp.ne.s32.totalorder %s360, %s361
    %p373 = scmp.eq.s32.totalorder %s27, 1
    %p374 = por %p372, %p373
    %p376 = scmp.ne.s32.totalorder %s361, %s375
    %p377 = scmp.eq.s32.totalorder %s27, 0
    %p378 = por %p376, %p377
    %s379 = ssub.s32 %s21, %s28
    %p380 = scmp.eq.s32.totalorder %s379, 0
    %s382 = sadd.s32 %s381, 1
    %s383 = scalar_select %p380, %s381, %s382
    %p386 = pneg %p380
    %p387 = scmp.eq.s32.totalorder %s21, 1
    %p388 = por %p386, %p387
    %p389 = scmp.ne.s32.totalorder %s381, %s384
    %p390 = scmp.eq.s32.totalorder %s21, 0
    %p391 = por %p389, %p390
    %p392 = scmp.ne.s32.totalorder %s381, %s384
    %p393 = scmp.eq.s32.totalorder %s26, 1
    %p394 = por %p392, %p393
    %p395 = scmp.ne.s32.totalorder %s384, %s385
    %p396 = scmp.eq.s32.totalorder %s26, 0
    %p397 = por %p395, %p396
    %p398 = scmp.ne.s32.totalorder %s384, %s385
    %p399 = scmp.eq.s32.totalorder %s27, 1
    %p400 = por %p398, %p399
    %p402 = scmp.ne.s32.totalorder %s385, %s401
    %p403 = scmp.eq.s32.totalorder %s27, 0
    %p404 = por %p402, %p403
    %p405 = scmp.le.s32.totalorder 1, %s21
    %p406 = scmp.lt.s32.totalorder %s21, 3
    %p407 = pnand %p405, %p406
    %p408 = pneg %p407
    // Predicated region
    $region9: #{tpu_custom_call.1} parent=5 // pred_check
      _
    $region10: #{tpu_custom_call.1} parent=5 // pred_check_branch
      %410 = sbr.rel (%p407) target = $region12
    $region11: #{tpu_custom_call.1} parent=5 // pred_region
      %s411 = ssub.s32 %s21, 1
      // Predicated region
      $region13: #{tpu_custom_call.1} parent=11 // pred_check
        %p412 = pneg %p68
      $region14: #{tpu_custom_call.1} parent=11 // pred_check_branch
        %414 = sbr.rel (%p412) target = $region16
      $region15: #{tpu_custom_call.1} parent=11 // pred_region
        _
      $region16: #{tpu_custom_call.1} parent=11 // pred_fallthru
        _
      // Predicated region
      $region17: #{tpu_custom_call.1} parent=11 // pred_check
        %p415 = pneg %p89
      $region18: #{tpu_custom_call.1} parent=11 // pred_check_branch
        %417 = sbr.rel (%p415) target = $region20
      $region19: #{tpu_custom_call.1} parent=11 // pred_region
        _
      $region20: #{tpu_custom_call.1} parent=11 // pred_fallthru
        _
      // Predicated region
      $region21: #{tpu_custom_call.1} parent=11 // pred_check
        %p418 = pneg %p110
      $region22: #{tpu_custom_call.1} parent=11 // pred_check_branch
        %420 = sbr.rel (%p418) target = $region24
      $region23: #{tpu_custom_call.1} parent=11 // pred_region
        _
      $region24: #{tpu_custom_call.1} parent=11 // pred_fallthru
        _
      // Predicated region
      $region25: #{tpu_custom_call.1} parent=11 // pred_check
        %p421 = pneg %p157
      $region26: #{tpu_custom_call.1} parent=11 // pred_check_branch
        %423 = sbr.rel (%p421) target = $region28
      $region27: #{tpu_custom_call.1} parent=11 // pred_region
        _
      $region28: #{tpu_custom_call.1} parent=11 // pred_fallthru
        _
      // Predicated region
      $region29: #{tpu_custom_call.1} parent=11 // pred_check
        %p424 = pneg %p230
      $region30: #{tpu_custom_call.1} parent=11 // pred_check_branch
        %426 = sbr.rel (%p424) target = $region32
      $region31: #{tpu_custom_call.1} parent=11 // pred_region
        _
      $region32: #{tpu_custom_call.1} parent=11 // pred_fallthru
        _
      // Predicated region
      $region33: #{tpu_custom_call.1} parent=11 // pred_check
        %p427 = pneg %p251
      $region34: #{tpu_custom_call.1} parent=11 // pred_check_branch
        %429 = sbr.rel (%p427) target = $region36
      $region35: #{tpu_custom_call.1} parent=11 // pred_region
        _
      $region36: #{tpu_custom_call.1} parent=11 // pred_fallthru
        _
      // Predicated region
      $region37: #{tpu_custom_call.1} parent=11 // pred_check
        %p430 = pneg %p298
      $region38: #{tpu_custom_call.1} parent=11 // pred_check_branch
        %432 = sbr.rel (%p430) target = $region40
      $region39: #{tpu_custom_call.1} parent=11 // pred_region
        _
      $region40: #{tpu_custom_call.1} parent=11 // pred_fallthru
        _
      // Predicated region
      $region41: #{tpu_custom_call.1} parent=11 // pred_check
        %p433 = pneg %p371
      $region42: #{tpu_custom_call.1} parent=11 // pred_check_branch
        %435 = sbr.rel (%p433) target = $region44
      $region43: #{tpu_custom_call.1} parent=11 // pred_region
        _
      $region44: #{tpu_custom_call.1} parent=11 // pred_fallthru
        _
    $region12: #{tpu_custom_call.1} parent=5 // pred_fallthru
      _
    %p436 = scmp.lt.s32.totalorder %s21, 2
    // Predicated region
    $region45: #{tpu_custom_call.1} parent=5 // pred_check
      %p437 = pneg %p436
    $region46: #{tpu_custom_call.1} parent=5 // pred_check_branch
      %439 = sbr.rel (%p437) target = $region48
    $region47: #{tpu_custom_call.1} parent=5 // pred_region
      // Predicated region
      $region49: #{tpu_custom_call.1} parent=47 // pred_check
        %p440 = pneg %p41
      $region50: #{tpu_custom_call.1} parent=47 // pred_check_branch
        %442 = sbr.rel (%p440) target = $region52
      $region51: #{tpu_custom_call.1} parent=47 // pred_region
        %p443 = scmp.lt.s32.totalorder %s21, 1
        %s444 = scalar_select %p443, %s21, 1
        %s445 = smul.addr %s444, 8
        %s446 = smul.addr %s445, 8
        %s447 = scalar_lea.vmem %s0, %s446
      $region52: #{tpu_custom_call.1} parent=47 // pred_fallthru
        _
      // Predicated region
      $region53: #{tpu_custom_call.1} parent=47 // pred_check
        %p448 = pneg %p130
      $region54: #{tpu_custom_call.1} parent=47 // pred_check_branch
        %450 = sbr.rel (%p448) target = $region56
      $region55: #{tpu_custom_call.1} parent=47 // pred_region
        %p451 = scmp.lt.s32.totalorder %s21, 1
        %s452 = scalar_select %p451, %s21, 1
        %s453 = smul.addr %s452, 36
        %s454 = smul.addr %s453, 8
        %s455 = scalar_lea.vmem %s4, %s454
      $region56: #{tpu_custom_call.1} parent=47 // pred_fallthru
        _
      // Predicated region
      $region57: #{tpu_custom_call.1} parent=47 // pred_check
        %p456 = pneg %p177
      $region58: #{tpu_custom_call.1} parent=47 // pred_check_branch
        %458 = sbr.rel (%p456) target = $region60
      $region59: #{tpu_custom_call.1} parent=47 // pred_region
        %p459 = scmp.lt.s32.totalorder %s21, 1
        %s460 = scalar_select %p459, %s21, 1
        %s461 = scalar_lea.vmem %s6, %s460
      $region60: #{tpu_custom_call.1} parent=47 // pred_fallthru
        _
      // Predicated region
      $region61: #{tpu_custom_call.1} parent=47 // pred_check
        %p462 = pneg %p203
      $region62: #{tpu_custom_call.1} parent=47 // pred_check_branch
        %464 = sbr.rel (%p462) target = $region64
      $region63: #{tpu_custom_call.1} parent=47 // pred_region
        %p465 = scmp.lt.s32.totalorder %s21, 1
        %s466 = scalar_select %p465, %s21, 1
        %s467 = scalar_lea.vmem %s7, %s466
      $region64: #{tpu_custom_call.1} parent=47 // pred_fallthru
        _
      // Predicated region
      $region65: #{tpu_custom_call.1} parent=47 // pred_check
        %p468 = pneg %p271
      $region66: #{tpu_custom_call.1} parent=47 // pred_check_branch
        %470 = sbr.rel (%p468) target = $region68
      $region67: #{tpu_custom_call.1} parent=47 // pred_region
        %p471 = scmp.lt.s32.totalorder %s21, 1
        %s472 = scalar_select %p471, %s21, 1
        %s473 = smul.addr %s472, 36
        %s474 = smul.addr %s473, 8
        %s475 = scalar_lea.vmem %s10, %s474
      $region68: #{tpu_custom_call.1} parent=47 // pred_fallthru
        _
      // Predicated region
      $region69: #{tpu_custom_call.1} parent=47 // pred_check
        %p476 = pneg %p318
      $region70: #{tpu_custom_call.1} parent=47 // pred_check_branch
        %478 = sbr.rel (%p476) target = $region72
      $region71: #{tpu_custom_call.1} parent=47 // pred_region
        %p479 = scmp.lt.s32.totalorder %s21, 1
        %s480 = scalar_select %p479, %s21, 1
        %s481 = scalar_lea.vmem %s12, %s480
      $region72: #{tpu_custom_call.1} parent=47 // pred_fallthru
        _
      // Predicated region
      $region73: #{tpu_custom_call.1} parent=47 // pred_check
        %p482 = pneg %p344
      $region74: #{tpu_custom_call.1} parent=47 // pred_check_branch
        %484 = sbr.rel (%p482) target = $region76
      $region75: #{tpu_custom_call.1} parent=47 // pred_region
        %p485 = scmp.lt.s32.totalorder %s21, 1
        %s486 = scalar_select %p485, %s21, 1
        %s487 = scalar_lea.vmem %s13, %s486
      $region76: #{tpu_custom_call.1} parent=47 // pred_fallthru
        _
    $region48: #{tpu_custom_call.1} parent=5 // pred_fallthru
      _
    %p488 = scmp.le.s32.totalorder 1, %s21
    %p489 = scmp.lt.s32.totalorder %s21, 3
    %p490 = pnand %p488, %p489
    %p491 = pneg %p490
    // Predicated region
    $region77: #{tpu_custom_call.1} parent=5 // pred_check
      _
    $region78: #{tpu_custom_call.1} parent=5 // pred_check_branch
      %493 = sbr.rel (%p490) target = $region80
    $region79: #{tpu_custom_call.1} parent=5 // pred_region
      %s494 = ssub.s32 %s21, 1
      %p495 = scmp.lt.s32.totalorder %s26, 1
      %s496 = scalar_select %p495, %s26, 1
      %s497 = smul.addr %s496, 8
      %s498 = smul.addr %s497, 8
      %s499 = scalar_lea.vmem %s0, %s498
      %p500 = pneg %p47
      %p501 = pneg %p44
      %p502 = pneg %p68
      %p503 = pneg %p65
      %p504 = pneg %p89
      %p505 = pneg %p86
      %p506 = pneg %p110
      %p507 = pneg %p107
      %p508 = scmp.lt.s32.totalorder %s26, 1
      %s509 = scalar_select %p508, %s26, 1
      %s510 = smul.addr %s509, 36
      %s511 = smul.addr %s510, 8
      %s512 = scalar_lea.vmem %s4, %s511
      %p513 = pneg %p136
      %p514 = pneg %p133
      %p515 = pneg %p157
      %p516 = pneg %p154
      %p517 = scmp.lt.s32.totalorder %s26, 1
      %s518 = scalar_select %p517, %s26, 1
      %s519 = scalar_lea.vmem %s6, %s518
      %p520 = pneg %p183
      %p521 = pneg %p180
      %p522 = scmp.lt.s32.totalorder %s26, 1
      %s523 = scalar_select %p522, %s26, 1
      %s524 = scalar_lea.vmem %s7, %s523
      %p525 = pneg %p209
      %p526 = pneg %p206
      %p527 = pneg %p230
      %p528 = pneg %p227
      %p529 = pneg %p251
      %p530 = pneg %p248
      %p531 = scmp.lt.s32.totalorder %s26, 1
      %s532 = scalar_select %p531, %s26, 1
      %s533 = smul.addr %s532, 36
      %s534 = smul.addr %s533, 8
      %s535 = scalar_lea.vmem %s10, %s534
      %p536 = pneg %p277
      %p537 = pneg %p274
      %p538 = pneg %p298
      %p539 = pneg %p295
      %p540 = scmp.lt.s32.totalorder %s26, 1
      %s541 = scalar_select %p540, %s26, 1
      %s542 = scalar_lea.vmem %s12, %s541
      %p543 = pneg %p324
      %p544 = pneg %p321
      %p545 = scmp.lt.s32.totalorder %s26, 1
      %s546 = scalar_select %p545, %s26, 1
      %s547 = scalar_lea.vmem %s13, %s546
      %p548 = pneg %p350
      %p549 = pneg %p347
      %p550 = pneg %p371
      %p551 = pneg %p368
      %p552 = pneg %p397
      %p553 = pneg %p394
      %p554 = scmp.lt.s32.totalorder %s26, 1
      %s555 = scalar_select %p554, %s26, 1
      %s556 = smul.addr %s555, 36
      %s557 = smul.addr %s556, 8
      %s558 = scalar_lea.vmem %s15, %s557
      %p559 = scmp.lt.s32.totalorder %s26, 1
      %s560 = scalar_select %p559, %s26, 1
      %s561 = smul.addr %s560, 8
      %s562 = smul.addr %s561, 8
      %s563 = scalar_lea.vmem %s0, %s562
      %p564 = scmp.lt.s32.totalorder %s26, 1
      %s565 = scalar_select %p564, %s26, 1
      %s566 = smul.addr %s565, 36
      %s567 = smul.addr %s566, 8
      %s568 = scalar_lea.vmem %s4, %s567
      %p569 = scmp.lt.s32.totalorder %s26, 1
      %s570 = scalar_select %p569, %s26, 1
      %s571 = scalar_lea.vmem %s6, %s570
      %p572 = scmp.lt.s32.totalorder %s26, 1
      %s573 = scalar_select %p572, %s26, 1
      %s574 = scalar_lea.vmem %s7, %s573
      %p575 = scmp.lt.s32.totalorder %s26, 1
      %s576 = scalar_select %p575, %s26, 1
      %s577 = smul.addr %s576, 36
      %s578 = smul.addr %s577, 8
      %s579 = scalar_lea.vmem %s10, %s578
      %p580 = scmp.lt.s32.totalorder %s26, 1
      %s581 = scalar_select %p580, %s26, 1
      %s582 = scalar_lea.vmem %s12, %s581
      %p583 = scmp.lt.s32.totalorder %s26, 1
      %s584 = scalar_select %p583, %s26, 1
      %s585 = scalar_lea.vmem %s13, %s584
      %p586 = scmp.lt.s32.totalorder %s26, 1
      %s587 = scalar_select %p586, %s26, 1
      %s588 = smul.addr %s587, 36
      %s589 = smul.addr %s588, 8
      %s590 = scalar_lea.vmem %s15, %s589
      %v591 = vld [vmem:[%s14] sm:$0xff]
      %v592 = vld [vmem:[%s14 + $0x8] sm:$0xff]
      %v593 = vld [vmem:[%s14 + $0x10] sm:$0xff]
      %v594 = vld [vmem:[%s14 + $0x18] sm:$0xff]
      %v595 = vld [vmem:[%s14 + $0x20] sm:$0xff]
      %v596 = vld [vmem:[%s14 + $0x28] sm:$0xff]
      %v597 = vld [vmem:[%s14 + $0x30] sm:$0xff]
      %v598 = vld [vmem:[%s14 + $0x38] sm:$0xff]
      %v599 = vld [vmem:[%s14 + $0x40] sm:$0xff]
      %v600 = vld [vmem:[%s14 + $0x48] sm:$0xff]
      %v601 = vld [vmem:[%s14 + $0x50] sm:$0xff]
      %v602 = vld [vmem:[%s14 + $0x58] sm:$0xff]
      %v603 = vld [vmem:[%s14 + $0x60] sm:$0xff]
      %v604 = vld [vmem:[%s14 + $0x68] sm:$0xff]
      %v605 = vld [vmem:[%s14 + $0x70] sm:$0xff]
      %v606 = vld [vmem:[%s14 + $0x78] sm:$0xff]
      %v607 = vld [vmem:[%s14 + $0x80] sm:$0xff]
      %v608 = vld [vmem:[%s14 + $0x88] sm:$0xff]
      %v609 = vld [vmem:[%s14 + $0x90] sm:$0xff]
      %v610 = vld [vmem:[%s14 + $0x98] sm:$0xff]
      %v611 = vld [vmem:[%s14 + $0xa0] sm:$0xff]
      %v612 = vld [vmem:[%s14 + $0xa8] sm:$0xff]
      %v613 = vld [vmem:[%s14 + $0xb0] sm:$0xff]
      %v614 = vld [vmem:[%s14 + $0xb8] sm:$0xff]
      %v615 = vld [vmem:[%s14 + $0xc0] sm:$0xff]
      %v616 = vld [vmem:[%s14 + $0xc8] sm:$0xff]
      %v617 = vld [vmem:[%s14 + $0xd0] sm:$0xff]
      %v618 = vld [vmem:[%s14 + $0xd8] sm:$0xff]
      %v619 = vld [vmem:[%s14 + $0xe0] sm:$0xff]
      %v620 = vld [vmem:[%s14 + $0xe8] sm:$0xff]
      %v621 = vld [vmem:[%s14 + $0xf0] sm:$0xff]
      %v622 = vld [vmem:[%s14 + $0xf8] sm:$0xff]
      %v623 = vld [vmem:[%s14 + $0x100] sm:$0xff]
      %v624 = vld [vmem:[%s14 + $0x108] sm:$0xff]
      %v625 = vld [vmem:[%s14 + $0x110] sm:$0xff]
      %v626 = vld [vmem:[%s14 + $0x118] sm:$0xff]
      %v627 = vld [vmem:[%s1] sm:$0xff]
      %v628 = vld [vmem:[%s1 + $0x8] sm:$0xff]
      %v629 = vld [vmem:[%s1 + $0x10] sm:$0xff]
      %v630 = vld [vmem:[%s1 + $0x18] sm:$0xff]
      %v631 = vld [vmem:[%s1 + $0x20] sm:$0xff]
      %v632 = vld [vmem:[%s1 + $0x28] sm:$0xff]
      %v633 = vld [vmem:[%s1 + $0x30] sm:$0xff]
      %v634 = vld [vmem:[%s1 + $0x38] sm:$0xff]
      %v635 = vld [vmem:[%s1 + $0x40] sm:$0xff]
      %v636 = vld [vmem:[%s1 + $0x48] sm:$0xff]
      %v637 = vld [vmem:[%s1 + $0x50] sm:$0xff]
      %v638 = vld [vmem:[%s1 + $0x58] sm:$0xff]
      %v639 = vld [vmem:[%s1 + $0x60] sm:$0xff]
      %v640 = vld [vmem:[%s1 + $0x68] sm:$0xff]
      %v641 = vld [vmem:[%s1 + $0x70] sm:$0xff]
      %v642 = vld [vmem:[%s1 + $0x78] sm:$0xff]
      %v643 = vld [vmem:[%s1 + $0x80] sm:$0xff]
      %v644 = vld [vmem:[%s1 + $0x88] sm:$0xff]
      %v645 = vld [vmem:[%s1 + $0x90] sm:$0xff]
      %v646 = vld [vmem:[%s1 + $0x98] sm:$0xff]
      %v647 = vld [vmem:[%s1 + $0xa0] sm:$0xff]
      %v648 = vld [vmem:[%s1 + $0xa8] sm:$0xff]
      %v649 = vld [vmem:[%s1 + $0xb0] sm:$0xff]
      %v650 = vld [vmem:[%s1 + $0xb8] sm:$0xff]
      %v651 = vld [vmem:[%s1 + $0xc0] sm:$0xff]
      %v652 = vld [vmem:[%s1 + $0xc8] sm:$0xff]
      %v653 = vld [vmem:[%s1 + $0xd0] sm:$0xff]
      %v654 = vld [vmem:[%s1 + $0xd8] sm:$0xff]
      %v655 = vld [vmem:[%s1 + $0xe0] sm:$0xff]
      %v656 = vld [vmem:[%s1 + $0xe8] sm:$0xff]
      %v657 = vld [vmem:[%s1 + $0xf0] sm:$0xff]
      %v658 = vld [vmem:[%s1 + $0xf8] sm:$0xff]
      %v659 = vld [vmem:[%s1 + $0x100] sm:$0xff]
      %v660 = vld [vmem:[%s1 + $0x108] sm:$0xff]
      %v661 = vld [vmem:[%s1 + $0x110] sm:$0xff]
      %v662 = vld [vmem:[%s1 + $0x118] sm:$0xff]
      %v663 = vld [vmem:[%s563] sm:$0xff]
      %v664 = vld [vmem:[%s563 + $0x8] sm:$0xff]
      %v665 = vld [vmem:[%s563 + $0x10] sm:$0xff]
      %v666 = vld [vmem:[%s563 + $0x18] sm:$0xff]
      %v667 = vld [vmem:[%s563 + $0x20] sm:$0xff]
      %v668 = vld [vmem:[%s563 + $0x28] sm:$0xff]
      %v669 = vld [vmem:[%s563 + $0x30] sm:$0xff]
      %v670 = vld [vmem:[%s563 + $0x38] sm:$0xff]
      %vm671 = vcmask 523264
      %v673 = vsel %vm671, %v627, 0
      %v676 = vsel %vm671, %v628, 0
      %v679 = vsel %vm671, %v629, 0
      %v682 = vsel %vm671, %v630, 0
      %v685 = vsel %vm671, %v631, 0
      %v688 = vsel %vm671, %v632, 0
      %v691 = vsel %vm671, %v633, 0
      %v694 = vsel %vm671, %v634, 0
      %v697 = vsel %vm671, %v635, 0
      %v700 = vsel %vm671, %v636, 0
      %v703 = vsel %vm671, %v637, 0
      %v706 = vsel %vm671, %v638, 0
      %v709 = vsel %vm671, %v639, 0
      %v712 = vsel %vm671, %v640, 0
      %v715 = vsel %vm671, %v641, 0
      %v718 = vsel %vm671, %v642, 0
      %v721 = vsel %vm671, %v643, 0
      %v724 = vsel %vm671, %v644, 0
      %v727 = vsel %vm671, %v645, 0
      %v730 = vsel %vm671, %v646, 0
      %v733 = vsel %vm671, %v647, 0
      %v736 = vsel %vm671, %v648, 0
      %v739 = vsel %vm671, %v649, 0
      %v742 = vsel %vm671, %v650, 0
      %v745 = vsel %vm671, %v651, 0
      %v748 = vsel %vm671, %v652, 0
      %v751 = vsel %vm671, %v653, 0
      %v754 = vsel %vm671, %v654, 0
      %v757 = vsel %vm671, %v655, 0
      %v760 = vsel %vm671, %v656, 0
      %v763 = vsel %vm671, %v657, 0
      %v766 = vsel %vm671, %v658, 0
      %v769 = vsel %vm671, %v659, 0
      %v772 = vsel %vm671, %v660, 0
      %v775 = vsel %vm671, %v661, 0
      %v778 = vsel %vm671, %v662, 0
      %780 = vmatprep.subr.mxu0 0.0
      %781 = vmatpush1.msra.mxu0 %v663
      %782 = vmatprep.subr.mxu0 0.0
      %783 = vmatpush1.msra.mxu0 %v664
      %784 = vmatprep.subr.mxu0 0.0
      %785 = vmatpush1.msra.mxu0 %v665
      %786 = vmatprep.subr.mxu0 0.0
      %787 = vmatpush1.msra.mxu0 %v666
      %788 = vmatprep.subr.mxu0 0.0
      %789 = vmatpush1.msra.mxu0 %v667
      %790 = vmatprep.subr.mxu0 0.0
      %791 = vmatpush1.msra.mxu0 %v668
      %792 = vmatprep.subr.mxu0 0.0
      %793 = vmatpush1.msra.mxu0 %v669
      %794 = vmatprep.subr.mxu0 0.0
      %795 = vmatpush1.msra.mxu0 %v670
      %796 = vmatprep.subr.mxu0 0.0
      %797 = vmatpush1.msra.mxu0 0.0
      %798 = vmatprep.subr.mxu0 0.0
      %799 = vmatpush1.msra.mxu0 0.0
      %800 = vmatprep.subr.mxu0 0.0
      %801 = vmatpush1.msra.mxu0 0.0
      %802 = vmatprep.subr.mxu0 0.0
      %803 = vmatpush1.msra.mxu0 0.0
      %804 = vmatprep.subr.mxu0 0.0
      %805 = vmatpush1.msra.mxu0 0.0
      %806 = vmatprep.subr.mxu0 0.0
      %807 = vmatpush1.msra.mxu0 0.0
      %808 = vmatprep.subr.mxu0 0.0
      %809 = vmatpush1.msra.mxu0 0.0
      %810 = vmatprep.subr.mxu0 0.0
      %811 = vmatpush1.msra.mxu0 0.0
      %812 = vmatprep.subr.mxu0 0.0
      %813 = vmatpush1.msra.mxu0 0.0
      %814 = vmatprep.subr.mxu0 0.0
      %815 = vmatpush1.msra.mxu0 0.0
      %816 = vmatprep.subr.mxu0 0.0
      %817 = vmatpush1.msra.mxu0 0.0
      %818 = vmatprep.subr.mxu0 0.0
      %819 = vmatpush1.msra.mxu0 0.0
      %820 = vmatprep.subr.mxu0 0.0
      %821 = vmatpush1.msra.mxu0 0.0
      %822 = vmatprep.subr.mxu0 0.0
      %823 = vmatpush1.msra.mxu0 0.0
      %824 = vmatprep.subr.mxu0 0.0
      %825 = vmatpush1.msra.mxu0 0.0
      %826 = vmatprep.subr.mxu0 0.0
      %827 = vmatpush1.msra.mxu0 0.0
      %828 = vmatprep.subr.mxu0 0.0
      %829 = vmatpush1.msra.mxu0 0.0
      %830 = vmatprep.subr.mxu0 0.0
      %831 = vmatpush1.msra.mxu0 0.0
      %832 = vmatprep.subr.mxu0 0.0
      %833 = vmatpush1.msra.mxu0 0.0
      %834 = vmatprep.subr.mxu0 0.0
      %835 = vmatpush1.msra.mxu0 0.0
      %836 = vmatprep.subr.mxu0 0.0
      %837 = vmatpush1.msra.mxu0 0.0
      %838 = vmatprep.subr.mxu0 0.0
      %839 = vmatpush1.msra.mxu0 0.0
      %840 = vmatprep.subr.mxu0 0.0
      %841 = vmatpush1.msra.mxu0 0.0
      %842 = vmatprep.subr.mxu0 0.0
      %843 = vmatpush1.msra.mxu0 0.0
      %844 = vmatprep.mubr.f32.mxu0 0.0
      %845 = vmatmul.mubr.f32.gmra.mrb[0].mxu0 %v673
      %v846 = vpop.f32.mrb[0].mxu0
      %v847 = vadd.f32 0.0, %v846
      %v848 = vpop.f32.mrb[0].mxu0
      %849 = vmatprep.mubr.f32.mxu0 0.0
      %850 = vmatmul.mubr.f32.gmra.mrb[0].mxu0 %v676
      %v851 = vpop.f32.mrb[0].mxu0
      %v852 = vadd.f32 0.0, %v851
      %v853 = vpop.f32.mrb[0].mxu0
      %854 = vmatprep.mubr.f32.mxu0 0.0
      %855 = vmatmul.mubr.f32.gmra.mrb[0].mxu0 %v679
      %v856 = vpop.f32.mrb[0].mxu0
      %v857 = vadd.f32 0.0, %v856
      %v858 = vpop.f32.mrb[0].mxu0
      %859 = vmatprep.mubr.f32.mxu0 0.0
      %860 = vmatmul.mubr.f32.gmra.mrb[0].mxu0 %v682
      %v861 = vpop.f32.mrb[0].mxu0
      %v862 = vadd.f32 0.0, %v861
      %v863 = vpop.f32.mrb[0].mxu0
      %864 = vmatprep.mubr.f32.mxu0 0.0
      %865 = vmatmul.mubr.f32.gmra.mrb[0].mxu0 %v685
      %v866 = vpop.f32.mrb[0].mxu0
      %v867 = vadd.f32 0.0, %v866
      %v868 = vpop.f32.mrb[0].mxu0
      %869 = vmatprep.mubr.f32.mxu0 0.0
      %870 = vmatmul.mubr.f32.gmra.mrb[0].mxu0 %v688
      %v871 = vpop.f32.mrb[0].mxu0
      %v872 = vadd.f32 0.0, %v871
      %v873 = vpop.f32.mrb[0].mxu0
      %874 = vmatprep.mubr.f32.mxu0 0.0
      %875 = vmatmul.mubr.f32.gmra.mrb[0].mxu0 %v691
      %v876 = vpop.f32.mrb[0].mxu0
      %v877 = vadd.f32 0.0, %v876
      %v878 = vpop.f32.mrb[0].mxu0
      %879 = vmatprep.mubr.f32.mxu0 0.0
      %880 = vmatmul.mubr.f32.gmra.mrb[0].mxu0 %v694
      %v881 = vpop.f32.mrb[0].mxu0
      %v882 = vadd.f32 0.0, %v881
      %v883 = vpop.f32.mrb[0].mxu0
      %884 = vmatprep.mubr.f32.mxu0 0.0
      %885 = vmatmul.mubr.f32.gmra.mrb[0].mxu0 %v697
      %v886 = vpop.f32.mrb[0].mxu0
      %v887 = vadd.f32 0.0, %v886
      %v888 = vpop.f32.mrb[0].mxu0
      %889 = vmatprep.mubr.f32.mxu0 0.0
      %890 = vmatmul.mubr.f32.gmra.mrb[0].mxu0 %v700
      %v891 = vpop.f32.mrb[0].mxu0
      %v892 = vadd.f32 0.0, %v891
      %v893 = vpop.f32.mrb[0].mxu0
      %894 = vmatprep.mubr.f32.mxu0 0.0
      %895 = vmatmul.mubr.f32.gmra.mrb[0].mxu0 %v703
      %v896 = vpop.f32.mrb[0].mxu0
      %v897 = vadd.f32 0.0, %v896
      %v898 = vpop.f32.mrb[0].mxu0
      %899 = vmatprep.mubr.f32.mxu0 0.0
      %900 = vmatmul.mubr.f32.gmra.mrb[0].mxu0 %v706
      %v901 = vpop.f32.mrb[0].mxu0
      %v902 = vadd.f32 0.0, %v901
      %v903 = vpop.f32.mrb[0].mxu0
      %904 = vmatprep.mubr.f32.mxu0 0.0
      %905 = vmatmul.mubr.f32.gmra.mrb[0].mxu0 %v709
      %v906 = vpop.f32.mrb[0].mxu0
      %v907 = vadd.f32 0.0, %v906
      %v908 = vpop.f32.mrb[0].mxu0
      %909 = vmatprep.mubr.f32.mxu0 0.0
      %910 = vmatmul.mubr.f32.gmra.mrb[0].mxu0 %v712
      %v911 = vpop.f32.mrb[0].mxu0
      %v912 = vadd.f32 0.0, %v911
      %v913 = vpop.f32.mrb[0].mxu0
      %914 = vmatprep.mubr.f32.mxu0 0.0
      %915 = vmatmul.mubr.f32.gmra.mrb[0].mxu0 %v715
      %v916 = vpop.f32.mrb[0].mxu0
      %v917 = vadd.f32 0.0, %v916
      %v918 = vpop.f32.mrb[0].mxu0
      %919 = vmatprep.mubr.f32.mxu0 0.0
      %920 = vmatmul.mubr.f32.gmra.mrb[0].mxu0 %v718
      %v921 = vpop.f32.mrb[0].mxu0
      %v922 = vadd.f32 0.0, %v921
      %v923 = vpop.f32.mrb[0].mxu0
      %924 = vmatprep.mubr.f32.mxu0 0.0
      %925 = vmatmul.mubr.f32.gmra.mrb[0].mxu0 %v721
      %v926 = vpop.f32.mrb[0].mxu0
      %v927 = vadd.f32 0.0, %v926
      %v928 = vpop.f32.mrb[0].mxu0
      %929 = vmatprep.mubr.f32.mxu0 0.0
      %930 = vmatmul.mubr.f32.gmra.mrb[0].mxu0 %v724
      %v931 = vpop.f32.mrb[0].mxu0
      %v932 = vadd.f32 0.0, %v931
      %v933 = vpop.f32.mrb[0].mxu0
      %934 = vmatprep.mubr.f32.mxu0 0.0
      %935 = vmatmul.mubr.f32.gmra.mrb[0].mxu0 %v727
      %v936 = vpop.f32.mrb[0].mxu0
      %v937 = vadd.f32 0.0, %v936
      %v938 = vpop.f32.mrb[0].mxu0
      %939 = vmatprep.mubr.f32.mxu0 0.0
      %940 = vmatmul.mubr.f32.gmra.mrb[0].mxu0 %v730
      %v941 = vpop.f32.mrb[0].mxu0
      %v942 = vadd.f32 0.0, %v941
      %v943 = vpop.f32.mrb[0].mxu0
      %944 = vmatprep.mubr.f32.mxu0 0.0
      %945 = vmatmul.mubr.f32.gmra.mrb[0].mxu0 %v733
      %v946 = vpop.f32.mrb[0].mxu0
      %v947 = vadd.f32 0.0, %v946
      %v948 = vpop.f32.mrb[0].mxu0
      %949 = vmatprep.mubr.f32.mxu0 0.0
      %950 = vmatmul.mubr.f32.gmra.mrb[0].mxu0 %v736
      %v951 = vpop.f32.mrb[0].mxu0
      %v952 = vadd.f32 0.0, %v951
      %v953 = vpop.f32.mrb[0].mxu0
      %954 = vmatprep.mubr.f32.mxu0 0.0
      %955 = vmatmul.mubr.f32.gmra.mrb[0].mxu0 %v739
      %v956 = vpop.f32.mrb[0].mxu0
      %v957 = vadd.f32 0.0, %v956
      %v958 = vpop.f32.mrb[0].mxu0
      %959 = vmatprep.mubr.f32.mxu0 0.0
      %960 = vmatmul.mubr.f32.gmra.mrb[0].mxu0 %v742
      %v961 = vpop.f32.mrb[0].mxu0
      %v962 = vadd.f32 0.0, %v961
      %v963 = vpop.f32.mrb[0].mxu0
      %964 = vmatprep.mubr.f32.mxu0 0.0
      %965 = vmatmul.mubr.f32.gmra.mrb[0].mxu0 %v745
      %v966 = vpop.f32.mrb[0].mxu0
      %v967 = vadd.f32 0.0, %v966
      %v968 = vpop.f32.mrb[0].mxu0
      %969 = vmatprep.mubr.f32.mxu0 0.0
      %970 = vmatmul.mubr.f32.gmra.mrb[0].mxu0 %v748
      %v971 = vpop.f32.mrb[0].mxu0
      %v972 = vadd.f32 0.0, %v971
      %v973 = vpop.f32.mrb[0].mxu0
      %974 = vmatprep.mubr.f32.mxu0 0.0
      %975 = vmatmul.mubr.f32.gmra.mrb[0].mxu0 %v751
      %v976 = vpop.f32.mrb[0].mxu0
      %v977 = vadd.f32 0.0, %v976
      %v978 = vpop.f32.mrb[0].mxu0
      %979 = vmatprep.mubr.f32.mxu0 0.0
      %980 = vmatmul.mubr.f32.gmra.mrb[0].mxu0 %v754
      %v981 = vpop.f32.mrb[0].mxu0
      %v982 = vadd.f32 0.0, %v981
      %v983 = vpop.f32.mrb[0].mxu0
      %984 = vmatprep.mubr.f32.mxu0 0.0
      %985 = vmatmul.mubr.f32.gmra.mrb[0].mxu0 %v757
      %v986 = vpop.f32.mrb[0].mxu0
      %v987 = vadd.f32 0.0, %v986
      %v988 = vpop.f32.mrb[0].mxu0
      %989 = vmatprep.mubr.f32.mxu0 0.0
      %990 = vmatmul.mubr.f32.gmra.mrb[0].mxu0 %v760
      %v991 = vpop.f32.mrb[0].mxu0
      %v992 = vadd.f32 0.0, %v991
      %v993 = vpop.f32.mrb[0].mxu0
      %994 = vmatprep.mubr.f32.mxu0 0.0
      %995 = vmatmul.mubr.f32.gmra.mrb[0].mxu0 %v763
      %v996 = vpop.f32.mrb[0].mxu0
      %v997 = vadd.f32 0.0, %v996
      %v998 = vpop.f32.mrb[0].mxu0
      %999 = vmatprep.mubr.f32.mxu0 0.0
      %1000 = vmatmul.mubr.f32.gmra.mrb[0].mxu0 %v766
      %v1001 = vpop.f32.mrb[0].mxu0
      %v1002 = vadd.f32 0.0, %v1001
      %v1003 = vpop.f32.mrb[0].mxu0
      %1004 = vmatprep.mubr.f32.mxu0 0.0
      %1005 = vmatmul.mubr.f32.gmra.mrb[0].mxu0 %v769
      %v1006 = vpop.f32.mrb[0].mxu0
      %v1007 = vadd.f32 0.0, %v1006
      %v1008 = vpop.f32.mrb[0].mxu0
      %1009 = vmatprep.mubr.f32.mxu0 0.0
      %1010 = vmatmul.mubr.f32.gmra.mrb[0].mxu0 %v772
      %v1011 = vpop.f32.mrb[0].mxu0
      %v1012 = vadd.f32 0.0, %v1011
      %v1013 = vpop.f32.mrb[0].mxu0
      %1014 = vmatprep.mubr.f32.mxu0 0.0
      %1015 = vmatmul.mubr.f32.gmra.mrb[0].mxu0 %v775
      %v1016 = vpop.f32.mrb[0].mxu0
      %v1017 = vadd.f32 0.0, %v1016
      %v1018 = vpop.f32.mrb[0].mxu0
      %1019 = vmatprep.mubr.f32.mxu0 0.0
      %1020 = vmatmul.mubr.f32.gmra.mrb[0].mxu0 %v778
      %v1021 = vpop.f32.mrb[0].mxu0
      %v1022 = vadd.f32 0.0, %v1021
      %v1023 = vpop.f32.mrb[0].mxu0
      %1024 = vdwg.mxu0
      %vm1025 = vcmask 31744
      %1026 = vst.msk [vmem:[#allocation2] sm:$0xff] %vm1025, 0.0
      %1027 = vst.msk [vmem:[#allocation2 + $0x8] sm:$0xff] %vm1025, 0.0
      %1028 = vst.msk [vmem:[#allocation2 + $0x10] sm:$0xff] %vm1025, 0.0
      %1029 = vst.msk [vmem:[#allocation2 + $0x18] sm:$0xff] %vm1025, 0.0
      %1030 = vst.msk [vmem:[#allocation2 + $0x20] sm:$0xff] %vm1025, 0.0
      %1031 = vst.msk [vmem:[#allocation2 + $0x28] sm:$0xff] %vm1025, 0.0
      %1032 = vst.msk [vmem:[#allocation2 + $0x30] sm:$0xff] %vm1025, 0.0
      %1033 = vst.msk [vmem:[#allocation2 + $0x38] sm:$0xff] %vm1025, 0.0
      %1034 = vst.msk [vmem:[#allocation2 + $0x40] sm:$0xff] %vm1025, 0.0
      %1035 = vst.msk [vmem:[#allocation2 + $0x48] sm:$0xff] %vm1025, 0.0
      %1036 = vst.msk [vmem:[#allocation2 + $0x50] sm:$0xff] %vm1025, 0.0
      %1037 = vst.msk [vmem:[#allocation2 + $0x58] sm:$0xff] %vm1025, 0.0
      %1038 = vst.msk [vmem:[#allocation2 + $0x60] sm:$0xff] %vm1025, 0.0
      %1039 = vst.msk [vmem:[#allocation2 + $0x68] sm:$0xff] %vm1025, 0.0
      %1040 = vst.msk [vmem:[#allocation2 + $0x70] sm:$0xff] %vm1025, 0.0
      %1041 = vst.msk [vmem:[#allocation2 + $0x78] sm:$0xff] %vm1025, 0.0
      %1042 = vst.msk [vmem:[#allocation2 + $0x80] sm:$0xff] %vm1025, 0.0
      %1043 = vst.msk [vmem:[#allocation2 + $0x88] sm:$0xff] %vm1025, 0.0
      %1044 = vst.msk [vmem:[#allocation2 + $0x90] sm:$0xff] %vm1025, 0.0
      %1045 = vst.msk [vmem:[#allocation2 + $0x98] sm:$0xff] %vm1025, 0.0
      %1046 = vst.msk [vmem:[#allocation2 + $0xa0] sm:$0xff] %vm1025, 0.0
      %1047 = vst.msk [vmem:[#allocation2 + $0xa8] sm:$0xff] %vm1025, 0.0
      %1048 = vst.msk [vmem:[#allocation2 + $0xb0] sm:$0xff] %vm1025, 0.0
      %1049 = vst.msk [vmem:[#allocation2 + $0xb8] sm:$0xff] %vm1025, 0.0
      %1050 = vst.msk [vmem:[#allocation2 + $0xc0] sm:$0xff] %vm1025, 0.0
      %1051 = vst.msk [vmem:[#allocation2 + $0xc8] sm:$0xff] %vm1025, 0.0
      %1052 = vst.msk [vmem:[#allocation2 + $0xd0] sm:$0xff] %vm1025, 0.0
      %1053 = vst.msk [vmem:[#allocation2 + $0xd8] sm:$0xff] %vm1025, 0.0
      %1054 = vst.msk [vmem:[#allocation2 + $0xe0] sm:$0xff] %vm1025, 0.0
      %1055 = vst.msk [vmem:[#allocation2 + $0xe8] sm:$0xff] %vm1025, 0.0
      %1056 = vst.msk [vmem:[#allocation2 + $0xf0] sm:$0xff] %vm1025, 0.0
      %1057 = vst.msk [vmem:[#allocation2 + $0xf8] sm:$0xff] %vm1025, 0.0
      %1058 = vst.msk [vmem:[#allocation2 + $0x100] sm:$0xff] %vm1025, 0.0
      %1059 = vst.msk [vmem:[#allocation2 + $0x108] sm:$0xff] %vm1025, 0.0
      %1060 = vst.msk [vmem:[#allocation2 + $0x110] sm:$0xff] %vm1025, 0.0
      %1061 = vst.msk [vmem:[#allocation2 + $0x118] sm:$0xff] %vm1025, 0.0
      %1062 = vst.msk [vmem:[#allocation2 + $0x120] sm:$0xff] %vm1025, 0.0
      %1063 = vst.msk [vmem:[#allocation2 + $0x128] sm:$0xff] %vm1025, 0.0
      %1064 = vst.msk [vmem:[#allocation2 + $0x130] sm:$0xff] %vm1025, 0.0
      %1065 = vst.msk [vmem:[#allocation2 + $0x138] sm:$0xff] %vm1025, 0.0
      %1066 = vst.msk [vmem:[#allocation2 + $0x140] sm:$0xff] %vm1025, 0.0
      %1067 = vst.msk [vmem:[#allocation2 + $0x148] sm:$0xff] %vm1025, 0.0
      %1068 = vst.msk [vmem:[#allocation2 + $0x18] sm:$0xff] %vm1025, %v847
      %1069 = vst.msk [vmem:[#allocation2 + $0x20] sm:$0xff] %vm1025, %v852
      %1070 = vst.msk [vmem:[#allocation2 + $0x28] sm:$0xff] %vm1025, %v857
      %1071 = vst.msk [vmem:[#allocation2 + $0x30] sm:$0xff] %vm1025, %v862
      %1072 = vst.msk [vmem:[#allocation2 + $0x38] sm:$0xff] %vm1025, %v867
      %1073 = vst.msk [vmem:[#allocation2 + $0x40] sm:$0xff] %vm1025, %v872
      %1074 = vst.msk [vmem:[#allocation2 + $0x48] sm:$0xff] %vm1025, %v877
      %1075 = vst.msk [vmem:[#allocation2 + $0x50] sm:$0xff] %vm1025, %v882
      %1076 = vst.msk [vmem:[#allocation2 + $0x58] sm:$0xff] %vm1025, %v887
      %1077 = vst.msk [vmem:[#allocation2 + $0x60] sm:$0xff] %vm1025, %v892
      %1078 = vst.msk [vmem:[#allocation2 + $0x68] sm:$0xff] %vm1025, %v897
      %1079 = vst.msk [vmem:[#allocation2 + $0x70] sm:$0xff] %vm1025, %v902
      %1080 = vst.msk [vmem:[#allocation2 + $0x78] sm:$0xff] %vm1025, %v907
      %1081 = vst.msk [vmem:[#allocation2 + $0x80] sm:$0xff] %vm1025, %v912
      %1082 = vst.msk [vmem:[#allocation2 + $0x88] sm:$0xff] %vm1025, %v917
      %1083 = vst.msk [vmem:[#allocation2 + $0x90] sm:$0xff] %vm1025, %v922
      %1084 = vst.msk [vmem:[#allocation2 + $0x98] sm:$0xff] %vm1025, %v927
      %1085 = vst.msk [vmem:[#allocation2 + $0xa0] sm:$0xff] %vm1025, %v932
      %1086 = vst.msk [vmem:[#allocation2 + $0xa8] sm:$0xff] %vm1025, %v937
      %1087 = vst.msk [vmem:[#allocation2 + $0xb0] sm:$0xff] %vm1025, %v942
      %1088 = vst.msk [vmem:[#allocation2 + $0xb8] sm:$0xff] %vm1025, %v947
      %1089 = vst.msk [vmem:[#allocation2 + $0xc0] sm:$0xff] %vm1025, %v952
      %1090 = vst.msk [vmem:[#allocation2 + $0xc8] sm:$0xff] %vm1025, %v957
      %1091 = vst.msk [vmem:[#allocation2 + $0xd0] sm:$0xff] %vm1025, %v962
      %1092 = vst.msk [vmem:[#allocation2 + $0xd8] sm:$0xff] %vm1025, %v967
      %1093 = vst.msk [vmem:[#allocation2 + $0xe0] sm:$0xff] %vm1025, %v972
      %1094 = vst.msk [vmem:[#allocation2 + $0xe8] sm:$0xff] %vm1025, %v977
      %1095 = vst.msk [vmem:[#allocation2 + $0xf0] sm:$0xff] %vm1025, %v982
      %1096 = vst.msk [vmem:[#allocation2 + $0xf8] sm:$0xff] %vm1025, %v987
      %1097 = vst.msk [vmem:[#allocation2 + $0x100] sm:$0xff] %vm1025, %v992
      %1098 = vst.msk [vmem:[#allocation2 + $0x108] sm:$0xff] %vm1025, %v997
      %1099 = vst.msk [vmem:[#allocation2 + $0x110] sm:$0xff] %vm1025, %v1002
      %1100 = vst.msk [vmem:[#allocation2 + $0x118] sm:$0xff] %vm1025, %v1007
      %1101 = vst.msk [vmem:[#allocation2 + $0x120] sm:$0xff] %vm1025, %v1012
      %1102 = vst.msk [vmem:[#allocation2 + $0x128] sm:$0xff] %vm1025, %v1017
      %1103 = vst.msk [vmem:[#allocation2 + $0x130] sm:$0xff] %vm1025, %v1022
      %v1104 = vld [vmem:[#allocation2 + $0x5] sm:$0xff]
      %v1105 = vld [vmem:[#allocation2 + $0xd] sm:$0xff]
      %v1106 = vld [vmem:[#allocation2 + $0x15] sm:$0xff]
      %v1107 = vld [vmem:[#allocation2 + $0x1d] sm:$0xff]
      %v1108 = vld [vmem:[#allocation2 + $0x25] sm:$0xff]
      %v1109 = vld [vmem:[#allocation2 + $0x2d] sm:$0xff]
      %v1110 = vld [vmem:[#allocation2 + $0x35] sm:$0xff]
      %v1111 = vld [vmem:[#allocation2 + $0x3d] sm:$0xff]
      %v1112 = vld [vmem:[#allocation2 + $0x45] sm:$0xff]
      %v1113 = vld [vmem:[#allocation2 + $0x4d] sm:$0xff]
      %v1114 = vld [vmem:[#allocation2 + $0x55] sm:$0xff]
      %v1115 = vld [vmem:[#allocation2 + $0x5d] sm:$0xff]
      %v1116 = vld [vmem:[#allocation2 + $0x65] sm:$0xff]
      %v1117 = vld [vmem:[#allocation2 + $0x6d] sm:$0xff]
      %v1118 = vld [vmem:[#allocation2 + $0x75] sm:$0xff]
      %v1119 = vld [vmem:[#allocation2 + $0x7d] sm:$0xff]
      %v1120 = vld [vmem:[#allocation2 + $0x85] sm:$0xff]
      %v1121 = vld [vmem:[#allocation2 + $0x8d] sm:$0xff]
      %v1122 = vld [vmem:[#allocation2 + $0x95] sm:$0xff]
      %v1123 = vld [vmem:[#allocation2 + $0x9d] sm:$0xff]
      %v1124 = vld [vmem:[#allocation2 + $0xa5] sm:$0xff]
      %v1125 = vld [vmem:[#allocation2 + $0xad] sm:$0xff]
      %v1126 = vld [vmem:[#allocation2 + $0xb5] sm:$0xff]
      %v1127 = vld [vmem:[#allocation2 + $0xbd] sm:$0xff]
      %v1128 = vld [vmem:[#allocation2 + $0xc5] sm:$0xff]
      %v1129 = vld [vmem:[#allocation2 + $0xcd] sm:$0xff]
      %v1130 = vld [vmem:[#allocation2 + $0xd5] sm:$0xff]
      %v1131 = vld [vmem:[#allocation2 + $0xdd] sm:$0xff]
      %v1132 = vld [vmem:[#allocation2 + $0xe5] sm:$0xff]
      %v1133 = vld [vmem:[#allocation2 + $0xed] sm:$0xff]
      %v1134 = vld [vmem:[#allocation2 + $0xf5] sm:$0xff]
      %v1135 = vld [vmem:[#allocation2 + $0xfd] sm:$0xff]
      %v1136 = vld [vmem:[#allocation2 + $0x105] sm:$0xff]
      %v1137 = vld [vmem:[#allocation2 + $0x10d] sm:$0xff]
      %v1138 = vld [vmem:[#allocation2 + $0x115] sm:$0xff]
      %v1139 = vld [vmem:[#allocation2 + $0x11d] sm:$0xff]
      %v1140 = vld [vmem:[%s2] sm:$0xf]
      %v1141 = vld [vmem:[#allocation2 + $0x6] sm:$0xff]
      %v1142 = vld [vmem:[#allocation2 + $0xe] sm:$0xff]
      %v1143 = vld [vmem:[#allocation2 + $0x16] sm:$0xff]
      %v1144 = vld [vmem:[#allocation2 + $0x1e] sm:$0xff]
      %v1145 = vld [vmem:[#allocation2 + $0x26] sm:$0xff]
      %v1146 = vld [vmem:[#allocation2 + $0x2e] sm:$0xff]
      %v1147 = vld [vmem:[#allocation2 + $0x36] sm:$0xff]
      %v1148 = vld [vmem:[#allocation2 + $0x3e] sm:$0xff]
      %v1149 = vld [vmem:[#allocation2 + $0x46] sm:$0xff]
      %v1150 = vld [vmem:[#allocation2 + $0x4e] sm:$0xff]
      %v1151 = vld [vmem:[#allocation2 + $0x56] sm:$0xff]
      %v1152 = vld [vmem:[#allocation2 + $0x5e] sm:$0xff]
      %v1153 = vld [vmem:[#allocation2 + $0x66] sm:$0xff]
      %v1154 = vld [vmem:[#allocation2 + $0x6e] sm:$0xff]
      %v1155 = vld [vmem:[#allocation2 + $0x76] sm:$0xff]
      %v1156 = vld [vmem:[#allocation2 + $0x7e] sm:$0xff]
      %v1157 = vld [vmem:[#allocation2 + $0x86] sm:$0xff]
      %v1158 = vld [vmem:[#allocation2 + $0x8e] sm:$0xff]
      %v1159 = vld [vmem:[#allocation2 + $0x96] sm:$0xff]
      %v1160 = vld [vmem:[#allocation2 + $0x9e] sm:$0xff]
      %v1161 = vld [vmem:[#allocation2 + $0xa6] sm:$0xff]
      %v1162 = vld [vmem:[#allocation2 + $0xae] sm:$0xff]
      %v1163 = vld [vmem:[#allocation2 + $0xb6] sm:$0xff]
      %v1164 = vld [vmem:[#allocation2 + $0xbe] sm:$0xff]
      %v1165 = vld [vmem:[#allocation2 + $0xc6] sm:$0xff]
      %v1166 = vld [vmem:[#allocation2 + $0xce] sm:$0xff]
      %v1167 = vld [vmem:[#allocation2 + $0xd6] sm:$0xff]
      %v1168 = vld [vmem:[#allocation2 + $0xde] sm:$0xff]
      %v1169 = vld [vmem:[#allocation2 + $0xe6] sm:$0xff]
      %v1170 = vld [vmem:[#allocation2 + $0xee] sm:$0xff]
      %v1171 = vld [vmem:[#allocation2 + $0xf6] sm:$0xff]
      %v1172 = vld [vmem:[#allocation2 + $0xfe] sm:$0xff]
      %v1173 = vld [vmem:[#allocation2 + $0x106] sm:$0xff]
      %v1174 = vld [vmem:[#allocation2 + $0x10e] sm:$0xff]
      %v1175 = vld [vmem:[#allocation2 + $0x116] sm:$0xff]
      %v1176 = vld [vmem:[#allocation2 + $0x11e] sm:$0xff]
      %s1177 = scalar_lea.vmem %s2, 4
      %v1178 = vld [vmem:[%s1177] sm:$0xf]
      %v1180 = vsel %vm1025, %v1141, 0
      %v1183 = vsel %vm1025, %v1142, 0
      %v1186 = vsel %vm1025, %v1143, 0
      %v1189 = vsel %vm1025, %v1144, 0
      %v1192 = vsel %vm1025, %v1145, 0
      %v1195 = vsel %vm1025, %v1146, 0
      %v1198 = vsel %vm1025, %v1147, 0
      %v1201 = vsel %vm1025, %v1148, 0
      %v1204 = vsel %vm1025, %v1149, 0
      %v1207 = vsel %vm1025, %v1150, 0
      %v1210 = vsel %vm1025, %v1151, 0
      %v1213 = vsel %vm1025, %v1152, 0
      %v1216 = vsel %vm1025, %v1153, 0
      %v1219 = vsel %vm1025, %v1154, 0
      %v1222 = vsel %vm1025, %v1155, 0
      %v1225 = vsel %vm1025, %v1156, 0
      %v1228 = vsel %vm1025, %v1157, 0
      %v1231 = vsel %vm1025, %v1158, 0
      %v1234 = vsel %vm1025, %v1159, 0
      %v1237 = vsel %vm1025, %v1160, 0
      %v1240 = vsel %vm1025, %v1161, 0
      %v1243 = vsel %vm1025, %v1162, 0
      %v1246 = vsel %vm1025, %v1163, 0
      %v1249 = vsel %vm1025, %v1164, 0
      %v1252 = vsel %vm1025, %v1165, 0
      %v1255 = vsel %vm1025, %v1166, 0
      %v1258 = vsel %vm1025, %v1167, 0
      %v1261 = vsel %vm1025, %v1168, 0
      %v1264 = vsel %vm1025, %v1169, 0
      %v1267 = vsel %vm1025, %v1170, 0
      %v1270 = vsel %vm1025, %v1171, 0
      %v1273 = vsel %vm1025, %v1172, 0
      %v1276 = vsel %vm1025, %v1173, 0
      %v1279 = vsel %vm1025, %v1174, 0
      %v1282 = vsel %vm1025, %v1175, 0
      %v1285 = vsel %vm1025, %v1176, 0
      %vm1287 = vcmask 1043456
      %v1289 = vsel %vm1287, %v1178, 0
      %1291 = vmatprep.subr.mxu0 0.0
      %1292 = vmatpush1.msra.mxu0 %v1289
      %1293 = vmatprep.subr.mxu0 0.0
      %1294 = vmatpush1.msra.mxu0 0.0
      %1295 = vmatprep.subr.mxu0 0.0
      %1296 = vmatpush1.msra.mxu0 0.0
      %1297 = vmatprep.subr.mxu0 0.0
      %1298 = vmatpush1.msra.mxu0 0.0
      %1299 = vmatprep.subr.mxu0 0.0
      %1300 = vmatpush1.msra.mxu0 0.0
      %1301 = vmatprep.subr.mxu0 0.0
      %1302 = vmatpush1.msra.mxu0 0.0
      %1303 = vmatprep.subr.mxu0 0.0
      %1304 = vmatpush1.msra.mxu0 0.0
      %1305 = vmatprep.subr.mxu0 0.0
      %1306 = vmatpush1.msra.mxu0 0.0
      %1307 = vmatprep.subr.mxu0 0.0
      %1308 = vmatpush1.msra.mxu0 0.0
      %1309 = vmatprep.subr.mxu0 0.0
      %1310 = vmatpush1.msra.mxu0 0.0
      %1311 = vmatprep.subr.mxu0 0.0
      %1312 = vmatpush1.msra.mxu0 0.0
      %1313 = vmatprep.subr.mxu0 0.0
      %1314 = vmatpush1.msra.mxu0 0.0
      %1315 = vmatprep.subr.mxu0 0.0
      %1316 = vmatpush1.msra.mxu0 0.0
      %1317 = vmatprep.subr.mxu0 0.0
      %1318 = vmatpush1.msra.mxu0 0.0
      %1319 = vmatprep.subr.mxu0 0.0
      %1320 = vmatpush1.msra.mxu0 0.0
      %1321 = vmatprep.subr.mxu0 0.0
      %1322 = vmatpush1.msra.mxu0 0.0
      %1323 = vmatprep.subr.mxu0 0.0
      %1324 = vmatpush1.msra.mxu0 0.0
      %1325 = vmatprep.subr.mxu0 0.0
      %1326 = vmatpush1.msra.mxu0 0.0
      %1327 = vmatprep.subr.mxu0 0.0
      %1328 = vmatpush1.msra.mxu0 0.0
      %1329 = vmatprep.subr.mxu0 0.0
      %1330 = vmatpush1.msra.mxu0 0.0
      %1331 = vmatprep.subr.mxu0 0.0
      %1332 = vmatpush1.msra.mxu0 0.0
      %1333 = vmatprep.subr.mxu0 0.0
      %1334 = vmatpush1.msra.mxu0 0.0
      %1335 = vmatprep.subr.mxu0 0.0
      %1336 = vmatpush1.msra.mxu0 0.0
      %1337 = vmatprep.subr.mxu0 0.0
      %1338 = vmatpush1.msra.mxu0 0.0
      %1339 = vmatprep.subr.mxu0 0.0
      %1340 = vmatpush1.msra.mxu0 0.0
      %1341 = vmatprep.subr.mxu0 0.0
      %1342 = vmatpush1.msra.mxu0 0.0
      %1343 = vmatprep.subr.mxu0 0.0
      %1344 = vmatpush1.msra.mxu0 0.0
      %1345 = vmatprep.subr.mxu0 0.0
      %1346 = vmatpush1.msra.mxu0 0.0
      %1347 = vmatprep.subr.mxu0 0.0
      %1348 = vmatpush1.msra.mxu0 0.0
      %1349 = vmatprep.subr.mxu0 0.0
      %1350 = vmatpush1.msra.mxu0 0.0
      %1351 = vmatprep.subr.mxu0 0.0
      %1352 = vmatpush1.msra.mxu0 0.0
      %1353 = vmatprep.subr.mxu0 0.0
      %1354 = vmatpush1.msra.mxu0 0.0
      %1355 = vmatprep.mubr.f32.mxu0 0.0
      %1356 = vmatmul.mubr.f32.gmra.mrb[0].mxu0 %v1180
      %v1357 = vpop.f32.mrb[0].mxu0
      %v1358 = vadd.f32 0.0, %v1357
      %v1359 = vpop.f32.mrb[0].mxu0
      %1360 = vmatprep.mubr.f32.mxu0 0.0
      %1361 = vmatmul.mubr.f32.gmra.mrb[0].mxu0 %v1183
      %v1362 = vpop.f32.mrb[0].mxu0
      %v1363 = vadd.f32 0.0, %v1362
      %v1364 = vpop.f32.mrb[0].mxu0
      %1365 = vmatprep.mubr.f32.mxu0 0.0
      %1366 = vmatmul.mubr.f32.gmra.mrb[0].mxu0 %v1186
      %v1367 = vpop.f32.mrb[0].mxu0
      %v1368 = vadd.f32 0.0, %v1367
      %v1369 = vpop.f32.mrb[0].mxu0
      %1370 = vmatprep.mubr.f32.mxu0 0.0
      %1371 = vmatmul.mubr.f32.gmra.mrb[0].mxu0 %v1189
      %v1372 = vpop.f32.mrb[0].mxu0
      %v1373 = vadd.f32 0.0, %v1372
      %v1374 = vpop.f32.mrb[0].mxu0
      %1375 = vmatprep.mubr.f32.mxu0 0.0
      %1376 = vmatmul.mubr.f32.gmra.mrb[0].mxu0 %v1192
      %v1377 = vpop.f32.mrb[0].mxu0
      %v1378 = vadd.f32 0.0, %v1377
      %v1379 = vpop.f32.mrb[0].mxu0
      %1380 = vmatprep.mubr.f32.mxu0 0.0
      %1381 = vmatmul.mubr.f32.gmra.mrb[0].mxu0 %v1195
      %v1382 = vpop.f32.mrb[0].mxu0
      %v1383 = vadd.f32 0.0, %v1382
      %v1384 = vpop.f32.mrb[0].mxu0
      %1385 = vmatprep.mubr.f32.mxu0 0.0
      %1386 = vmatmul.mubr.f32.gmra.mrb[0].mxu0 %v1198
      %v1387 = vpop.f32.mrb[0].mxu0
      %v1388 = vadd.f32 0.0, %v1387
      %v1389 = vpop.f32.mrb[0].mxu0
      %1390 = vmatprep.mubr.f32.mxu0 0.0
      %1391 = vmatmul.mubr.f32.gmra.mrb[0].mxu0 %v1201
      %v1392 = vpop.f32.mrb[0].mxu0
      %v1393 = vadd.f32 0.0, %v1392
      %v1394 = vpop.f32.mrb[0].mxu0
      %1395 = vmatprep.mubr.f32.mxu0 0.0
      %1396 = vmatmul.mubr.f32.gmra.mrb[0].mxu0 %v1204
      %v1397 = vpop.f32.mrb[0].mxu0
      %v1398 = vadd.f32 0.0, %v1397
      %v1399 = vpop.f32.mrb[0].mxu0
      %1400 = vmatprep.mubr.f32.mxu0 0.0
      %1401 = vmatmul.mubr.f32.gmra.mrb[0].mxu0 %v1207
      %v1402 = vpop.f32.mrb[0].mxu0
      %v1403 = vadd.f32 0.0, %v1402
      %v1404 = vpop.f32.mrb[0].mxu0
      %1405 = vmatprep.mubr.f32.mxu0 0.0
      %1406 = vmatmul.mubr.f32.gmra.mrb[0].mxu0 %v1210
      %v1407 = vpop.f32.mrb[0].mxu0
      %v1408 = vadd.f32 0.0, %v1407
      %v1409 = vpop.f32.mrb[0].mxu0
      %1410 = vmatprep.mubr.f32.mxu0 0.0
      %1411 = vmatmul.mubr.f32.gmra.mrb[0].mxu0 %v1213
      %v1412 = vpop.f32.mrb[0].mxu0
      %v1413 = vadd.f32 0.0, %v1412
      %v1414 = vpop.f32.mrb[0].mxu0
      %1415 = vmatprep.mubr.f32.mxu0 0.0
      %1416 = vmatmul.mubr.f32.gmra.mrb[0].mxu0 %v1216
      %v1417 = vpop.f32.mrb[0].mxu0
      %v1418 = vadd.f32 0.0, %v1417
      %v1419 = vpop.f32.mrb[0].mxu0
      %1420 = vmatprep.mubr.f32.mxu0 0.0
      %1421 = vmatmul.mubr.f32.gmra.mrb[0].mxu0 %v1219
      %v1422 = vpop.f32.mrb[0].mxu0
      %v1423 = vadd.f32 0.0, %v1422
      %v1424 = vpop.f32.mrb[0].mxu0
      %1425 = vmatprep.mubr.f32.mxu0 0.0
      %1426 = vmatmul.mubr.f32.gmra.mrb[0].mxu0 %v1222
      %v1427 = vpop.f32.mrb[0].mxu0
      %v1428 = vadd.f32 0.0, %v1427
      %v1429 = vpop.f32.mrb[0].mxu0
      %1430 = vmatprep.mubr.f32.mxu0 0.0
      %1431 = vmatmul.mubr.f32.gmra.mrb[0].mxu0 %v1225
      %v1432 = vpop.f32.mrb[0].mxu0
      %v1433 = vadd.f32 0.0, %v1432
      %v1434 = vpop.f32.mrb[0].mxu0
      %1435 = vmatprep.mubr.f32.mxu0 0.0
      %1436 = vmatmul.mubr.f32.gmra.mrb[0].mxu0 %v1228
      %v1437 = vpop.f32.mrb[0].mxu0
      %v1438 = vadd.f32 0.0, %v1437
      %v1439 = vpop.f32.mrb[0].mxu0
      %1440 = vmatprep.mubr.f32.mxu0 0.0
      %1441 = vmatmul.mubr.f32.gmra.mrb[0].mxu0 %v1231
      %v1442 = vpop.f32.mrb[0].mxu0
      %v1443 = vadd.f32 0.0, %v1442
      %v1444 = vpop.f32.mrb[0].mxu0
      %1445 = vmatprep.mubr.f32.mxu0 0.0
      %1446 = vmatmul.mubr.f32.gmra.mrb[0].mxu0 %v1234
      %v1447 = vpop.f32.mrb[0].mxu0
      %v1448 = vadd.f32 0.0, %v1447
      %v1449 = vpop.f32.mrb[0].mxu0
      %1450 = vmatprep.mubr.f32.mxu0 0.0
      %1451 = vmatmul.mubr.f32.gmra.mrb[0].mxu0 %v1237
      %v1452 = vpop.f32.mrb[0].mxu0
      %v1453 = vadd.f32 0.0, %v1452
      %v1454 = vpop.f32.mrb[0].mxu0
      %1455 = vmatprep.mubr.f32.mxu0 0.0
      %1456 = vmatmul.mubr.f32.gmra.mrb[0].mxu0 %v1240
      %v1457 = vpop.f32.mrb[0].mxu0
      %v1458 = vadd.f32 0.0, %v1457
      %v1459 = vpop.f32.mrb[0].mxu0
      %1460 = vmatprep.mubr.f32.mxu0 0.0
      %1461 = vmatmul.mubr.f32.gmra.mrb[0].mxu0 %v1243
      %v1462 = vpop.f32.mrb[0].mxu0
      %v1463 = vadd.f32 0.0, %v1462
      %v1464 = vpop.f32.mrb[0].mxu0
      %1465 = vmatprep.mubr.f32.mxu0 0.0
      %1466 = vmatmul.mubr.f32.gmra.mrb[0].mxu0 %v1246
      %v1467 = vpop.f32.mrb[0].mxu0
      %v1468 = vadd.f32 0.0, %v1467
      %v1469 = vpop.f32.mrb[0].mxu0
      %1470 = vmatprep.mubr.f32.mxu0 0.0
      %1471 = vmatmul.mubr.f32.gmra.mrb[0].mxu0 %v1249
      %v1472 = vpop.f32.mrb[0].mxu0
      %v1473 = vadd.f32 0.0, %v1472
      %v1474 = vpop.f32.mrb[0].mxu0
      %1475 = vmatprep.mubr.f32.mxu0 0.0
      %1476 = vmatmul.mubr.f32.gmra.mrb[0].mxu0 %v1252
      %v1477 = vpop.f32.mrb[0].mxu0
      %v1478 = vadd.f32 0.0, %v1477
      %v1479 = vpop.f32.mrb[0].mxu0
      %1480 = vmatprep.mubr.f32.mxu0 0.0
      %1481 = vmatmul.mubr.f32.gmra.mrb[0].mxu0 %v1255
      %v1482 = vpop.f32.mrb[0].mxu0
      %v1483 = vadd.f32 0.0, %v1482
      %v1484 = vpop.f32.mrb[0].mxu0
      %1485 = vmatprep.mubr.f32.mxu0 0.0
      %1486 = vmatmul.mubr.f32.gmra.mrb[0].mxu0 %v1258
      %v1487 = vpop.f32.mrb[0].mxu0
      %v1488 = vadd.f32 0.0, %v1487
      %v1489 = vpop.f32.mrb[0].mxu0
      %1490 = vmatprep.mubr.f32.mxu0 0.0
      %1491 = vmatmul.mubr.f32.gmra.mrb[0].mxu0 %v1261
      %v1492 = vpop.f32.mrb[0].mxu0
      %v1493 = vadd.f32 0.0, %v1492
      %v1494 = vpop.f32.mrb[0].mxu0
      %1495 = vmatprep.mubr.f32.mxu0 0.0
      %1496 = vmatmul.mubr.f32.gmra.mrb[0].mxu0 %v1264
      %v1497 = vpop.f32.mrb[0].mxu0
      %v1498 = vadd.f32 0.0, %v1497
      %v1499 = vpop.f32.mrb[0].mxu0
      %1500 = vmatprep.mubr.f32.mxu0 0.0
      %1501 = vmatmul.mubr.f32.gmra.mrb[0].mxu0 %v1267
      %v1502 = vpop.f32.mrb[0].mxu0
      %v1503 = vadd.f32 0.0, %v1502
      %v1504 = vpop.f32.mrb[0].mxu0
      %1505 = vmatprep.mubr.f32.mxu0 0.0
      %1506 = vmatmul.mubr.f32.gmra.mrb[0].mxu0 %v1270
      %v1507 = vpop.f32.mrb[0].mxu0
      %v1508 = vadd.f32 0.0, %v1507
      %v1509 = vpop.f32.mrb[0].mxu0
      %1510 = vmatprep.mubr.f32.mxu0 0.0
      %1511 = vmatmul.mubr.f32.gmra.mrb[0].mxu0 %v1273
      %v1512 = vpop.f32.mrb[0].mxu0
      %v1513 = vadd.f32 0.0, %v1512
      %v1514 = vpop.f32.mrb[0].mxu0
      %1515 = vmatprep.mubr.f32.mxu0 0.0
      %1516 = vmatmul.mubr.f32.gmra.mrb[0].mxu0 %v1276
      %v1517 = vpop.f32.mrb[0].mxu0
      %v1518 = vadd.f32 0.0, %v1517
      %v1519 = vpop.f32.mrb[0].mxu0
      %1520 = vmatprep.mubr.f32.mxu0 0.0
      %1521 = vmatmul.mubr.f32.gmra.mrb[0].mxu0 %v1279
      %v1522 = vpop.f32.mrb[0].mxu0
      %v1523 = vadd.f32 0.0, %v1522
      %v1524 = vpop.f32.mrb[0].mxu0
      %1525 = vmatprep.mubr.f32.mxu0 0.0
      %1526 = vmatmul.mubr.f32.gmra.mrb[0].mxu0 %v1282
      %v1527 = vpop.f32.mrb[0].mxu0
      %v1528 = vadd.f32 0.0, %v1527
      %v1529 = vpop.f32.mrb[0].mxu0
      %1530 = vmatprep.mubr.f32.mxu0 0.0
      %1531 = vmatmul.mubr.f32.gmra.mrb[0].mxu0 %v1285
      %v1532 = vpop.f32.mrb[0].mxu0
      %v1533 = vadd.f32 0.0, %v1532
      %v1534 = vpop.f32.mrb[0].mxu0
      %1535 = vdwg.mxu0
      %v1537 = vsel %vm1025, %v1104, 0
      %v1540 = vsel %vm1025, %v1105, 0
      %v1543 = vsel %vm1025, %v1106, 0
      %v1546 = vsel %vm1025, %v1107, 0
      %v1549 = vsel %vm1025, %v1108, 0
      %v1552 = vsel %vm1025, %v1109, 0
      %v1555 = vsel %vm1025, %v1110, 0
      %v1558 = vsel %vm1025, %v1111, 0
      %v1561 = vsel %vm1025, %v1112, 0
      %v1564 = vsel %vm1025, %v1113, 0
      %v1567 = vsel %vm1025, %v1114, 0
      %v1570 = vsel %vm1025, %v1115, 0
      %v1573 = vsel %vm1025, %v1116, 0
      %v1576 = vsel %vm1025, %v1117, 0
      %v1579 = vsel %vm1025, %v1118, 0
      %v1582 = vsel %vm1025, %v1119, 0
      %v1585 = vsel %vm1025, %v1120, 0
      %v1588 = vsel %vm1025, %v1121, 0
      %v1591 = vsel %vm1025, %v1122, 0
      %v1594 = vsel %vm1025, %v1123, 0
      %v1597 = vsel %vm1025, %v1124, 0
      %v1600 = vsel %vm1025, %v1125, 0
      %v1603 = vsel %vm1025, %v1126, 0
      %v1606 = vsel %vm1025, %v1127, 0
      %v1609 = vsel %vm1025, %v1128, 0
      %v1612 = vsel %vm1025, %v1129, 0
      %v1615 = vsel %vm1025, %v1130, 0
      %v1618 = vsel %vm1025, %v1131, 0
      %v1621 = vsel %vm1025, %v1132, 0
      %v1624 = vsel %vm1025, %v1133, 0
      %v1627 = vsel %vm1025, %v1134, 0
      %v1630 = vsel %vm1025, %v1135, 0
      %v1633 = vsel %vm1025, %v1136, 0
      %v1636 = vsel %vm1025, %v1137, 0
      %v1639 = vsel %vm1025, %v1138, 0
      %v1642 = vsel %vm1025, %v1139, 0
      %v1645 = vsel %vm1287, %v1140, 0
      %1647 = vmatprep.subr.mxu0 0.0
      %1648 = vmatpush1.msra.mxu0 %v1645
      %1649 = vmatprep.subr.mxu0 0.0
      %1650 = vmatpush1.msra.mxu0 0.0
      %1651 = vmatprep.subr.mxu0 0.0
      %1652 = vmatpush1.msra.mxu0 0.0
      %1653 = vmatprep.subr.mxu0 0.0
      %1654 = vmatpush1.msra.mxu0 0.0
      %1655 = vmatprep.subr.mxu0 0.0
      %1656 = vmatpush1.msra.mxu0 0.0
      %1657 = vmatprep.subr.mxu0 0.0
      %1658 = vmatpush1.msra.mxu0 0.0
      %1659 = vmatprep.subr.mxu0 0.0
      %1660 = vmatpush1.msra.mxu0 0.0
      %1661 = vmatprep.subr.mxu0 0.0
      %1662 = vmatpush1.msra.mxu0 0.0
      %1663 = vmatprep.subr.mxu0 0.0
      %1664 = vmatpush1.msra.mxu0 0.0
      %1665 = vmatprep.subr.mxu0 0.0
      %1666 = vmatpush1.msra.mxu0 0.0
      %1667 = vmatprep.subr.mxu0 0.0
      %1668 = vmatpush1.msra.mxu0 0.0
      %1669 = vmatprep.subr.mxu0 0.0
      %1670 = vmatpush1.msra.mxu0 0.0
      %1671 = vmatprep.subr.mxu0 0.0
      %1672 = vmatpush1.msra.mxu0 0.0
      %1673 = vmatprep.subr.mxu0 0.0
      %1674 = vmatpush1.msra.mxu0 0.0
      %1675 = vmatprep.subr.mxu0 0.0
      %1676 = vmatpush1.msra.mxu0 0.0
      %1677 = vmatprep.subr.mxu0 0.0
      %1678 = vmatpush1.msra.mxu0 0.0
      %1679 = vmatprep.subr.mxu0 0.0
      %1680 = vmatpush1.msra.mxu0 0.0
      %1681 = vmatprep.subr.mxu0 0.0
      %1682 = vmatpush1.msra.mxu0 0.0
      %1683 = vmatprep.subr.mxu0 0.0
      %1684 = vmatpush1.msra.mxu0 0.0
      %1685 = vmatprep.subr.mxu0 0.0
      %1686 = vmatpush1.msra.mxu0 0.0
      %1687 = vmatprep.subr.mxu0 0.0
      %1688 = vmatpush1.msra.mxu0 0.0
      %1689 = vmatprep.subr.mxu0 0.0
      %1690 = vmatpush1.msra.mxu0 0.0
      %1691 = vmatprep.subr.mxu0 0.0
      %1692 = vmatpush1.msra.mxu0 0.0
      %1693 = vmatprep.subr.mxu0 0.0
      %1694 = vmatpush1.msra.mxu0 0.0
      %1695 = vmatprep.subr.mxu0 0.0
      %1696 = vmatpush1.msra.mxu0 0.0
      %1697 = vmatprep.subr.mxu0 0.0
      %1698 = vmatpush1.msra.mxu0 0.0
      %1699 = vmatprep.subr.mxu0 0.0
      %1700 = vmatpush1.msra.mxu0 0.0
      %1701 = vmatprep.subr.mxu0 0.0
      %1702 = vmatpush1.msra.mxu0 0.0
      %1703 = vmatprep.subr.mxu0 0.0
      %1704 = vmatpush1.msra.mxu0 0.0
      %1705 = vmatprep.subr.mxu0 0.0
      %1706 = vmatpush1.msra.mxu0 0.0
      %1707 = vmatprep.subr.mxu0 0.0
      %1708 = vmatpush1.msra.mxu0 0.0
      %1709 = vmatprep.subr.mxu0 0.0
      %1710 = vmatpush1.msra.mxu0 0.0
      %1711 = vmatprep.mubr.f32.mxu0 0.0
      %1712 = vmatmul.mubr.f32.gmra.mrb[0].mxu0 %v1537
      %v1713 = vpop.f32.mrb[0].mxu0
      %v1714 = vadd.f32 %v1358, %v1713
      %v1715 = vpop.f32.mrb[0].mxu0
      %1716 = vmatprep.mubr.f32.mxu0 0.0
      %1717 = vmatmul.mubr.f32.gmra.mrb[0].mxu0 %v1540
      %v1718 = vpop.f32.mrb[0].mxu0
      %v1719 = vadd.f32 %v1363, %v1718
      %v1720 = vpop.f32.mrb[0].mxu0
      %1721 = vmatprep.mubr.f32.mxu0 0.0
      %1722 = vmatmul.mubr.f32.gmra.mrb[0].mxu0 %v1543
      %v1723 = vpop.f32.mrb[0].mxu0
      %v1724 = vadd.f32 %v1368, %v1723
      %v1725 = vpop.f32.mrb[0].mxu0
      %1726 = vmatprep.mubr.f32.mxu0 0.0
      %1727 = vmatmul.mubr.f32.gmra.mrb[0].mxu0 %v1546
      %v1728 = vpop.f32.mrb[0].mxu0
      %v1729 = vadd.f32 %v1373, %v1728
      %v1730 = vpop.f32.mrb[0].mxu0
      %1731 = vmatprep.mubr.f32.mxu0 0.0
      %1732 = vmatmul.mubr.f32.gmra.mrb[0].mxu0 %v1549
      %v1733 = vpop.f32.mrb[0].mxu0
      %v1734 = vadd.f32 %v1378, %v1733
      %v1735 = vpop.f32.mrb[0].mxu0
      %1736 = vmatprep.mubr.f32.mxu0 0.0
      %1737 = vmatmul.mubr.f32.gmra.mrb[0].mxu0 %v1552
      %v1738 = vpop.f32.mrb[0].mxu0
      %v1739 = vadd.f32 %v1383, %v1738
      %v1740 = vpop.f32.mrb[0].mxu0
      %1741 = vmatprep.mubr.f32.mxu0 0.0
      %1742 = vmatmul.mubr.f32.gmra.mrb[0].mxu0 %v1555
      %v1743 = vpop.f32.mrb[0].mxu0
      %v1744 = vadd.f32 %v1388, %v1743
      %v1745 = vpop.f32.mrb[0].mxu0
      %1746 = vmatprep.mubr.f32.mxu0 0.0
      %1747 = vmatmul.mubr.f32.gmra.mrb[0].mxu0 %v1558
      %v1748 = vpop.f32.mrb[0].mxu0
      %v1749 = vadd.f32 %v1393, %v1748
      %v1750 = vpop.f32.mrb[0].mxu0
      %1751 = vmatprep.mubr.f32.mxu0 0.0
      %1752 = vmatmul.mubr.f32.gmra.mrb[0].mxu0 %v1561
      %v1753 = vpop.f32.mrb[0].mxu0
      %v1754 = vadd.f32 %v1398, %v1753
      %v1755 = vpop.f32.mrb[0].mxu0
      %1756 = vmatprep.mubr.f32.mxu0 0.0
      %1757 = vmatmul.mubr.f32.gmra.mrb[0].mxu0 %v1564
      %v1758 = vpop.f32.mrb[0].mxu0
      %v1759 = vadd.f32 %v1403, %v1758
      %v1760 = vpop.f32.mrb[0].mxu0
      %1761 = vmatprep.mubr.f32.mxu0 0.0
      %1762 = vmatmul.mubr.f32.gmra.mrb[0].mxu0 %v1567
      %v1763 = vpop.f32.mrb[0].mxu0
      %v1764 = vadd.f32 %v1408, %v1763
      %v1765 = vpop.f32.mrb[0].mxu0
      %1766 = vmatprep.mubr.f32.mxu0 0.0
      %1767 = vmatmul.mubr.f32.gmra.mrb[0].mxu0 %v1570
      %v1768 = vpop.f32.mrb[0].mxu0
      %v1769 = vadd.f32 %v1413, %v1768
      %v1770 = vpop.f32.mrb[0].mxu0
      %1771 = vmatprep.mubr.f32.mxu0 0.0
      %1772 = vmatmul.mubr.f32.gmra.mrb[0].mxu0 %v1573
      %v1773 = vpop.f32.mrb[0].mxu0
      %v1774 = vadd.f32 %v1418, %v1773
      %v1775 = vpop.f32.mrb[0].mxu0
      %1776 = vmatprep.mubr.f32.mxu0 0.0
      %1777 = vmatmul.mubr.f32.gmra.mrb[0].mxu0 %v1576
      %v1778 = vpop.f32.mrb[0].mxu0
      %v1779 = vadd.f32 %v1423, %v1778
      %v1780 = vpop.f32.mrb[0].mxu0
      %1781 = vmatprep.mubr.f32.mxu0 0.0
      %1782 = vmatmul.mubr.f32.gmra.mrb[0].mxu0 %v1579
      %v1783 = vpop.f32.mrb[0].mxu0
      %v1784 = vadd.f32 %v1428, %v1783
      %v1785 = vpop.f32.mrb[0].mxu0
      %1786 = vmatprep.mubr.f32.mxu0 0.0
      %1787 = vmatmul.mubr.f32.gmra.mrb[0].mxu0 %v1582
      %v1788 = vpop.f32.mrb[0].mxu0
      %v1789 = vadd.f32 %v1433, %v1788
      %v1790 = vpop.f32.mrb[0].mxu0
      %1791 = vmatprep.mubr.f32.mxu0 0.0
      %1792 = vmatmul.mubr.f32.gmra.mrb[0].mxu0 %v1585
      %v1793 = vpop.f32.mrb[0].mxu0
      %v1794 = vadd.f32 %v1438, %v1793
      %v1795 = vpop.f32.mrb[0].mxu0
      %1796 = vmatprep.mubr.f32.mxu0 0.0
      %1797 = vmatmul.mubr.f32.gmra.mrb[0].mxu0 %v1588
      %v1798 = vpop.f32.mrb[0].mxu0
      %v1799 = vadd.f32 %v1443, %v1798
      %v1800 = vpop.f32.mrb[0].mxu0
      %1801 = vmatprep.mubr.f32.mxu0 0.0
      %1802 = vmatmul.mubr.f32.gmra.mrb[0].mxu0 %v1591
      %v1803 = vpop.f32.mrb[0].mxu0
      %v1804 = vadd.f32 %v1448, %v1803
      %v1805 = vpop.f32.mrb[0].mxu0
      %1806 = vmatprep.mubr.f32.mxu0 0.0
      %1807 = vmatmul.mubr.f32.gmra.mrb[0].mxu0 %v1594
      %v1808 = vpop.f32.mrb[0].mxu0
      %v1809 = vadd.f32 %v1453, %v1808
      %v1810 = vpop.f32.mrb[0].mxu0
      %1811 = vmatprep.mubr.f32.mxu0 0.0
      %1812 = vmatmul.mubr.f32.gmra.mrb[0].mxu0 %v1597
      %v1813 = vpop.f32.mrb[0].mxu0
      %v1814 = vadd.f32 %v1458, %v1813
      %v1815 = vpop.f32.mrb[0].mxu0
      %1816 = vmatprep.mubr.f32.mxu0 0.0
      %1817 = vmatmul.mubr.f32.gmra.mrb[0].mxu0 %v1600
      %v1818 = vpop.f32.mrb[0].mxu0
      %v1819 = vadd.f32 %v1463, %v1818
      %v1820 = vpop.f32.mrb[0].mxu0
      %1821 = vmatprep.mubr.f32.mxu0 0.0
      %1822 = vmatmul.mubr.f32.gmra.mrb[0].mxu0 %v1603
      %v1823 = vpop.f32.mrb[0].mxu0
      %v1824 = vadd.f32 %v1468, %v1823
      %v1825 = vpop.f32.mrb[0].mxu0
      %1826 = vmatprep.mubr.f32.mxu0 0.0
      %1827 = vmatmul.mubr.f32.gmra.mrb[0].mxu0 %v1606
      %v1828 = vpop.f32.mrb[0].mxu0
      %v1829 = vadd.f32 %v1473, %v1828
      %v1830 = vpop.f32.mrb[0].mxu0
      %1831 = vmatprep.mubr.f32.mxu0 0.0
      %1832 = vmatmul.mubr.f32.gmra.mrb[0].mxu0 %v1609
      %v1833 = vpop.f32.mrb[0].mxu0
      %v1834 = vadd.f32 %v1478, %v1833
      %v1835 = vpop.f32.mrb[0].mxu0
      %1836 = vmatprep.mubr.f32.mxu0 0.0
      %1837 = vmatmul.mubr.f32.gmra.mrb[0].mxu0 %v1612
      %v1838 = vpop.f32.mrb[0].mxu0
      %v1839 = vadd.f32 %v1483, %v1838
      %v1840 = vpop.f32.mrb[0].mxu0
      %1841 = vmatprep.mubr.f32.mxu0 0.0
      %1842 = vmatmul.mubr.f32.gmra.mrb[0].mxu0 %v1615
      %v1843 = vpop.f32.mrb[0].mxu0
      %v1844 = vadd.f32 %v1488, %v1843
      %v1845 = vpop.f32.mrb[0].mxu0
      %1846 = vmatprep.mubr.f32.mxu0 0.0
      %1847 = vmatmul.mubr.f32.gmra.mrb[0].mxu0 %v1618
      %v1848 = vpop.f32.mrb[0].mxu0
      %v1849 = vadd.f32 %v1493, %v1848
      %v1850 = vpop.f32.mrb[0].mxu0
      %1851 = vmatprep.mubr.f32.mxu0 0.0
      %1852 = vmatmul.mubr.f32.gmra.mrb[0].mxu0 %v1621
      %v1853 = vpop.f32.mrb[0].mxu0
      %v1854 = vadd.f32 %v1498, %v1853
      %v1855 = vpop.f32.mrb[0].mxu0
      %1856 = vmatprep.mubr.f32.mxu0 0.0
      %1857 = vmatmul.mubr.f32.gmra.mrb[0].mxu0 %v1624
      %v1858 = vpop.f32.mrb[0].mxu0
      %v1859 = vadd.f32 %v1503, %v1858
      %v1860 = vpop.f32.mrb[0].mxu0
      %1861 = vmatprep.mubr.f32.mxu0 0.0
      %1862 = vmatmul.mubr.f32.gmra.mrb[0].mxu0 %v1627
      %v1863 = vpop.f32.mrb[0].mxu0
      %v1864 = vadd.f32 %v1508, %v1863
      %v1865 = vpop.f32.mrb[0].mxu0
      %1866 = vmatprep.mubr.f32.mxu0 0.0
      %1867 = vmatmul.mubr.f32.gmra.mrb[0].mxu0 %v1630
      %v1868 = vpop.f32.mrb[0].mxu0
      %v1869 = vadd.f32 %v1513, %v1868
      %v1870 = vpop.f32.mrb[0].mxu0
      %1871 = vmatprep.mubr.f32.mxu0 0.0
      %1872 = vmatmul.mubr.f32.gmra.mrb[0].mxu0 %v1633
      %v1873 = vpop.f32.mrb[0].mxu0
      %v1874 = vadd.f32 %v1518, %v1873
      %v1875 = vpop.f32.mrb[0].mxu0
      %1876 = vmatprep.mubr.f32.mxu0 0.0
      %1877 = vmatmul.mubr.f32.gmra.mrb[0].mxu0 %v1636
      %v1878 = vpop.f32.mrb[0].mxu0
      %v1879 = vadd.f32 %v1523, %v1878
      %v1880 = vpop.f32.mrb[0].mxu0
      %1881 = vmatprep.mubr.f32.mxu0 0.0
      %1882 = vmatmul.mubr.f32.gmra.mrb[0].mxu0 %v1639
      %v1883 = vpop.f32.mrb[0].mxu0
      %v1884 = vadd.f32 %v1528, %v1883
      %v1885 = vpop.f32.mrb[0].mxu0
      %1886 = vmatprep.mubr.f32.mxu0 0.0
      %1887 = vmatmul.mubr.f32.gmra.mrb[0].mxu0 %v1642
      %v1888 = vpop.f32.mrb[0].mxu0
      %v1889 = vadd.f32 %v1533, %v1888
      %v1890 = vpop.f32.mrb[0].mxu0
      %1891 = vdwg.mxu0
      %v1892 = vld [vmem:[#allocation2 + $0x7] sm:$0xff]
      %v1893 = vld [vmem:[#allocation2 + $0xf] sm:$0xff]
      %v1894 = vld [vmem:[#allocation2 + $0x17] sm:$0xff]
      %v1895 = vld [vmem:[#allocation2 + $0x1f] sm:$0xff]
      %v1896 = vld [vmem:[#allocation2 + $0x27] sm:$0xff]
      %v1897 = vld [vmem:[#allocation2 + $0x2f] sm:$0xff]
      %v1898 = vld [vmem:[#allocation2 + $0x37] sm:$0xff]
      %v1899 = vld [vmem:[#allocation2 + $0x3f] sm:$0xff]
      %v1900 = vld [vmem:[#allocation2 + $0x47] sm:$0xff]
      %v1901 = vld [vmem:[#allocation2 + $0x4f] sm:$0xff]
      %v1902 = vld [vmem:[#allocation2 + $0x57] sm:$0xff]
      %v1903 = vld [vmem:[#allocation2 + $0x5f] sm:$0xff]
      %v1904 = vld [vmem:[#allocation2 + $0x67] sm:$0xff]
      %v1905 = vld [vmem:[#allocation2 + $0x6f] sm:$0xff]
      %v1906 = vld [vmem:[#allocation2 + $0x77] sm:$0xff]
      %v1907 = vld [vmem:[#allocation2 + $0x7f] sm:$0xff]
      %v1908 = vld [vmem:[#allocation2 + $0x87] sm:$0xff]
      %v1909 = vld [vmem:[#allocation2 + $0x8f] sm:$0xff]
      %v1910 = vld [vmem:[#allocation2 + $0x97] sm:$0xff]
      %v1911 = vld [vmem:[#allocation2 + $0x9f] sm:$0xff]
      %v1912 = vld [vmem:[#allocation2 + $0xa7] sm:$0xff]
      %v1913 = vld [vmem:[#allocation2 + $0xaf] sm:$0xff]
      %v1914 = vld [vmem:[#allocation2 + $0xb7] sm:$0xff]
      %v1915 = vld [vmem:[#allocation2 + $0xbf] sm:$0xff]
      %v1916 = vld [vmem:[#allocation2 + $0xc7] sm:$0xff]
      %v1917 = vld [vmem:[#allocation2 + $0xcf] sm:$0xff]
      %v1918 = vld [vmem:[#allocation2 + $0xd7] sm:$0xff]
      %v1919 = vld [vmem:[#allocation2 + $0xdf] sm:$0xff]
      %v1920 = vld [vmem:[#allocation2 + $0xe7] sm:$0xff]
      %v1921 = vld [vmem:[#allocation2 + $0xef] sm:$0xff]
      %v1922 = vld [vmem:[#allocation2 + $0xf7] sm:$0xff]
      %v1923 = vld [vmem:[#allocation2 + $0xff] sm:$0xff]
      %v1924 = vld [vmem:[#allocation2 + $0x107] sm:$0xff]
      %v1925 = vld [vmem:[#allocation2 + $0x10f] sm:$0xff]
      %v1926 = vld [vmem:[#allocation2 + $0x117] sm:$0xff]
      %v1927 = vld [vmem:[#allocation2 + $0x11f] sm:$0xff]
      %s1928 = scalar_lea.vmem %s2, 8
      %v1929 = vld [vmem:[%s1928] sm:$0xf]
      %v1931 = vsel %vm1025, %v1892, 0
      %v1934 = vsel %vm1025, %v1893, 0
      %v1937 = vsel %vm1025, %v1894, 0
      %v1940 = vsel %vm1025, %v1895, 0
      %v1943 = vsel %vm1025, %v1896, 0
      %v1946 = vsel %vm1025, %v1897, 0
      %v1949 = vsel %vm1025, %v1898, 0
      %v1952 = vsel %vm1025, %v1899, 0
      %v1955 = vsel %vm1025, %v1900, 0
      %v1958 = vsel %vm1025, %v1901, 0
      %v1961 = vsel %vm1025, %v1902, 0
      %v1964 = vsel %vm1025, %v1903, 0
      %v1967 = vsel %vm1025, %v1904, 0
      %v1970 = vsel %vm1025, %v1905, 0
      %v1973 = vsel %vm1025, %v1906, 0
      %v1976 = vsel %vm1025, %v1907, 0
      %v1979 = vsel %vm1025, %v1908, 0
      %v1982 = vsel %vm1025, %v1909, 0
      %v1985 = vsel %vm1025, %v1910, 0
      %v1988 = vsel %vm1025, %v1911, 0
      %v1991 = vsel %vm1025, %v1912, 0
      %v1994 = vsel %vm1025, %v1913, 0
      %v1997 = vsel %vm1025, %v1914, 0
      %v2000 = vsel %vm1025, %v1915, 0
      %v2003 = vsel %vm1025, %v1916, 0
      %v2006 = vsel %vm1025, %v1917, 0
      %v2009 = vsel %vm1025, %v1918, 0
      %v2012 = vsel %vm1025, %v1919, 0
      %v2015 = vsel %vm1025, %v1920, 0
      %v2018 = vsel %vm1025, %v1921, 0
      %v2021 = vsel %vm1025, %v1922, 0
      %v2024 = vsel %vm1025, %v1923, 0
      %v2027 = vsel %vm1025, %v1924, 0
      %v2030 = vsel %vm1025, %v1925, 0
      %v2033 = vsel %vm1025, %v1926, 0
      %v2036 = vsel %vm1025, %v1927, 0
      %v2039 = vsel %vm1287, %v1929, 0
      %2041 = vmatprep.subr.mxu0 0.0
      %2042 = vmatpush1.msra.mxu0 %v2039
      %2043 = vmatprep.subr.mxu0 0.0
      %2044 = vmatpush1.msra.mxu0 0.0
      %2045 = vmatprep.subr.mxu0 0.0
      %2046 = vmatpush1.msra.mxu0 0.0
      %2047 = vmatprep.subr.mxu0 0.0
      %2048 = vmatpush1.msra.mxu0 0.0
      %2049 = vmatprep.subr.mxu0 0.0
      %2050 = vmatpush1.msra.mxu0 0.0
      %2051 = vmatprep.subr.mxu0 0.0
      %2052 = vmatpush1.msra.mxu0 0.0
      %2053 = vmatprep.subr.mxu0 0.0
      %2054 = vmatpush1.msra.mxu0 0.0
      %2055 = vmatprep.subr.mxu0 0.0
      %2056 = vmatpush1.msra.mxu0 0.0
      %2057 = vmatprep.subr.mxu0 0.0
      %2058 = vmatpush1.msra.mxu0 0.0
      %2059 = vmatprep.subr.mxu0 0.0
      %2060 = vmatpush1.msra.mxu0 0.0
      %2061 = vmatprep.subr.mxu0 0.0
      %2062 = vmatpush1.msra.mxu0 0.0
      %2063 = vmatprep.subr.mxu0 0.0
      %2064 = vmatpush1.msra.mxu0 0.0
      %2065 = vmatprep.subr.mxu0 0.0
      %2066 = vmatpush1.msra.mxu0 0.0
      %2067 = vmatprep.subr.mxu0 0.0
      %2068 = vmatpush1.msra.mxu0 0.0
      %2069 = vmatprep.subr.mxu0 0.0
      %2070 = vmatpush1.msra.mxu0 0.0
      %2071 = vmatprep.subr.mxu0 0.0
      %2072 = vmatpush1.msra.mxu0 0.0
      %2073 = vmatprep.subr.mxu0 0.0
      %2074 = vmatpush1.msra.mxu0 0.0
      %2075 = vmatprep.subr.mxu0 0.0
      %2076 = vmatpush1.msra.mxu0 0.0
      %2077 = vmatprep.subr.mxu0 0.0
      %2078 = vmatpush1.msra.mxu0 0.0
      %2079 = vmatprep.subr.mxu0 0.0
      %2080 = vmatpush1.msra.mxu0 0.0
      %2081 = vmatprep.subr.mxu0 0.0
      %2082 = vmatpush1.msra.mxu0 0.0
      %2083 = vmatprep.subr.mxu0 0.0
      %2084 = vmatpush1.msra.mxu0 0.0
      %2085 = vmatprep.subr.mxu0 0.0
      %2086 = vmatpush1.msra.mxu0 0.0
      %2087 = vmatprep.subr.mxu0 0.0
      %2088 = vmatpush1.msra.mxu0 0.0
      %2089 = vmatprep.subr.mxu0 0.0
      %2090 = vmatpush1.msra.mxu0 0.0
      %2091 = vmatprep.subr.mxu0 0.0
      %2092 = vmatpush1.msra.mxu0 0.0
      %2093 = vmatprep.subr.mxu0 0.0
      %2094 = vmatpush1.msra.mxu0 0.0
      %2095 = vmatprep.subr.mxu0 0.0
      %2096 = vmatpush1.msra.mxu0 0.0
      %2097 = vmatprep.subr.mxu0 0.0
      %2098 = vmatpush1.msra.mxu0 0.0
      %2099 = vmatprep.subr.mxu0 0.0
      %2100 = vmatpush1.msra.mxu0 0.0
      %2101 = vmatprep.subr.mxu0 0.0
      %2102 = vmatpush1.msra.mxu0 0.0
      %2103 = vmatprep.subr.mxu0 0.0
      %2104 = vmatpush1.msra.mxu0 0.0
      %2105 = vmatprep.mubr.f32.mxu0 0.0
      %2106 = vmatmul.mubr.f32.gmra.mrb[0].mxu0 %v1931
      %v2107 = vpop.f32.mrb[0].mxu0
      %v2108 = vadd.f32 0.0, %v2107
      %v2109 = vpop.f32.mrb[0].mxu0
      %2110 = vmatprep.mubr.f32.mxu0 0.0
      %2111 = vmatmul.mubr.f32.gmra.mrb[0].mxu0 %v1934
      %v2112 = vpop.f32.mrb[0].mxu0
      %v2113 = vadd.f32 0.0, %v2112
      %v2114 = vpop.f32.mrb[0].mxu0
      %2115 = vmatprep.mubr.f32.mxu0 0.0
      %2116 = vmatmul.mubr.f32.gmra.mrb[0].mxu0 %v1937
      %v2117 = vpop.f32.mrb[0].mxu0
      %v2118 = vadd.f32 0.0, %v2117
      %v2119 = vpop.f32.mrb[0].mxu0
      %2120 = vmatprep.mubr.f32.mxu0 0.0
      %2121 = vmatmul.mubr.f32.gmra.mrb[0].mxu0 %v1940
      %v2122 = vpop.f32.mrb[0].mxu0
      %v2123 = vadd.f32 0.0, %v2122
      %v2124 = vpop.f32.mrb[0].mxu0
      %2125 = vmatprep.mubr.f32.mxu0 0.0
      %2126 = vmatmul.mubr.f32.gmra.mrb[0].mxu0 %v1943
      %v2127 = vpop.f32.mrb[0].mxu0
      %v2128 = vadd.f32 0.0, %v2127
      %v2129 = vpop.f32.mrb[0].mxu0
      %2130 = vmatprep.mubr.f32.mxu0 0.0
      %2131 = vmatmul.mubr.f32.gmra.mrb[0].mxu0 %v1946
      %v2132 = vpop.f32.mrb[0].mxu0
      %v2133 = vadd.f32 0.0, %v2132
      %v2134 = vpop.f32.mrb[0].mxu0
      %2135 = vmatprep.mubr.f32.mxu0 0.0
      %2136 = vmatmul.mubr.f32.gmra.mrb[0].mxu0 %v1949
      %v2137 = vpop.f32.mrb[0].mxu0
      %v2138 = vadd.f32 0.0, %v2137
      %v2139 = vpop.f32.mrb[0].mxu0
      %2140 = vmatprep.mubr.f32.mxu0 0.0
      %2141 = vmatmul.mubr.f32.gmra.mrb[0].mxu0 %v1952
      %v2142 = vpop.f32.mrb[0].mxu0
      %v2143 = vadd.f32 0.0, %v2142
      %v2144 = vpop.f32.mrb[0].mxu0
      %2145 = vmatprep.mubr.f32.mxu0 0.0
      %2146 = vmatmul.mubr.f32.gmra.mrb[0].mxu0 %v1955
      %v2147 = vpop.f32.mrb[0].mxu0
      %v2148 = vadd.f32 0.0, %v2147
      %v2149 = vpop.f32.mrb[0].mxu0
      %2150 = vmatprep.mubr.f32.mxu0 0.0
      %2151 = vmatmul.mubr.f32.gmra.mrb[0].mxu0 %v1958
      %v2152 = vpop.f32.mrb[0].mxu0
      %v2153 = vadd.f32 0.0, %v2152
      %v2154 = vpop.f32.mrb[0].mxu0
      %2155 = vmatprep.mubr.f32.mxu0 0.0
      %2156 = vmatmul.mubr.f32.gmra.mrb[0].mxu0 %v1961
      %v2157 = vpop.f32.mrb[0].mxu0
      %v2158 = vadd.f32 0.0, %v2157
      %v2159 = vpop.f32.mrb[0].mxu0
      %2160 = vmatprep.mubr.f32.mxu0 0.0
      %2161 = vmatmul.mubr.f32.gmra.mrb[0].mxu0 %v1964
      %v2162 = vpop.f32.mrb[0].mxu0
      %v2163 = vadd.f32 0.0, %v2162
      %v2164 = vpop.f32.mrb[0].mxu0
      %2165 = vmatprep.mubr.f32.mxu0 0.0
      %2166 = vmatmul.mubr.f32.gmra.mrb[0].mxu0 %v1967
      %v2167 = vpop.f32.mrb[0].mxu0
      %v2168 = vadd.f32 0.0, %v2167
      %v2169 = vpop.f32.mrb[0].mxu0
      %2170 = vmatprep.mubr.f32.mxu0 0.0
      %2171 = vmatmul.mubr.f32.gmra.mrb[0].mxu0 %v1970
      %v2172 = vpop.f32.mrb[0].mxu0
      %v2173 = vadd.f32 0.0, %v2172
      %v2174 = vpop.f32.mrb[0].mxu0
      %2175 = vmatprep.mubr.f32.mxu0 0.0
      %2176 = vmatmul.mubr.f32.gmra.mrb[0].mxu0 %v1973
      %v2177 = vpop.f32.mrb[0].mxu0
      %v2178 = vadd.f32 0.0, %v2177
      %v2179 = vpop.f32.mrb[0].mxu0
      %2180 = vmatprep.mubr.f32.mxu0 0.0
      %2181 = vmatmul.mubr.f32.gmra.mrb[0].mxu0 %v1976
      %v2182 = vpop.f32.mrb[0].mxu0
      %v2183 = vadd.f32 0.0, %v2182
      %v2184 = vpop.f32.mrb[0].mxu0
      %2185 = vmatprep.mubr.f32.mxu0 0.0
      %2186 = vmatmul.mubr.f32.gmra.mrb[0].mxu0 %v1979
      %v2187 = vpop.f32.mrb[0].mxu0
      %v2188 = vadd.f32 0.0, %v2187
      %v2189 = vpop.f32.mrb[0].mxu0
      %2190 = vmatprep.mubr.f32.mxu0 0.0
      %2191 = vmatmul.mubr.f32.gmra.mrb[0].mxu0 %v1982
      %v2192 = vpop.f32.mrb[0].mxu0
      %v2193 = vadd.f32 0.0, %v2192
      %v2194 = vpop.f32.mrb[0].mxu0
      %2195 = vmatprep.mubr.f32.mxu0 0.0
      %2196 = vmatmul.mubr.f32.gmra.mrb[0].mxu0 %v1985
      %v2197 = vpop.f32.mrb[0].mxu0
      %v2198 = vadd.f32 0.0, %v2197
      %v2199 = vpop.f32.mrb[0].mxu0
      %2200 = vmatprep.mubr.f32.mxu0 0.0
      %2201 = vmatmul.mubr.f32.gmra.mrb[0].mxu0 %v1988
      %v2202 = vpop.f32.mrb[0].mxu0
      %v2203 = vadd.f32 0.0, %v2202
      %v2204 = vpop.f32.mrb[0].mxu0
      %2205 = vmatprep.mubr.f32.mxu0 0.0
      %2206 = vmatmul.mubr.f32.gmra.mrb[0].mxu0 %v1991
      %v2207 = vpop.f32.mrb[0].mxu0
      %v2208 = vadd.f32 0.0, %v2207
      %v2209 = vpop.f32.mrb[0].mxu0
      %2210 = vmatprep.mubr.f32.mxu0 0.0
      %2211 = vmatmul.mubr.f32.gmra.mrb[0].mxu0 %v1994
      %v2212 = vpop.f32.mrb[0].mxu0
      %v2213 = vadd.f32 0.0, %v2212
      %v2214 = vpop.f32.mrb[0].mxu0
      %2215 = vmatprep.mubr.f32.mxu0 0.0
      %2216 = vmatmul.mubr.f32.gmra.mrb[0].mxu0 %v1997
      %v2217 = vpop.f32.mrb[0].mxu0
      %v2218 = vadd.f32 0.0, %v2217
      %v2219 = vpop.f32.mrb[0].mxu0
      %2220 = vmatprep.mubr.f32.mxu0 0.0
      %2221 = vmatmul.mubr.f32.gmra.mrb[0].mxu0 %v2000
      %v2222 = vpop.f32.mrb[0].mxu0
      %v2223 = vadd.f32 0.0, %v2222
      %v2224 = vpop.f32.mrb[0].mxu0
      %2225 = vmatprep.mubr.f32.mxu0 0.0
      %2226 = vmatmul.mubr.f32.gmra.mrb[0].mxu0 %v2003
      %v2227 = vpop.f32.mrb[0].mxu0
      %v2228 = vadd.f32 0.0, %v2227
      %v2229 = vpop.f32.mrb[0].mxu0
      %2230 = vmatprep.mubr.f32.mxu0 0.0
      %2231 = vmatmul.mubr.f32.gmra.mrb[0].mxu0 %v2006
      %v2232 = vpop.f32.mrb[0].mxu0
      %v2233 = vadd.f32 0.0, %v2232
      %v2234 = vpop.f32.mrb[0].mxu0
      %2235 = vmatprep.mubr.f32.mxu0 0.0
      %2236 = vmatmul.mubr.f32.gmra.mrb[0].mxu0 %v2009
      %v2237 = vpop.f32.mrb[0].mxu0
      %v2238 = vadd.f32 0.0, %v2237
      %v2239 = vpop.f32.mrb[0].mxu0
      %2240 = vmatprep.mubr.f32.mxu0 0.0
      %2241 = vmatmul.mubr.f32.gmra.mrb[0].mxu0 %v2012
      %v2242 = vpop.f32.mrb[0].mxu0
      %v2243 = vadd.f32 0.0, %v2242
      %v2244 = vpop.f32.mrb[0].mxu0
      %2245 = vmatprep.mubr.f32.mxu0 0.0
      %2246 = vmatmul.mubr.f32.gmra.mrb[0].mxu0 %v2015
      %v2247 = vpop.f32.mrb[0].mxu0
      %v2248 = vadd.f32 0.0, %v2247
      %v2249 = vpop.f32.mrb[0].mxu0
      %2250 = vmatprep.mubr.f32.mxu0 0.0
      %2251 = vmatmul.mubr.f32.gmra.mrb[0].mxu0 %v2018
      %v2252 = vpop.f32.mrb[0].mxu0
      %v2253 = vadd.f32 0.0, %v2252
      %v2254 = vpop.f32.mrb[0].mxu0
      %2255 = vmatprep.mubr.f32.mxu0 0.0
      %2256 = vmatmul.mubr.f32.gmra.mrb[0].mxu0 %v2021
      %v2257 = vpop.f32.mrb[0].mxu0
      %v2258 = vadd.f32 0.0, %v2257
      %v2259 = vpop.f32.mrb[0].mxu0
      %2260 = vmatprep.mubr.f32.mxu0 0.0
      %2261 = vmatmul.mubr.f32.gmra.mrb[0].mxu0 %v2024
      %v2262 = vpop.f32.mrb[0].mxu0
      %v2263 = vadd.f32 0.0, %v2262
      %v2264 = vpop.f32.mrb[0].mxu0
      %2265 = vmatprep.mubr.f32.mxu0 0.0
      %2266 = vmatmul.mubr.f32.gmra.mrb[0].mxu0 %v2027
      %v2267 = vpop.f32.mrb[0].mxu0
      %v2268 = vadd.f32 0.0, %v2267
      %v2269 = vpop.f32.mrb[0].mxu0
      %2270 = vmatprep.mubr.f32.mxu0 0.0
      %2271 = vmatmul.mubr.f32.gmra.mrb[0].mxu0 %v2030
      %v2272 = vpop.f32.mrb[0].mxu0
      %v2273 = vadd.f32 0.0, %v2272
      %v2274 = vpop.f32.mrb[0].mxu0
      %2275 = vmatprep.mubr.f32.mxu0 0.0
      %2276 = vmatmul.mubr.f32.gmra.mrb[0].mxu0 %v2033
      %v2277 = vpop.f32.mrb[0].mxu0
      %v2278 = vadd.f32 0.0, %v2277
      %v2279 = vpop.f32.mrb[0].mxu0
      %2280 = vmatprep.mubr.f32.mxu0 0.0
      %2281 = vmatmul.mubr.f32.gmra.mrb[0].mxu0 %v2036
      %v2282 = vpop.f32.mrb[0].mxu0
      %v2283 = vadd.f32 0.0, %v2282
      %v2284 = vpop.f32.mrb[0].mxu0
      %2285 = vdwg.mxu0
      %v2286 = vadd.f32 %v1714, %v2108
      %v2287 = vadd.f32 %v1719, %v2113
      %v2288 = vadd.f32 %v1724, %v2118
      %v2289 = vadd.f32 %v1729, %v2123
      %v2290 = vadd.f32 %v1734, %v2128
      %v2291 = vadd.f32 %v1739, %v2133
      %v2292 = vadd.f32 %v1744, %v2138
      %v2293 = vadd.f32 %v1749, %v2143
      %v2294 = vadd.f32 %v1754, %v2148
      %v2295 = vadd.f32 %v1759, %v2153
      %v2296 = vadd.f32 %v1764, %v2158
      %v2297 = vadd.f32 %v1769, %v2163
      %v2298 = vadd.f32 %v1774, %v2168
      %v2299 = vadd.f32 %v1779, %v2173
      %v2300 = vadd.f32 %v1784, %v2178
      %v2301 = vadd.f32 %v1789, %v2183
      %v2302 = vadd.f32 %v1794, %v2188
      %v2303 = vadd.f32 %v1799, %v2193
      %v2304 = vadd.f32 %v1804, %v2198
      %v2305 = vadd.f32 %v1809, %v2203
      %v2306 = vadd.f32 %v1814, %v2208
      %v2307 = vadd.f32 %v1819, %v2213
      %v2308 = vadd.f32 %v1824, %v2218
      %v2309 = vadd.f32 %v1829, %v2223
      %v2310 = vadd.f32 %v1834, %v2228
      %v2311 = vadd.f32 %v1839, %v2233
      %v2312 = vadd.f32 %v1844, %v2238
      %v2313 = vadd.f32 %v1849, %v2243
      %v2314 = vadd.f32 %v1854, %v2248
      %v2315 = vadd.f32 %v1859, %v2253
      %v2316 = vadd.f32 %v1864, %v2258
      %v2317 = vadd.f32 %v1869, %v2263
      %v2318 = vadd.f32 %v1874, %v2268
      %v2319 = vadd.f32 %v1879, %v2273
      %v2320 = vadd.f32 %v1884, %v2278
      %v2321 = vadd.f32 %v1889, %v2283
      %v2322 = vld [vmem:[#allocation2 + $0x17] sm:$0xff]
      %v2323 = vld [vmem:[#allocation2 + $0x1f] sm:$0xff]
      %v2324 = vld [vmem:[#allocation2 + $0x27] sm:$0xff]
      %v2325 = vld [vmem:[#allocation2 + $0x2f] sm:$0xff]
      %v2326 = vld [vmem:[#allocation2 + $0x37] sm:$0xff]
      %v2327 = vld [vmem:[#allocation2 + $0x3f] sm:$0xff]
      %v2328 = vld [vmem:[#allocation2 + $0x47] sm:$0xff]
      %v2329 = vld [vmem:[#allocation2 + $0x4f] sm:$0xff]
      %v2330 = vld [vmem:[#allocation2 + $0x57] sm:$0xff]
      %v2331 = vld [vmem:[#allocation2 + $0x5f] sm:$0xff]
      %v2332 = vld [vmem:[#allocation2 + $0x67] sm:$0xff]
      %v2333 = vld [vmem:[#allocation2 + $0x6f] sm:$0xff]
      %v2334 = vld [vmem:[#allocation2 + $0x77] sm:$0xff]
      %v2335 = vld [vmem:[#allocation2 + $0x7f] sm:$0xff]
      %v2336 = vld [vmem:[#allocation2 + $0x87] sm:$0xff]
      %v2337 = vld [vmem:[#allocation2 + $0x8f] sm:$0xff]
      %v2338 = vld [vmem:[#allocation2 + $0x97] sm:$0xff]
      %v2339 = vld [vmem:[#allocation2 + $0x9f] sm:$0xff]
      %v2340 = vld [vmem:[#allocation2 + $0xa7] sm:$0xff]
      %v2341 = vld [vmem:[#allocation2 + $0xaf] sm:$0xff]
      %v2342 = vld [vmem:[#allocation2 + $0xb7] sm:$0xff]
      %v2343 = vld [vmem:[#allocation2 + $0xbf] sm:$0xff]
      %v2344 = vld [vmem:[#allocation2 + $0xc7] sm:$0xff]
      %v2345 = vld [vmem:[#allocation2 + $0xcf] sm:$0xff]
      %v2346 = vld [vmem:[#allocation2 + $0xd7] sm:$0xff]
      %v2347 = vld [vmem:[#allocation2 + $0xdf] sm:$0xff]
      %v2348 = vld [vmem:[#allocation2 + $0xe7] sm:$0xff]
      %v2349 = vld [vmem:[#allocation2 + $0xef] sm:$0xff]
      %v2350 = vld [vmem:[#allocation2 + $0xf7] sm:$0xff]
      %v2351 = vld [vmem:[#allocation2 + $0xff] sm:$0xff]
      %v2352 = vld [vmem:[#allocation2 + $0x107] sm:$0xff]
      %v2353 = vld [vmem:[#allocation2 + $0x10f] sm:$0xff]
      %v2354 = vld [vmem:[#allocation2 + $0x117] sm:$0xff]
      %v2355 = vld [vmem:[#allocation2 + $0x11f] sm:$0xff]
      %v2356 = vld [vmem:[#allocation2 + $0x127] sm:$0xff]
      %v2357 = vld [vmem:[#allocation2 + $0x12f] sm:$0xff]
      %s2358 = scalar_lea.vmem %s2, 12
      %v2359 = vld [vmem:[%s2358] sm:$0xf]
      %v2361 = vsel %vm1025, %v2322, 0
      %v2364 = vsel %vm1025, %v2323, 0
      %v2367 = vsel %vm1025, %v2324, 0
      %v2370 = vsel %vm1025, %v2325, 0
      %v2373 = vsel %vm1025, %v2326, 0
      %v2376 = vsel %vm1025, %v2327, 0
      %v2379 = vsel %vm1025, %v2328, 0
      %v2382 = vsel %vm1025, %v2329, 0
      %v2385 = vsel %vm1025, %v2330, 0
      %v2388 = vsel %vm1025, %v2331, 0
      %v2391 = vsel %vm1025, %v2332, 0
      %v2394 = vsel %vm1025, %v2333, 0
      %v2397 = vsel %vm1025, %v2334, 0
      %v2400 = vsel %vm1025, %v2335, 0
      %v2403 = vsel %vm1025, %v2336, 0
      %v2406 = vsel %vm1025, %v2337, 0
      %v2409 = vsel %vm1025, %v2338, 0
      %v2412 = vsel %vm1025, %v2339, 0
      %v2415 = vsel %vm1025, %v2340, 0
      %v2418 = vsel %vm1025, %v2341, 0
      %v2421 = vsel %vm1025, %v2342, 0
      %v2424 = vsel %vm1025, %v2343, 0
      %v2427 = vsel %vm1025, %v2344, 0
      %v2430 = vsel %vm1025, %v2345, 0
      %v2433 = vsel %vm1025, %v2346, 0
      %v2436 = vsel %vm1025, %v2347, 0
      %v2439 = vsel %vm1025, %v2348, 0
      %v2442 = vsel %vm1025, %v2349, 0
      %v2445 = vsel %vm1025, %v2350, 0
      %v2448 = vsel %vm1025, %v2351, 0
      %v2451 = vsel %vm1025, %v2352, 0
      %v2454 = vsel %vm1025, %v2353, 0
      %v2457 = vsel %vm1025, %v2354, 0
      %v2460 = vsel %vm1025, %v2355, 0
      %v2463 = vsel %vm1025, %v2356, 0
      %v2466 = vsel %vm1025, %v2357, 0
      %v2469 = vsel %vm1287, %v2359, 0
      %2471 = vmatprep.subr.mxu0 0.0
      %2472 = vmatpush1.msra.mxu0 %v2469
      %2473 = vmatprep.subr.mxu0 0.0
      %2474 = vmatpush1.msra.mxu0 0.0
      %2475 = vmatprep.subr.mxu0 0.0
      %2476 = vmatpush1.msra.mxu0 0.0
      %2477 = vmatprep.subr.mxu0 0.0
      %2478 = vmatpush1.msra.mxu0 0.0
      %2479 = vmatprep.subr.mxu0 0.0
      %2480 = vmatpush1.msra.mxu0 0.0
      %2481 = vmatprep.subr.mxu0 0.0
      %2482 = vmatpush1.msra.mxu0 0.0
      %2483 = vmatprep.subr.mxu0 0.0
      %2484 = vmatpush1.msra.mxu0 0.0
      %2485 = vmatprep.subr.mxu0 0.0
      %2486 = vmatpush1.msra.mxu0 0.0
      %2487 = vmatprep.subr.mxu0 0.0
      %2488 = vmatpush1.msra.mxu0 0.0
      %2489 = vmatprep.subr.mxu0 0.0
      %2490 = vmatpush1.msra.mxu0 0.0
      %2491 = vmatprep.subr.mxu0 0.0
      %2492 = vmatpush1.msra.mxu0 0.0
      %2493 = vmatprep.subr.mxu0 0.0
      %2494 = vmatpush1.msra.mxu0 0.0
      %2495 = vmatprep.subr.mxu0 0.0
      %2496 = vmatpush1.msra.mxu0 0.0
      %2497 = vmatprep.subr.mxu0 0.0
      %2498 = vmatpush1.msra.mxu0 0.0
      %2499 = vmatprep.subr.mxu0 0.0
      %2500 = vmatpush1.msra.mxu0 0.0
      %2501 = vmatprep.subr.mxu0 0.0
      %2502 = vmatpush1.msra.mxu0 0.0
      %2503 = vmatprep.subr.mxu0 0.0
      %2504 = vmatpush1.msra.mxu0 0.0
      %2505 = vmatprep.subr.mxu0 0.0
      %2506 = vmatpush1.msra.mxu0 0.0
      %2507 = vmatprep.subr.mxu0 0.0
      %2508 = vmatpush1.msra.mxu0 0.0
      %2509 = vmatprep.subr.mxu0 0.0
      %2510 = vmatpush1.msra.mxu0 0.0
      %2511 = vmatprep.subr.mxu0 0.0
      %2512 = vmatpush1.msra.mxu0 0.0
      %2513 = vmatprep.subr.mxu0 0.0
      %2514 = vmatpush1.msra.mxu0 0.0
      %2515 = vmatprep.subr.mxu0 0.0
      %2516 = vmatpush1.msra.mxu0 0.0
      %2517 = vmatprep.subr.mxu0 0.0
      %2518 = vmatpush1.msra.mxu0 0.0
      %2519 = vmatprep.subr.mxu0 0.0
      %2520 = vmatpush1.msra.mxu0 0.0
      %2521 = vmatprep.subr.mxu0 0.0
      %2522 = vmatpush1.msra.mxu0 0.0
      %2523 = vmatprep.subr.mxu0 0.0
      %2524 = vmatpush1.msra.mxu0 0.0
      %2525 = vmatprep.subr.mxu0 0.0
      %2526 = vmatpush1.msra.mxu0 0.0
      %2527 = vmatprep.subr.mxu0 0.0
      %2528 = vmatpush1.msra.mxu0 0.0
      %2529 = vmatprep.subr.mxu0 0.0
      %2530 = vmatpush1.msra.mxu0 0.0
      %2531 = vmatprep.subr.mxu0 0.0
      %2532 = vmatpush1.msra.mxu0 0.0
      %2533 = vmatprep.subr.mxu0 0.0
      %2534 = vmatpush1.msra.mxu0 0.0
      %2535 = vmatprep.mubr.f32.mxu0 0.0
      %2536 = vmatmul.mubr.f32.gmra.mrb[0].mxu0 %v2361
      %v2537 = vpop.f32.mrb[0].mxu0
      %v2538 = vadd.f32 0.0, %v2537
      %v2539 = vpop.f32.mrb[0].mxu0
      %2540 = vmatprep.mubr.f32.mxu0 0.0
      %2541 = vmatmul.mubr.f32.gmra.mrb[0].mxu0 %v2364
      %v2542 = vpop.f32.mrb[0].mxu0
      %v2543 = vadd.f32 0.0, %v2542
      %v2544 = vpop.f32.mrb[0].mxu0
      %2545 = vmatprep.mubr.f32.mxu0 0.0
      %2546 = vmatmul.mubr.f32.gmra.mrb[0].mxu0 %v2367
      %v2547 = vpop.f32.mrb[0].mxu0
      %v2548 = vadd.f32 0.0, %v2547
      %v2549 = vpop.f32.mrb[0].mxu0
      %2550 = vmatprep.mubr.f32.mxu0 0.0
      %2551 = vmatmul.mubr.f32.gmra.mrb[0].mxu0 %v2370
      %v2552 = vpop.f32.mrb[0].mxu0
      %v2553 = vadd.f32 0.0, %v2552
      %v2554 = vpop.f32.mrb[0].mxu0
      %2555 = vmatprep.mubr.f32.mxu0 0.0
      %2556 = vmatmul.mubr.f32.gmra.mrb[0].mxu0 %v2373
      %v2557 = vpop.f32.mrb[0].mxu0
      %v2558 = vadd.f32 0.0, %v2557
      %v2559 = vpop.f32.mrb[0].mxu0
      %2560 = vmatprep.mubr.f32.mxu0 0.0
      %2561 = vmatmul.mubr.f32.gmra.mrb[0].mxu0 %v2376
      %v2562 = vpop.f32.mrb[0].mxu0
      %v2563 = vadd.f32 0.0, %v2562
      %v2564 = vpop.f32.mrb[0].mxu0
      %2565 = vmatprep.mubr.f32.mxu0 0.0
      %2566 = vmatmul.mubr.f32.gmra.mrb[0].mxu0 %v2379
      %v2567 = vpop.f32.mrb[0].mxu0
      %v2568 = vadd.f32 0.0, %v2567
      %v2569 = vpop.f32.mrb[0].mxu0
      %2570 = vmatprep.mubr.f32.mxu0 0.0
      %2571 = vmatmul.mubr.f32.gmra.mrb[0].mxu0 %v2382
      %v2572 = vpop.f32.mrb[0].mxu0
      %v2573 = vadd.f32 0.0, %v2572
      %v2574 = vpop.f32.mrb[0].mxu0
      %2575 = vmatprep.mubr.f32.mxu0 0.0
      %2576 = vmatmul.mubr.f32.gmra.mrb[0].mxu0 %v2385
      %v2577 = vpop.f32.mrb[0].mxu0
      %v2578 = vadd.f32 0.0, %v2577
      %v2579 = vpop.f32.mrb[0].mxu0
      %2580 = vmatprep.mubr.f32.mxu0 0.0
      %2581 = vmatmul.mubr.f32.gmra.mrb[0].mxu0 %v2388
      %v2582 = vpop.f32.mrb[0].mxu0
      %v2583 = vadd.f32 0.0, %v2582
      %v2584 = vpop.f32.mrb[0].mxu0
      %2585 = vmatprep.mubr.f32.mxu0 0.0
      %2586 = vmatmul.mubr.f32.gmra.mrb[0].mxu0 %v2391
      %v2587 = vpop.f32.mrb[0].mxu0
      %v2588 = vadd.f32 0.0, %v2587
      %v2589 = vpop.f32.mrb[0].mxu0
      %2590 = vmatprep.mubr.f32.mxu0 0.0
      %2591 = vmatmul.mubr.f32.gmra.mrb[0].mxu0 %v2394
      %v2592 = vpop.f32.mrb[0].mxu0
      %v2593 = vadd.f32 0.0, %v2592
      %v2594 = vpop.f32.mrb[0].mxu0
      %2595 = vmatprep.mubr.f32.mxu0 0.0
      %2596 = vmatmul.mubr.f32.gmra.mrb[0].mxu0 %v2397
      %v2597 = vpop.f32.mrb[0].mxu0
      %v2598 = vadd.f32 0.0, %v2597
      %v2599 = vpop.f32.mrb[0].mxu0
      %2600 = vmatprep.mubr.f32.mxu0 0.0
      %2601 = vmatmul.mubr.f32.gmra.mrb[0].mxu0 %v2400
      %v2602 = vpop.f32.mrb[0].mxu0
      %v2603 = vadd.f32 0.0, %v2602
      %v2604 = vpop.f32.mrb[0].mxu0
      %2605 = vmatprep.mubr.f32.mxu0 0.0
      %2606 = vmatmul.mubr.f32.gmra.mrb[0].mxu0 %v2403
      %v2607 = vpop.f32.mrb[0].mxu0
      %v2608 = vadd.f32 0.0, %v2607
      %v2609 = vpop.f32.mrb[0].mxu0
      %2610 = vmatprep.mubr.f32.mxu0 0.0
      %2611 = vmatmul.mubr.f32.gmra.mrb[0].mxu0 %v2406
      %v2612 = vpop.f32.mrb[0].mxu0
      %v2613 = vadd.f32 0.0, %v2612
      %v2614 = vpop.f32.mrb[0].mxu0
      %2615 = vmatprep.mubr.f32.mxu0 0.0
      %2616 = vmatmul.mubr.f32.gmra.mrb[0].mxu0 %v2409
      %v2617 = vpop.f32.mrb[0].mxu0
      %v2618 = vadd.f32 0.0, %v2617
      %v2619 = vpop.f32.mrb[0].mxu0
      %2620 = vmatprep.mubr.f32.mxu0 0.0
      %2621 = vmatmul.mubr.f32.gmra.mrb[0].mxu0 %v2412
      %v2622 = vpop.f32.mrb[0].mxu0
      %v2623 = vadd.f32 0.0, %v2622
      %v2624 = vpop.f32.mrb[0].mxu0
      %2625 = vmatprep.mubr.f32.mxu0 0.0
      %2626 = vmatmul.mubr.f32.gmra.mrb[0].mxu0 %v2415
      %v2627 = vpop.f32.mrb[0].mxu0
      %v2628 = vadd.f32 0.0, %v2627
      %v2629 = vpop.f32.mrb[0].mxu0
      %2630 = vmatprep.mubr.f32.mxu0 0.0
      %2631 = vmatmul.mubr.f32.gmra.mrb[0].mxu0 %v2418
      %v2632 = vpop.f32.mrb[0].mxu0
      %v2633 = vadd.f32 0.0, %v2632
      %v2634 = vpop.f32.mrb[0].mxu0
      %2635 = vmatprep.mubr.f32.mxu0 0.0
      %2636 = vmatmul.mubr.f32.gmra.mrb[0].mxu0 %v2421
      %v2637 = vpop.f32.mrb[0].mxu0
      %v2638 = vadd.f32 0.0, %v2637
      %v2639 = vpop.f32.mrb[0].mxu0
      %2640 = vmatprep.mubr.f32.mxu0 0.0
      %2641 = vmatmul.mubr.f32.gmra.mrb[0].mxu0 %v2424
      %v2642 = vpop.f32.mrb[0].mxu0
      %v2643 = vadd.f32 0.0, %v2642
      %v2644 = vpop.f32.mrb[0].mxu0
      %2645 = vmatprep.mubr.f32.mxu0 0.0
      %2646 = vmatmul.mubr.f32.gmra.mrb[0].mxu0 %v2427
      %v2647 = vpop.f32.mrb[0].mxu0
      %v2648 = vadd.f32 0.0, %v2647
      %v2649 = vpop.f32.mrb[0].mxu0
      %2650 = vmatprep.mubr.f32.mxu0 0.0
      %2651 = vmatmul.mubr.f32.gmra.mrb[0].mxu0 %v2430
      %v2652 = vpop.f32.mrb[0].mxu0
      %v2653 = vadd.f32 0.0, %v2652
      %v2654 = vpop.f32.mrb[0].mxu0
      %2655 = vmatprep.mubr.f32.mxu0 0.0
      %2656 = vmatmul.mubr.f32.gmra.mrb[0].mxu0 %v2433
      %v2657 = vpop.f32.mrb[0].mxu0
      %v2658 = vadd.f32 0.0, %v2657
      %v2659 = vpop.f32.mrb[0].mxu0
      %2660 = vmatprep.mubr.f32.mxu0 0.0
      %2661 = vmatmul.mubr.f32.gmra.mrb[0].mxu0 %v2436
      %v2662 = vpop.f32.mrb[0].mxu0
      %v2663 = vadd.f32 0.0, %v2662
      %v2664 = vpop.f32.mrb[0].mxu0
      %2665 = vmatprep.mubr.f32.mxu0 0.0
      %2666 = vmatmul.mubr.f32.gmra.mrb[0].mxu0 %v2439
      %v2667 = vpop.f32.mrb[0].mxu0
      %v2668 = vadd.f32 0.0, %v2667
      %v2669 = vpop.f32.mrb[0].mxu0
      %2670 = vmatprep.mubr.f32.mxu0 0.0
      %2671 = vmatmul.mubr.f32.gmra.mrb[0].mxu0 %v2442
      %v2672 = vpop.f32.mrb[0].mxu0
      %v2673 = vadd.f32 0.0, %v2672
      %v2674 = vpop.f32.mrb[0].mxu0
      %2675 = vmatprep.mubr.f32.mxu0 0.0
      %2676 = vmatmul.mubr.f32.gmra.mrb[0].mxu0 %v2445
      %v2677 = vpop.f32.mrb[0].mxu0
      %v2678 = vadd.f32 0.0, %v2677
      %v2679 = vpop.f32.mrb[0].mxu0
      %2680 = vmatprep.mubr.f32.mxu0 0.0
      %2681 = vmatmul.mubr.f32.gmra.mrb[0].mxu0 %v2448
      %v2682 = vpop.f32.mrb[0].mxu0
      %v2683 = vadd.f32 0.0, %v2682
      %v2684 = vpop.f32.mrb[0].mxu0
      %2685 = vmatprep.mubr.f32.mxu0 0.0
      %2686 = vmatmul.mubr.f32.gmra.mrb[0].mxu0 %v2451
      %v2687 = vpop.f32.mrb[0].mxu0
      %v2688 = vadd.f32 0.0, %v2687
      %v2689 = vpop.f32.mrb[0].mxu0
      %2690 = vmatprep.mubr.f32.mxu0 0.0
      %2691 = vmatmul.mubr.f32.gmra.mrb[0].mxu0 %v2454
      %v2692 = vpop.f32.mrb[0].mxu0
      %v2693 = vadd.f32 0.0, %v2692
      %v2694 = vpop.f32.mrb[0].mxu0
      %2695 = vmatprep.mubr.f32.mxu0 0.0
      %2696 = vmatmul.mubr.f32.gmra.mrb[0].mxu0 %v2457
      %v2697 = vpop.f32.mrb[0].mxu0
      %v2698 = vadd.f32 0.0, %v2697
      %v2699 = vpop.f32.mrb[0].mxu0
      %2700 = vmatprep.mubr.f32.mxu0 0.0
      %2701 = vmatmul.mubr.f32.gmra.mrb[0].mxu0 %v2460
      %v2702 = vpop.f32.mrb[0].mxu0
      %v2703 = vadd.f32 0.0, %v2702
      %v2704 = vpop.f32.mrb[0].mxu0
      %2705 = vmatprep.mubr.f32.mxu0 0.0
      %2706 = vmatmul.mubr.f32.gmra.mrb[0].mxu0 %v2463
      %v2707 = vpop.f32.mrb[0].mxu0
      %v2708 = vadd.f32 0.0, %v2707
      %v2709 = vpop.f32.mrb[0].mxu0
      %2710 = vmatprep.mubr.f32.mxu0 0.0
      %2711 = vmatmul.mubr.f32.gmra.mrb[0].mxu0 %v2466
      %v2712 = vpop.f32.mrb[0].mxu0
      %v2713 = vadd.f32 0.0, %v2712
      %v2714 = vpop.f32.mrb[0].mxu0
      %2715 = vdwg.mxu0
      %v2716 = vadd.f32 %v2286, %v2538
      %v2717 = vadd.f32 %v2287, %v2543
      %v2718 = vadd.f32 %v2288, %v2548
      %v2719 = vadd.f32 %v2289, %v2553
      %v2720 = vadd.f32 %v2290, %v2558
      %v2721 = vadd.f32 %v2291, %v2563
      %v2722 = vadd.f32 %v2292, %v2568
      %v2723 = vadd.f32 %v2293, %v2573
      %v2724 = vadd.f32 %v2294, %v2578
      %v2725 = vadd.f32 %v2295, %v2583
      %v2726 = vadd.f32 %v2296, %v2588
      %v2727 = vadd.f32 %v2297, %v2593
      %v2728 = vadd.f32 %v2298, %v2598
      %v2729 = vadd.f32 %v2299, %v2603
      %v2730 = vadd.f32 %v2300, %v2608
      %v2731 = vadd.f32 %v2301, %v2613
      %v2732 = vadd.f32 %v2302, %v2618
      %v2733 = vadd.f32 %v2303, %v2623
      %v2734 = vadd.f32 %v2304, %v2628
      %v2735 = vadd.f32 %v2305, %v2633
      %v2736 = vadd.f32 %v2306, %v2638
      %v2737 = vadd.f32 %v2307, %v2643
      %v2738 = vadd.f32 %v2308, %v2648
      %v2739 = vadd.f32 %v2309, %v2653
      %v2740 = vadd.f32 %v2310, %v2658
      %v2741 = vadd.f32 %v2311, %v2663
      %v2742 = vadd.f32 %v2312, %v2668
      %v2743 = vadd.f32 %v2313, %v2673
      %v2744 = vadd.f32 %v2314, %v2678
      %v2745 = vadd.f32 %v2315, %v2683
      %v2746 = vadd.f32 %v2316, %v2688
      %v2747 = vadd.f32 %v2317, %v2693
      %v2748 = vadd.f32 %v2318, %v2698
      %v2749 = vadd.f32 %v2319, %v2703
      %v2750 = vadd.f32 %v2320, %v2708
      %v2751 = vadd.f32 %v2321, %v2713
      %v2752 = vld [vmem:[#allocation2 + $0x18] sm:$0xff]
      %v2753 = vld [vmem:[#allocation2 + $0x20] sm:$0xff]
      %v2754 = vld [vmem:[#allocation2 + $0x28] sm:$0xff]
      %v2755 = vld [vmem:[#allocation2 + $0x30] sm:$0xff]
      %v2756 = vld [vmem:[#allocation2 + $0x38] sm:$0xff]
      %v2757 = vld [vmem:[#allocation2 + $0x40] sm:$0xff]
      %v2758 = vld [vmem:[#allocation2 + $0x48] sm:$0xff]
      %v2759 = vld [vmem:[#allocation2 + $0x50] sm:$0xff]
      %v2760 = vld [vmem:[#allocation2 + $0x58] sm:$0xff]
      %v2761 = vld [vmem:[#allocation2 + $0x60] sm:$0xff]
      %v2762 = vld [vmem:[#allocation2 + $0x68] sm:$0xff]
      %v2763 = vld [vmem:[#allocation2 + $0x70] sm:$0xff]
      %v2764 = vld [vmem:[#allocation2 + $0x78] sm:$0xff]
      %v2765 = vld [vmem:[#allocation2 + $0x80] sm:$0xff]
      %v2766 = vld [vmem:[#allocation2 + $0x88] sm:$0xff]
      %v2767 = vld [vmem:[#allocation2 + $0x90] sm:$0xff]
      %v2768 = vld [vmem:[#allocation2 + $0x98] sm:$0xff]
      %v2769 = vld [vmem:[#allocation2 + $0xa0] sm:$0xff]
      %v2770 = vld [vmem:[#allocation2 + $0xa8] sm:$0xff]
      %v2771 = vld [vmem:[#allocation2 + $0xb0] sm:$0xff]
      %v2772 = vld [vmem:[#allocation2 + $0xb8] sm:$0xff]
      %v2773 = vld [vmem:[#allocation2 + $0xc0] sm:$0xff]
      %v2774 = vld [vmem:[#allocation2 + $0xc8] sm:$0xff]
      %v2775 = vld [vmem:[#allocation2 + $0xd0] sm:$0xff]
      %v2776 = vld [vmem:[#allocation2 + $0xd8] sm:$0xff]
      %v2777 = vld [vmem:[#allocation2 + $0xe0] sm:$0xff]
      %v2778 = vld [vmem:[#allocation2 + $0xe8] sm:$0xff]
      %v2779 = vld [vmem:[#allocation2 + $0xf0] sm:$0xff]
      %v2780 = vld [vmem:[#allocation2 + $0xf8] sm:$0xff]
      %v2781 = vld [vmem:[#allocation2 + $0x100] sm:$0xff]
      %v2782 = vld [vmem:[#allocation2 + $0x108] sm:$0xff]
      %v2783 = vld [vmem:[#allocation2 + $0x110] sm:$0xff]
      %v2784 = vld [vmem:[#allocation2 + $0x118] sm:$0xff]
      %v2785 = vld [vmem:[#allocation2 + $0x120] sm:$0xff]
      %v2786 = vld [vmem:[#allocation2 + $0x128] sm:$0xff]
      %v2787 = vld [vmem:[#allocation2 + $0x130] sm:$0xff]
      %s2788 = scalar_lea.vmem %s2, 16
      %v2789 = vld [vmem:[%s2788] sm:$0xf]
      %v2791 = vsel %vm1025, %v2752, 0
      %v2794 = vsel %vm1025, %v2753, 0
      %v2797 = vsel %vm1025, %v2754, 0
      %v2800 = vsel %vm1025, %v2755, 0
      %v2803 = vsel %vm1025, %v2756, 0
      %v2806 = vsel %vm1025, %v2757, 0
      %v2809 = vsel %vm1025, %v2758, 0
      %v2812 = vsel %vm1025, %v2759, 0
      %v2815 = vsel %vm1025, %v2760, 0
      %v2818 = vsel %vm1025, %v2761, 0
      %v2821 = vsel %vm1025, %v2762, 0
      %v2824 = vsel %vm1025, %v2763, 0
      %v2827 = vsel %vm1025, %v2764, 0
      %v2830 = vsel %vm1025, %v2765, 0
      %v2833 = vsel %vm1025, %v2766, 0
      %v2836 = vsel %vm1025, %v2767, 0
      %v2839 = vsel %vm1025, %v2768, 0
      %v2842 = vsel %vm1025, %v2769, 0
      %v2845 = vsel %vm1025, %v2770, 0
      %v2848 = vsel %vm1025, %v2771, 0
      %v2851 = vsel %vm1025, %v2772, 0
      %v2854 = vsel %vm1025, %v2773, 0
      %v2857 = vsel %vm1025, %v2774, 0
      %v2860 = vsel %vm1025, %v2775, 0
      %v2863 = vsel %vm1025, %v2776, 0
      %v2866 = vsel %vm1025, %v2777, 0
      %v2869 = vsel %vm1025, %v2778, 0
      %v2872 = vsel %vm1025, %v2779, 0
      %v2875 = vsel %vm1025, %v2780, 0
      %v2878 = vsel %vm1025, %v2781, 0
      %v2881 = vsel %vm1025, %v2782, 0
      %v2884 = vsel %vm1025, %v2783, 0
      %v2887 = vsel %vm1025, %v2784, 0
      %v2890 = vsel %vm1025, %v2785, 0
      %v2893 = vsel %vm1025, %v2786, 0
      %v2896 = vsel %vm1025, %v2787, 0
      %v2899 = vsel %vm1287, %v2789, 0
      %2901 = vmatprep.subr.mxu0 0.0
      %2902 = vmatpush1.msra.mxu0 %v2899
      %2903 = vmatprep.subr.mxu0 0.0
      %2904 = vmatpush1.msra.mxu0 0.0
      %2905 = vmatprep.subr.mxu0 0.0
      %2906 = vmatpush1.msra.mxu0 0.0
      %2907 = vmatprep.subr.mxu0 0.0
      %2908 = vmatpush1.msra.mxu0 0.0
      %2909 = vmatprep.subr.mxu0 0.0
      %2910 = vmatpush1.msra.mxu0 0.0
      %2911 = vmatprep.subr.mxu0 0.0
      %2912 = vmatpush1.msra.mxu0 0.0
      %2913 = vmatprep.subr.mxu0 0.0
      %2914 = vmatpush1.msra.mxu0 0.0
      %2915 = vmatprep.subr.mxu0 0.0
      %2916 = vmatpush1.msra.mxu0 0.0
      %2917 = vmatprep.subr.mxu0 0.0
      %2918 = vmatpush1.msra.mxu0 0.0
      %2919 = vmatprep.subr.mxu0 0.0
      %2920 = vmatpush1.msra.mxu0 0.0
      %2921 = vmatprep.subr.mxu0 0.0
      %2922 = vmatpush1.msra.mxu0 0.0
      %2923 = vmatprep.subr.mxu0 0.0
      %2924 = vmatpush1.msra.mxu0 0.0
      %2925 = vmatprep.subr.mxu0 0.0
      %2926 = vmatpush1.msra.mxu0 0.0
      %2927 = vmatprep.subr.mxu0 0.0
      %2928 = vmatpush1.msra.mxu0 0.0
      %2929 = vmatprep.subr.mxu0 0.0
      %2930 = vmatpush1.msra.mxu0 0.0
      %2931 = vmatprep.subr.mxu0 0.0
      %2932 = vmatpush1.msra.mxu0 0.0
      %2933 = vmatprep.subr.mxu0 0.0
      %2934 = vmatpush1.msra.mxu0 0.0
      %2935 = vmatprep.subr.mxu0 0.0
      %2936 = vmatpush1.msra.mxu0 0.0
      %2937 = vmatprep.subr.mxu0 0.0
      %2938 = vmatpush1.msra.mxu0 0.0
      %2939 = vmatprep.subr.mxu0 0.0
      %2940 = vmatpush1.msra.mxu0 0.0
      %2941 = vmatprep.subr.mxu0 0.0
      %2942 = vmatpush1.msra.mxu0 0.0
      %2943 = vmatprep.subr.mxu0 0.0
      %2944 = vmatpush1.msra.mxu0 0.0
      %2945 = vmatprep.subr.mxu0 0.0
      %2946 = vmatpush1.msra.mxu0 0.0
      %2947 = vmatprep.subr.mxu0 0.0
      %2948 = vmatpush1.msra.mxu0 0.0
      %2949 = vmatprep.subr.mxu0 0.0
      %2950 = vmatpush1.msra.mxu0 0.0
      %2951 = vmatprep.subr.mxu0 0.0
      %2952 = vmatpush1.msra.mxu0 0.0
      %2953 = vmatprep.subr.mxu0 0.0
      %2954 = vmatpush1.msra.mxu0 0.0
      %2955 = vmatprep.subr.mxu0 0.0
      %2956 = vmatpush1.msra.mxu0 0.0
      %2957 = vmatprep.subr.mxu0 0.0
      %2958 = vmatpush1.msra.mxu0 0.0
      %2959 = vmatprep.subr.mxu0 0.0
      %2960 = vmatpush1.msra.mxu0 0.0
      %2961 = vmatprep.subr.mxu0 0.0
      %2962 = vmatpush1.msra.mxu0 0.0
      %2963 = vmatprep.subr.mxu0 0.0
      %2964 = vmatpush1.msra.mxu0 0.0
      %2965 = vmatprep.mubr.f32.mxu0 0.0
      %2966 = vmatmul.mubr.f32.gmra.mrb[0].mxu0 %v2791
      %v2967 = vpop.f32.mrb[0].mxu0
      %v2968 = vadd.f32 0.0, %v2967
      %v2969 = vpop.f32.mrb[0].mxu0
      %2970 = vmatprep.mubr.f32.mxu0 0.0
      %2971 = vmatmul.mubr.f32.gmra.mrb[0].mxu0 %v2794
      %v2972 = vpop.f32.mrb[0].mxu0
      %v2973 = vadd.f32 0.0, %v2972
      %v2974 = vpop.f32.mrb[0].mxu0
      %2975 = vmatprep.mubr.f32.mxu0 0.0
      %2976 = vmatmul.mubr.f32.gmra.mrb[0].mxu0 %v2797
      %v2977 = vpop.f32.mrb[0].mxu0
      %v2978 = vadd.f32 0.0, %v2977
      %v2979 = vpop.f32.mrb[0].mxu0
      %2980 = vmatprep.mubr.f32.mxu0 0.0
      %2981 = vmatmul.mubr.f32.gmra.mrb[0].mxu0 %v2800
      %v2982 = vpop.f32.mrb[0].mxu0
      %v2983 = vadd.f32 0.0, %v2982
      %v2984 = vpop.f32.mrb[0].mxu0
      %2985 = vmatprep.mubr.f32.mxu0 0.0
      %2986 = vmatmul.mubr.f32.gmra.mrb[0].mxu0 %v2803
      %v2987 = vpop.f32.mrb[0].mxu0
      %v2988 = vadd.f32 0.0, %v2987
      %v2989 = vpop.f32.mrb[0].mxu0
      %2990 = vmatprep.mubr.f32.mxu0 0.0
      %2991 = vmatmul.mubr.f32.gmra.mrb[0].mxu0 %v2806
      %v2992 = vpop.f32.mrb[0].mxu0
      %v2993 = vadd.f32 0.0, %v2992
      %v2994 = vpop.f32.mrb[0].mxu0
      %2995 = vmatprep.mubr.f32.mxu0 0.0
      %2996 = vmatmul.mubr.f32.gmra.mrb[0].mxu0 %v2809
      %v2997 = vpop.f32.mrb[0].mxu0
      %v2998 = vadd.f32 0.0, %v2997
      %v2999 = vpop.f32.mrb[0].mxu0
      %3000 = vmatprep.mubr.f32.mxu0 0.0
      %3001 = vmatmul.mubr.f32.gmra.mrb[0].mxu0 %v2812
      %v3002 = vpop.f32.mrb[0].mxu0
      %v3003 = vadd.f32 0.0, %v3002
      %v3004 = vpop.f32.mrb[0].mxu0
      %3005 = vmatprep.mubr.f32.mxu0 0.0
      %3006 = vmatmul.mubr.f32.gmra.mrb[0].mxu0 %v2815
      %v3007 = vpop.f32.mrb[0].mxu0
      %v3008 = vadd.f32 0.0, %v3007
      %v3009 = vpop.f32.mrb[0].mxu0
      %3010 = vmatprep.mubr.f32.mxu0 0.0
      %3011 = vmatmul.mubr.f32.gmra.mrb[0].mxu0 %v2818
      %v3012 = vpop.f32.mrb[0].mxu0
      %v3013 = vadd.f32 0.0, %v3012
      %v3014 = vpop.f32.mrb[0].mxu0
      %3015 = vmatprep.mubr.f32.mxu0 0.0
      %3016 = vmatmul.mubr.f32.gmra.mrb[0].mxu0 %v2821
      %v3017 = vpop.f32.mrb[0].mxu0
      %v3018 = vadd.f32 0.0, %v3017
      %v3019 = vpop.f32.mrb[0].mxu0
      %3020 = vmatprep.mubr.f32.mxu0 0.0
      %3021 = vmatmul.mubr.f32.gmra.mrb[0].mxu0 %v2824
      %v3022 = vpop.f32.mrb[0].mxu0
      %v3023 = vadd.f32 0.0, %v3022
      %v3024 = vpop.f32.mrb[0].mxu0
      %3025 = vmatprep.mubr.f32.mxu0 0.0
      %3026 = vmatmul.mubr.f32.gmra.mrb[0].mxu0 %v2827
      %v3027 = vpop.f32.mrb[0].mxu0
      %v3028 = vadd.f32 0.0, %v3027
      %v3029 = vpop.f32.mrb[0].mxu0
      %3030 = vmatprep.mubr.f32.mxu0 0.0
      %3031 = vmatmul.mubr.f32.gmra.mrb[0].mxu0 %v2830
      %v3032 = vpop.f32.mrb[0].mxu0
      %v3033 = vadd.f32 0.0, %v3032
      %v3034 = vpop.f32.mrb[0].mxu0
      %3035 = vmatprep.mubr.f32.mxu0 0.0
      %3036 = vmatmul.mubr.f32.gmra.mrb[0].mxu0 %v2833
      %v3037 = vpop.f32.mrb[0].mxu0
      %v3038 = vadd.f32 0.0, %v3037
      %v3039 = vpop.f32.mrb[0].mxu0
      %3040 = vmatprep.mubr.f32.mxu0 0.0
      %3041 = vmatmul.mubr.f32.gmra.mrb[0].mxu0 %v2836
      %v3042 = vpop.f32.mrb[0].mxu0
      %v3043 = vadd.f32 0.0, %v3042
      %v3044 = vpop.f32.mrb[0].mxu0
      %3045 = vmatprep.mubr.f32.mxu0 0.0
      %3046 = vmatmul.mubr.f32.gmra.mrb[0].mxu0 %v2839
      %v3047 = vpop.f32.mrb[0].mxu0
      %v3048 = vadd.f32 0.0, %v3047
      %v3049 = vpop.f32.mrb[0].mxu0
      %3050 = vmatprep.mubr.f32.mxu0 0.0
      %3051 = vmatmul.mubr.f32.gmra.mrb[0].mxu0 %v2842
      %v3052 = vpop.f32.mrb[0].mxu0
      %v3053 = vadd.f32 0.0, %v3052
      %v3054 = vpop.f32.mrb[0].mxu0
      %3055 = vmatprep.mubr.f32.mxu0 0.0
      %3056 = vmatmul.mubr.f32.gmra.mrb[0].mxu0 %v2845
      %v3057 = vpop.f32.mrb[0].mxu0
      %v3058 = vadd.f32 0.0, %v3057
      %v3059 = vpop.f32.mrb[0].mxu0
      %3060 = vmatprep.mubr.f32.mxu0 0.0
      %3061 = vmatmul.mubr.f32.gmra.mrb[0].mxu0 %v2848
      %v3062 = vpop.f32.mrb[0].mxu0
      %v3063 = vadd.f32 0.0, %v3062
      %v3064 = vpop.f32.mrb[0].mxu0
      %3065 = vmatprep.mubr.f32.mxu0 0.0
      %3066 = vmatmul.mubr.f32.gmra.mrb[0].mxu0 %v2851
      %v3067 = vpop.f32.mrb[0].mxu0
      %v3068 = vadd.f32 0.0, %v3067
      %v3069 = vpop.f32.mrb[0].mxu0
      %3070 = vmatprep.mubr.f32.mxu0 0.0
      %3071 = vmatmul.mubr.f32.gmra.mrb[0].mxu0 %v2854
      %v3072 = vpop.f32.mrb[0].mxu0
      %v3073 = vadd.f32 0.0, %v3072
      %v3074 = vpop.f32.mrb[0].mxu0
      %3075 = vmatprep.mubr.f32.mxu0 0.0
      %3076 = vmatmul.mubr.f32.gmra.mrb[0].mxu0 %v2857
      %v3077 = vpop.f32.mrb[0].mxu0
      %v3078 = vadd.f32 0.0, %v3077
      %v3079 = vpop.f32.mrb[0].mxu0
      %3080 = vmatprep.mubr.f32.mxu0 0.0
      %3081 = vmatmul.mubr.f32.gmra.mrb[0].mxu0 %v2860
      %v3082 = vpop.f32.mrb[0].mxu0
      %v3083 = vadd.f32 0.0, %v3082
      %v3084 = vpop.f32.mrb[0].mxu0
      %3085 = vmatprep.mubr.f32.mxu0 0.0
      %3086 = vmatmul.mubr.f32.gmra.mrb[0].mxu0 %v2863
      %v3087 = vpop.f32.mrb[0].mxu0
      %v3088 = vadd.f32 0.0, %v3087
      %v3089 = vpop.f32.mrb[0].mxu0
      %3090 = vmatprep.mubr.f32.mxu0 0.0
      %3091 = vmatmul.mubr.f32.gmra.mrb[0].mxu0 %v2866
      %v3092 = vpop.f32.mrb[0].mxu0
      %v3093 = vadd.f32 0.0, %v3092
      %v3094 = vpop.f32.mrb[0].mxu0
      %3095 = vmatprep.mubr.f32.mxu0 0.0
      %3096 = vmatmul.mubr.f32.gmra.mrb[0].mxu0 %v2869
      %v3097 = vpop.f32.mrb[0].mxu0
      %v3098 = vadd.f32 0.0, %v3097
      %v3099 = vpop.f32.mrb[0].mxu0
      %3100 = vmatprep.mubr.f32.mxu0 0.0
      %3101 = vmatmul.mubr.f32.gmra.mrb[0].mxu0 %v2872
      %v3102 = vpop.f32.mrb[0].mxu0
      %v3103 = vadd.f32 0.0, %v3102
      %v3104 = vpop.f32.mrb[0].mxu0
      %3105 = vmatprep.mubr.f32.mxu0 0.0
      %3106 = vmatmul.mubr.f32.gmra.mrb[0].mxu0 %v2875
      %v3107 = vpop.f32.mrb[0].mxu0
      %v3108 = vadd.f32 0.0, %v3107
      %v3109 = vpop.f32.mrb[0].mxu0
      %3110 = vmatprep.mubr.f32.mxu0 0.0
      %3111 = vmatmul.mubr.f32.gmra.mrb[0].mxu0 %v2878
      %v3112 = vpop.f32.mrb[0].mxu0
      %v3113 = vadd.f32 0.0, %v3112
      %v3114 = vpop.f32.mrb[0].mxu0
      %3115 = vmatprep.mubr.f32.mxu0 0.0
      %3116 = vmatmul.mubr.f32.gmra.mrb[0].mxu0 %v2881
      %v3117 = vpop.f32.mrb[0].mxu0
      %v3118 = vadd.f32 0.0, %v3117
      %v3119 = vpop.f32.mrb[0].mxu0
      %3120 = vmatprep.mubr.f32.mxu0 0.0
      %3121 = vmatmul.mubr.f32.gmra.mrb[0].mxu0 %v2884
      %v3122 = vpop.f32.mrb[0].mxu0
      %v3123 = vadd.f32 0.0, %v3122
      %v3124 = vpop.f32.mrb[0].mxu0
      %3125 = vmatprep.mubr.f32.mxu0 0.0
      %3126 = vmatmul.mubr.f32.gmra.mrb[0].mxu0 %v2887
      %v3127 = vpop.f32.mrb[0].mxu0
      %v3128 = vadd.f32 0.0, %v3127
      %v3129 = vpop.f32.mrb[0].mxu0
      %3130 = vmatprep.mubr.f32.mxu0 0.0
      %3131 = vmatmul.mubr.f32.gmra.mrb[0].mxu0 %v2890
      %v3132 = vpop.f32.mrb[0].mxu0
      %v3133 = vadd.f32 0.0, %v3132
      %v3134 = vpop.f32.mrb[0].mxu0
      %3135 = vmatprep.mubr.f32.mxu0 0.0
      %3136 = vmatmul.mubr.f32.gmra.mrb[0].mxu0 %v2893
      %v3137 = vpop.f32.mrb[0].mxu0
      %v3138 = vadd.f32 0.0, %v3137
      %v3139 = vpop.f32.mrb[0].mxu0
      %3140 = vmatprep.mubr.f32.mxu0 0.0
      %3141 = vmatmul.mubr.f32.gmra.mrb[0].mxu0 %v2896
      %v3142 = vpop.f32.mrb[0].mxu0
      %v3143 = vadd.f32 0.0, %v3142
      %v3144 = vpop.f32.mrb[0].mxu0
      %3145 = vdwg.mxu0
      %v3146 = vadd.f32 %v2716, %v2968
      %v3147 = vadd.f32 %v2717, %v2973
      %v3148 = vadd.f32 %v2718, %v2978
      %v3149 = vadd.f32 %v2719, %v2983
      %v3150 = vadd.f32 %v2720, %v2988
      %v3151 = vadd.f32 %v2721, %v2993
      %v3152 = vadd.f32 %v2722, %v2998
      %v3153 = vadd.f32 %v2723, %v3003
      %v3154 = vadd.f32 %v2724, %v3008
      %v3155 = vadd.f32 %v2725, %v3013
      %v3156 = vadd.f32 %v2726, %v3018
      %v3157 = vadd.f32 %v2727, %v3023
      %v3158 = vadd.f32 %v2728, %v3028
      %v3159 = vadd.f32 %v2729, %v3033
      %v3160 = vadd.f32 %v2730, %v3038
      %v3161 = vadd.f32 %v2731, %v3043
      %v3162 = vadd.f32 %v2732, %v3048
      %v3163 = vadd.f32 %v2733, %v3053
      %v3164 = vadd.f32 %v2734, %v3058
      %v3165 = vadd.f32 %v2735, %v3063
      %v3166 = vadd.f32 %v2736, %v3068
      %v3167 = vadd.f32 %v2737, %v3073
      %v3168 = vadd.f32 %v2738, %v3078
      %v3169 = vadd.f32 %v2739, %v3083
      %v3170 = vadd.f32 %v2740, %v3088
      %v3171 = vadd.f32 %v2741, %v3093
      %v3172 = vadd.f32 %v2742, %v3098
      %v3173 = vadd.f32 %v2743, %v3103
      %v3174 = vadd.f32 %v2744, %v3108
      %v3175 = vadd.f32 %v2745, %v3113
      %v3176 = vadd.f32 %v2746, %v3118
      %v3177 = vadd.f32 %v2747, %v3123
      %v3178 = vadd.f32 %v2748, %v3128
      %v3179 = vadd.f32 %v2749, %v3133
      %v3180 = vadd.f32 %v2750, %v3138
      %v3181 = vadd.f32 %v2751, %v3143
      %v3182 = vld [vmem:[#allocation2 + $0x19] sm:$0xff]
      %v3183 = vld [vmem:[#allocation2 + $0x21] sm:$0xff]
      %v3184 = vld [vmem:[#allocation2 + $0x29] sm:$0xff]
      %v3185 = vld [vmem:[#allocation2 + $0x31] sm:$0xff]
      %v3186 = vld [vmem:[#allocation2 + $0x39] sm:$0xff]
      %v3187 = vld [vmem:[#allocation2 + $0x41] sm:$0xff]
      %v3188 = vld [vmem:[#allocation2 + $0x49] sm:$0xff]
      %v3189 = vld [vmem:[#allocation2 + $0x51] sm:$0xff]
      %v3190 = vld [vmem:[#allocation2 + $0x59] sm:$0xff]
      %v3191 = vld [vmem:[#allocation2 + $0x61] sm:$0xff]
      %v3192 = vld [vmem:[#allocation2 + $0x69] sm:$0xff]
      %v3193 = vld [vmem:[#allocation2 + $0x71] sm:$0xff]
      %v3194 = vld [vmem:[#allocation2 + $0x79] sm:$0xff]
      %v3195 = vld [vmem:[#allocation2 + $0x81] sm:$0xff]
      %v3196 = vld [vmem:[#allocation2 + $0x89] sm:$0xff]
      %v3197 = vld [vmem:[#allocation2 + $0x91] sm:$0xff]
      %v3198 = vld [vmem:[#allocation2 + $0x99] sm:$0xff]
      %v3199 = vld [vmem:[#allocation2 + $0xa1] sm:$0xff]
      %v3200 = vld [vmem:[#allocation2 + $0xa9] sm:$0xff]
      %v3201 = vld [vmem:[#allocation2 + $0xb1] sm:$0xff]
      %v3202 = vld [vmem:[#allocation2 + $0xb9] sm:$0xff]
      %v3203 = vld [vmem:[#allocation2 + $0xc1] sm:$0xff]
      %v3204 = vld [vmem:[#allocation2 + $0xc9] sm:$0xff]
      %v3205 = vld [vmem:[#allocation2 + $0xd1] sm:$0xff]
      %v3206 = vld [vmem:[#allocation2 + $0xd9] sm:$0xff]
      %v3207 = vld [vmem:[#allocation2 + $0xe1] sm:$0xff]
      %v3208 = vld [vmem:[#allocation2 + $0xe9] sm:$0xff]
      %v3209 = vld [vmem:[#allocation2 + $0xf1] sm:$0xff]
      %v3210 = vld [vmem:[#allocation2 + $0xf9] sm:$0xff]
      %v3211 = vld [vmem:[#allocation2 + $0x101] sm:$0xff]
      %v3212 = vld [vmem:[#allocation2 + $0x109] sm:$0xff]
      %v3213 = vld [vmem:[#allocation2 + $0x111] sm:$0xff]
      %v3214 = vld [vmem:[#allocation2 + $0x119] sm:$0xff]
      %v3215 = vld [vmem:[#allocation2 + $0x121] sm:$0xff]
      %v3216 = vld [vmem:[#allocation2 + $0x129] sm:$0xff]
      %v3217 = vld [vmem:[#allocation2 + $0x131] sm:$0xff]
      %s3218 = scalar_lea.vmem %s2, 20
      %v3219 = vld [vmem:[%s3218] sm:$0xf]
      %v3221 = vsel %vm1025, %v3182, 0
      %v3224 = vsel %vm1025, %v3183, 0
      %v3227 = vsel %vm1025, %v3184, 0
      %v3230 = vsel %vm1025, %v3185, 0
      %v3233 = vsel %vm1025, %v3186, 0
      %v3236 = vsel %vm1025, %v3187, 0
      %v3239 = vsel %vm1025, %v3188, 0
      %v3242 = vsel %vm1025, %v3189, 0
      %v3245 = vsel %vm1025, %v3190, 0
      %v3248 = vsel %vm1025, %v3191, 0
      %v3251 = vsel %vm1025, %v3192, 0
      %v3254 = vsel %vm1025, %v3193, 0
      %v3257 = vsel %vm1025, %v3194, 0
      %v3260 = vsel %vm1025, %v3195, 0
      %v3263 = vsel %vm1025, %v3196, 0
      %v3266 = vsel %vm1025, %v3197, 0
      %v3269 = vsel %vm1025, %v3198, 0
      %v3272 = vsel %vm1025, %v3199, 0
      %v3275 = vsel %vm1025, %v3200, 0
      %v3278 = vsel %vm1025, %v3201, 0
      %v3281 = vsel %vm1025, %v3202, 0
      %v3284 = vsel %vm1025, %v3203, 0
      %v3287 = vsel %vm1025, %v3204, 0
      %v3290 = vsel %vm1025, %v3205, 0
      %v3293 = vsel %vm1025, %v3206, 0
      %v3296 = vsel %vm1025, %v3207, 0
      %v3299 = vsel %vm1025, %v3208, 0
      %v3302 = vsel %vm1025, %v3209, 0
      %v3305 = vsel %vm1025, %v3210, 0
      %v3308 = vsel %vm1025, %v3211, 0
      %v3311 = vsel %vm1025, %v3212, 0
      %v3314 = vsel %vm1025, %v3213, 0
      %v3317 = vsel %vm1025, %v3214, 0
      %v3320 = vsel %vm1025, %v3215, 0
      %v3323 = vsel %vm1025, %v3216, 0
      %v3326 = vsel %vm1025, %v3217, 0
      %v3329 = vsel %vm1287, %v3219, 0
      %3331 = vmatprep.subr.mxu0 0.0
      %3332 = vmatpush1.msra.mxu0 %v3329
      %3333 = vmatprep.subr.mxu0 0.0
      %3334 = vmatpush1.msra.mxu0 0.0
      %3335 = vmatprep.subr.mxu0 0.0
      %3336 = vmatpush1.msra.mxu0 0.0
      %3337 = vmatprep.subr.mxu0 0.0
      %3338 = vmatpush1.msra.mxu0 0.0
      %3339 = vmatprep.subr.mxu0 0.0
      %3340 = vmatpush1.msra.mxu0 0.0
      %3341 = vmatprep.subr.mxu0 0.0
      %3342 = vmatpush1.msra.mxu0 0.0
      %3343 = vmatprep.subr.mxu0 0.0
      %3344 = vmatpush1.msra.mxu0 0.0
      %3345 = vmatprep.subr.mxu0 0.0
      %3346 = vmatpush1.msra.mxu0 0.0
      %3347 = vmatprep.subr.mxu0 0.0
      %3348 = vmatpush1.msra.mxu0 0.0
      %3349 = vmatprep.subr.mxu0 0.0
      %3350 = vmatpush1.msra.mxu0 0.0
      %3351 = vmatprep.subr.mxu0 0.0
      %3352 = vmatpush1.msra.mxu0 0.0
      %3353 = vmatprep.subr.mxu0 0.0
      %3354 = vmatpush1.msra.mxu0 0.0
      %3355 = vmatprep.subr.mxu0 0.0
      %3356 = vmatpush1.msra.mxu0 0.0
      %3357 = vmatprep.subr.mxu0 0.0
      %3358 = vmatpush1.msra.mxu0 0.0
      %3359 = vmatprep.subr.mxu0 0.0
      %3360 = vmatpush1.msra.mxu0 0.0
      %3361 = vmatprep.subr.mxu0 0.0
      %3362 = vmatpush1.msra.mxu0 0.0
      %3363 = vmatprep.subr.mxu0 0.0
      %3364 = vmatpush1.msra.mxu0 0.0
      %3365 = vmatprep.subr.mxu0 0.0
      %3366 = vmatpush1.msra.mxu0 0.0
      %3367 = vmatprep.subr.mxu0 0.0
      %3368 = vmatpush1.msra.mxu0 0.0
      %3369 = vmatprep.subr.mxu0 0.0
      %3370 = vmatpush1.msra.mxu0 0.0
      %3371 = vmatprep.subr.mxu0 0.0
      %3372 = vmatpush1.msra.mxu0 0.0
      %3373 = vmatprep.subr.mxu0 0.0
      %3374 = vmatpush1.msra.mxu0 0.0
      %3375 = vmatprep.subr.mxu0 0.0
      %3376 = vmatpush1.msra.mxu0 0.0
      %3377 = vmatprep.subr.mxu0 0.0
      %3378 = vmatpush1.msra.mxu0 0.0
      %3379 = vmatprep.subr.mxu0 0.0
      %3380 = vmatpush1.msra.mxu0 0.0
      %3381 = vmatprep.subr.mxu0 0.0
      %3382 = vmatpush1.msra.mxu0 0.0
      %3383 = vmatprep.subr.mxu0 0.0
      %3384 = vmatpush1.msra.mxu0 0.0
      %3385 = vmatprep.subr.mxu0 0.0
      %3386 = vmatpush1.msra.mxu0 0.0
      %3387 = vmatprep.subr.mxu0 0.0
      %3388 = vmatpush1.msra.mxu0 0.0
      %3389 = vmatprep.subr.mxu0 0.0
      %3390 = vmatpush1.msra.mxu0 0.0
      %3391 = vmatprep.subr.mxu0 0.0
      %3392 = vmatpush1.msra.mxu0 0.0
      %3393 = vmatprep.subr.mxu0 0.0
      %3394 = vmatpush1.msra.mxu0 0.0
      %3395 = vmatprep.mubr.f32.mxu0 0.0
      %3396 = vmatmul.mubr.f32.gmra.mrb[0].mxu0 %v3221
      %v3397 = vpop.f32.mrb[0].mxu0
      %v3398 = vadd.f32 0.0, %v3397
      %v3399 = vpop.f32.mrb[0].mxu0
      %3400 = vmatprep.mubr.f32.mxu0 0.0
      %3401 = vmatmul.mubr.f32.gmra.mrb[0].mxu0 %v3224
      %v3402 = vpop.f32.mrb[0].mxu0
      %v3403 = vadd.f32 0.0, %v3402
      %v3404 = vpop.f32.mrb[0].mxu0
      %3405 = vmatprep.mubr.f32.mxu0 0.0
      %3406 = vmatmul.mubr.f32.gmra.mrb[0].mxu0 %v3227
      %v3407 = vpop.f32.mrb[0].mxu0
      %v3408 = vadd.f32 0.0, %v3407
      %v3409 = vpop.f32.mrb[0].mxu0
      %3410 = vmatprep.mubr.f32.mxu0 0.0
      %3411 = vmatmul.mubr.f32.gmra.mrb[0].mxu0 %v3230
      %v3412 = vpop.f32.mrb[0].mxu0
      %v3413 = vadd.f32 0.0, %v3412
      %v3414 = vpop.f32.mrb[0].mxu0
      %3415 = vmatprep.mubr.f32.mxu0 0.0
      %3416 = vmatmul.mubr.f32.gmra.mrb[0].mxu0 %v3233
      %v3417 = vpop.f32.mrb[0].mxu0
      %v3418 = vadd.f32 0.0, %v3417
      %v3419 = vpop.f32.mrb[0].mxu0
      %3420 = vmatprep.mubr.f32.mxu0 0.0
      %3421 = vmatmul.mubr.f32.gmra.mrb[0].mxu0 %v3236
      %v3422 = vpop.f32.mrb[0].mxu0
      %v3423 = vadd.f32 0.0, %v3422
      %v3424 = vpop.f32.mrb[0].mxu0
      %3425 = vmatprep.mubr.f32.mxu0 0.0
      %3426 = vmatmul.mubr.f32.gmra.mrb[0].mxu0 %v3239
      %v3427 = vpop.f32.mrb[0].mxu0
      %v3428 = vadd.f32 0.0, %v3427
      %v3429 = vpop.f32.mrb[0].mxu0
      %3430 = vmatprep.mubr.f32.mxu0 0.0
      %3431 = vmatmul.mubr.f32.gmra.mrb[0].mxu0 %v3242
      %v3432 = vpop.f32.mrb[0].mxu0
      %v3433 = vadd.f32 0.0, %v3432
      %v3434 = vpop.f32.mrb[0].mxu0
      %3435 = vmatprep.mubr.f32.mxu0 0.0
      %3436 = vmatmul.mubr.f32.gmra.mrb[0].mxu0 %v3245
      %v3437 = vpop.f32.mrb[0].mxu0
      %v3438 = vadd.f32 0.0, %v3437
      %v3439 = vpop.f32.mrb[0].mxu0
      %3440 = vmatprep.mubr.f32.mxu0 0.0
      %3441 = vmatmul.mubr.f32.gmra.mrb[0].mxu0 %v3248
      %v3442 = vpop.f32.mrb[0].mxu0
      %v3443 = vadd.f32 0.0, %v3442
      %v3444 = vpop.f32.mrb[0].mxu0
      %3445 = vmatprep.mubr.f32.mxu0 0.0
      %3446 = vmatmul.mubr.f32.gmra.mrb[0].mxu0 %v3251
      %v3447 = vpop.f32.mrb[0].mxu0
      %v3448 = vadd.f32 0.0, %v3447
      %v3449 = vpop.f32.mrb[0].mxu0
      %3450 = vmatprep.mubr.f32.mxu0 0.0
      %3451 = vmatmul.mubr.f32.gmra.mrb[0].mxu0 %v3254
      %v3452 = vpop.f32.mrb[0].mxu0
      %v3453 = vadd.f32 0.0, %v3452
      %v3454 = vpop.f32.mrb[0].mxu0
      %3455 = vmatprep.mubr.f32.mxu0 0.0
      %3456 = vmatmul.mubr.f32.gmra.mrb[0].mxu0 %v3257
      %v3457 = vpop.f32.mrb[0].mxu0
      %v3458 = vadd.f32 0.0, %v3457
      %v3459 = vpop.f32.mrb[0].mxu0
      %3460 = vmatprep.mubr.f32.mxu0 0.0
      %3461 = vmatmul.mubr.f32.gmra.mrb[0].mxu0 %v3260
      %v3462 = vpop.f32.mrb[0].mxu0
      %v3463 = vadd.f32 0.0, %v3462
      %v3464 = vpop.f32.mrb[0].mxu0
      %3465 = vmatprep.mubr.f32.mxu0 0.0
      %3466 = vmatmul.mubr.f32.gmra.mrb[0].mxu0 %v3263
      %v3467 = vpop.f32.mrb[0].mxu0
      %v3468 = vadd.f32 0.0, %v3467
      %v3469 = vpop.f32.mrb[0].mxu0
      %3470 = vmatprep.mubr.f32.mxu0 0.0
      %3471 = vmatmul.mubr.f32.gmra.mrb[0].mxu0 %v3266
      %v3472 = vpop.f32.mrb[0].mxu0
      %v3473 = vadd.f32 0.0, %v3472
      %v3474 = vpop.f32.mrb[0].mxu0
      %3475 = vmatprep.mubr.f32.mxu0 0.0
      %3476 = vmatmul.mubr.f32.gmra.mrb[0].mxu0 %v3269
      %v3477 = vpop.f32.mrb[0].mxu0
      %v3478 = vadd.f32 0.0, %v3477
      %v3479 = vpop.f32.mrb[0].mxu0
      %3480 = vmatprep.mubr.f32.mxu0 0.0
      %3481 = vmatmul.mubr.f32.gmra.mrb[0].mxu0 %v3272
      %v3482 = vpop.f32.mrb[0].mxu0
      %v3483 = vadd.f32 0.0, %v3482
      %v3484 = vpop.f32.mrb[0].mxu0
      %3485 = vmatprep.mubr.f32.mxu0 0.0
      %3486 = vmatmul.mubr.f32.gmra.mrb[0].mxu0 %v3275
      %v3487 = vpop.f32.mrb[0].mxu0
      %v3488 = vadd.f32 0.0, %v3487
      %v3489 = vpop.f32.mrb[0].mxu0
      %3490 = vmatprep.mubr.f32.mxu0 0.0
      %3491 = vmatmul.mubr.f32.gmra.mrb[0].mxu0 %v3278
      %v3492 = vpop.f32.mrb[0].mxu0
      %v3493 = vadd.f32 0.0, %v3492
      %v3494 = vpop.f32.mrb[0].mxu0
      %3495 = vmatprep.mubr.f32.mxu0 0.0
      %3496 = vmatmul.mubr.f32.gmra.mrb[0].mxu0 %v3281
      %v3497 = vpop.f32.mrb[0].mxu0
      %v3498 = vadd.f32 0.0, %v3497
      %v3499 = vpop.f32.mrb[0].mxu0
      %3500 = vmatprep.mubr.f32.mxu0 0.0
      %3501 = vmatmul.mubr.f32.gmra.mrb[0].mxu0 %v3284
      %v3502 = vpop.f32.mrb[0].mxu0
      %v3503 = vadd.f32 0.0, %v3502
      %v3504 = vpop.f32.mrb[0].mxu0
      %3505 = vmatprep.mubr.f32.mxu0 0.0
      %3506 = vmatmul.mubr.f32.gmra.mrb[0].mxu0 %v3287
      %v3507 = vpop.f32.mrb[0].mxu0
      %v3508 = vadd.f32 0.0, %v3507
      %v3509 = vpop.f32.mrb[0].mxu0
      %3510 = vmatprep.mubr.f32.mxu0 0.0
      %3511 = vmatmul.mubr.f32.gmra.mrb[0].mxu0 %v3290
      %v3512 = vpop.f32.mrb[0].mxu0
      %v3513 = vadd.f32 0.0, %v3512
      %v3514 = vpop.f32.mrb[0].mxu0
      %3515 = vmatprep.mubr.f32.mxu0 0.0
      %3516 = vmatmul.mubr.f32.gmra.mrb[0].mxu0 %v3293
      %v3517 = vpop.f32.mrb[0].mxu0
      %v3518 = vadd.f32 0.0, %v3517
      %v3519 = vpop.f32.mrb[0].mxu0
      %3520 = vmatprep.mubr.f32.mxu0 0.0
      %3521 = vmatmul.mubr.f32.gmra.mrb[0].mxu0 %v3296
      %v3522 = vpop.f32.mrb[0].mxu0
      %v3523 = vadd.f32 0.0, %v3522
      %v3524 = vpop.f32.mrb[0].mxu0
      %3525 = vmatprep.mubr.f32.mxu0 0.0
      %3526 = vmatmul.mubr.f32.gmra.mrb[0].mxu0 %v3299
      %v3527 = vpop.f32.mrb[0].mxu0
      %v3528 = vadd.f32 0.0, %v3527
      %v3529 = vpop.f32.mrb[0].mxu0
      %3530 = vmatprep.mubr.f32.mxu0 0.0
      %3531 = vmatmul.mubr.f32.gmra.mrb[0].mxu0 %v3302
      %v3532 = vpop.f32.mrb[0].mxu0
      %v3533 = vadd.f32 0.0, %v3532
      %v3534 = vpop.f32.mrb[0].mxu0
      %3535 = vmatprep.mubr.f32.mxu0 0.0
      %3536 = vmatmul.mubr.f32.gmra.mrb[0].mxu0 %v3305
      %v3537 = vpop.f32.mrb[0].mxu0
      %v3538 = vadd.f32 0.0, %v3537
      %v3539 = vpop.f32.mrb[0].mxu0
      %3540 = vmatprep.mubr.f32.mxu0 0.0
      %3541 = vmatmul.mubr.f32.gmra.mrb[0].mxu0 %v3308
      %v3542 = vpop.f32.mrb[0].mxu0
      %v3543 = vadd.f32 0.0, %v3542
      %v3544 = vpop.f32.mrb[0].mxu0
      %3545 = vmatprep.mubr.f32.mxu0 0.0
      %3546 = vmatmul.mubr.f32.gmra.mrb[0].mxu0 %v3311
      %v3547 = vpop.f32.mrb[0].mxu0
      %v3548 = vadd.f32 0.0, %v3547
      %v3549 = vpop.f32.mrb[0].mxu0
      %3550 = vmatprep.mubr.f32.mxu0 0.0
      %3551 = vmatmul.mubr.f32.gmra.mrb[0].mxu0 %v3314
      %v3552 = vpop.f32.mrb[0].mxu0
      %v3553 = vadd.f32 0.0, %v3552
      %v3554 = vpop.f32.mrb[0].mxu0
      %3555 = vmatprep.mubr.f32.mxu0 0.0
      %3556 = vmatmul.mubr.f32.gmra.mrb[0].mxu0 %v3317
      %v3557 = vpop.f32.mrb[0].mxu0
      %v3558 = vadd.f32 0.0, %v3557
      %v3559 = vpop.f32.mrb[0].mxu0
      %3560 = vmatprep.mubr.f32.mxu0 0.0
      %3561 = vmatmul.mubr.f32.gmra.mrb[0].mxu0 %v3320
      %v3562 = vpop.f32.mrb[0].mxu0
      %v3563 = vadd.f32 0.0, %v3562
      %v3564 = vpop.f32.mrb[0].mxu0
      %3565 = vmatprep.mubr.f32.mxu0 0.0
      %3566 = vmatmul.mubr.f32.gmra.mrb[0].mxu0 %v3323
      %v3567 = vpop.f32.mrb[0].mxu0
      %v3568 = vadd.f32 0.0, %v3567
      %v3569 = vpop.f32.mrb[0].mxu0
      %3570 = vmatprep.mubr.f32.mxu0 0.0
      %3571 = vmatmul.mubr.f32.gmra.mrb[0].mxu0 %v3326
      %v3572 = vpop.f32.mrb[0].mxu0
      %v3573 = vadd.f32 0.0, %v3572
      %v3574 = vpop.f32.mrb[0].mxu0
      %3575 = vdwg.mxu0
      %v3576 = vadd.f32 %v3146, %v3398
      %v3577 = vadd.f32 %v3147, %v3403
      %v3578 = vadd.f32 %v3148, %v3408
      %v3579 = vadd.f32 %v3149, %v3413
      %v3580 = vadd.f32 %v3150, %v3418
      %v3581 = vadd.f32 %v3151, %v3423
      %v3582 = vadd.f32 %v3152, %v3428
      %v3583 = vadd.f32 %v3153, %v3433
      %v3584 = vadd.f32 %v3154, %v3438
      %v3585 = vadd.f32 %v3155, %v3443
      %v3586 = vadd.f32 %v3156, %v3448
      %v3587 = vadd.f32 %v3157, %v3453
      %v3588 = vadd.f32 %v3158, %v3458
      %v3589 = vadd.f32 %v3159, %v3463
      %v3590 = vadd.f32 %v3160, %v3468
      %v3591 = vadd.f32 %v3161, %v3473
      %v3592 = vadd.f32 %v3162, %v3478
      %v3593 = vadd.f32 %v3163, %v3483
      %v3594 = vadd.f32 %v3164, %v3488
      %v3595 = vadd.f32 %v3165, %v3493
      %v3596 = vadd.f32 %v3166, %v3498
      %v3597 = vadd.f32 %v3167, %v3503
      %v3598 = vadd.f32 %v3168, %v3508
      %v3599 = vadd.f32 %v3169, %v3513
      %v3600 = vadd.f32 %v3170, %v3518
      %v3601 = vadd.f32 %v3171, %v3523
      %v3602 = vadd.f32 %v3172, %v3528
      %v3603 = vadd.f32 %v3173, %v3533
      %v3604 = vadd.f32 %v3174, %v3538
      %v3605 = vadd.f32 %v3175, %v3543
      %v3606 = vadd.f32 %v3176, %v3548
      %v3607 = vadd.f32 %v3177, %v3553
      %v3608 = vadd.f32 %v3178, %v3558
      %v3609 = vadd.f32 %v3179, %v3563
      %v3610 = vadd.f32 %v3180, %v3568
      %v3611 = vadd.f32 %v3181, %v3573
      %v3612 = vld [vmem:[#allocation2 + $0x29] sm:$0xff]
      %v3613 = vld [vmem:[#allocation2 + $0x31] sm:$0xff]
      %v3614 = vld [vmem:[#allocation2 + $0x39] sm:$0xff]
      %v3615 = vld [vmem:[#allocation2 + $0x41] sm:$0xff]
      %v3616 = vld [vmem:[#allocation2 + $0x49] sm:$0xff]
      %v3617 = vld [vmem:[#allocation2 + $0x51] sm:$0xff]
      %v3618 = vld [vmem:[#allocation2 + $0x59] sm:$0xff]
      %v3619 = vld [vmem:[#allocation2 + $0x61] sm:$0xff]
      %v3620 = vld [vmem:[#allocation2 + $0x69] sm:$0xff]
      %v3621 = vld [vmem:[#allocation2 + $0x71] sm:$0xff]
      %v3622 = vld [vmem:[#allocation2 + $0x79] sm:$0xff]
      %v3623 = vld [vmem:[#allocation2 + $0x81] sm:$0xff]
      %v3624 = vld [vmem:[#allocation2 + $0x89] sm:$0xff]
      %v3625 = vld [vmem:[#allocation2 + $0x91] sm:$0xff]
      %v3626 = vld [vmem:[#allocation2 + $0x99] sm:$0xff]
      %v3627 = vld [vmem:[#allocation2 + $0xa1] sm:$0xff]
      %v3628 = vld [vmem:[#allocation2 + $0xa9] sm:$0xff]
      %v3629 = vld [vmem:[#allocation2 + $0xb1] sm:$0xff]
      %v3630 = vld [vmem:[#allocation2 + $0xb9] sm:$0xff]
      %v3631 = vld [vmem:[#allocation2 + $0xc1] sm:$0xff]
      %v3632 = vld [vmem:[#allocation2 + $0xc9] sm:$0xff]
      %v3633 = vld [vmem:[#allocation2 + $0xd1] sm:$0xff]
      %v3634 = vld [vmem:[#allocation2 + $0xd9] sm:$0xff]
      %v3635 = vld [vmem:[#allocation2 + $0xe1] sm:$0xff]
      %v3636 = vld [vmem:[#allocation2 + $0xe9] sm:$0xff]
      %v3637 = vld [vmem:[#allocation2 + $0xf1] sm:$0xff]
      %v3638 = vld [vmem:[#allocation2 + $0xf9] sm:$0xff]
      %v3639 = vld [vmem:[#allocation2 + $0x101] sm:$0xff]
      %v3640 = vld [vmem:[#allocation2 + $0x109] sm:$0xff]
      %v3641 = vld [vmem:[#allocation2 + $0x111] sm:$0xff]
      %v3642 = vld [vmem:[#allocation2 + $0x119] sm:$0xff]
      %v3643 = vld [vmem:[#allocation2 + $0x121] sm:$0xff]
      %v3644 = vld [vmem:[#allocation2 + $0x129] sm:$0xff]
      %v3645 = vld [vmem:[#allocation2 + $0x131] sm:$0xff]
      %v3646 = vld [vmem:[#allocation2 + $0x139] sm:$0xff]
      %v3647 = vld [vmem:[#allocation2 + $0x141] sm:$0xff]
      %s3648 = scalar_lea.vmem %s2, 24
      %v3649 = vld [vmem:[%s3648] sm:$0xf]
      %v3651 = vsel %vm1025, %v3612, 0
      %v3654 = vsel %vm1025, %v3613, 0
      %v3657 = vsel %vm1025, %v3614, 0
      %v3660 = vsel %vm1025, %v3615, 0
      %v3663 = vsel %vm1025, %v3616, 0
      %v3666 = vsel %vm1025, %v3617, 0
      %v3669 = vsel %vm1025, %v3618, 0
      %v3672 = vsel %vm1025, %v3619, 0
      %v3675 = vsel %vm1025, %v3620, 0
      %v3678 = vsel %vm1025, %v3621, 0
      %v3681 = vsel %vm1025, %v3622, 0
      %v3684 = vsel %vm1025, %v3623, 0
      %v3687 = vsel %vm1025, %v3624, 0
      %v3690 = vsel %vm1025, %v3625, 0
      %v3693 = vsel %vm1025, %v3626, 0
      %v3696 = vsel %vm1025, %v3627, 0
      %v3699 = vsel %vm1025, %v3628, 0
      %v3702 = vsel %vm1025, %v3629, 0
      %v3705 = vsel %vm1025, %v3630, 0
      %v3708 = vsel %vm1025, %v3631, 0
      %v3711 = vsel %vm1025, %v3632, 0
      %v3714 = vsel %vm1025, %v3633, 0
      %v3717 = vsel %vm1025, %v3634, 0
      %v3720 = vsel %vm1025, %v3635, 0
      %v3723 = vsel %vm1025, %v3636, 0
      %v3726 = vsel %vm1025, %v3637, 0
      %v3729 = vsel %vm1025, %v3638, 0
      %v3732 = vsel %vm1025, %v3639, 0
      %v3735 = vsel %vm1025, %v3640, 0
      %v3738 = vsel %vm1025, %v3641, 0
      %v3741 = vsel %vm1025, %v3642, 0
      %v3744 = vsel %vm1025, %v3643, 0
      %v3747 = vsel %vm1025, %v3644, 0
      %v3750 = vsel %vm1025, %v3645, 0
      %v3753 = vsel %vm1025, %v3646, 0
      %v3756 = vsel %vm1025, %v3647, 0
      %v3759 = vsel %vm1287, %v3649, 0
      %3761 = vmatprep.subr.mxu0 0.0
      %3762 = vmatpush1.msra.mxu0 %v3759
      %3763 = vmatprep.subr.mxu0 0.0
      %3764 = vmatpush1.msra.mxu0 0.0
      %3765 = vmatprep.subr.mxu0 0.0
      %3766 = vmatpush1.msra.mxu0 0.0
      %3767 = vmatprep.subr.mxu0 0.0
      %3768 = vmatpush1.msra.mxu0 0.0
      %3769 = vmatprep.subr.mxu0 0.0
      %3770 = vmatpush1.msra.mxu0 0.0
      %3771 = vmatprep.subr.mxu0 0.0
      %3772 = vmatpush1.msra.mxu0 0.0
      %3773 = vmatprep.subr.mxu0 0.0
      %3774 = vmatpush1.msra.mxu0 0.0
      %3775 = vmatprep.subr.mxu0 0.0
      %3776 = vmatpush1.msra.mxu0 0.0
      %3777 = vmatprep.subr.mxu0 0.0
      %3778 = vmatpush1.msra.mxu0 0.0
      %3779 = vmatprep.subr.mxu0 0.0
      %3780 = vmatpush1.msra.mxu0 0.0
      %3781 = vmatprep.subr.mxu0 0.0
      %3782 = vmatpush1.msra.mxu0 0.0
      %3783 = vmatprep.subr.mxu0 0.0
      %3784 = vmatpush1.msra.mxu0 0.0
      %3785 = vmatprep.subr.mxu0 0.0
      %3786 = vmatpush1.msra.mxu0 0.0
      %3787 = vmatprep.subr.mxu0 0.0
      %3788 = vmatpush1.msra.mxu0 0.0
      %3789 = vmatprep.subr.mxu0 0.0
      %3790 = vmatpush1.msra.mxu0 0.0
      %3791 = vmatprep.subr.mxu0 0.0
      %3792 = vmatpush1.msra.mxu0 0.0
      %3793 = vmatprep.subr.mxu0 0.0
      %3794 = vmatpush1.msra.mxu0 0.0
      %3795 = vmatprep.subr.mxu0 0.0
      %3796 = vmatpush1.msra.mxu0 0.0
      %3797 = vmatprep.subr.mxu0 0.0
      %3798 = vmatpush1.msra.mxu0 0.0
      %3799 = vmatprep.subr.mxu0 0.0
      %3800 = vmatpush1.msra.mxu0 0.0
      %3801 = vmatprep.subr.mxu0 0.0
      %3802 = vmatpush1.msra.mxu0 0.0
      %3803 = vmatprep.subr.mxu0 0.0
      %3804 = vmatpush1.msra.mxu0 0.0
      %3805 = vmatprep.subr.mxu0 0.0
      %3806 = vmatpush1.msra.mxu0 0.0
      %3807 = vmatprep.subr.mxu0 0.0
      %3808 = vmatpush1.msra.mxu0 0.0
      %3809 = vmatprep.subr.mxu0 0.0
      %3810 = vmatpush1.msra.mxu0 0.0
      %3811 = vmatprep.subr.mxu0 0.0
      %3812 = vmatpush1.msra.mxu0 0.0
      %3813 = vmatprep.subr.mxu0 0.0
      %3814 = vmatpush1.msra.mxu0 0.0
      %3815 = vmatprep.subr.mxu0 0.0
      %3816 = vmatpush1.msra.mxu0 0.0
      %3817 = vmatprep.subr.mxu0 0.0
      %3818 = vmatpush1.msra.mxu0 0.0
      %3819 = vmatprep.subr.mxu0 0.0
      %3820 = vmatpush1.msra.mxu0 0.0
      %3821 = vmatprep.subr.mxu0 0.0
      %3822 = vmatpush1.msra.mxu0 0.0
      %3823 = vmatprep.subr.mxu0 0.0
      %3824 = vmatpush1.msra.mxu0 0.0
      %3825 = vmatprep.mubr.f32.mxu0 0.0
      %3826 = vmatmul.mubr.f32.gmra.mrb[0].mxu0 %v3651
      %v3827 = vpop.f32.mrb[0].mxu0
      %v3828 = vadd.f32 0.0, %v3827
      %v3829 = vpop.f32.mrb[0].mxu0
      %3830 = vmatprep.mubr.f32.mxu0 0.0
      %3831 = vmatmul.mubr.f32.gmra.mrb[0].mxu0 %v3654
      %v3832 = vpop.f32.mrb[0].mxu0
      %v3833 = vadd.f32 0.0, %v3832
      %v3834 = vpop.f32.mrb[0].mxu0
      %3835 = vmatprep.mubr.f32.mxu0 0.0
      %3836 = vmatmul.mubr.f32.gmra.mrb[0].mxu0 %v3657
      %v3837 = vpop.f32.mrb[0].mxu0
      %v3838 = vadd.f32 0.0, %v3837
      %v3839 = vpop.f32.mrb[0].mxu0
      %3840 = vmatprep.mubr.f32.mxu0 0.0
      %3841 = vmatmul.mubr.f32.gmra.mrb[0].mxu0 %v3660
      %v3842 = vpop.f32.mrb[0].mxu0
      %v3843 = vadd.f32 0.0, %v3842
      %v3844 = vpop.f32.mrb[0].mxu0
      %3845 = vmatprep.mubr.f32.mxu0 0.0
      %3846 = vmatmul.mubr.f32.gmra.mrb[0].mxu0 %v3663
      %v3847 = vpop.f32.mrb[0].mxu0
      %v3848 = vadd.f32 0.0, %v3847
      %v3849 = vpop.f32.mrb[0].mxu0
      %3850 = vmatprep.mubr.f32.mxu0 0.0
      %3851 = vmatmul.mubr.f32.gmra.mrb[0].mxu0 %v3666
      %v3852 = vpop.f32.mrb[0].mxu0
      %v3853 = vadd.f32 0.0, %v3852
      %v3854 = vpop.f32.mrb[0].mxu0
      %3855 = vmatprep.mubr.f32.mxu0 0.0
      %3856 = vmatmul.mubr.f32.gmra.mrb[0].mxu0 %v3669
      %v3857 = vpop.f32.mrb[0].mxu0
      %v3858 = vadd.f32 0.0, %v3857
      %v3859 = vpop.f32.mrb[0].mxu0
      %3860 = vmatprep.mubr.f32.mxu0 0.0
      %3861 = vmatmul.mubr.f32.gmra.mrb[0].mxu0 %v3672
      %v3862 = vpop.f32.mrb[0].mxu0
      %v3863 = vadd.f32 0.0, %v3862
      %v3864 = vpop.f32.mrb[0].mxu0
      %3865 = vmatprep.mubr.f32.mxu0 0.0
      %3866 = vmatmul.mubr.f32.gmra.mrb[0].mxu0 %v3675
      %v3867 = vpop.f32.mrb[0].mxu0
      %v3868 = vadd.f32 0.0, %v3867
      %v3869 = vpop.f32.mrb[0].mxu0
      %3870 = vmatprep.mubr.f32.mxu0 0.0
      %3871 = vmatmul.mubr.f32.gmra.mrb[0].mxu0 %v3678
      %v3872 = vpop.f32.mrb[0].mxu0
      %v3873 = vadd.f32 0.0, %v3872
      %v3874 = vpop.f32.mrb[0].mxu0
      %3875 = vmatprep.mubr.f32.mxu0 0.0
      %3876 = vmatmul.mubr.f32.gmra.mrb[0].mxu0 %v3681
      %v3877 = vpop.f32.mrb[0].mxu0
      %v3878 = vadd.f32 0.0, %v3877
      %v3879 = vpop.f32.mrb[0].mxu0
      %3880 = vmatprep.mubr.f32.mxu0 0.0
      %3881 = vmatmul.mubr.f32.gmra.mrb[0].mxu0 %v3684
      %v3882 = vpop.f32.mrb[0].mxu0
      %v3883 = vadd.f32 0.0, %v3882
      %v3884 = vpop.f32.mrb[0].mxu0
      %3885 = vmatprep.mubr.f32.mxu0 0.0
      %3886 = vmatmul.mubr.f32.gmra.mrb[0].mxu0 %v3687
      %v3887 = vpop.f32.mrb[0].mxu0
      %v3888 = vadd.f32 0.0, %v3887
      %v3889 = vpop.f32.mrb[0].mxu0
      %3890 = vmatprep.mubr.f32.mxu0 0.0
      %3891 = vmatmul.mubr.f32.gmra.mrb[0].mxu0 %v3690
      %v3892 = vpop.f32.mrb[0].mxu0
      %v3893 = vadd.f32 0.0, %v3892
      %v3894 = vpop.f32.mrb[0].mxu0
      %3895 = vmatprep.mubr.f32.mxu0 0.0
      %3896 = vmatmul.mubr.f32.gmra.mrb[0].mxu0 %v3693
      %v3897 = vpop.f32.mrb[0].mxu0
      %v3898 = vadd.f32 0.0, %v3897
      %v3899 = vpop.f32.mrb[0].mxu0
      %3900 = vmatprep.mubr.f32.mxu0 0.0
      %3901 = vmatmul.mubr.f32.gmra.mrb[0].mxu0 %v3696
      %v3902 = vpop.f32.mrb[0].mxu0
      %v3903 = vadd.f32 0.0, %v3902
      %v3904 = vpop.f32.mrb[0].mxu0
      %3905 = vmatprep.mubr.f32.mxu0 0.0
      %3906 = vmatmul.mubr.f32.gmra.mrb[0].mxu0 %v3699
      %v3907 = vpop.f32.mrb[0].mxu0
      %v3908 = vadd.f32 0.0, %v3907
      %v3909 = vpop.f32.mrb[0].mxu0
      %3910 = vmatprep.mubr.f32.mxu0 0.0
      %3911 = vmatmul.mubr.f32.gmra.mrb[0].mxu0 %v3702
      %v3912 = vpop.f32.mrb[0].mxu0
      %v3913 = vadd.f32 0.0, %v3912
      %v3914 = vpop.f32.mrb[0].mxu0
      %3915 = vmatprep.mubr.f32.mxu0 0.0
      %3916 = vmatmul.mubr.f32.gmra.mrb[0].mxu0 %v3705
      %v3917 = vpop.f32.mrb[0].mxu0
      %v3918 = vadd.f32 0.0, %v3917
      %v3919 = vpop.f32.mrb[0].mxu0
      %3920 = vmatprep.mubr.f32.mxu0 0.0
      %3921 = vmatmul.mubr.f32.gmra.mrb[0].mxu0 %v3708
      %v3922 = vpop.f32.mrb[0].mxu0
      %v3923 = vadd.f32 0.0, %v3922
      %v3924 = vpop.f32.mrb[0].mxu0
      %3925 = vmatprep.mubr.f32.mxu0 0.0
      %3926 = vmatmul.mubr.f32.gmra.mrb[0].mxu0 %v3711
      %v3927 = vpop.f32.mrb[0].mxu0
      %v3928 = vadd.f32 0.0, %v3927
      %v3929 = vpop.f32.mrb[0].mxu0
      %3930 = vmatprep.mubr.f32.mxu0 0.0
      %3931 = vmatmul.mubr.f32.gmra.mrb[0].mxu0 %v3714
      %v3932 = vpop.f32.mrb[0].mxu0
      %v3933 = vadd.f32 0.0, %v3932
      %v3934 = vpop.f32.mrb[0].mxu0
      %3935 = vmatprep.mubr.f32.mxu0 0.0
      %3936 = vmatmul.mubr.f32.gmra.mrb[0].mxu0 %v3717
      %v3937 = vpop.f32.mrb[0].mxu0
      %v3938 = vadd.f32 0.0, %v3937
      %v3939 = vpop.f32.mrb[0].mxu0
      %3940 = vmatprep.mubr.f32.mxu0 0.0
      %3941 = vmatmul.mubr.f32.gmra.mrb[0].mxu0 %v3720
      %v3942 = vpop.f32.mrb[0].mxu0
      %v3943 = vadd.f32 0.0, %v3942
      %v3944 = vpop.f32.mrb[0].mxu0
      %3945 = vmatprep.mubr.f32.mxu0 0.0
      %3946 = vmatmul.mubr.f32.gmra.mrb[0].mxu0 %v3723
      %v3947 = vpop.f32.mrb[0].mxu0
      %v3948 = vadd.f32 0.0, %v3947
      %v3949 = vpop.f32.mrb[0].mxu0
      %3950 = vmatprep.mubr.f32.mxu0 0.0
      %3951 = vmatmul.mubr.f32.gmra.mrb[0].mxu0 %v3726
      %v3952 = vpop.f32.mrb[0].mxu0
      %v3953 = vadd.f32 0.0, %v3952
      %v3954 = vpop.f32.mrb[0].mxu0
      %3955 = vmatprep.mubr.f32.mxu0 0.0
      %3956 = vmatmul.mubr.f32.gmra.mrb[0].mxu0 %v3729
      %v3957 = vpop.f32.mrb[0].mxu0
      %v3958 = vadd.f32 0.0, %v3957
      %v3959 = vpop.f32.mrb[0].mxu0
      %3960 = vmatprep.mubr.f32.mxu0 0.0
      %3961 = vmatmul.mubr.f32.gmra.mrb[0].mxu0 %v3732
      %v3962 = vpop.f32.mrb[0].mxu0
      %v3963 = vadd.f32 0.0, %v3962
      %v3964 = vpop.f32.mrb[0].mxu0
      %3965 = vmatprep.mubr.f32.mxu0 0.0
      %3966 = vmatmul.mubr.f32.gmra.mrb[0].mxu0 %v3735
      %v3967 = vpop.f32.mrb[0].mxu0
      %v3968 = vadd.f32 0.0, %v3967
      %v3969 = vpop.f32.mrb[0].mxu0
      %3970 = vmatprep.mubr.f32.mxu0 0.0
      %3971 = vmatmul.mubr.f32.gmra.mrb[0].mxu0 %v3738
      %v3972 = vpop.f32.mrb[0].mxu0
      %v3973 = vadd.f32 0.0, %v3972
      %v3974 = vpop.f32.mrb[0].mxu0
      %3975 = vmatprep.mubr.f32.mxu0 0.0
      %3976 = vmatmul.mubr.f32.gmra.mrb[0].mxu0 %v3741
      %v3977 = vpop.f32.mrb[0].mxu0
      %v3978 = vadd.f32 0.0, %v3977
      %v3979 = vpop.f32.mrb[0].mxu0
      %3980 = vmatprep.mubr.f32.mxu0 0.0
      %3981 = vmatmul.mubr.f32.gmra.mrb[0].mxu0 %v3744
      %v3982 = vpop.f32.mrb[0].mxu0
      %v3983 = vadd.f32 0.0, %v3982
      %v3984 = vpop.f32.mrb[0].mxu0
      %3985 = vmatprep.mubr.f32.mxu0 0.0
      %3986 = vmatmul.mubr.f32.gmra.mrb[0].mxu0 %v3747
      %v3987 = vpop.f32.mrb[0].mxu0
      %v3988 = vadd.f32 0.0, %v3987
      %v3989 = vpop.f32.mrb[0].mxu0
      %3990 = vmatprep.mubr.f32.mxu0 0.0
      %3991 = vmatmul.mubr.f32.gmra.mrb[0].mxu0 %v3750
      %v3992 = vpop.f32.mrb[0].mxu0
      %v3993 = vadd.f32 0.0, %v3992
      %v3994 = vpop.f32.mrb[0].mxu0
      %3995 = vmatprep.mubr.f32.mxu0 0.0
      %3996 = vmatmul.mubr.f32.gmra.mrb[0].mxu0 %v3753
      %v3997 = vpop.f32.mrb[0].mxu0
      %v3998 = vadd.f32 0.0, %v3997
      %v3999 = vpop.f32.mrb[0].mxu0
      %4000 = vmatprep.mubr.f32.mxu0 0.0
      %4001 = vmatmul.mubr.f32.gmra.mrb[0].mxu0 %v3756
      %v4002 = vpop.f32.mrb[0].mxu0
      %v4003 = vadd.f32 0.0, %v4002
      %v4004 = vpop.f32.mrb[0].mxu0
      %4005 = vdwg.mxu0
      %v4006 = vadd.f32 %v3576, %v3828
      %v4007 = vadd.f32 %v3577, %v3833
      %v4008 = vadd.f32 %v3578, %v3838
      %v4009 = vadd.f32 %v3579, %v3843
      %v4010 = vadd.f32 %v3580, %v3848
      %v4011 = vadd.f32 %v3581, %v3853
      %v4012 = vadd.f32 %v3582, %v3858
      %v4013 = vadd.f32 %v3583, %v3863
      %v4014 = vadd.f32 %v3584, %v3868
      %v4015 = vadd.f32 %v3585, %v3873
      %v4016 = vadd.f32 %v3586, %v3878
      %v4017 = vadd.f32 %v3587, %v3883
      %v4018 = vadd.f32 %v3588, %v3888
      %v4019 = vadd.f32 %v3589, %v3893
      %v4020 = vadd.f32 %v3590, %v3898
      %v4021 = vadd.f32 %v3591, %v3903
      %v4022 = vadd.f32 %v3592, %v3908
      %v4023 = vadd.f32 %v3593, %v3913
      %v4024 = vadd.f32 %v3594, %v3918
      %v4025 = vadd.f32 %v3595, %v3923
      %v4026 = vadd.f32 %v3596, %v3928
      %v4027 = vadd.f32 %v3597, %v3933
      %v4028 = vadd.f32 %v3598, %v3938
      %v4029 = vadd.f32 %v3599, %v3943
      %v4030 = vadd.f32 %v3600, %v3948
      %v4031 = vadd.f32 %v3601, %v3953
      %v4032 = vadd.f32 %v3602, %v3958
      %v4033 = vadd.f32 %v3603, %v3963
      %v4034 = vadd.f32 %v3604, %v3968
      %v4035 = vadd.f32 %v3605, %v3973
      %v4036 = vadd.f32 %v3606, %v3978
      %v4037 = vadd.f32 %v3607, %v3983
      %v4038 = vadd.f32 %v3608, %v3988
      %v4039 = vadd.f32 %v3609, %v3993
      %v4040 = vadd.f32 %v3610, %v3998
      %v4041 = vadd.f32 %v3611, %v4003
      %v4042 = vld [vmem:[#allocation2 + $0x2a] sm:$0xff]
      %v4043 = vld [vmem:[#allocation2 + $0x32] sm:$0xff]
      %v4044 = vld [vmem:[#allocation2 + $0x3a] sm:$0xff]
      %v4045 = vld [vmem:[#allocation2 + $0x42] sm:$0xff]
      %v4046 = vld [vmem:[#allocation2 + $0x4a] sm:$0xff]
      %v4047 = vld [vmem:[#allocation2 + $0x52] sm:$0xff]
      %v4048 = vld [vmem:[#allocation2 + $0x5a] sm:$0xff]
      %v4049 = vld [vmem:[#allocation2 + $0x62] sm:$0xff]
      %v4050 = vld [vmem:[#allocation2 + $0x6a] sm:$0xff]
      %v4051 = vld [vmem:[#allocation2 + $0x72] sm:$0xff]
      %v4052 = vld [vmem:[#allocation2 + $0x7a] sm:$0xff]
      %v4053 = vld [vmem:[#allocation2 + $0x82] sm:$0xff]
      %v4054 = vld [vmem:[#allocation2 + $0x8a] sm:$0xff]
      %v4055 = vld [vmem:[#allocation2 + $0x92] sm:$0xff]
      %v4056 = vld [vmem:[#allocation2 + $0x9a] sm:$0xff]
      %v4057 = vld [vmem:[#allocation2 + $0xa2] sm:$0xff]
      %v4058 = vld [vmem:[#allocation2 + $0xaa] sm:$0xff]
      %v4059 = vld [vmem:[#allocation2 + $0xb2] sm:$0xff]
      %v4060 = vld [vmem:[#allocation2 + $0xba] sm:$0xff]
      %v4061 = vld [vmem:[#allocation2 + $0xc2] sm:$0xff]
      %v4062 = vld [vmem:[#allocation2 + $0xca] sm:$0xff]
      %v4063 = vld [vmem:[#allocation2 + $0xd2] sm:$0xff]
      %v4064 = vld [vmem:[#allocation2 + $0xda] sm:$0xff]
      %v4065 = vld [vmem:[#allocation2 + $0xe2] sm:$0xff]
      %v4066 = vld [vmem:[#allocation2 + $0xea] sm:$0xff]
      %v4067 = vld [vmem:[#allocation2 + $0xf2] sm:$0xff]
      %v4068 = vld [vmem:[#allocation2 + $0xfa] sm:$0xff]
      %v4069 = vld [vmem:[#allocation2 + $0x102] sm:$0xff]
      %v4070 = vld [vmem:[#allocation2 + $0x10a] sm:$0xff]
      %v4071 = vld [vmem:[#allocation2 + $0x112] sm:$0xff]
      %v4072 = vld [vmem:[#allocation2 + $0x11a] sm:$0xff]
      %v4073 = vld [vmem:[#allocation2 + $0x122] sm:$0xff]
      %v4074 = vld [vmem:[#allocation2 + $0x12a] sm:$0xff]
      %v4075 = vld [vmem:[#allocation2 + $0x132] sm:$0xff]
      %v4076 = vld [vmem:[#allocation2 + $0x13a] sm:$0xff]
      %v4077 = vld [vmem:[#allocation2 + $0x142] sm:$0xff]
      %s4078 = scalar_lea.vmem %s2, 28
      %v4079 = vld [vmem:[%s4078] sm:$0xf]
      %v4081 = vsel %vm1025, %v4042, 0
      %v4084 = vsel %vm1025, %v4043, 0
      %v4087 = vsel %vm1025, %v4044, 0
      %v4090 = vsel %vm1025, %v4045, 0
      %v4093 = vsel %vm1025, %v4046, 0
      %v4096 = vsel %vm1025, %v4047, 0
      %v4099 = vsel %vm1025, %v4048, 0
      %v4102 = vsel %vm1025, %v4049, 0
      %v4105 = vsel %vm1025, %v4050, 0
      %v4108 = vsel %vm1025, %v4051, 0
      %v4111 = vsel %vm1025, %v4052, 0
      %v4114 = vsel %vm1025, %v4053, 0
      %v4117 = vsel %vm1025, %v4054, 0
      %v4120 = vsel %vm1025, %v4055, 0
      %v4123 = vsel %vm1025, %v4056, 0
      %v4126 = vsel %vm1025, %v4057, 0
      %v4129 = vsel %vm1025, %v4058, 0
      %v4132 = vsel %vm1025, %v4059, 0
      %v4135 = vsel %vm1025, %v4060, 0
      %v4138 = vsel %vm1025, %v4061, 0
      %v4141 = vsel %vm1025, %v4062, 0
      %v4144 = vsel %vm1025, %v4063, 0
      %v4147 = vsel %vm1025, %v4064, 0
      %v4150 = vsel %vm1025, %v4065, 0
      %v4153 = vsel %vm1025, %v4066, 0
      %v4156 = vsel %vm1025, %v4067, 0
      %v4159 = vsel %vm1025, %v4068, 0
      %v4162 = vsel %vm1025, %v4069, 0
      %v4165 = vsel %vm1025, %v4070, 0
      %v4168 = vsel %vm1025, %v4071, 0
      %v4171 = vsel %vm1025, %v4072, 0
      %v4174 = vsel %vm1025, %v4073, 0
      %v4177 = vsel %vm1025, %v4074, 0
      %v4180 = vsel %vm1025, %v4075, 0
      %v4183 = vsel %vm1025, %v4076, 0
      %v4186 = vsel %vm1025, %v4077, 0
      %v4189 = vsel %vm1287, %v4079, 0
      %4191 = vmatprep.subr.mxu0 0.0
      %4192 = vmatpush1.msra.mxu0 %v4189
      %4193 = vmatprep.subr.mxu0 0.0
      %4194 = vmatpush1.msra.mxu0 0.0
      %4195 = vmatprep.subr.mxu0 0.0
      %4196 = vmatpush1.msra.mxu0 0.0
      %4197 = vmatprep.subr.mxu0 0.0
      %4198 = vmatpush1.msra.mxu0 0.0
      %4199 = vmatprep.subr.mxu0 0.0
      %4200 = vmatpush1.msra.mxu0 0.0
      %4201 = vmatprep.subr.mxu0 0.0
      %4202 = vmatpush1.msra.mxu0 0.0
      %4203 = vmatprep.subr.mxu0 0.0
      %4204 = vmatpush1.msra.mxu0 0.0
      %4205 = vmatprep.subr.mxu0 0.0
      %4206 = vmatpush1.msra.mxu0 0.0
      %4207 = vmatprep.subr.mxu0 0.0
      %4208 = vmatpush1.msra.mxu0 0.0
      %4209 = vmatprep.subr.mxu0 0.0
      %4210 = vmatpush1.msra.mxu0 0.0
      %4211 = vmatprep.subr.mxu0 0.0
      %4212 = vmatpush1.msra.mxu0 0.0
      %4213 = vmatprep.subr.mxu0 0.0
      %4214 = vmatpush1.msra.mxu0 0.0
      %4215 = vmatprep.subr.mxu0 0.0
      %4216 = vmatpush1.msra.mxu0 0.0
      %4217 = vmatprep.subr.mxu0 0.0
      %4218 = vmatpush1.msra.mxu0 0.0
      %4219 = vmatprep.subr.mxu0 0.0
      %4220 = vmatpush1.msra.mxu0 0.0
      %4221 = vmatprep.subr.mxu0 0.0
      %4222 = vmatpush1.msra.mxu0 0.0
      %4223 = vmatprep.subr.mxu0 0.0
      %4224 = vmatpush1.msra.mxu0 0.0
      %4225 = vmatprep.subr.mxu0 0.0
      %4226 = vmatpush1.msra.mxu0 0.0
      %4227 = vmatprep.subr.mxu0 0.0
      %4228 = vmatpush1.msra.mxu0 0.0
      %4229 = vmatprep.subr.mxu0 0.0
      %4230 = vmatpush1.msra.mxu0 0.0
      %4231 = vmatprep.subr.mxu0 0.0
      %4232 = vmatpush1.msra.mxu0 0.0
      %4233 = vmatprep.subr.mxu0 0.0
      %4234 = vmatpush1.msra.mxu0 0.0
      %4235 = vmatprep.subr.mxu0 0.0
      %4236 = vmatpush1.msra.mxu0 0.0
      %4237 = vmatprep.subr.mxu0 0.0
      %4238 = vmatpush1.msra.mxu0 0.0
      %4239 = vmatprep.subr.mxu0 0.0
      %4240 = vmatpush1.msra.mxu0 0.0
      %4241 = vmatprep.subr.mxu0 0.0
      %4242 = vmatpush1.msra.mxu0 0.0
      %4243 = vmatprep.subr.mxu0 0.0
      %4244 = vmatpush1.msra.mxu0 0.0
      %4245 = vmatprep.subr.mxu0 0.0
      %4246 = vmatpush1.msra.mxu0 0.0
      %4247 = vmatprep.subr.mxu0 0.0
      %4248 = vmatpush1.msra.mxu0 0.0
      %4249 = vmatprep.subr.mxu0 0.0
      %4250 = vmatpush1.msra.mxu0 0.0
      %4251 = vmatprep.subr.mxu0 0.0
      %4252 = vmatpush1.msra.mxu0 0.0
      %4253 = vmatprep.subr.mxu0 0.0
      %4254 = vmatpush1.msra.mxu0 0.0
      %4255 = vmatprep.mubr.f32.mxu0 0.0
      %4256 = vmatmul.mubr.f32.gmra.mrb[0].mxu0 %v4081
      %v4257 = vpop.f32.mrb[0].mxu0
      %v4258 = vadd.f32 0.0, %v4257
      %v4259 = vpop.f32.mrb[0].mxu0
      %4260 = vmatprep.mubr.f32.mxu0 0.0
      %4261 = vmatmul.mubr.f32.gmra.mrb[0].mxu0 %v4084
      %v4262 = vpop.f32.mrb[0].mxu0
      %v4263 = vadd.f32 0.0, %v4262
      %v4264 = vpop.f32.mrb[0].mxu0
      %4265 = vmatprep.mubr.f32.mxu0 0.0
      %4266 = vmatmul.mubr.f32.gmra.mrb[0].mxu0 %v4087
      %v4267 = vpop.f32.mrb[0].mxu0
      %v4268 = vadd.f32 0.0, %v4267
      %v4269 = vpop.f32.mrb[0].mxu0
      %4270 = vmatprep.mubr.f32.mxu0 0.0
      %4271 = vmatmul.mubr.f32.gmra.mrb[0].mxu0 %v4090
      %v4272 = vpop.f32.mrb[0].mxu0
      %v4273 = vadd.f32 0.0, %v4272
      %v4274 = vpop.f32.mrb[0].mxu0
      %4275 = vmatprep.mubr.f32.mxu0 0.0
      %4276 = vmatmul.mubr.f32.gmra.mrb[0].mxu0 %v4093
      %v4277 = vpop.f32.mrb[0].mxu0
      %v4278 = vadd.f32 0.0, %v4277
      %v4279 = vpop.f32.mrb[0].mxu0
      %4280 = vmatprep.mubr.f32.mxu0 0.0
      %4281 = vmatmul.mubr.f32.gmra.mrb[0].mxu0 %v4096
      %v4282 = vpop.f32.mrb[0].mxu0
      %v4283 = vadd.f32 0.0, %v4282
      %v4284 = vpop.f32.mrb[0].mxu0
      %4285 = vmatprep.mubr.f32.mxu0 0.0
      %4286 = vmatmul.mubr.f32.gmra.mrb[0].mxu0 %v4099
      %v4287 = vpop.f32.mrb[0].mxu0
      %v4288 = vadd.f32 0.0, %v4287
      %v4289 = vpop.f32.mrb[0].mxu0
      %4290 = vmatprep.mubr.f32.mxu0 0.0
      %4291 = vmatmul.mubr.f32.gmra.mrb[0].mxu0 %v4102
      %v4292 = vpop.f32.mrb[0].mxu0
      %v4293 = vadd.f32 0.0, %v4292
      %v4294 = vpop.f32.mrb[0].mxu0
      %4295 = vmatprep.mubr.f32.mxu0 0.0
      %4296 = vmatmul.mubr.f32.gmra.mrb[0].mxu0 %v4105
      %v4297 = vpop.f32.mrb[0].mxu0
      %v4298 = vadd.f32 0.0, %v4297
      %v4299 = vpop.f32.mrb[0].mxu0
      %4300 = vmatprep.mubr.f32.mxu0 0.0
      %4301 = vmatmul.mubr.f32.gmra.mrb[0].mxu0 %v4108
      %v4302 = vpop.f32.mrb[0].mxu0
      %v4303 = vadd.f32 0.0, %v4302
      %v4304 = vpop.f32.mrb[0].mxu0
      %4305 = vmatprep.mubr.f32.mxu0 0.0
      %4306 = vmatmul.mubr.f32.gmra.mrb[0].mxu0 %v4111
      %v4307 = vpop.f32.mrb[0].mxu0
      %v4308 = vadd.f32 0.0, %v4307
      %v4309 = vpop.f32.mrb[0].mxu0
      %4310 = vmatprep.mubr.f32.mxu0 0.0
      %4311 = vmatmul.mubr.f32.gmra.mrb[0].mxu0 %v4114
      %v4312 = vpop.f32.mrb[0].mxu0
      %v4313 = vadd.f32 0.0, %v4312
      %v4314 = vpop.f32.mrb[0].mxu0
      %4315 = vmatprep.mubr.f32.mxu0 0.0
      %4316 = vmatmul.mubr.f32.gmra.mrb[0].mxu0 %v4117
      %v4317 = vpop.f32.mrb[0].mxu0
      %v4318 = vadd.f32 0.0, %v4317
      %v4319 = vpop.f32.mrb[0].mxu0
      %4320 = vmatprep.mubr.f32.mxu0 0.0
      %4321 = vmatmul.mubr.f32.gmra.mrb[0].mxu0 %v4120
      %v4322 = vpop.f32.mrb[0].mxu0
      %v4323 = vadd.f32 0.0, %v4322
      %v4324 = vpop.f32.mrb[0].mxu0
      %4325 = vmatprep.mubr.f32.mxu0 0.0
      %4326 = vmatmul.mubr.f32.gmra.mrb[0].mxu0 %v4123
      %v4327 = vpop.f32.mrb[0].mxu0
      %v4328 = vadd.f32 0.0, %v4327
      %v4329 = vpop.f32.mrb[0].mxu0
      %4330 = vmatprep.mubr.f32.mxu0 0.0
      %4331 = vmatmul.mubr.f32.gmra.mrb[0].mxu0 %v4126
      %v4332 = vpop.f32.mrb[0].mxu0
      %v4333 = vadd.f32 0.0, %v4332
      %v4334 = vpop.f32.mrb[0].mxu0
      %4335 = vmatprep.mubr.f32.mxu0 0.0
      %4336 = vmatmul.mubr.f32.gmra.mrb[0].mxu0 %v4129
      %v4337 = vpop.f32.mrb[0].mxu0
      %v4338 = vadd.f32 0.0, %v4337
      %v4339 = vpop.f32.mrb[0].mxu0
      %4340 = vmatprep.mubr.f32.mxu0 0.0
      %4341 = vmatmul.mubr.f32.gmra.mrb[0].mxu0 %v4132
      %v4342 = vpop.f32.mrb[0].mxu0
      %v4343 = vadd.f32 0.0, %v4342
      %v4344 = vpop.f32.mrb[0].mxu0
      %4345 = vmatprep.mubr.f32.mxu0 0.0
      %4346 = vmatmul.mubr.f32.gmra.mrb[0].mxu0 %v4135
      %v4347 = vpop.f32.mrb[0].mxu0
      %v4348 = vadd.f32 0.0, %v4347
      %v4349 = vpop.f32.mrb[0].mxu0
      %4350 = vmatprep.mubr.f32.mxu0 0.0
      %4351 = vmatmul.mubr.f32.gmra.mrb[0].mxu0 %v4138
      %v4352 = vpop.f32.mrb[0].mxu0
      %v4353 = vadd.f32 0.0, %v4352
      %v4354 = vpop.f32.mrb[0].mxu0
      %4355 = vmatprep.mubr.f32.mxu0 0.0
      %4356 = vmatmul.mubr.f32.gmra.mrb[0].mxu0 %v4141
      %v4357 = vpop.f32.mrb[0].mxu0
      %v4358 = vadd.f32 0.0, %v4357
      %v4359 = vpop.f32.mrb[0].mxu0
      %4360 = vmatprep.mubr.f32.mxu0 0.0
      %4361 = vmatmul.mubr.f32.gmra.mrb[0].mxu0 %v4144
      %v4362 = vpop.f32.mrb[0].mxu0
      %v4363 = vadd.f32 0.0, %v4362
      %v4364 = vpop.f32.mrb[0].mxu0
      %4365 = vmatprep.mubr.f32.mxu0 0.0
      %4366 = vmatmul.mubr.f32.gmra.mrb[0].mxu0 %v4147
      %v4367 = vpop.f32.mrb[0].mxu0
      %v4368 = vadd.f32 0.0, %v4367
      %v4369 = vpop.f32.mrb[0].mxu0
      %4370 = vmatprep.mubr.f32.mxu0 0.0
      %4371 = vmatmul.mubr.f32.gmra.mrb[0].mxu0 %v4150
      %v4372 = vpop.f32.mrb[0].mxu0
      %v4373 = vadd.f32 0.0, %v4372
      %v4374 = vpop.f32.mrb[0].mxu0
      %4375 = vmatprep.mubr.f32.mxu0 0.0
      %4376 = vmatmul.mubr.f32.gmra.mrb[0].mxu0 %v4153
      %v4377 = vpop.f32.mrb[0].mxu0
      %v4378 = vadd.f32 0.0, %v4377
      %v4379 = vpop.f32.mrb[0].mxu0
      %4380 = vmatprep.mubr.f32.mxu0 0.0
      %4381 = vmatmul.mubr.f32.gmra.mrb[0].mxu0 %v4156
      %v4382 = vpop.f32.mrb[0].mxu0
      %v4383 = vadd.f32 0.0, %v4382
      %v4384 = vpop.f32.mrb[0].mxu0
      %4385 = vmatprep.mubr.f32.mxu0 0.0
      %4386 = vmatmul.mubr.f32.gmra.mrb[0].mxu0 %v4159
      %v4387 = vpop.f32.mrb[0].mxu0
      %v4388 = vadd.f32 0.0, %v4387
      %v4389 = vpop.f32.mrb[0].mxu0
      %4390 = vmatprep.mubr.f32.mxu0 0.0
      %4391 = vmatmul.mubr.f32.gmra.mrb[0].mxu0 %v4162
      %v4392 = vpop.f32.mrb[0].mxu0
      %v4393 = vadd.f32 0.0, %v4392
      %v4394 = vpop.f32.mrb[0].mxu0
      %4395 = vmatprep.mubr.f32.mxu0 0.0
      %4396 = vmatmul.mubr.f32.gmra.mrb[0].mxu0 %v4165
      %v4397 = vpop.f32.mrb[0].mxu0
      %v4398 = vadd.f32 0.0, %v4397
      %v4399 = vpop.f32.mrb[0].mxu0
      %4400 = vmatprep.mubr.f32.mxu0 0.0
      %4401 = vmatmul.mubr.f32.gmra.mrb[0].mxu0 %v4168
      %v4402 = vpop.f32.mrb[0].mxu0
      %v4403 = vadd.f32 0.0, %v4402
      %v4404 = vpop.f32.mrb[0].mxu0
      %4405 = vmatprep.mubr.f32.mxu0 0.0
      %4406 = vmatmul.mubr.f32.gmra.mrb[0].mxu0 %v4171
      %v4407 = vpop.f32.mrb[0].mxu0
      %v4408 = vadd.f32 0.0, %v4407
      %v4409 = vpop.f32.mrb[0].mxu0
      %4410 = vmatprep.mubr.f32.mxu0 0.0
      %4411 = vmatmul.mubr.f32.gmra.mrb[0].mxu0 %v4174
      %v4412 = vpop.f32.mrb[0].mxu0
      %v4413 = vadd.f32 0.0, %v4412
      %v4414 = vpop.f32.mrb[0].mxu0
      %4415 = vmatprep.mubr.f32.mxu0 0.0
      %4416 = vmatmul.mubr.f32.gmra.mrb[0].mxu0 %v4177
      %v4417 = vpop.f32.mrb[0].mxu0
      %v4418 = vadd.f32 0.0, %v4417
      %v4419 = vpop.f32.mrb[0].mxu0
      %4420 = vmatprep.mubr.f32.mxu0 0.0
      %4421 = vmatmul.mubr.f32.gmra.mrb[0].mxu0 %v4180
      %v4422 = vpop.f32.mrb[0].mxu0
      %v4423 = vadd.f32 0.0, %v4422
      %v4424 = vpop.f32.mrb[0].mxu0
      %4425 = vmatprep.mubr.f32.mxu0 0.0
      %4426 = vmatmul.mubr.f32.gmra.mrb[0].mxu0 %v4183
      %v4427 = vpop.f32.mrb[0].mxu0
      %v4428 = vadd.f32 0.0, %v4427
      %v4429 = vpop.f32.mrb[0].mxu0
      %4430 = vmatprep.mubr.f32.mxu0 0.0
      %4431 = vmatmul.mubr.f32.gmra.mrb[0].mxu0 %v4186
      %v4432 = vpop.f32.mrb[0].mxu0
      %v4433 = vadd.f32 0.0, %v4432
      %v4434 = vpop.f32.mrb[0].mxu0
      %4435 = vdwg.mxu0
      %v4436 = vadd.f32 %v4006, %v4258
      %v4437 = vadd.f32 %v4007, %v4263
      %v4438 = vadd.f32 %v4008, %v4268
      %v4439 = vadd.f32 %v4009, %v4273
      %v4440 = vadd.f32 %v4010, %v4278
      %v4441 = vadd.f32 %v4011, %v4283
      %v4442 = vadd.f32 %v4012, %v4288
      %v4443 = vadd.f32 %v4013, %v4293
      %v4444 = vadd.f32 %v4014, %v4298
      %v4445 = vadd.f32 %v4015, %v4303
      %v4446 = vadd.f32 %v4016, %v4308
      %v4447 = vadd.f32 %v4017, %v4313
      %v4448 = vadd.f32 %v4018, %v4318
      %v4449 = vadd.f32 %v4019, %v4323
      %v4450 = vadd.f32 %v4020, %v4328
      %v4451 = vadd.f32 %v4021, %v4333
      %v4452 = vadd.f32 %v4022, %v4338
      %v4453 = vadd.f32 %v4023, %v4343
      %v4454 = vadd.f32 %v4024, %v4348
      %v4455 = vadd.f32 %v4025, %v4353
      %v4456 = vadd.f32 %v4026, %v4358
      %v4457 = vadd.f32 %v4027, %v4363
      %v4458 = vadd.f32 %v4028, %v4368
      %v4459 = vadd.f32 %v4029, %v4373
      %v4460 = vadd.f32 %v4030, %v4378
      %v4461 = vadd.f32 %v4031, %v4383
      %v4462 = vadd.f32 %v4032, %v4388
      %v4463 = vadd.f32 %v4033, %v4393
      %v4464 = vadd.f32 %v4034, %v4398
      %v4465 = vadd.f32 %v4035, %v4403
      %v4466 = vadd.f32 %v4036, %v4408
      %v4467 = vadd.f32 %v4037, %v4413
      %v4468 = vadd.f32 %v4038, %v4418
      %v4469 = vadd.f32 %v4039, %v4423
      %v4470 = vadd.f32 %v4040, %v4428
      %v4471 = vadd.f32 %v4041, %v4433
      %v4472 = vld [vmem:[#allocation2 + $0x2b] sm:$0xff]
      %v4473 = vld [vmem:[#allocation2 + $0x33] sm:$0xff]
      %v4474 = vld [vmem:[#allocation2 + $0x3b] sm:$0xff]
      %v4475 = vld [vmem:[#allocation2 + $0x43] sm:$0xff]
      %v4476 = vld [vmem:[#allocation2 + $0x4b] sm:$0xff]
      %v4477 = vld [vmem:[#allocation2 + $0x53] sm:$0xff]
      %v4478 = vld [vmem:[#allocation2 + $0x5b] sm:$0xff]
      %v4479 = vld [vmem:[#allocation2 + $0x63] sm:$0xff]
      %v4480 = vld [vmem:[#allocation2 + $0x6b] sm:$0xff]
      %v4481 = vld [vmem:[#allocation2 + $0x73] sm:$0xff]
      %v4482 = vld [vmem:[#allocation2 + $0x7b] sm:$0xff]
      %v4483 = vld [vmem:[#allocation2 + $0x83] sm:$0xff]
      %v4484 = vld [vmem:[#allocation2 + $0x8b] sm:$0xff]
      %v4485 = vld [vmem:[#allocation2 + $0x93] sm:$0xff]
      %v4486 = vld [vmem:[#allocation2 + $0x9b] sm:$0xff]
      %v4487 = vld [vmem:[#allocation2 + $0xa3] sm:$0xff]
      %v4488 = vld [vmem:[#allocation2 + $0xab] sm:$0xff]
      %v4489 = vld [vmem:[#allocation2 + $0xb3] sm:$0xff]
      %v4490 = vld [vmem:[#allocation2 + $0xbb] sm:$0xff]
      %v4491 = vld [vmem:[#allocation2 + $0xc3] sm:$0xff]
      %v4492 = vld [vmem:[#allocation2 + $0xcb] sm:$0xff]
      %v4493 = vld [vmem:[#allocation2 + $0xd3] sm:$0xff]
      %v4494 = vld [vmem:[#allocation2 + $0xdb] sm:$0xff]
      %v4495 = vld [vmem:[#allocation2 + $0xe3] sm:$0xff]
      %v4496 = vld [vmem:[#allocation2 + $0xeb] sm:$0xff]
      %v4497 = vld [vmem:[#allocation2 + $0xf3] sm:$0xff]
      %v4498 = vld [vmem:[#allocation2 + $0xfb] sm:$0xff]
      %v4499 = vld [vmem:[#allocation2 + $0x103] sm:$0xff]
      %v4500 = vld [vmem:[#allocation2 + $0x10b] sm:$0xff]
      %v4501 = vld [vmem:[#allocation2 + $0x113] sm:$0xff]
      %v4502 = vld [vmem:[#allocation2 + $0x11b] sm:$0xff]
      %v4503 = vld [vmem:[#allocation2 + $0x123] sm:$0xff]
      %v4504 = vld [vmem:[#allocation2 + $0x12b] sm:$0xff]
      %v4505 = vld [vmem:[#allocation2 + $0x133] sm:$0xff]
      %v4506 = vld [vmem:[#allocation2 + $0x13b] sm:$0xff]
      %v4507 = vld [vmem:[#allocation2 + $0x143] sm:$0xff]
      %s4508 = scalar_lea.vmem %s2, 32
      %v4509 = vld [vmem:[%s4508] sm:$0xf]
      %v4511 = vsel %vm1025, %v4472, 0
      %v4514 = vsel %vm1025, %v4473, 0
      %v4517 = vsel %vm1025, %v4474, 0
      %v4520 = vsel %vm1025, %v4475, 0
      %v4523 = vsel %vm1025, %v4476, 0
      %v4526 = vsel %vm1025, %v4477, 0
      %v4529 = vsel %vm1025, %v4478, 0
      %v4532 = vsel %vm1025, %v4479, 0
      %v4535 = vsel %vm1025, %v4480, 0
      %v4538 = vsel %vm1025, %v4481, 0
      %v4541 = vsel %vm1025, %v4482, 0
      %v4544 = vsel %vm1025, %v4483, 0
      %v4547 = vsel %vm1025, %v4484, 0
      %v4550 = vsel %vm1025, %v4485, 0
      %v4553 = vsel %vm1025, %v4486, 0
      %v4556 = vsel %vm1025, %v4487, 0
      %v4559 = vsel %vm1025, %v4488, 0
      %v4562 = vsel %vm1025, %v4489, 0
      %v4565 = vsel %vm1025, %v4490, 0
      %v4568 = vsel %vm1025, %v4491, 0
      %v4571 = vsel %vm1025, %v4492, 0
      %v4574 = vsel %vm1025, %v4493, 0
      %v4577 = vsel %vm1025, %v4494, 0
      %v4580 = vsel %vm1025, %v4495, 0
      %v4583 = vsel %vm1025, %v4496, 0
      %v4586 = vsel %vm1025, %v4497, 0
      %v4589 = vsel %vm1025, %v4498, 0
      %v4592 = vsel %vm1025, %v4499, 0
      %v4595 = vsel %vm1025, %v4500, 0
      %v4598 = vsel %vm1025, %v4501, 0
      %v4601 = vsel %vm1025, %v4502, 0
      %v4604 = vsel %vm1025, %v4503, 0
      %v4607 = vsel %vm1025, %v4504, 0
      %v4610 = vsel %vm1025, %v4505, 0
      %v4613 = vsel %vm1025, %v4506, 0
      %v4616 = vsel %vm1025, %v4507, 0
      %v4619 = vsel %vm1287, %v4509, 0
      %4621 = vmatprep.subr.mxu0 0.0
      %4622 = vmatpush1.msra.mxu0 %v4619
      %4623 = vmatprep.subr.mxu0 0.0
      %4624 = vmatpush1.msra.mxu0 0.0
      %4625 = vmatprep.subr.mxu0 0.0
      %4626 = vmatpush1.msra.mxu0 0.0
      %4627 = vmatprep.subr.mxu0 0.0
      %4628 = vmatpush1.msra.mxu0 0.0
      %4629 = vmatprep.subr.mxu0 0.0
      %4630 = vmatpush1.msra.mxu0 0.0
      %4631 = vmatprep.subr.mxu0 0.0
      %4632 = vmatpush1.msra.mxu0 0.0
      %4633 = vmatprep.subr.mxu0 0.0
      %4634 = vmatpush1.msra.mxu0 0.0
      %4635 = vmatprep.subr.mxu0 0.0
      %4636 = vmatpush1.msra.mxu0 0.0
      %4637 = vmatprep.subr.mxu0 0.0
      %4638 = vmatpush1.msra.mxu0 0.0
      %4639 = vmatprep.subr.mxu0 0.0
      %4640 = vmatpush1.msra.mxu0 0.0
      %4641 = vmatprep.subr.mxu0 0.0
      %4642 = vmatpush1.msra.mxu0 0.0
      %4643 = vmatprep.subr.mxu0 0.0
      %4644 = vmatpush1.msra.mxu0 0.0
      %4645 = vmatprep.subr.mxu0 0.0
      %4646 = vmatpush1.msra.mxu0 0.0
      %4647 = vmatprep.subr.mxu0 0.0
      %4648 = vmatpush1.msra.mxu0 0.0
      %4649 = vmatprep.subr.mxu0 0.0
      %4650 = vmatpush1.msra.mxu0 0.0
      %4651 = vmatprep.subr.mxu0 0.0
      %4652 = vmatpush1.msra.mxu0 0.0
      %4653 = vmatprep.subr.mxu0 0.0
      %4654 = vmatpush1.msra.mxu0 0.0
      %4655 = vmatprep.subr.mxu0 0.0
      %4656 = vmatpush1.msra.mxu0 0.0
      %4657 = vmatprep.subr.mxu0 0.0
      %4658 = vmatpush1.msra.mxu0 0.0
      %4659 = vmatprep.subr.mxu0 0.0
      %4660 = vmatpush1.msra.mxu0 0.0
      %4661 = vmatprep.subr.mxu0 0.0
      %4662 = vmatpush1.msra.mxu0 0.0
      %4663 = vmatprep.subr.mxu0 0.0
      %4664 = vmatpush1.msra.mxu0 0.0
      %4665 = vmatprep.subr.mxu0 0.0
      %4666 = vmatpush1.msra.mxu0 0.0
      %4667 = vmatprep.subr.mxu0 0.0
      %4668 = vmatpush1.msra.mxu0 0.0
      %4669 = vmatprep.subr.mxu0 0.0
      %4670 = vmatpush1.msra.mxu0 0.0
      %4671 = vmatprep.subr.mxu0 0.0
      %4672 = vmatpush1.msra.mxu0 0.0
      %4673 = vmatprep.subr.mxu0 0.0
      %4674 = vmatpush1.msra.mxu0 0.0
      %4675 = vmatprep.subr.mxu0 0.0
      %4676 = vmatpush1.msra.mxu0 0.0
      %4677 = vmatprep.subr.mxu0 0.0
      %4678 = vmatpush1.msra.mxu0 0.0
      %4679 = vmatprep.subr.mxu0 0.0
      %4680 = vmatpush1.msra.mxu0 0.0
      %4681 = vmatprep.subr.mxu0 0.0
      %4682 = vmatpush1.msra.mxu0 0.0
      %4683 = vmatprep.subr.mxu0 0.0
      %4684 = vmatpush1.msra.mxu0 0.0
      %4685 = vmatprep.mubr.f32.mxu0 0.0
      %4686 = vmatmul.mubr.f32.gmra.mrb[0].mxu0 %v4511
      %v4687 = vpop.f32.mrb[0].mxu0
      %v4688 = vadd.f32 0.0, %v4687
      %v4689 = vpop.f32.mrb[0].mxu0
      %4690 = vmatprep.mubr.f32.mxu0 0.0
      %4691 = vmatmul.mubr.f32.gmra.mrb[0].mxu0 %v4514
      %v4692 = vpop.f32.mrb[0].mxu0
      %v4693 = vadd.f32 0.0, %v4692
      %v4694 = vpop.f32.mrb[0].mxu0
      %4695 = vmatprep.mubr.f32.mxu0 0.0
      %4696 = vmatmul.mubr.f32.gmra.mrb[0].mxu0 %v4517
      %v4697 = vpop.f32.mrb[0].mxu0
      %v4698 = vadd.f32 0.0, %v4697
      %v4699 = vpop.f32.mrb[0].mxu0
      %4700 = vmatprep.mubr.f32.mxu0 0.0
      %4701 = vmatmul.mubr.f32.gmra.mrb[0].mxu0 %v4520
      %v4702 = vpop.f32.mrb[0].mxu0
      %v4703 = vadd.f32 0.0, %v4702
      %v4704 = vpop.f32.mrb[0].mxu0
      %4705 = vmatprep.mubr.f32.mxu0 0.0
      %4706 = vmatmul.mubr.f32.gmra.mrb[0].mxu0 %v4523
      %v4707 = vpop.f32.mrb[0].mxu0
      %v4708 = vadd.f32 0.0, %v4707
      %v4709 = vpop.f32.mrb[0].mxu0
      %4710 = vmatprep.mubr.f32.mxu0 0.0
      %4711 = vmatmul.mubr.f32.gmra.mrb[0].mxu0 %v4526
      %v4712 = vpop.f32.mrb[0].mxu0
      %v4713 = vadd.f32 0.0, %v4712
      %v4714 = vpop.f32.mrb[0].mxu0
      %4715 = vmatprep.mubr.f32.mxu0 0.0
      %4716 = vmatmul.mubr.f32.gmra.mrb[0].mxu0 %v4529
      %v4717 = vpop.f32.mrb[0].mxu0
      %v4718 = vadd.f32 0.0, %v4717
      %v4719 = vpop.f32.mrb[0].mxu0
      %4720 = vmatprep.mubr.f32.mxu0 0.0
      %4721 = vmatmul.mubr.f32.gmra.mrb[0].mxu0 %v4532
      %v4722 = vpop.f32.mrb[0].mxu0
      %v4723 = vadd.f32 0.0, %v4722
      %v4724 = vpop.f32.mrb[0].mxu0
      %4725 = vmatprep.mubr.f32.mxu0 0.0
      %4726 = vmatmul.mubr.f32.gmra.mrb[0].mxu0 %v4535
      %v4727 = vpop.f32.mrb[0].mxu0
      %v4728 = vadd.f32 0.0, %v4727
      %v4729 = vpop.f32.mrb[0].mxu0
      %4730 = vmatprep.mubr.f32.mxu0 0.0
      %4731 = vmatmul.mubr.f32.gmra.mrb[0].mxu0 %v4538
      %v4732 = vpop.f32.mrb[0].mxu0
      %v4733 = vadd.f32 0.0, %v4732
      %v4734 = vpop.f32.mrb[0].mxu0
      %4735 = vmatprep.mubr.f32.mxu0 0.0
      %4736 = vmatmul.mubr.f32.gmra.mrb[0].mxu0 %v4541
      %v4737 = vpop.f32.mrb[0].mxu0
      %v4738 = vadd.f32 0.0, %v4737
      %v4739 = vpop.f32.mrb[0].mxu0
      %4740 = vmatprep.mubr.f32.mxu0 0.0
      %4741 = vmatmul.mubr.f32.gmra.mrb[0].mxu0 %v4544
      %v4742 = vpop.f32.mrb[0].mxu0
      %v4743 = vadd.f32 0.0, %v4742
      %v4744 = vpop.f32.mrb[0].mxu0
      %4745 = vmatprep.mubr.f32.mxu0 0.0
      %4746 = vmatmul.mubr.f32.gmra.mrb[0].mxu0 %v4547
      %v4747 = vpop.f32.mrb[0].mxu0
      %v4748 = vadd.f32 0.0, %v4747
      %v4749 = vpop.f32.mrb[0].mxu0
      %4750 = vmatprep.mubr.f32.mxu0 0.0
      %4751 = vmatmul.mubr.f32.gmra.mrb[0].mxu0 %v4550
      %v4752 = vpop.f32.mrb[0].mxu0
      %v4753 = vadd.f32 0.0, %v4752
      %v4754 = vpop.f32.mrb[0].mxu0
      %4755 = vmatprep.mubr.f32.mxu0 0.0
      %4756 = vmatmul.mubr.f32.gmra.mrb[0].mxu0 %v4553
      %v4757 = vpop.f32.mrb[0].mxu0
      %v4758 = vadd.f32 0.0, %v4757
      %v4759 = vpop.f32.mrb[0].mxu0
      %4760 = vmatprep.mubr.f32.mxu0 0.0
      %4761 = vmatmul.mubr.f32.gmra.mrb[0].mxu0 %v4556
      %v4762 = vpop.f32.mrb[0].mxu0
      %v4763 = vadd.f32 0.0, %v4762
      %v4764 = vpop.f32.mrb[0].mxu0
      %4765 = vmatprep.mubr.f32.mxu0 0.0
      %4766 = vmatmul.mubr.f32.gmra.mrb[0].mxu0 %v4559
      %v4767 = vpop.f32.mrb[0].mxu0
      %v4768 = vadd.f32 0.0, %v4767
      %v4769 = vpop.f32.mrb[0].mxu0
      %4770 = vmatprep.mubr.f32.mxu0 0.0
      %4771 = vmatmul.mubr.f32.gmra.mrb[0].mxu0 %v4562
      %v4772 = vpop.f32.mrb[0].mxu0
      %v4773 = vadd.f32 0.0, %v4772
      %v4774 = vpop.f32.mrb[0].mxu0
      %4775 = vmatprep.mubr.f32.mxu0 0.0
      %4776 = vmatmul.mubr.f32.gmra.mrb[0].mxu0 %v4565
      %v4777 = vpop.f32.mrb[0].mxu0
      %v4778 = vadd.f32 0.0, %v4777
      %v4779 = vpop.f32.mrb[0].mxu0
      %4780 = vmatprep.mubr.f32.mxu0 0.0
      %4781 = vmatmul.mubr.f32.gmra.mrb[0].mxu0 %v4568
      %v4782 = vpop.f32.mrb[0].mxu0
      %v4783 = vadd.f32 0.0, %v4782
      %v4784 = vpop.f32.mrb[0].mxu0
      %4785 = vmatprep.mubr.f32.mxu0 0.0
      %4786 = vmatmul.mubr.f32.gmra.mrb[0].mxu0 %v4571
      %v4787 = vpop.f32.mrb[0].mxu0
      %v4788 = vadd.f32 0.0, %v4787
      %v4789 = vpop.f32.mrb[0].mxu0
      %4790 = vmatprep.mubr.f32.mxu0 0.0
      %4791 = vmatmul.mubr.f32.gmra.mrb[0].mxu0 %v4574
      %v4792 = vpop.f32.mrb[0].mxu0
      %v4793 = vadd.f32 0.0, %v4792
      %v4794 = vpop.f32.mrb[0].mxu0
      %4795 = vmatprep.mubr.f32.mxu0 0.0
      %4796 = vmatmul.mubr.f32.gmra.mrb[0].mxu0 %v4577
      %v4797 = vpop.f32.mrb[0].mxu0
      %v4798 = vadd.f32 0.0, %v4797
      %v4799 = vpop.f32.mrb[0].mxu0
      %4800 = vmatprep.mubr.f32.mxu0 0.0
      %4801 = vmatmul.mubr.f32.gmra.mrb[0].mxu0 %v4580
      %v4802 = vpop.f32.mrb[0].mxu0
      %v4803 = vadd.f32 0.0, %v4802
      %v4804 = vpop.f32.mrb[0].mxu0
      %4805 = vmatprep.mubr.f32.mxu0 0.0
      %4806 = vmatmul.mubr.f32.gmra.mrb[0].mxu0 %v4583
      %v4807 = vpop.f32.mrb[0].mxu0
      %v4808 = vadd.f32 0.0, %v4807
      %v4809 = vpop.f32.mrb[0].mxu0
      %4810 = vmatprep.mubr.f32.mxu0 0.0
      %4811 = vmatmul.mubr.f32.gmra.mrb[0].mxu0 %v4586
      %v4812 = vpop.f32.mrb[0].mxu0
      %v4813 = vadd.f32 0.0, %v4812
      %v4814 = vpop.f32.mrb[0].mxu0
      %4815 = vmatprep.mubr.f32.mxu0 0.0
      %4816 = vmatmul.mubr.f32.gmra.mrb[0].mxu0 %v4589
      %v4817 = vpop.f32.mrb[0].mxu0
      %v4818 = vadd.f32 0.0, %v4817
      %v4819 = vpop.f32.mrb[0].mxu0
      %4820 = vmatprep.mubr.f32.mxu0 0.0
      %4821 = vmatmul.mubr.f32.gmra.mrb[0].mxu0 %v4592
      %v4822 = vpop.f32.mrb[0].mxu0
      %v4823 = vadd.f32 0.0, %v4822
      %v4824 = vpop.f32.mrb[0].mxu0
      %4825 = vmatprep.mubr.f32.mxu0 0.0
      %4826 = vmatmul.mubr.f32.gmra.mrb[0].mxu0 %v4595
      %v4827 = vpop.f32.mrb[0].mxu0
      %v4828 = vadd.f32 0.0, %v4827
      %v4829 = vpop.f32.mrb[0].mxu0
      %4830 = vmatprep.mubr.f32.mxu0 0.0
      %4831 = vmatmul.mubr.f32.gmra.mrb[0].mxu0 %v4598
      %v4832 = vpop.f32.mrb[0].mxu0
      %v4833 = vadd.f32 0.0, %v4832
      %v4834 = vpop.f32.mrb[0].mxu0
      %4835 = vmatprep.mubr.f32.mxu0 0.0
      %4836 = vmatmul.mubr.f32.gmra.mrb[0].mxu0 %v4601
      %v4837 = vpop.f32.mrb[0].mxu0
      %v4838 = vadd.f32 0.0, %v4837
      %v4839 = vpop.f32.mrb[0].mxu0
      %4840 = vmatprep.mubr.f32.mxu0 0.0
      %4841 = vmatmul.mubr.f32.gmra.mrb[0].mxu0 %v4604
      %v4842 = vpop.f32.mrb[0].mxu0
      %v4843 = vadd.f32 0.0, %v4842
      %v4844 = vpop.f32.mrb[0].mxu0
      %4845 = vmatprep.mubr.f32.mxu0 0.0
      %4846 = vmatmul.mubr.f32.gmra.mrb[0].mxu0 %v4607
      %v4847 = vpop.f32.mrb[0].mxu0
      %v4848 = vadd.f32 0.0, %v4847
      %v4849 = vpop.f32.mrb[0].mxu0
      %4850 = vmatprep.mubr.f32.mxu0 0.0
      %4851 = vmatmul.mubr.f32.gmra.mrb[0].mxu0 %v4610
      %v4852 = vpop.f32.mrb[0].mxu0
      %v4853 = vadd.f32 0.0, %v4852
      %v4854 = vpop.f32.mrb[0].mxu0
      %4855 = vmatprep.mubr.f32.mxu0 0.0
      %4856 = vmatmul.mubr.f32.gmra.mrb[0].mxu0 %v4613
      %v4857 = vpop.f32.mrb[0].mxu0
      %v4858 = vadd.f32 0.0, %v4857
      %v4859 = vpop.f32.mrb[0].mxu0
      %4860 = vmatprep.mubr.f32.mxu0 0.0
      %4861 = vmatmul.mubr.f32.gmra.mrb[0].mxu0 %v4616
      %v4862 = vpop.f32.mrb[0].mxu0
      %v4863 = vadd.f32 0.0, %v4862
      %v4864 = vpop.f32.mrb[0].mxu0
      %4865 = vdwg.mxu0
      %v4866 = vadd.f32 %v4436, %v4688
      %v4867 = vadd.f32 %v4437, %v4693
      %v4868 = vadd.f32 %v4438, %v4698
      %v4869 = vadd.f32 %v4439, %v4703
      %v4870 = vadd.f32 %v4440, %v4708
      %v4871 = vadd.f32 %v4441, %v4713
      %v4872 = vadd.f32 %v4442, %v4718
      %v4873 = vadd.f32 %v4443, %v4723
      %v4874 = vadd.f32 %v4444, %v4728
      %v4875 = vadd.f32 %v4445, %v4733
      %v4876 = vadd.f32 %v4446, %v4738
      %v4877 = vadd.f32 %v4447, %v4743
      %v4878 = vadd.f32 %v4448, %v4748
      %v4879 = vadd.f32 %v4449, %v4753
      %v4880 = vadd.f32 %v4450, %v4758
      %v4881 = vadd.f32 %v4451, %v4763
      %v4882 = vadd.f32 %v4452, %v4768
      %v4883 = vadd.f32 %v4453, %v4773
      %v4884 = vadd.f32 %v4454, %v4778
      %v4885 = vadd.f32 %v4455, %v4783
      %v4886 = vadd.f32 %v4456, %v4788
      %v4887 = vadd.f32 %v4457, %v4793
      %v4888 = vadd.f32 %v4458, %v4798
      %v4889 = vadd.f32 %v4459, %v4803
      %v4890 = vadd.f32 %v4460, %v4808
      %v4891 = vadd.f32 %v4461, %v4813
      %v4892 = vadd.f32 %v4462, %v4818
      %v4893 = vadd.f32 %v4463, %v4823
      %v4894 = vadd.f32 %v4464, %v4828
      %v4895 = vadd.f32 %v4465, %v4833
      %v4896 = vadd.f32 %v4466, %v4838
      %v4897 = vadd.f32 %v4467, %v4843
      %v4898 = vadd.f32 %v4468, %v4848
      %v4899 = vadd.f32 %v4469, %v4853
      %v4900 = vadd.f32 %v4470, %v4858
      %v4901 = vadd.f32 %v4471, %v4863
      %v4902 = vld [vmem:[%s3] sm:$0x1]
      %v4904 = vlaneseq
      %v4905 = vshrl.u32 %v4904, 7
      %v4906 = vsub.s32 0, %v4905
      %v4907 = vrot.slane %v4902, %v4906
      %v4909 = vadd.f32 %v4866, %v4907
      %v4910 = vadd.f32 %v4867, %v4907
      %v4911 = vadd.f32 %v4868, %v4907
      %v4912 = vadd.f32 %v4869, %v4907
      %v4913 = vadd.f32 %v4870, %v4907
      %v4914 = vadd.f32 %v4871, %v4907
      %v4915 = vadd.f32 %v4872, %v4907
      %v4916 = vadd.f32 %v4873, %v4907
      %v4917 = vadd.f32 %v4874, %v4907
      %v4918 = vadd.f32 %v4875, %v4907
      %v4919 = vadd.f32 %v4876, %v4907
      %v4920 = vadd.f32 %v4877, %v4907
      %v4921 = vadd.f32 %v4878, %v4907
      %v4922 = vadd.f32 %v4879, %v4907
      %v4923 = vadd.f32 %v4880, %v4907
      %v4924 = vadd.f32 %v4881, %v4907
      %v4925 = vadd.f32 %v4882, %v4907
      %v4926 = vadd.f32 %v4883, %v4907
      %v4927 = vadd.f32 %v4884, %v4907
      %v4928 = vadd.f32 %v4885, %v4907
      %v4929 = vadd.f32 %v4886, %v4907
      %v4930 = vadd.f32 %v4887, %v4907
      %v4931 = vadd.f32 %v4888, %v4907
      %v4932 = vadd.f32 %v4889, %v4907
      %v4933 = vadd.f32 %v4890, %v4907
      %v4934 = vadd.f32 %v4891, %v4907
      %v4935 = vadd.f32 %v4892, %v4907
      %v4936 = vadd.f32 %v4893, %v4907
      %v4937 = vadd.f32 %v4894, %v4907
      %v4938 = vadd.f32 %v4895, %v4907
      %v4939 = vadd.f32 %v4896, %v4907
      %v4940 = vadd.f32 %v4897, %v4907
      %v4941 = vadd.f32 %v4898, %v4907
      %v4942 = vadd.f32 %v4899, %v4907
      %v4943 = vadd.f32 %v4900, %v4907
      %v4944 = vadd.f32 %v4901, %v4907
      %v4945 = vld [vmem:[%s568] sm:$0xff]
      %v4946 = vld [vmem:[%s568 + $0x8] sm:$0xff]
      %v4947 = vld [vmem:[%s568 + $0x10] sm:$0xff]
      %v4948 = vld [vmem:[%s568 + $0x18] sm:$0xff]
      %v4949 = vld [vmem:[%s568 + $0x20] sm:$0xff]
      %v4950 = vld [vmem:[%s568 + $0x28] sm:$0xff]
      %v4951 = vld [vmem:[%s568 + $0x30] sm:$0xff]
      %v4952 = vld [vmem:[%s568 + $0x38] sm:$0xff]
      %v4953 = vld [vmem:[%s568 + $0x40] sm:$0xff]
      %v4954 = vld [vmem:[%s568 + $0x48] sm:$0xff]
      %v4955 = vld [vmem:[%s568 + $0x50] sm:$0xff]
      %v4956 = vld [vmem:[%s568 + $0x58] sm:$0xff]
      %v4957 = vld [vmem:[%s568 + $0x60] sm:$0xff]
      %v4958 = vld [vmem:[%s568 + $0x68] sm:$0xff]
      %v4959 = vld [vmem:[%s568 + $0x70] sm:$0xff]
      %v4960 = vld [vmem:[%s568 + $0x78] sm:$0xff]
      %v4961 = vld [vmem:[%s568 + $0x80] sm:$0xff]
      %v4962 = vld [vmem:[%s568 + $0x88] sm:$0xff]
      %v4963 = vld [vmem:[%s568 + $0x90] sm:$0xff]
      %v4964 = vld [vmem:[%s568 + $0x98] sm:$0xff]
      %v4965 = vld [vmem:[%s568 + $0xa0] sm:$0xff]
      %v4966 = vld [vmem:[%s568 + $0xa8] sm:$0xff]
      %v4967 = vld [vmem:[%s568 + $0xb0] sm:$0xff]
      %v4968 = vld [vmem:[%s568 + $0xb8] sm:$0xff]
      %v4969 = vld [vmem:[%s568 + $0xc0] sm:$0xff]
      %v4970 = vld [vmem:[%s568 + $0xc8] sm:$0xff]
      %v4971 = vld [vmem:[%s568 + $0xd0] sm:$0xff]
      %v4972 = vld [vmem:[%s568 + $0xd8] sm:$0xff]
      %v4973 = vld [vmem:[%s568 + $0xe0] sm:$0xff]
      %v4974 = vld [vmem:[%s568 + $0xe8] sm:$0xff]
      %v4975 = vld [vmem:[%s568 + $0xf0] sm:$0xff]
      %v4976 = vld [vmem:[%s568 + $0xf8] sm:$0xff]
      %v4977 = vld [vmem:[%s568 + $0x100] sm:$0xff]
      %v4978 = vld [vmem:[%s568 + $0x108] sm:$0xff]
      %v4979 = vld [vmem:[%s568 + $0x110] sm:$0xff]
      %v4980 = vld [vmem:[%s568 + $0x118] sm:$0xff]
      %v4981 = vld [vmem:[%s5] sm:$0x1]
      %v4982 = vld [vmem:[%s571] sm:$0x1]
      %v4983 = vld [vmem:[%s574] sm:$0x1]
      %4985 = vset.pattern.permute.xlu0 0
      %4986 = vperm.xlu0 %4985, %v4945
      %v4987 = vpop.permute.xlu0 %4986
      %4990 = vset.pattern.permute.xlu0 0
      %4991 = vperm.xlu0 %4990, %v4946
      %v4992 = vpop.permute.xlu0 %4991
      %4995 = vset.pattern.permute.xlu0 0
      %4996 = vperm.xlu0 %4995, %v4947
      %v4997 = vpop.permute.xlu0 %4996
      %5000 = vset.pattern.permute.xlu0 0
      %5001 = vperm.xlu0 %5000, %v4948
      %v5002 = vpop.permute.xlu0 %5001
      %5005 = vset.pattern.permute.xlu0 0
      %5006 = vperm.xlu0 %5005, %v4949
      %v5007 = vpop.permute.xlu0 %5006
      %5010 = vset.pattern.permute.xlu0 0
      %5011 = vperm.xlu0 %5010, %v4950
      %v5012 = vpop.permute.xlu0 %5011
      %5015 = vset.pattern.permute.xlu0 0
      %5016 = vperm.xlu0 %5015, %v4951
      %v5017 = vpop.permute.xlu0 %5016
      %5020 = vset.pattern.permute.xlu0 0
      %5021 = vperm.xlu0 %5020, %v4952
      %v5022 = vpop.permute.xlu0 %5021
      %5025 = vset.pattern.permute.xlu0 0
      %5026 = vperm.xlu0 %5025, %v4953
      %v5027 = vpop.permute.xlu0 %5026
      %5030 = vset.pattern.permute.xlu0 0
      %5031 = vperm.xlu0 %5030, %v4954
      %v5032 = vpop.permute.xlu0 %5031
      %5035 = vset.pattern.permute.xlu0 0
      %5036 = vperm.xlu0 %5035, %v4955
      %v5037 = vpop.permute.xlu0 %5036
      %5040 = vset.pattern.permute.xlu0 0
      %5041 = vperm.xlu0 %5040, %v4956
      %v5042 = vpop.permute.xlu0 %5041
      %5045 = vset.pattern.permute.xlu0 0
      %5046 = vperm.xlu0 %5045, %v4957
      %v5047 = vpop.permute.xlu0 %5046
      %5050 = vset.pattern.permute.xlu0 0
      %5051 = vperm.xlu0 %5050, %v4958
      %v5052 = vpop.permute.xlu0 %5051
      %5055 = vset.pattern.permute.xlu0 0
      %5056 = vperm.xlu0 %5055, %v4959
      %v5057 = vpop.permute.xlu0 %5056
      %5060 = vset.pattern.permute.xlu0 0
      %5061 = vperm.xlu0 %5060, %v4960
      %v5062 = vpop.permute.xlu0 %5061
      %5065 = vset.pattern.permute.xlu0 0
      %5066 = vperm.xlu0 %5065, %v4961
      %v5067 = vpop.permute.xlu0 %5066
      %5070 = vset.pattern.permute.xlu0 0
      %5071 = vperm.xlu0 %5070, %v4962
      %v5072 = vpop.permute.xlu0 %5071
      %5075 = vset.pattern.permute.xlu0 0
      %5076 = vperm.xlu0 %5075, %v4963
      %v5077 = vpop.permute.xlu0 %5076
      %5080 = vset.pattern.permute.xlu0 0
      %5081 = vperm.xlu0 %5080, %v4964
      %v5082 = vpop.permute.xlu0 %5081
      %5085 = vset.pattern.permute.xlu0 0
      %5086 = vperm.xlu0 %5085, %v4965
      %v5087 = vpop.permute.xlu0 %5086
      %5090 = vset.pattern.permute.xlu0 0
      %5091 = vperm.xlu0 %5090, %v4966
      %v5092 = vpop.permute.xlu0 %5091
      %5095 = vset.pattern.permute.xlu0 0
      %5096 = vperm.xlu0 %5095, %v4967
      %v5097 = vpop.permute.xlu0 %5096
      %5100 = vset.pattern.permute.xlu0 0
      %5101 = vperm.xlu0 %5100, %v4968
      %v5102 = vpop.permute.xlu0 %5101
      %5105 = vset.pattern.permute.xlu0 0
      %5106 = vperm.xlu0 %5105, %v4969
      %v5107 = vpop.permute.xlu0 %5106
      %5110 = vset.pattern.permute.xlu0 0
      %5111 = vperm.xlu0 %5110, %v4970
      %v5112 = vpop.permute.xlu0 %5111
      %5115 = vset.pattern.permute.xlu0 0
      %5116 = vperm.xlu0 %5115, %v4971
      %v5117 = vpop.permute.xlu0 %5116
      %5120 = vset.pattern.permute.xlu0 0
      %5121 = vperm.xlu0 %5120, %v4972
      %v5122 = vpop.permute.xlu0 %5121
      %5125 = vset.pattern.permute.xlu0 0
      %5126 = vperm.xlu0 %5125, %v4973
      %v5127 = vpop.permute.xlu0 %5126
      %5130 = vset.pattern.permute.xlu0 0
      %5131 = vperm.xlu0 %5130, %v4974
      %v5132 = vpop.permute.xlu0 %5131
      %5135 = vset.pattern.permute.xlu0 0
      %5136 = vperm.xlu0 %5135, %v4975
      %v5137 = vpop.permute.xlu0 %5136
      %5140 = vset.pattern.permute.xlu0 0
      %5141 = vperm.xlu0 %5140, %v4976
      %v5142 = vpop.permute.xlu0 %5141
      %5145 = vset.pattern.permute.xlu0 0
      %5146 = vperm.xlu0 %5145, %v4977
      %v5147 = vpop.permute.xlu0 %5146
      %5150 = vset.pattern.permute.xlu0 0
      %5151 = vperm.xlu0 %5150, %v4978
      %v5152 = vpop.permute.xlu0 %5151
      %5155 = vset.pattern.permute.xlu0 0
      %5156 = vperm.xlu0 %5155, %v4979
      %v5157 = vpop.permute.xlu0 %5156
      %5160 = vset.pattern.permute.xlu0 0
      %5161 = vperm.xlu0 %5160, %v4980
      %v5162 = vpop.permute.xlu0 %5161
      %v5165 = vlaneseq
      %v5166 = vshrl.u32 %v5165, 7
      %v5167 = vsub.s32 0, %v5166
      %v5168 = vrot.slane %v4981, %v5167
      %v5170 = vmul.f32 %v4987, %v5168
      %v5171 = vmul.f32 %v4992, %v5168
      %v5172 = vmul.f32 %v4997, %v5168
      %v5173 = vmul.f32 %v5002, %v5168
      %v5174 = vmul.f32 %v5007, %v5168
      %v5175 = vmul.f32 %v5012, %v5168
      %v5176 = vmul.f32 %v5017, %v5168
      %v5177 = vmul.f32 %v5022, %v5168
      %v5178 = vmul.f32 %v5027, %v5168
      %v5179 = vmul.f32 %v5032, %v5168
      %v5180 = vmul.f32 %v5037, %v5168
      %v5181 = vmul.f32 %v5042, %v5168
      %v5182 = vmul.f32 %v5047, %v5168
      %v5183 = vmul.f32 %v5052, %v5168
      %v5184 = vmul.f32 %v5057, %v5168
      %v5185 = vmul.f32 %v5062, %v5168
      %v5186 = vmul.f32 %v5067, %v5168
      %v5187 = vmul.f32 %v5072, %v5168
      %v5188 = vmul.f32 %v5077, %v5168
      %v5189 = vmul.f32 %v5082, %v5168
      %v5190 = vmul.f32 %v5087, %v5168
      %v5191 = vmul.f32 %v5092, %v5168
      %v5192 = vmul.f32 %v5097, %v5168
      %v5193 = vmul.f32 %v5102, %v5168
      %v5194 = vmul.f32 %v5107, %v5168
      %v5195 = vmul.f32 %v5112, %v5168
      %v5196 = vmul.f32 %v5117, %v5168
      %v5197 = vmul.f32 %v5122, %v5168
      %v5198 = vmul.f32 %v5127, %v5168
      %v5199 = vmul.f32 %v5132, %v5168
      %v5200 = vmul.f32 %v5137, %v5168
      %v5201 = vmul.f32 %v5142, %v5168
      %v5202 = vmul.f32 %v5147, %v5168
      %v5203 = vmul.f32 %v5152, %v5168
      %v5204 = vmul.f32 %v5157, %v5168
      %v5205 = vmul.f32 %v5162, %v5168
      %v5206 = vadd.f32 %v4909, %v5170
      %v5207 = vadd.f32 %v4910, %v5171
      %v5208 = vadd.f32 %v4911, %v5172
      %v5209 = vadd.f32 %v4912, %v5173
      %v5210 = vadd.f32 %v4913, %v5174
      %v5211 = vadd.f32 %v4914, %v5175
      %v5212 = vadd.f32 %v4915, %v5176
      %v5213 = vadd.f32 %v4916, %v5177
      %v5214 = vadd.f32 %v4917, %v5178
      %v5215 = vadd.f32 %v4918, %v5179
      %v5216 = vadd.f32 %v4919, %v5180
      %v5217 = vadd.f32 %v4920, %v5181
      %v5218 = vadd.f32 %v4921, %v5182
      %v5219 = vadd.f32 %v4922, %v5183
      %v5220 = vadd.f32 %v4923, %v5184
      %v5221 = vadd.f32 %v4924, %v5185
      %v5222 = vadd.f32 %v4925, %v5186
      %v5223 = vadd.f32 %v4926, %v5187
      %v5224 = vadd.f32 %v4927, %v5188
      %v5225 = vadd.f32 %v4928, %v5189
      %v5226 = vadd.f32 %v4929, %v5190
      %v5227 = vadd.f32 %v4930, %v5191
      %v5228 = vadd.f32 %v4931, %v5192
      %v5229 = vadd.f32 %v4932, %v5193
      %v5230 = vadd.f32 %v4933, %v5194
      %v5231 = vadd.f32 %v4934, %v5195
      %v5232 = vadd.f32 %v4935, %v5196
      %v5233 = vadd.f32 %v4936, %v5197
      %v5234 = vadd.f32 %v4937, %v5198
      %v5235 = vadd.f32 %v4938, %v5199
      %v5236 = vadd.f32 %v4939, %v5200
      %v5237 = vadd.f32 %v4940, %v5201
      %v5238 = vadd.f32 %v4941, %v5202
      %v5239 = vadd.f32 %v4942, %v5203
      %v5240 = vadd.f32 %v4943, %v5204
      %v5241 = vadd.f32 %v4944, %v5205
      %5243 = vset.pattern.permute.xlu0 0
      %5244 = vperm.xlu0 %5243, %v591
      %v5245 = vpop.permute.xlu0 %5244
      %5248 = vset.pattern.permute.xlu0 0
      %5249 = vperm.xlu0 %5248, %v592
      %v5250 = vpop.permute.xlu0 %5249
      %5253 = vset.pattern.permute.xlu0 0
      %5254 = vperm.xlu0 %5253, %v593
      %v5255 = vpop.permute.xlu0 %5254
      %5258 = vset.pattern.permute.xlu0 0
      %5259 = vperm.xlu0 %5258, %v594
      %v5260 = vpop.permute.xlu0 %5259
      %5263 = vset.pattern.permute.xlu0 0
      %5264 = vperm.xlu0 %5263, %v595
      %v5265 = vpop.permute.xlu0 %5264
      %5268 = vset.pattern.permute.xlu0 0
      %5269 = vperm.xlu0 %5268, %v596
      %v5270 = vpop.permute.xlu0 %5269
      %5273 = vset.pattern.permute.xlu0 0
      %5274 = vperm.xlu0 %5273, %v597
      %v5275 = vpop.permute.xlu0 %5274
      %5278 = vset.pattern.permute.xlu0 0
      %5279 = vperm.xlu0 %5278, %v598
      %v5280 = vpop.permute.xlu0 %5279
      %5283 = vset.pattern.permute.xlu0 0
      %5284 = vperm.xlu0 %5283, %v599
      %v5285 = vpop.permute.xlu0 %5284
      %5288 = vset.pattern.permute.xlu0 0
      %5289 = vperm.xlu0 %5288, %v600
      %v5290 = vpop.permute.xlu0 %5289
      %5293 = vset.pattern.permute.xlu0 0
      %5294 = vperm.xlu0 %5293, %v601
      %v5295 = vpop.permute.xlu0 %5294
      %5298 = vset.pattern.permute.xlu0 0
      %5299 = vperm.xlu0 %5298, %v602
      %v5300 = vpop.permute.xlu0 %5299
      %5303 = vset.pattern.permute.xlu0 0
      %5304 = vperm.xlu0 %5303, %v603
      %v5305 = vpop.permute.xlu0 %5304
      %5308 = vset.pattern.permute.xlu0 0
      %5309 = vperm.xlu0 %5308, %v604
      %v5310 = vpop.permute.xlu0 %5309
      %5313 = vset.pattern.permute.xlu0 0
      %5314 = vperm.xlu0 %5313, %v605
      %v5315 = vpop.permute.xlu0 %5314
      %5318 = vset.pattern.permute.xlu0 0
      %5319 = vperm.xlu0 %5318, %v606
      %v5320 = vpop.permute.xlu0 %5319
      %5323 = vset.pattern.permute.xlu0 0
      %5324 = vperm.xlu0 %5323, %v607
      %v5325 = vpop.permute.xlu0 %5324
      %5328 = vset.pattern.permute.xlu0 0
      %5329 = vperm.xlu0 %5328, %v608
      %v5330 = vpop.permute.xlu0 %5329
      %5333 = vset.pattern.permute.xlu0 0
      %5334 = vperm.xlu0 %5333, %v609
      %v5335 = vpop.permute.xlu0 %5334
      %5338 = vset.pattern.permute.xlu0 0
      %5339 = vperm.xlu0 %5338, %v610
      %v5340 = vpop.permute.xlu0 %5339
      %5343 = vset.pattern.permute.xlu0 0
      %5344 = vperm.xlu0 %5343, %v611
      %v5345 = vpop.permute.xlu0 %5344
      %5348 = vset.pattern.permute.xlu0 0
      %5349 = vperm.xlu0 %5348, %v612
      %v5350 = vpop.permute.xlu0 %5349
      %5353 = vset.pattern.permute.xlu0 0
      %5354 = vperm.xlu0 %5353, %v613
      %v5355 = vpop.permute.xlu0 %5354
      %5358 = vset.pattern.permute.xlu0 0
      %5359 = vperm.xlu0 %5358, %v614
      %v5360 = vpop.permute.xlu0 %5359
      %5363 = vset.pattern.permute.xlu0 0
      %5364 = vperm.xlu0 %5363, %v615
      %v5365 = vpop.permute.xlu0 %5364
      %5368 = vset.pattern.permute.xlu0 0
      %5369 = vperm.xlu0 %5368, %v616
      %v5370 = vpop.permute.xlu0 %5369
      %5373 = vset.pattern.permute.xlu0 0
      %5374 = vperm.xlu0 %5373, %v617
      %v5375 = vpop.permute.xlu0 %5374
      %5378 = vset.pattern.permute.xlu0 0
      %5379 = vperm.xlu0 %5378, %v618
      %v5380 = vpop.permute.xlu0 %5379
      %5383 = vset.pattern.permute.xlu0 0
      %5384 = vperm.xlu0 %5383, %v619
      %v5385 = vpop.permute.xlu0 %5384
      %5388 = vset.pattern.permute.xlu0 0
      %5389 = vperm.xlu0 %5388, %v620
      %v5390 = vpop.permute.xlu0 %5389
      %5393 = vset.pattern.permute.xlu0 0
      %5394 = vperm.xlu0 %5393, %v621
      %v5395 = vpop.permute.xlu0 %5394
      %5398 = vset.pattern.permute.xlu0 0
      %5399 = vperm.xlu0 %5398, %v622
      %v5400 = vpop.permute.xlu0 %5399
      %5403 = vset.pattern.permute.xlu0 0
      %5404 = vperm.xlu0 %5403, %v623
      %v5405 = vpop.permute.xlu0 %5404
      %5408 = vset.pattern.permute.xlu0 0
      %5409 = vperm.xlu0 %5408, %v624
      %v5410 = vpop.permute.xlu0 %5409
      %5413 = vset.pattern.permute.xlu0 0
      %5414 = vperm.xlu0 %5413, %v625
      %v5415 = vpop.permute.xlu0 %5414
      %5418 = vset.pattern.permute.xlu0 0
      %5419 = vperm.xlu0 %5418, %v626
      %v5420 = vpop.permute.xlu0 %5419
      %v5422 = vmul.f32 %v5206, %v5245
      %v5423 = vmul.f32 %v5207, %v5250
      %v5424 = vmul.f32 %v5208, %v5255
      %v5425 = vmul.f32 %v5209, %v5260
      %v5426 = vmul.f32 %v5210, %v5265
      %v5427 = vmul.f32 %v5211, %v5270
      %v5428 = vmul.f32 %v5212, %v5275
      %v5429 = vmul.f32 %v5213, %v5280
      %v5430 = vmul.f32 %v5214, %v5285
      %v5431 = vmul.f32 %v5215, %v5290
      %v5432 = vmul.f32 %v5216, %v5295
      %v5433 = vmul.f32 %v5217, %v5300
      %v5434 = vmul.f32 %v5218, %v5305
      %v5435 = vmul.f32 %v5219, %v5310
      %v5436 = vmul.f32 %v5220, %v5315
      %v5437 = vmul.f32 %v5221, %v5320
      %v5438 = vmul.f32 %v5222, %v5325
      %v5439 = vmul.f32 %v5223, %v5330
      %v5440 = vmul.f32 %v5224, %v5335
      %v5441 = vmul.f32 %v5225, %v5340
      %v5442 = vmul.f32 %v5226, %v5345
      %v5443 = vmul.f32 %v5227, %v5350
      %v5444 = vmul.f32 %v5228, %v5355
      %v5445 = vmul.f32 %v5229, %v5360
      %v5446 = vmul.f32 %v5230, %v5365
      %v5447 = vmul.f32 %v5231, %v5370
      %v5448 = vmul.f32 %v5232, %v5375
      %v5449 = vmul.f32 %v5233, %v5380
      %v5450 = vmul.f32 %v5234, %v5385
      %v5451 = vmul.f32 %v5235, %v5390
      %v5452 = vmul.f32 %v5236, %v5395
      %v5453 = vmul.f32 %v5237, %v5400
      %v5454 = vmul.f32 %v5238, %v5405
      %v5455 = vmul.f32 %v5239, %v5410
      %v5456 = vmul.f32 %v5240, %v5415
      %v5457 = vmul.f32 %v5241, %v5420
      %v5458 = vsel %vm1025, %v5422, 0.0
      %v5459 = vsel %vm1025, %v5423, 0.0
      %v5460 = vadd.f32 %v5458, %v5459
      %v5461 = vsel %vm1025, %v5424, 0.0
      %v5462 = vadd.f32 %v5460, %v5461
      %v5463 = vsel %vm1025, %v5425, 0.0
      %v5464 = vadd.f32 %v5462, %v5463
      %v5465 = vsel %vm1025, %v5426, 0.0
      %v5466 = vadd.f32 %v5464, %v5465
      %v5467 = vsel %vm1025, %v5427, 0.0
      %v5468 = vadd.f32 %v5466, %v5467
      %v5469 = vsel %vm1025, %v5428, 0.0
      %v5470 = vadd.f32 %v5468, %v5469
      %v5471 = vsel %vm1025, %v5429, 0.0
      %v5472 = vadd.f32 %v5470, %v5471
      %v5473 = vsel %vm1025, %v5430, 0.0
      %v5474 = vadd.f32 %v5472, %v5473
      %v5475 = vsel %vm1025, %v5431, 0.0
      %v5476 = vadd.f32 %v5474, %v5475
      %v5477 = vsel %vm1025, %v5432, 0.0
      %v5478 = vadd.f32 %v5476, %v5477
      %v5479 = vsel %vm1025, %v5433, 0.0
      %v5480 = vadd.f32 %v5478, %v5479
      %v5481 = vsel %vm1025, %v5434, 0.0
      %v5482 = vadd.f32 %v5480, %v5481
      %v5483 = vsel %vm1025, %v5435, 0.0
      %v5484 = vadd.f32 %v5482, %v5483
      %v5485 = vsel %vm1025, %v5436, 0.0
      %v5486 = vadd.f32 %v5484, %v5485
      %v5487 = vsel %vm1025, %v5437, 0.0
      %v5488 = vadd.f32 %v5486, %v5487
      %v5489 = vsel %vm1025, %v5438, 0.0
      %v5490 = vadd.f32 %v5488, %v5489
      %v5491 = vsel %vm1025, %v5439, 0.0
      %v5492 = vadd.f32 %v5490, %v5491
      %v5493 = vsel %vm1025, %v5440, 0.0
      %v5494 = vadd.f32 %v5492, %v5493
      %v5495 = vsel %vm1025, %v5441, 0.0
      %v5496 = vadd.f32 %v5494, %v5495
      %v5497 = vsel %vm1025, %v5442, 0.0
      %v5498 = vadd.f32 %v5496, %v5497
      %v5499 = vsel %vm1025, %v5443, 0.0
      %v5500 = vadd.f32 %v5498, %v5499
      %v5501 = vsel %vm1025, %v5444, 0.0
      %v5502 = vadd.f32 %v5500, %v5501
      %v5503 = vsel %vm1025, %v5445, 0.0
      %v5504 = vadd.f32 %v5502, %v5503
      %v5505 = vsel %vm1025, %v5446, 0.0
      %v5506 = vadd.f32 %v5504, %v5505
      %v5507 = vsel %vm1025, %v5447, 0.0
      %v5508 = vadd.f32 %v5506, %v5507
      %v5509 = vsel %vm1025, %v5448, 0.0
      %v5510 = vadd.f32 %v5508, %v5509
      %v5511 = vsel %vm1025, %v5449, 0.0
      %v5512 = vadd.f32 %v5510, %v5511
      %v5513 = vsel %vm1025, %v5450, 0.0
      %v5514 = vadd.f32 %v5512, %v5513
      %v5515 = vsel %vm1025, %v5451, 0.0
      %v5516 = vadd.f32 %v5514, %v5515
      %v5517 = vsel %vm1025, %v5452, 0.0
      %v5518 = vadd.f32 %v5516, %v5517
      %v5519 = vsel %vm1025, %v5453, 0.0
      %v5520 = vadd.f32 %v5518, %v5519
      %v5521 = vsel %vm1025, %v5454, 0.0
      %v5522 = vadd.f32 %v5520, %v5521
      %v5523 = vsel %vm1025, %v5455, 0.0
      %v5524 = vadd.f32 %v5522, %v5523
      %v5525 = vsel %vm1025, %v5456, 0.0
      %v5526 = vadd.f32 %v5524, %v5525
      %v5527 = vsel %vm1025, %v5457, 0.0
      %v5528 = vadd.f32 %v5526, %v5527
      %v5529 = vrot.slane %v5528, 4
      %v5530 = vadd.f32 %v5528, %v5529
      %v5531 = vrot.slane %v5530, 2
      %v5532 = vadd.f32 %v5530, %v5531
      %v5533 = vrot.slane %v5532, 1
      %v5534 = vadd.f32 %v5532, %v5533
      %v5535 = vmul.f32 %v5534, 0.00390625
      %v5536 = vsub.f32 %v5206, %v5535
      %v5537 = vsub.f32 %v5207, %v5535
      %v5538 = vsub.f32 %v5208, %v5535
      %v5539 = vsub.f32 %v5209, %v5535
      %v5540 = vsub.f32 %v5210, %v5535
      %v5541 = vsub.f32 %v5211, %v5535
      %v5542 = vsub.f32 %v5212, %v5535
      %v5543 = vsub.f32 %v5213, %v5535
      %v5544 = vsub.f32 %v5214, %v5535
      %v5545 = vsub.f32 %v5215, %v5535
      %v5546 = vsub.f32 %v5216, %v5535
      %v5547 = vsub.f32 %v5217, %v5535
      %v5548 = vsub.f32 %v5218, %v5535
      %v5549 = vsub.f32 %v5219, %v5535
      %v5550 = vsub.f32 %v5220, %v5535
      %v5551 = vsub.f32 %v5221, %v5535
      %v5552 = vsub.f32 %v5222, %v5535
      %v5553 = vsub.f32 %v5223, %v5535
      %v5554 = vsub.f32 %v5224, %v5535
      %v5555 = vsub.f32 %v5225, %v5535
      %v5556 = vsub.f32 %v5226, %v5535
      %v5557 = vsub.f32 %v5227, %v5535
      %v5558 = vsub.f32 %v5228, %v5535
      %v5559 = vsub.f32 %v5229, %v5535
      %v5560 = vsub.f32 %v5230, %v5535
      %v5561 = vsub.f32 %v5231, %v5535
      %v5562 = vsub.f32 %v5232, %v5535
      %v5563 = vsub.f32 %v5233, %v5535
      %v5564 = vsub.f32 %v5234, %v5535
      %v5565 = vsub.f32 %v5235, %v5535
      %v5566 = vsub.f32 %v5236, %v5535
      %v5567 = vsub.f32 %v5237, %v5535
      %v5568 = vsub.f32 %v5238, %v5535
      %v5569 = vsub.f32 %v5239, %v5535
      %v5570 = vsub.f32 %v5240, %v5535
      %v5571 = vsub.f32 %v5241, %v5535
      %v5572 = vmul.f32 %v5536, %v5245
      %v5573 = vmul.f32 %v5537, %v5250
      %v5574 = vmul.f32 %v5538, %v5255
      %v5575 = vmul.f32 %v5539, %v5260
      %v5576 = vmul.f32 %v5540, %v5265
      %v5577 = vmul.f32 %v5541, %v5270
      %v5578 = vmul.f32 %v5542, %v5275
      %v5579 = vmul.f32 %v5543, %v5280
      %v5580 = vmul.f32 %v5544, %v5285
      %v5581 = vmul.f32 %v5545, %v5290
      %v5582 = vmul.f32 %v5546, %v5295
      %v5583 = vmul.f32 %v5547, %v5300
      %v5584 = vmul.f32 %v5548, %v5305
      %v5585 = vmul.f32 %v5549, %v5310
      %v5586 = vmul.f32 %v5550, %v5315
      %v5587 = vmul.f32 %v5551, %v5320
      %v5588 = vmul.f32 %v5552, %v5325
      %v5589 = vmul.f32 %v5553, %v5330
      %v5590 = vmul.f32 %v5554, %v5335
      %v5591 = vmul.f32 %v5555, %v5340
      %v5592 = vmul.f32 %v5556, %v5345
      %v5593 = vmul.f32 %v5557, %v5350
      %v5594 = vmul.f32 %v5558, %v5355
      %v5595 = vmul.f32 %v5559, %v5360
      %v5596 = vmul.f32 %v5560, %v5365
      %v5597 = vmul.f32 %v5561, %v5370
      %v5598 = vmul.f32 %v5562, %v5375
      %v5599 = vmul.f32 %v5563, %v5380
      %v5600 = vmul.f32 %v5564, %v5385
      %v5601 = vmul.f32 %v5565, %v5390
      %v5602 = vmul.f32 %v5566, %v5395
      %v5603 = vmul.f32 %v5567, %v5400
      %v5604 = vmul.f32 %v5568, %v5405
      %v5605 = vmul.f32 %v5569, %v5410
      %v5606 = vmul.f32 %v5570, %v5415
      %v5607 = vmul.f32 %v5571, %v5420
      %v5608 = vmul.f32 %v5572, %v5572
      %v5609 = vmul.f32 %v5573, %v5573
      %v5610 = vmul.f32 %v5574, %v5574
      %v5611 = vmul.f32 %v5575, %v5575
      %v5612 = vmul.f32 %v5576, %v5576
      %v5613 = vmul.f32 %v5577, %v5577
      %v5614 = vmul.f32 %v5578, %v5578
      %v5615 = vmul.f32 %v5579, %v5579
      %v5616 = vmul.f32 %v5580, %v5580
      %v5617 = vmul.f32 %v5581, %v5581
      %v5618 = vmul.f32 %v5582, %v5582
      %v5619 = vmul.f32 %v5583, %v5583
      %v5620 = vmul.f32 %v5584, %v5584
      %v5621 = vmul.f32 %v5585, %v5585
      %v5622 = vmul.f32 %v5586, %v5586
      %v5623 = vmul.f32 %v5587, %v5587
      %v5624 = vmul.f32 %v5588, %v5588
      %v5625 = vmul.f32 %v5589, %v5589
      %v5626 = vmul.f32 %v5590, %v5590
      %v5627 = vmul.f32 %v5591, %v5591
      %v5628 = vmul.f32 %v5592, %v5592
      %v5629 = vmul.f32 %v5593, %v5593
      %v5630 = vmul.f32 %v5594, %v5594
      %v5631 = vmul.f32 %v5595, %v5595
      %v5632 = vmul.f32 %v5596, %v5596
      %v5633 = vmul.f32 %v5597, %v5597
      %v5634 = vmul.f32 %v5598, %v5598
      %v5635 = vmul.f32 %v5599, %v5599
      %v5636 = vmul.f32 %v5600, %v5600
      %v5637 = vmul.f32 %v5601, %v5601
      %v5638 = vmul.f32 %v5602, %v5602
      %v5639 = vmul.f32 %v5603, %v5603
      %v5640 = vmul.f32 %v5604, %v5604
      %v5641 = vmul.f32 %v5605, %v5605
      %v5642 = vmul.f32 %v5606, %v5606
      %v5643 = vmul.f32 %v5607, %v5607
      %v5644 = vsel %vm1025, %v5608, 0.0
      %v5645 = vsel %vm1025, %v5609, 0.0
      %v5646 = vadd.f32 %v5644, %v5645
      %v5647 = vsel %vm1025, %v5610, 0.0
      %v5648 = vadd.f32 %v5646, %v5647
      %v5649 = vsel %vm1025, %v5611, 0.0
      %v5650 = vadd.f32 %v5648, %v5649
      %v5651 = vsel %vm1025, %v5612, 0.0
      %v5652 = vadd.f32 %v5650, %v5651
      %v5653 = vsel %vm1025, %v5613, 0.0
      %v5654 = vadd.f32 %v5652, %v5653
      %v5655 = vsel %vm1025, %v5614, 0.0
      %v5656 = vadd.f32 %v5654, %v5655
      %v5657 = vsel %vm1025, %v5615, 0.0
      %v5658 = vadd.f32 %v5656, %v5657
      %v5659 = vsel %vm1025, %v5616, 0.0
      %v5660 = vadd.f32 %v5658, %v5659
      %v5661 = vsel %vm1025, %v5617, 0.0
      %v5662 = vadd.f32 %v5660, %v5661
      %v5663 = vsel %vm1025, %v5618, 0.0
      %v5664 = vadd.f32 %v5662, %v5663
      %v5665 = vsel %vm1025, %v5619, 0.0
      %v5666 = vadd.f32 %v5664, %v5665
      %v5667 = vsel %vm1025, %v5620, 0.0
      %v5668 = vadd.f32 %v5666, %v5667
      %v5669 = vsel %vm1025, %v5621, 0.0
      %v5670 = vadd.f32 %v5668, %v5669
      %v5671 = vsel %vm1025, %v5622, 0.0
      %v5672 = vadd.f32 %v5670, %v5671
      %v5673 = vsel %vm1025, %v5623, 0.0
      %v5674 = vadd.f32 %v5672, %v5673
      %v5675 = vsel %vm1025, %v5624, 0.0
      %v5676 = vadd.f32 %v5674, %v5675
      %v5677 = vsel %vm1025, %v5625, 0.0
      %v5678 = vadd.f32 %v5676, %v5677
      %v5679 = vsel %vm1025, %v5626, 0.0
      %v5680 = vadd.f32 %v5678, %v5679
      %v5681 = vsel %vm1025, %v5627, 0.0
      %v5682 = vadd.f32 %v5680, %v5681
      %v5683 = vsel %vm1025, %v5628, 0.0
      %v5684 = vadd.f32 %v5682, %v5683
      %v5685 = vsel %vm1025, %v5629, 0.0
      %v5686 = vadd.f32 %v5684, %v5685
      %v5687 = vsel %vm1025, %v5630, 0.0
      %v5688 = vadd.f32 %v5686, %v5687
      %v5689 = vsel %vm1025, %v5631, 0.0
      %v5690 = vadd.f32 %v5688, %v5689
      %v5691 = vsel %vm1025, %v5632, 0.0
      %v5692 = vadd.f32 %v5690, %v5691
      %v5693 = vsel %vm1025, %v5633, 0.0
      %v5694 = vadd.f32 %v5692, %v5693
      %v5695 = vsel %vm1025, %v5634, 0.0
      %v5696 = vadd.f32 %v5694, %v5695
      %v5697 = vsel %vm1025, %v5635, 0.0
      %v5698 = vadd.f32 %v5696, %v5697
      %v5699 = vsel %vm1025, %v5636, 0.0
      %v5700 = vadd.f32 %v5698, %v5699
      %v5701 = vsel %vm1025, %v5637, 0.0
      %v5702 = vadd.f32 %v5700, %v5701
      %v5703 = vsel %vm1025, %v5638, 0.0
      %v5704 = vadd.f32 %v5702, %v5703
      %v5705 = vsel %vm1025, %v5639, 0.0
      %v5706 = vadd.f32 %v5704, %v5705
      %v5707 = vsel %vm1025, %v5640, 0.0
      %v5708 = vadd.f32 %v5706, %v5707
      %v5709 = vsel %vm1025, %v5641, 0.0
      %v5710 = vadd.f32 %v5708, %v5709
      %v5711 = vsel %vm1025, %v5642, 0.0
      %v5712 = vadd.f32 %v5710, %v5711
      %v5713 = vsel %vm1025, %v5643, 0.0
      %v5714 = vadd.f32 %v5712, %v5713
      %v5715 = vrot.slane %v5714, 4
      %v5716 = vadd.f32 %v5714, %v5715
      %v5717 = vrot.slane %v5716, 2
      %v5718 = vadd.f32 %v5716, %v5717
      %v5719 = vrot.slane %v5718, 1
      %v5720 = vadd.f32 %v5718, %v5719
      %v5721 = vmul.f32 %v5720, 0.00390625
      %v5722 = vadd.f32 %v5721, 1e-05
      %v5723 = vrsqrt.pop %v5722
      %v5724 = vmul.f32 %v5536, %v5723
      %v5725 = vmul.f32 %v5537, %v5723
      %v5726 = vmul.f32 %v5538, %v5723
      %v5727 = vmul.f32 %v5539, %v5723
      %v5728 = vmul.f32 %v5540, %v5723
      %v5729 = vmul.f32 %v5541, %v5723
      %v5730 = vmul.f32 %v5542, %v5723
      %v5731 = vmul.f32 %v5543, %v5723
      %v5732 = vmul.f32 %v5544, %v5723
      %v5733 = vmul.f32 %v5545, %v5723
      %v5734 = vmul.f32 %v5546, %v5723
      %v5735 = vmul.f32 %v5547, %v5723
      %v5736 = vmul.f32 %v5548, %v5723
      %v5737 = vmul.f32 %v5549, %v5723
      %v5738 = vmul.f32 %v5550, %v5723
      %v5739 = vmul.f32 %v5551, %v5723
      %v5740 = vmul.f32 %v5552, %v5723
      %v5741 = vmul.f32 %v5553, %v5723
      %v5742 = vmul.f32 %v5554, %v5723
      %v5743 = vmul.f32 %v5555, %v5723
      %v5744 = vmul.f32 %v5556, %v5723
      %v5745 = vmul.f32 %v5557, %v5723
      %v5746 = vmul.f32 %v5558, %v5723
      %v5747 = vmul.f32 %v5559, %v5723
      %v5748 = vmul.f32 %v5560, %v5723
      %v5749 = vmul.f32 %v5561, %v5723
      %v5750 = vmul.f32 %v5562, %v5723
      %v5751 = vmul.f32 %v5563, %v5723
      %v5752 = vmul.f32 %v5564, %v5723
      %v5753 = vmul.f32 %v5565, %v5723
      %v5754 = vmul.f32 %v5566, %v5723
      %v5755 = vmul.f32 %v5567, %v5723
      %v5756 = vmul.f32 %v5568, %v5723
      %v5757 = vmul.f32 %v5569, %v5723
      %v5758 = vmul.f32 %v5570, %v5723
      %v5759 = vmul.f32 %v5571, %v5723
      %v5761 = vlaneseq
      %v5762 = vshrl.u32 %v5761, 7
      %v5763 = vsub.s32 0, %v5762
      %v5764 = vrot.slane %v4982, %v5763
      %v5766 = vmul.f32 %v5764, %v5724
      %v5767 = vmul.f32 %v5764, %v5725
      %v5768 = vmul.f32 %v5764, %v5726
      %v5769 = vmul.f32 %v5764, %v5727
      %v5770 = vmul.f32 %v5764, %v5728
      %v5771 = vmul.f32 %v5764, %v5729
      %v5772 = vmul.f32 %v5764, %v5730
      %v5773 = vmul.f32 %v5764, %v5731
      %v5774 = vmul.f32 %v5764, %v5732
      %v5775 = vmul.f32 %v5764, %v5733
      %v5776 = vmul.f32 %v5764, %v5734
      %v5777 = vmul.f32 %v5764, %v5735
      %v5778 = vmul.f32 %v5764, %v5736
      %v5779 = vmul.f32 %v5764, %v5737
      %v5780 = vmul.f32 %v5764, %v5738
      %v5781 = vmul.f32 %v5764, %v5739
      %v5782 = vmul.f32 %v5764, %v5740
      %v5783 = vmul.f32 %v5764, %v5741
      %v5784 = vmul.f32 %v5764, %v5742
      %v5785 = vmul.f32 %v5764, %v5743
      %v5786 = vmul.f32 %v5764, %v5744
      %v5787 = vmul.f32 %v5764, %v5745
      %v5788 = vmul.f32 %v5764, %v5746
      %v5789 = vmul.f32 %v5764, %v5747
      %v5790 = vmul.f32 %v5764, %v5748
      %v5791 = vmul.f32 %v5764, %v5749
      %v5792 = vmul.f32 %v5764, %v5750
      %v5793 = vmul.f32 %v5764, %v5751
      %v5794 = vmul.f32 %v5764, %v5752
      %v5795 = vmul.f32 %v5764, %v5753
      %v5796 = vmul.f32 %v5764, %v5754
      %v5797 = vmul.f32 %v5764, %v5755
      %v5798 = vmul.f32 %v5764, %v5756
      %v5799 = vmul.f32 %v5764, %v5757
      %v5800 = vmul.f32 %v5764, %v5758
      %v5801 = vmul.f32 %v5764, %v5759
      %v5803 = vlaneseq
      %v5804 = vshrl.u32 %v5803, 7
      %v5805 = vsub.s32 0, %v5804
      %v5806 = vrot.slane %v4983, %v5805
      %v5808 = vadd.f32 %v5766, %v5806
      %v5809 = vadd.f32 %v5767, %v5806
      %v5810 = vadd.f32 %v5768, %v5806
      %v5811 = vadd.f32 %v5769, %v5806
      %v5812 = vadd.f32 %v5770, %v5806
      %v5813 = vadd.f32 %v5771, %v5806
      %v5814 = vadd.f32 %v5772, %v5806
      %v5815 = vadd.f32 %v5773, %v5806
      %v5816 = vadd.f32 %v5774, %v5806
      %v5817 = vadd.f32 %v5775, %v5806
      %v5818 = vadd.f32 %v5776, %v5806
      %v5819 = vadd.f32 %v5777, %v5806
      %v5820 = vadd.f32 %v5778, %v5806
      %v5821 = vadd.f32 %v5779, %v5806
      %v5822 = vadd.f32 %v5780, %v5806
      %v5823 = vadd.f32 %v5781, %v5806
      %v5824 = vadd.f32 %v5782, %v5806
      %v5825 = vadd.f32 %v5783, %v5806
      %v5826 = vadd.f32 %v5784, %v5806
      %v5827 = vadd.f32 %v5785, %v5806
      %v5828 = vadd.f32 %v5786, %v5806
      %v5829 = vadd.f32 %v5787, %v5806
      %v5830 = vadd.f32 %v5788, %v5806
      %v5831 = vadd.f32 %v5789, %v5806
      %v5832 = vadd.f32 %v5790, %v5806
      %v5833 = vadd.f32 %v5791, %v5806
      %v5834 = vadd.f32 %v5792, %v5806
      %v5835 = vadd.f32 %v5793, %v5806
      %v5836 = vadd.f32 %v5794, %v5806
      %v5837 = vadd.f32 %v5795, %v5806
      %v5838 = vadd.f32 %v5796, %v5806
      %v5839 = vadd.f32 %v5797, %v5806
      %v5840 = vadd.f32 %v5798, %v5806
      %v5841 = vadd.f32 %v5799, %v5806
      %v5842 = vadd.f32 %v5800, %v5806
      %v5843 = vadd.f32 %v5801, %v5806
      %vm5844 = vcmp.ge.f32.partialorder %v5808, 0.0
      %vm5845 = vcmp.ge.f32.partialorder %v5809, 0.0
      %vm5846 = vcmp.ge.f32.partialorder %v5810, 0.0
      %vm5847 = vcmp.ge.f32.partialorder %v5811, 0.0
      %vm5848 = vcmp.ge.f32.partialorder %v5812, 0.0
      %vm5849 = vcmp.ge.f32.partialorder %v5813, 0.0
      %vm5850 = vcmp.ge.f32.partialorder %v5814, 0.0
      %vm5851 = vcmp.ge.f32.partialorder %v5815, 0.0
      %vm5852 = vcmp.ge.f32.partialorder %v5816, 0.0
      %vm5853 = vcmp.ge.f32.partialorder %v5817, 0.0
      %vm5854 = vcmp.ge.f32.partialorder %v5818, 0.0
      %vm5855 = vcmp.ge.f32.partialorder %v5819, 0.0
      %vm5856 = vcmp.ge.f32.partialorder %v5820, 0.0
      %vm5857 = vcmp.ge.f32.partialorder %v5821, 0.0
      %vm5858 = vcmp.ge.f32.partialorder %v5822, 0.0
      %vm5859 = vcmp.ge.f32.partialorder %v5823, 0.0
      %vm5860 = vcmp.ge.f32.partialorder %v5824, 0.0
      %vm5861 = vcmp.ge.f32.partialorder %v5825, 0.0
      %vm5862 = vcmp.ge.f32.partialorder %v5826, 0.0
      %vm5863 = vcmp.ge.f32.partialorder %v5827, 0.0
      %vm5864 = vcmp.ge.f32.partialorder %v5828, 0.0
      %vm5865 = vcmp.ge.f32.partialorder %v5829, 0.0
      %vm5866 = vcmp.ge.f32.partialorder %v5830, 0.0
      %vm5867 = vcmp.ge.f32.partialorder %v5831, 0.0
      %vm5868 = vcmp.ge.f32.partialorder %v5832, 0.0
      %vm5869 = vcmp.ge.f32.partialorder %v5833, 0.0
      %vm5870 = vcmp.ge.f32.partialorder %v5834, 0.0
      %vm5871 = vcmp.ge.f32.partialorder %v5835, 0.0
      %vm5872 = vcmp.ge.f32.partialorder %v5836, 0.0
      %vm5873 = vcmp.ge.f32.partialorder %v5837, 0.0
      %vm5874 = vcmp.ge.f32.partialorder %v5838, 0.0
      %vm5875 = vcmp.ge.f32.partialorder %v5839, 0.0
      %vm5876 = vcmp.ge.f32.partialorder %v5840, 0.0
      %vm5877 = vcmp.ge.f32.partialorder %v5841, 0.0
      %vm5878 = vcmp.ge.f32.partialorder %v5842, 0.0
      %vm5879 = vcmp.ge.f32.partialorder %v5843, 0.0
      %v5880 = vmul.f32 %v5808, 0.2
      %v5881 = vmul.f32 %v5809, 0.2
      %v5882 = vmul.f32 %v5810, 0.2
      %v5883 = vmul.f32 %v5811, 0.2
      %v5884 = vmul.f32 %v5812, 0.2
      %v5885 = vmul.f32 %v5813, 0.2
      %v5886 = vmul.f32 %v5814, 0.2
      %v5887 = vmul.f32 %v5815, 0.2
      %v5888 = vmul.f32 %v5816, 0.2
      %v5889 = vmul.f32 %v5817, 0.2
      %v5890 = vmul.f32 %v5818, 0.2
      %v5891 = vmul.f32 %v5819, 0.2
      %v5892 = vmul.f32 %v5820, 0.2
      %v5893 = vmul.f32 %v5821, 0.2
      %v5894 = vmul.f32 %v5822, 0.2
      %v5895 = vmul.f32 %v5823, 0.2
      %v5896 = vmul.f32 %v5824, 0.2
      %v5897 = vmul.f32 %v5825, 0.2
      %v5898 = vmul.f32 %v5826, 0.2
      %v5899 = vmul.f32 %v5827, 0.2
      %v5900 = vmul.f32 %v5828, 0.2
      %v5901 = vmul.f32 %v5829, 0.2
      %v5902 = vmul.f32 %v5830, 0.2
      %v5903 = vmul.f32 %v5831, 0.2
      %v5904 = vmul.f32 %v5832, 0.2
      %v5905 = vmul.f32 %v5833, 0.2
      %v5906 = vmul.f32 %v5834, 0.2
      %v5907 = vmul.f32 %v5835, 0.2
      %v5908 = vmul.f32 %v5836, 0.2
      %v5909 = vmul.f32 %v5837, 0.2
      %v5910 = vmul.f32 %v5838, 0.2
      %v5911 = vmul.f32 %v5839, 0.2
      %v5912 = vmul.f32 %v5840, 0.2
      %v5913 = vmul.f32 %v5841, 0.2
      %v5914 = vmul.f32 %v5842, 0.2
      %v5915 = vmul.f32 %v5843, 0.2
      %v5916 = vsel %vm5844, %v5808, %v5880
      %v5917 = vsel %vm5845, %v5809, %v5881
      %v5918 = vsel %vm5846, %v5810, %v5882
      %v5919 = vsel %vm5847, %v5811, %v5883
      %v5920 = vsel %vm5848, %v5812, %v5884
      %v5921 = vsel %vm5849, %v5813, %v5885
      %v5922 = vsel %vm5850, %v5814, %v5886
      %v5923 = vsel %vm5851, %v5815, %v5887
      %v5924 = vsel %vm5852, %v5816, %v5888
      %v5925 = vsel %vm5853, %v5817, %v5889
      %v5926 = vsel %vm5854, %v5818, %v5890
      %v5927 = vsel %vm5855, %v5819, %v5891
      %v5928 = vsel %vm5856, %v5820, %v5892
      %v5929 = vsel %vm5857, %v5821, %v5893
      %v5930 = vsel %vm5858, %v5822, %v5894
      %v5931 = vsel %vm5859, %v5823, %v5895
      %v5932 = vsel %vm5860, %v5824, %v5896
      %v5933 = vsel %vm5861, %v5825, %v5897
      %v5934 = vsel %vm5862, %v5826, %v5898
      %v5935 = vsel %vm5863, %v5827, %v5899
      %v5936 = vsel %vm5864, %v5828, %v5900
      %v5937 = vsel %vm5865, %v5829, %v5901
      %v5938 = vsel %vm5866, %v5830, %v5902
      %v5939 = vsel %vm5867, %v5831, %v5903
      %v5940 = vsel %vm5868, %v5832, %v5904
      %v5941 = vsel %vm5869, %v5833, %v5905
      %v5942 = vsel %vm5870, %v5834, %v5906
      %v5943 = vsel %vm5871, %v5835, %v5907
      %v5944 = vsel %vm5872, %v5836, %v5908
      %v5945 = vsel %vm5873, %v5837, %v5909
      %v5946 = vsel %vm5874, %v5838, %v5910
      %v5947 = vsel %vm5875, %v5839, %v5911
      %v5948 = vsel %vm5876, %v5840, %v5912
      %v5949 = vsel %vm5877, %v5841, %v5913
      %v5950 = vsel %vm5878, %v5842, %v5914
      %v5951 = vsel %vm5879, %v5843, %v5915
      %v5952 = vmul.f32 %v5916, %v5245
      %v5953 = vmul.f32 %v5917, %v5250
      %v5954 = vmul.f32 %v5918, %v5255
      %v5955 = vmul.f32 %v5919, %v5260
      %v5956 = vmul.f32 %v5920, %v5265
      %v5957 = vmul.f32 %v5921, %v5270
      %v5958 = vmul.f32 %v5922, %v5275
      %v5959 = vmul.f32 %v5923, %v5280
      %v5960 = vmul.f32 %v5924, %v5285
      %v5961 = vmul.f32 %v5925, %v5290
      %v5962 = vmul.f32 %v5926, %v5295
      %v5963 = vmul.f32 %v5927, %v5300
      %v5964 = vmul.f32 %v5928, %v5305
      %v5965 = vmul.f32 %v5929, %v5310
      %v5966 = vmul.f32 %v5930, %v5315
      %v5967 = vmul.f32 %v5931, %v5320
      %v5968 = vmul.f32 %v5932, %v5325
      %v5969 = vmul.f32 %v5933, %v5330
      %v5970 = vmul.f32 %v5934, %v5335
      %v5971 = vmul.f32 %v5935, %v5340
      %v5972 = vmul.f32 %v5936, %v5345
      %v5973 = vmul.f32 %v5937, %v5350
      %v5974 = vmul.f32 %v5938, %v5355
      %v5975 = vmul.f32 %v5939, %v5360
      %v5976 = vmul.f32 %v5940, %v5365
      %v5977 = vmul.f32 %v5941, %v5370
      %v5978 = vmul.f32 %v5942, %v5375
      %v5979 = vmul.f32 %v5943, %v5380
      %v5980 = vmul.f32 %v5944, %v5385
      %v5981 = vmul.f32 %v5945, %v5390
      %v5982 = vmul.f32 %v5946, %v5395
      %v5983 = vmul.f32 %v5947, %v5400
      %v5984 = vmul.f32 %v5948, %v5405
      %v5985 = vmul.f32 %v5949, %v5410
      %v5986 = vmul.f32 %v5950, %v5415
      %v5987 = vmul.f32 %v5951, %v5420
      %5988 = vst.msk [vmem:[#allocation3] sm:$0xff] %vm1025, 0.0
      %5989 = vst.msk [vmem:[#allocation3 + $0x8] sm:$0xff] %vm1025, 0.0
      %5990 = vst.msk [vmem:[#allocation3 + $0x10] sm:$0xff] %vm1025, 0.0
      %5991 = vst.msk [vmem:[#allocation3 + $0x18] sm:$0xff] %vm1025, 0.0
      %5992 = vst.msk [vmem:[#allocation3 + $0x20] sm:$0xff] %vm1025, 0.0
      %5993 = vst.msk [vmem:[#allocation3 + $0x28] sm:$0xff] %vm1025, 0.0
      %5994 = vst.msk [vmem:[#allocation3 + $0x30] sm:$0xff] %vm1025, 0.0
      %5995 = vst.msk [vmem:[#allocation3 + $0x38] sm:$0xff] %vm1025, 0.0
      %5996 = vst.msk [vmem:[#allocation3 + $0x40] sm:$0xff] %vm1025, 0.0
      %5997 = vst.msk [vmem:[#allocation3 + $0x48] sm:$0xff] %vm1025, 0.0
      %5998 = vst.msk [vmem:[#allocation3 + $0x50] sm:$0xff] %vm1025, 0.0
      %5999 = vst.msk [vmem:[#allocation3 + $0x58] sm:$0xff] %vm1025, 0.0
      %6000 = vst.msk [vmem:[#allocation3 + $0x60] sm:$0xff] %vm1025, 0.0
      %6001 = vst.msk [vmem:[#allocation3 + $0x68] sm:$0xff] %vm1025, 0.0
      %6002 = vst.msk [vmem:[#allocation3 + $0x70] sm:$0xff] %vm1025, 0.0
      %6003 = vst.msk [vmem:[#allocation3 + $0x78] sm:$0xff] %vm1025, 0.0
      %6004 = vst.msk [vmem:[#allocation3 + $0x80] sm:$0xff] %vm1025, 0.0
      %6005 = vst.msk [vmem:[#allocation3 + $0x88] sm:$0xff] %vm1025, 0.0
      %6006 = vst.msk [vmem:[#allocation3 + $0x90] sm:$0xff] %vm1025, 0.0
      %6007 = vst.msk [vmem:[#allocation3 + $0x98] sm:$0xff] %vm1025, 0.0
      %6008 = vst.msk [vmem:[#allocation3 + $0xa0] sm:$0xff] %vm1025, 0.0
      %6009 = vst.msk [vmem:[#allocation3 + $0xa8] sm:$0xff] %vm1025, 0.0
      %6010 = vst.msk [vmem:[#allocation3 + $0xb0] sm:$0xff] %vm1025, 0.0
      %6011 = vst.msk [vmem:[#allocation3 + $0xb8] sm:$0xff] %vm1025, 0.0
      %6012 = vst.msk [vmem:[#allocation3 + $0xc0] sm:$0xff] %vm1025, 0.0
      %6013 = vst.msk [vmem:[#allocation3 + $0xc8] sm:$0xff] %vm1025, 0.0
      %6014 = vst.msk [vmem:[#allocation3 + $0xd0] sm:$0xff] %vm1025, 0.0
      %6015 = vst.msk [vmem:[#allocation3 + $0xd8] sm:$0xff] %vm1025, 0.0
      %6016 = vst.msk [vmem:[#allocation3 + $0xe0] sm:$0xff] %vm1025, 0.0
      %6017 = vst.msk [vmem:[#allocation3 + $0xe8] sm:$0xff] %vm1025, 0.0
      %6018 = vst.msk [vmem:[#allocation3 + $0xf0] sm:$0xff] %vm1025, 0.0
      %6019 = vst.msk [vmem:[#allocation3 + $0xf8] sm:$0xff] %vm1025, 0.0
      %6020 = vst.msk [vmem:[#allocation3 + $0x100] sm:$0xff] %vm1025, 0.0
      %6021 = vst.msk [vmem:[#allocation3 + $0x108] sm:$0xff] %vm1025, 0.0
      %6022 = vst.msk [vmem:[#allocation3 + $0x110] sm:$0xff] %vm1025, 0.0
      %6023 = vst.msk [vmem:[#allocation3 + $0x118] sm:$0xff] %vm1025, 0.0
      %6024 = vst.msk [vmem:[#allocation3 + $0x120] sm:$0xff] %vm1025, 0.0
      %6025 = vst.msk [vmem:[#allocation3 + $0x128] sm:$0xff] %vm1025, 0.0
      %6026 = vst.msk [vmem:[#allocation3 + $0x130] sm:$0xff] %vm1025, 0.0
      %6027 = vst.msk [vmem:[#allocation3 + $0x138] sm:$0xff] %vm1025, 0.0
      %6028 = vst.msk [vmem:[#allocation3 + $0x140] sm:$0xff] %vm1025, 0.0
      %6029 = vst.msk [vmem:[#allocation3 + $0x148] sm:$0xff] %vm1025, 0.0
      %6030 = vst.msk [vmem:[#allocation3 + $0x18] sm:$0xff] %vm1025, %v5952
      %6031 = vst.msk [vmem:[#allocation3 + $0x20] sm:$0xff] %vm1025, %v5953
      %6032 = vst.msk [vmem:[#allocation3 + $0x28] sm:$0xff] %vm1025, %v5954
      %6033 = vst.msk [vmem:[#allocation3 + $0x30] sm:$0xff] %vm1025, %v5955
      %6034 = vst.msk [vmem:[#allocation3 + $0x38] sm:$0xff] %vm1025, %v5956
      %6035 = vst.msk [vmem:[#allocation3 + $0x40] sm:$0xff] %vm1025, %v5957
      %6036 = vst.msk [vmem:[#allocation3 + $0x48] sm:$0xff] %vm1025, %v5958
      %6037 = vst.msk [vmem:[#allocation3 + $0x50] sm:$0xff] %vm1025, %v5959
      %6038 = vst.msk [vmem:[#allocation3 + $0x58] sm:$0xff] %vm1025, %v5960
      %6039 = vst.msk [vmem:[#allocation3 + $0x60] sm:$0xff] %vm1025, %v5961
      %6040 = vst.msk [vmem:[#allocation3 + $0x68] sm:$0xff] %vm1025, %v5962
      %6041 = vst.msk [vmem:[#allocation3 + $0x70] sm:$0xff] %vm1025, %v5963
      %6042 = vst.msk [vmem:[#allocation3 + $0x78] sm:$0xff] %vm1025, %v5964
      %6043 = vst.msk [vmem:[#allocation3 + $0x80] sm:$0xff] %vm1025, %v5965
      %6044 = vst.msk [vmem:[#allocation3 + $0x88] sm:$0xff] %vm1025, %v5966
      %6045 = vst.msk [vmem:[#allocation3 + $0x90] sm:$0xff] %vm1025, %v5967
      %6046 = vst.msk [vmem:[#allocation3 + $0x98] sm:$0xff] %vm1025, %v5968
      %6047 = vst.msk [vmem:[#allocation3 + $0xa0] sm:$0xff] %vm1025, %v5969
      %6048 = vst.msk [vmem:[#allocation3 + $0xa8] sm:$0xff] %vm1025, %v5970
      %6049 = vst.msk [vmem:[#allocation3 + $0xb0] sm:$0xff] %vm1025, %v5971
      %6050 = vst.msk [vmem:[#allocation3 + $0xb8] sm:$0xff] %vm1025, %v5972
      %6051 = vst.msk [vmem:[#allocation3 + $0xc0] sm:$0xff] %vm1025, %v5973
      %6052 = vst.msk [vmem:[#allocation3 + $0xc8] sm:$0xff] %vm1025, %v5974
      %6053 = vst.msk [vmem:[#allocation3 + $0xd0] sm:$0xff] %vm1025, %v5975
      %6054 = vst.msk [vmem:[#allocation3 + $0xd8] sm:$0xff] %vm1025, %v5976
      %6055 = vst.msk [vmem:[#allocation3 + $0xe0] sm:$0xff] %vm1025, %v5977
      %6056 = vst.msk [vmem:[#allocation3 + $0xe8] sm:$0xff] %vm1025, %v5978
      %6057 = vst.msk [vmem:[#allocation3 + $0xf0] sm:$0xff] %vm1025, %v5979
      %6058 = vst.msk [vmem:[#allocation3 + $0xf8] sm:$0xff] %vm1025, %v5980
      %6059 = vst.msk [vmem:[#allocation3 + $0x100] sm:$0xff] %vm1025, %v5981
      %6060 = vst.msk [vmem:[#allocation3 + $0x108] sm:$0xff] %vm1025, %v5982
      %6061 = vst.msk [vmem:[#allocation3 + $0x110] sm:$0xff] %vm1025, %v5983
      %6062 = vst.msk [vmem:[#allocation3 + $0x118] sm:$0xff] %vm1025, %v5984
      %6063 = vst.msk [vmem:[#allocation3 + $0x120] sm:$0xff] %vm1025, %v5985
      %6064 = vst.msk [vmem:[#allocation3 + $0x128] sm:$0xff] %vm1025, %v5986
      %6065 = vst.msk [vmem:[#allocation3 + $0x130] sm:$0xff] %vm1025, %v5987
      %v6066 = vld [vmem:[#allocation3 + $0x5] sm:$0xff]
      %v6067 = vld [vmem:[#allocation3 + $0xd] sm:$0xff]
      %v6068 = vld [vmem:[#allocation3 + $0x15] sm:$0xff]
      %v6069 = vld [vmem:[#allocation3 + $0x1d] sm:$0xff]
      %v6070 = vld [vmem:[#allocation3 + $0x25] sm:$0xff]
      %v6071 = vld [vmem:[#allocation3 + $0x2d] sm:$0xff]
      %v6072 = vld [vmem:[#allocation3 + $0x35] sm:$0xff]
      %v6073 = vld [vmem:[#allocation3 + $0x3d] sm:$0xff]
      %v6074 = vld [vmem:[#allocation3 + $0x45] sm:$0xff]
      %v6075 = vld [vmem:[#allocation3 + $0x4d] sm:$0xff]
      %v6076 = vld [vmem:[#allocation3 + $0x55] sm:$0xff]
      %v6077 = vld [vmem:[#allocation3 + $0x5d] sm:$0xff]
      %v6078 = vld [vmem:[#allocation3 + $0x65] sm:$0xff]
      %v6079 = vld [vmem:[#allocation3 + $0x6d] sm:$0xff]
      %v6080 = vld [vmem:[#allocation3 + $0x75] sm:$0xff]
      %v6081 = vld [vmem:[#allocation3 + $0x7d] sm:$0xff]
      %v6082 = vld [vmem:[#allocation3 + $0x85] sm:$0xff]
      %v6083 = vld [vmem:[#allocation3 + $0x8d] sm:$0xff]
      %v6084 = vld [vmem:[#allocation3 + $0x95] sm:$0xff]
      %v6085 = vld [vmem:[#allocation3 + $0x9d] sm:$0xff]
      %v6086 = vld [vmem:[#allocation3 + $0xa5] sm:$0xff]
      %v6087 = vld [vmem:[#allocation3 + $0xad] sm:$0xff]
      %v6088 = vld [vmem:[#allocation3 + $0xb5] sm:$0xff]
      %v6089 = vld [vmem:[#allocation3 + $0xbd] sm:$0xff]
      %v6090 = vld [vmem:[#allocation3 + $0xc5] sm:$0xff]
      %v6091 = vld [vmem:[#allocation3 + $0xcd] sm:$0xff]
      %v6092 = vld [vmem:[#allocation3 + $0xd5] sm:$0xff]
      %v6093 = vld [vmem:[#allocation3 + $0xdd] sm:$0xff]
      %v6094 = vld [vmem:[#allocation3 + $0xe5] sm:$0xff]
      %v6095 = vld [vmem:[#allocation3 + $0xed] sm:$0xff]
      %v6096 = vld [vmem:[#allocation3 + $0xf5] sm:$0xff]
      %v6097 = vld [vmem:[#allocation3 + $0xfd] sm:$0xff]
      %v6098 = vld [vmem:[#allocation3 + $0x105] sm:$0xff]
      %v6099 = vld [vmem:[#allocation3 + $0x10d] sm:$0xff]
      %v6100 = vld [vmem:[#allocation3 + $0x115] sm:$0xff]
      %v6101 = vld [vmem:[#allocation3 + $0x11d] sm:$0xff]
      %v6102 = vld [vmem:[%s8] sm:$0xf]
      %v6103 = vld [vmem:[#allocation3 + $0x6] sm:$0xff]
      %v6104 = vld [vmem:[#allocation3 + $0xe] sm:$0xff]
      %v6105 = vld [vmem:[#allocation3 + $0x16] sm:$0xff]
      %v6106 = vld [vmem:[#allocation3 + $0x1e] sm:$0xff]
      %v6107 = vld [vmem:[#allocation3 + $0x26] sm:$0xff]
      %v6108 = vld [vmem:[#allocation3 + $0x2e] sm:$0xff]
      %v6109 = vld [vmem:[#allocation3 + $0x36] sm:$0xff]
      %v6110 = vld [vmem:[#allocation3 + $0x3e] sm:$0xff]
      %v6111 = vld [vmem:[#allocation3 + $0x46] sm:$0xff]
      %v6112 = vld [vmem:[#allocation3 + $0x4e] sm:$0xff]
      %v6113 = vld [vmem:[#allocation3 + $0x56] sm:$0xff]
      %v6114 = vld [vmem:[#allocation3 + $0x5e] sm:$0xff]
      %v6115 = vld [vmem:[#allocation3 + $0x66] sm:$0xff]
      %v6116 = vld [vmem:[#allocation3 + $0x6e] sm:$0xff]
      %v6117 = vld [vmem:[#allocation3 + $0x76] sm:$0xff]
      %v6118 = vld [vmem:[#allocation3 + $0x7e] sm:$0xff]
      %v6119 = vld [vmem:[#allocation3 + $0x86] sm:$0xff]
      %v6120 = vld [vmem:[#allocation3 + $0x8e] sm:$0xff]
      %v6121 = vld [vmem:[#allocation3 + $0x96] sm:$0xff]
      %v6122 = vld [vmem:[#allocation3 + $0x9e] sm:$0xff]
      %v6123 = vld [vmem:[#allocation3 + $0xa6] sm:$0xff]
      %v6124 = vld [vmem:[#allocation3 + $0xae] sm:$0xff]
      %v6125 = vld [vmem:[#allocation3 + $0xb6] sm:$0xff]
      %v6126 = vld [vmem:[#allocation3 + $0xbe] sm:$0xff]
      %v6127 = vld [vmem:[#allocation3 + $0xc6] sm:$0xff]
      %v6128 = vld [vmem:[#allocation3 + $0xce] sm:$0xff]
      %v6129 = vld [vmem:[#allocation3 + $0xd6] sm:$0xff]
      %v6130 = vld [vmem:[#allocation3 + $0xde] sm:$0xff]
      %v6131 = vld [vmem:[#allocation3 + $0xe6] sm:$0xff]
      %v6132 = vld [vmem:[#allocation3 + $0xee] sm:$0xff]
      %v6133 = vld [vmem:[#allocation3 + $0xf6] sm:$0xff]
      %v6134 = vld [vmem:[#allocation3 + $0xfe] sm:$0xff]
      %v6135 = vld [vmem:[#allocation3 + $0x106] sm:$0xff]
      %v6136 = vld [vmem:[#allocation3 + $0x10e] sm:$0xff]
      %v6137 = vld [vmem:[#allocation3 + $0x116] sm:$0xff]
      %v6138 = vld [vmem:[#allocation3 + $0x11e] sm:$0xff]
      %s6139 = scalar_lea.vmem %s8, 4
      %v6140 = vld [vmem:[%s6139] sm:$0xf]
      %v6142 = vsel %vm1025, %v6103, 0
      %v6145 = vsel %vm1025, %v6104, 0
      %v6148 = vsel %vm1025, %v6105, 0
      %v6151 = vsel %vm1025, %v6106, 0
      %v6154 = vsel %vm1025, %v6107, 0
      %v6157 = vsel %vm1025, %v6108, 0
      %v6160 = vsel %vm1025, %v6109, 0
      %v6163 = vsel %vm1025, %v6110, 0
      %v6166 = vsel %vm1025, %v6111, 0
      %v6169 = vsel %vm1025, %v6112, 0
      %v6172 = vsel %vm1025, %v6113, 0
      %v6175 = vsel %vm1025, %v6114, 0
      %v6178 = vsel %vm1025, %v6115, 0
      %v6181 = vsel %vm1025, %v6116, 0
      %v6184 = vsel %vm1025, %v6117, 0
      %v6187 = vsel %vm1025, %v6118, 0
      %v6190 = vsel %vm1025, %v6119, 0
      %v6193 = vsel %vm1025, %v6120, 0
      %v6196 = vsel %vm1025, %v6121, 0
      %v6199 = vsel %vm1025, %v6122, 0
      %v6202 = vsel %vm1025, %v6123, 0
      %v6205 = vsel %vm1025, %v6124, 0
      %v6208 = vsel %vm1025, %v6125, 0
      %v6211 = vsel %vm1025, %v6126, 0
      %v6214 = vsel %vm1025, %v6127, 0
      %v6217 = vsel %vm1025, %v6128, 0
      %v6220 = vsel %vm1025, %v6129, 0
      %v6223 = vsel %vm1025, %v6130, 0
      %v6226 = vsel %vm1025, %v6131, 0
      %v6229 = vsel %vm1025, %v6132, 0
      %v6232 = vsel %vm1025, %v6133, 0
      %v6235 = vsel %vm1025, %v6134, 0
      %v6238 = vsel %vm1025, %v6135, 0
      %v6241 = vsel %vm1025, %v6136, 0
      %v6244 = vsel %vm1025, %v6137, 0
      %v6247 = vsel %vm1025, %v6138, 0
      %v6250 = vsel %vm1287, %v6140, 0
      %6252 = vmatprep.subr.mxu0 0.0
      %6253 = vmatpush1.msra.mxu0 %v6250
      %6254 = vmatprep.subr.mxu0 0.0
      %6255 = vmatpush1.msra.mxu0 0.0
      %6256 = vmatprep.subr.mxu0 0.0
      %6257 = vmatpush1.msra.mxu0 0.0
      %6258 = vmatprep.subr.mxu0 0.0
      %6259 = vmatpush1.msra.mxu0 0.0
      %6260 = vmatprep.subr.mxu0 0.0
      %6261 = vmatpush1.msra.mxu0 0.0
      %6262 = vmatprep.subr.mxu0 0.0
      %6263 = vmatpush1.msra.mxu0 0.0
      %6264 = vmatprep.subr.mxu0 0.0
      %6265 = vmatpush1.msra.mxu0 0.0
      %6266 = vmatprep.subr.mxu0 0.0
      %6267 = vmatpush1.msra.mxu0 0.0
      %6268 = vmatprep.subr.mxu0 0.0
      %6269 = vmatpush1.msra.mxu0 0.0
      %6270 = vmatprep.subr.mxu0 0.0
      %6271 = vmatpush1.msra.mxu0 0.0
      %6272 = vmatprep.subr.mxu0 0.0
      %6273 = vmatpush1.msra.mxu0 0.0
      %6274 = vmatprep.subr.mxu0 0.0
      %6275 = vmatpush1.msra.mxu0 0.0
      %6276 = vmatprep.subr.mxu0 0.0
      %6277 = vmatpush1.msra.mxu0 0.0
      %6278 = vmatprep.subr.mxu0 0.0
      %6279 = vmatpush1.msra.mxu0 0.0
      %6280 = vmatprep.subr.mxu0 0.0
      %6281 = vmatpush1.msra.mxu0 0.0
      %6282 = vmatprep.subr.mxu0 0.0
      %6283 = vmatpush1.msra.mxu0 0.0
      %6284 = vmatprep.subr.mxu0 0.0
      %6285 = vmatpush1.msra.mxu0 0.0
      %6286 = vmatprep.subr.mxu0 0.0
      %6287 = vmatpush1.msra.mxu0 0.0
      %6288 = vmatprep.subr.mxu0 0.0
      %6289 = vmatpush1.msra.mxu0 0.0
      %6290 = vmatprep.subr.mxu0 0.0
      %6291 = vmatpush1.msra.mxu0 0.0
      %6292 = vmatprep.subr.mxu0 0.0
      %6293 = vmatpush1.msra.mxu0 0.0
      %6294 = vmatprep.subr.mxu0 0.0
      %6295 = vmatpush1.msra.mxu0 0.0
      %6296 = vmatprep.subr.mxu0 0.0
      %6297 = vmatpush1.msra.mxu0 0.0
      %6298 = vmatprep.subr.mxu0 0.0
      %6299 = vmatpush1.msra.mxu0 0.0
      %6300 = vmatprep.subr.mxu0 0.0
      %6301 = vmatpush1.msra.mxu0 0.0
      %6302 = vmatprep.subr.mxu0 0.0
      %6303 = vmatpush1.msra.mxu0 0.0
      %6304 = vmatprep.subr.mxu0 0.0
      %6305 = vmatpush1.msra.mxu0 0.0
      %6306 = vmatprep.subr.mxu0 0.0
      %6307 = vmatpush1.msra.mxu0 0.0
      %6308 = vmatprep.subr.mxu0 0.0
      %6309 = vmatpush1.msra.mxu0 0.0
      %6310 = vmatprep.subr.mxu0 0.0
      %6311 = vmatpush1.msra.mxu0 0.0
      %6312 = vmatprep.subr.mxu0 0.0
      %6313 = vmatpush1.msra.mxu0 0.0
      %6314 = vmatprep.subr.mxu0 0.0
      %6315 = vmatpush1.msra.mxu0 0.0
      %6316 = vmatprep.mubr.f32.mxu0 0.0
      %6317 = vmatmul.mubr.f32.gmra.mrb[0].mxu0 %v6142
      %v6318 = vpop.f32.mrb[0].mxu0
      %v6319 = vadd.f32 0.0, %v6318
      %v6320 = vpop.f32.mrb[0].mxu0
      %6321 = vmatprep.mubr.f32.mxu0 0.0
      %6322 = vmatmul.mubr.f32.gmra.mrb[0].mxu0 %v6145
      %v6323 = vpop.f32.mrb[0].mxu0
      %v6324 = vadd.f32 0.0, %v6323
      %v6325 = vpop.f32.mrb[0].mxu0
      %6326 = vmatprep.mubr.f32.mxu0 0.0
      %6327 = vmatmul.mubr.f32.gmra.mrb[0].mxu0 %v6148
      %v6328 = vpop.f32.mrb[0].mxu0
      %v6329 = vadd.f32 0.0, %v6328
      %v6330 = vpop.f32.mrb[0].mxu0
      %6331 = vmatprep.mubr.f32.mxu0 0.0
      %6332 = vmatmul.mubr.f32.gmra.mrb[0].mxu0 %v6151
      %v6333 = vpop.f32.mrb[0].mxu0
      %v6334 = vadd.f32 0.0, %v6333
      %v6335 = vpop.f32.mrb[0].mxu0
      %6336 = vmatprep.mubr.f32.mxu0 0.0
      %6337 = vmatmul.mubr.f32.gmra.mrb[0].mxu0 %v6154
      %v6338 = vpop.f32.mrb[0].mxu0
      %v6339 = vadd.f32 0.0, %v6338
      %v6340 = vpop.f32.mrb[0].mxu0
      %6341 = vmatprep.mubr.f32.mxu0 0.0
      %6342 = vmatmul.mubr.f32.gmra.mrb[0].mxu0 %v6157
      %v6343 = vpop.f32.mrb[0].mxu0
      %v6344 = vadd.f32 0.0, %v6343
      %v6345 = vpop.f32.mrb[0].mxu0
      %6346 = vmatprep.mubr.f32.mxu0 0.0
      %6347 = vmatmul.mubr.f32.gmra.mrb[0].mxu0 %v6160
      %v6348 = vpop.f32.mrb[0].mxu0
      %v6349 = vadd.f32 0.0, %v6348
      %v6350 = vpop.f32.mrb[0].mxu0
      %6351 = vmatprep.mubr.f32.mxu0 0.0
      %6352 = vmatmul.mubr.f32.gmra.mrb[0].mxu0 %v6163
      %v6353 = vpop.f32.mrb[0].mxu0
      %v6354 = vadd.f32 0.0, %v6353
      %v6355 = vpop.f32.mrb[0].mxu0
      %6356 = vmatprep.mubr.f32.mxu0 0.0
      %6357 = vmatmul.mubr.f32.gmra.mrb[0].mxu0 %v6166
      %v6358 = vpop.f32.mrb[0].mxu0
      %v6359 = vadd.f32 0.0, %v6358
      %v6360 = vpop.f32.mrb[0].mxu0
      %6361 = vmatprep.mubr.f32.mxu0 0.0
      %6362 = vmatmul.mubr.f32.gmra.mrb[0].mxu0 %v6169
      %v6363 = vpop.f32.mrb[0].mxu0
      %v6364 = vadd.f32 0.0, %v6363
      %v6365 = vpop.f32.mrb[0].mxu0
      %6366 = vmatprep.mubr.f32.mxu0 0.0
      %6367 = vmatmul.mubr.f32.gmra.mrb[0].mxu0 %v6172
      %v6368 = vpop.f32.mrb[0].mxu0
      %v6369 = vadd.f32 0.0, %v6368
      %v6370 = vpop.f32.mrb[0].mxu0
      %6371 = vmatprep.mubr.f32.mxu0 0.0
      %6372 = vmatmul.mubr.f32.gmra.mrb[0].mxu0 %v6175
      %v6373 = vpop.f32.mrb[0].mxu0
      %v6374 = vadd.f32 0.0, %v6373
      %v6375 = vpop.f32.mrb[0].mxu0
      %6376 = vmatprep.mubr.f32.mxu0 0.0
      %6377 = vmatmul.mubr.f32.gmra.mrb[0].mxu0 %v6178
      %v6378 = vpop.f32.mrb[0].mxu0
      %v6379 = vadd.f32 0.0, %v6378
      %v6380 = vpop.f32.mrb[0].mxu0
      %6381 = vmatprep.mubr.f32.mxu0 0.0
      %6382 = vmatmul.mubr.f32.gmra.mrb[0].mxu0 %v6181
      %v6383 = vpop.f32.mrb[0].mxu0
      %v6384 = vadd.f32 0.0, %v6383
      %v6385 = vpop.f32.mrb[0].mxu0
      %6386 = vmatprep.mubr.f32.mxu0 0.0
      %6387 = vmatmul.mubr.f32.gmra.mrb[0].mxu0 %v6184
      %v6388 = vpop.f32.mrb[0].mxu0
      %v6389 = vadd.f32 0.0, %v6388
      %v6390 = vpop.f32.mrb[0].mxu0
      %6391 = vmatprep.mubr.f32.mxu0 0.0
      %6392 = vmatmul.mubr.f32.gmra.mrb[0].mxu0 %v6187
      %v6393 = vpop.f32.mrb[0].mxu0
      %v6394 = vadd.f32 0.0, %v6393
      %v6395 = vpop.f32.mrb[0].mxu0
      %6396 = vmatprep.mubr.f32.mxu0 0.0
      %6397 = vmatmul.mubr.f32.gmra.mrb[0].mxu0 %v6190
      %v6398 = vpop.f32.mrb[0].mxu0
      %v6399 = vadd.f32 0.0, %v6398
      %v6400 = vpop.f32.mrb[0].mxu0
      %6401 = vmatprep.mubr.f32.mxu0 0.0
      %6402 = vmatmul.mubr.f32.gmra.mrb[0].mxu0 %v6193
      %v6403 = vpop.f32.mrb[0].mxu0
      %v6404 = vadd.f32 0.0, %v6403
      %v6405 = vpop.f32.mrb[0].mxu0
      %6406 = vmatprep.mubr.f32.mxu0 0.0
      %6407 = vmatmul.mubr.f32.gmra.mrb[0].mxu0 %v6196
      %v6408 = vpop.f32.mrb[0].mxu0
      %v6409 = vadd.f32 0.0, %v6408
      %v6410 = vpop.f32.mrb[0].mxu0
      %6411 = vmatprep.mubr.f32.mxu0 0.0
      %6412 = vmatmul.mubr.f32.gmra.mrb[0].mxu0 %v6199
      %v6413 = vpop.f32.mrb[0].mxu0
      %v6414 = vadd.f32 0.0, %v6413
      %v6415 = vpop.f32.mrb[0].mxu0
      %6416 = vmatprep.mubr.f32.mxu0 0.0
      %6417 = vmatmul.mubr.f32.gmra.mrb[0].mxu0 %v6202
      %v6418 = vpop.f32.mrb[0].mxu0
      %v6419 = vadd.f32 0.0, %v6418
      %v6420 = vpop.f32.mrb[0].mxu0
      %6421 = vmatprep.mubr.f32.mxu0 0.0
      %6422 = vmatmul.mubr.f32.gmra.mrb[0].mxu0 %v6205
      %v6423 = vpop.f32.mrb[0].mxu0
      %v6424 = vadd.f32 0.0, %v6423
      %v6425 = vpop.f32.mrb[0].mxu0
      %6426 = vmatprep.mubr.f32.mxu0 0.0
      %6427 = vmatmul.mubr.f32.gmra.mrb[0].mxu0 %v6208
      %v6428 = vpop.f32.mrb[0].mxu0
      %v6429 = vadd.f32 0.0, %v6428
      %v6430 = vpop.f32.mrb[0].mxu0
      %6431 = vmatprep.mubr.f32.mxu0 0.0
      %6432 = vmatmul.mubr.f32.gmra.mrb[0].mxu0 %v6211
      %v6433 = vpop.f32.mrb[0].mxu0
      %v6434 = vadd.f32 0.0, %v6433
      %v6435 = vpop.f32.mrb[0].mxu0
      %6436 = vmatprep.mubr.f32.mxu0 0.0
      %6437 = vmatmul.mubr.f32.gmra.mrb[0].mxu0 %v6214
      %v6438 = vpop.f32.mrb[0].mxu0
      %v6439 = vadd.f32 0.0, %v6438
      %v6440 = vpop.f32.mrb[0].mxu0
      %6441 = vmatprep.mubr.f32.mxu0 0.0
      %6442 = vmatmul.mubr.f32.gmra.mrb[0].mxu0 %v6217
      %v6443 = vpop.f32.mrb[0].mxu0
      %v6444 = vadd.f32 0.0, %v6443
      %v6445 = vpop.f32.mrb[0].mxu0
      %6446 = vmatprep.mubr.f32.mxu0 0.0
      %6447 = vmatmul.mubr.f32.gmra.mrb[0].mxu0 %v6220
      %v6448 = vpop.f32.mrb[0].mxu0
      %v6449 = vadd.f32 0.0, %v6448
      %v6450 = vpop.f32.mrb[0].mxu0
      %6451 = vmatprep.mubr.f32.mxu0 0.0
      %6452 = vmatmul.mubr.f32.gmra.mrb[0].mxu0 %v6223
      %v6453 = vpop.f32.mrb[0].mxu0
      %v6454 = vadd.f32 0.0, %v6453
      %v6455 = vpop.f32.mrb[0].mxu0
      %6456 = vmatprep.mubr.f32.mxu0 0.0
      %6457 = vmatmul.mubr.f32.gmra.mrb[0].mxu0 %v6226
      %v6458 = vpop.f32.mrb[0].mxu0
      %v6459 = vadd.f32 0.0, %v6458
      %v6460 = vpop.f32.mrb[0].mxu0
      %6461 = vmatprep.mubr.f32.mxu0 0.0
      %6462 = vmatmul.mubr.f32.gmra.mrb[0].mxu0 %v6229
      %v6463 = vpop.f32.mrb[0].mxu0
      %v6464 = vadd.f32 0.0, %v6463
      %v6465 = vpop.f32.mrb[0].mxu0
      %6466 = vmatprep.mubr.f32.mxu0 0.0
      %6467 = vmatmul.mubr.f32.gmra.mrb[0].mxu0 %v6232
      %v6468 = vpop.f32.mrb[0].mxu0
      %v6469 = vadd.f32 0.0, %v6468
      %v6470 = vpop.f32.mrb[0].mxu0
      %6471 = vmatprep.mubr.f32.mxu0 0.0
      %6472 = vmatmul.mubr.f32.gmra.mrb[0].mxu0 %v6235
      %v6473 = vpop.f32.mrb[0].mxu0
      %v6474 = vadd.f32 0.0, %v6473
      %v6475 = vpop.f32.mrb[0].mxu0
      %6476 = vmatprep.mubr.f32.mxu0 0.0
      %6477 = vmatmul.mubr.f32.gmra.mrb[0].mxu0 %v6238
      %v6478 = vpop.f32.mrb[0].mxu0
      %v6479 = vadd.f32 0.0, %v6478
      %v6480 = vpop.f32.mrb[0].mxu0
      %6481 = vmatprep.mubr.f32.mxu0 0.0
      %6482 = vmatmul.mubr.f32.gmra.mrb[0].mxu0 %v6241
      %v6483 = vpop.f32.mrb[0].mxu0
      %v6484 = vadd.f32 0.0, %v6483
      %v6485 = vpop.f32.mrb[0].mxu0
      %6486 = vmatprep.mubr.f32.mxu0 0.0
      %6487 = vmatmul.mubr.f32.gmra.mrb[0].mxu0 %v6244
      %v6488 = vpop.f32.mrb[0].mxu0
      %v6489 = vadd.f32 0.0, %v6488
      %v6490 = vpop.f32.mrb[0].mxu0
      %6491 = vmatprep.mubr.f32.mxu0 0.0
      %6492 = vmatmul.mubr.f32.gmra.mrb[0].mxu0 %v6247
      %v6493 = vpop.f32.mrb[0].mxu0
      %v6494 = vadd.f32 0.0, %v6493
      %v6495 = vpop.f32.mrb[0].mxu0
      %6496 = vdwg.mxu0
      %v6498 = vsel %vm1025, %v6066, 0
      %v6501 = vsel %vm1025, %v6067, 0
      %v6504 = vsel %vm1025, %v6068, 0
      %v6507 = vsel %vm1025, %v6069, 0
      %v6510 = vsel %vm1025, %v6070, 0
      %v6513 = vsel %vm1025, %v6071, 0
      %v6516 = vsel %vm1025, %v6072, 0
      %v6519 = vsel %vm1025, %v6073, 0
      %v6522 = vsel %vm1025, %v6074, 0
      %v6525 = vsel %vm1025, %v6075, 0
      %v6528 = vsel %vm1025, %v6076, 0
      %v6531 = vsel %vm1025, %v6077, 0
      %v6534 = vsel %vm1025, %v6078, 0
      %v6537 = vsel %vm1025, %v6079, 0
      %v6540 = vsel %vm1025, %v6080, 0
      %v6543 = vsel %vm1025, %v6081, 0
      %v6546 = vsel %vm1025, %v6082, 0
      %v6549 = vsel %vm1025, %v6083, 0
      %v6552 = vsel %vm1025, %v6084, 0
      %v6555 = vsel %vm1025, %v6085, 0
      %v6558 = vsel %vm1025, %v6086, 0
      %v6561 = vsel %vm1025, %v6087, 0
      %v6564 = vsel %vm1025, %v6088, 0
      %v6567 = vsel %vm1025, %v6089, 0
      %v6570 = vsel %vm1025, %v6090, 0
      %v6573 = vsel %vm1025, %v6091, 0
      %v6576 = vsel %vm1025, %v6092, 0
      %v6579 = vsel %vm1025, %v6093, 0
      %v6582 = vsel %vm1025, %v6094, 0
      %v6585 = vsel %vm1025, %v6095, 0
      %v6588 = vsel %vm1025, %v6096, 0
      %v6591 = vsel %vm1025, %v6097, 0
      %v6594 = vsel %vm1025, %v6098, 0
      %v6597 = vsel %vm1025, %v6099, 0
      %v6600 = vsel %vm1025, %v6100, 0
      %v6603 = vsel %vm1025, %v6101, 0
      %v6606 = vsel %vm1287, %v6102, 0
      %6608 = vmatprep.subr.mxu0 0.0
      %6609 = vmatpush1.msra.mxu0 %v6606
      %6610 = vmatprep.subr.mxu0 0.0
      %6611 = vmatpush1.msra.mxu0 0.0
      %6612 = vmatprep.subr.mxu0 0.0
      %6613 = vmatpush1.msra.mxu0 0.0
      %6614 = vmatprep.subr.mxu0 0.0
      %6615 = vmatpush1.msra.mxu0 0.0
      %6616 = vmatprep.subr.mxu0 0.0
      %6617 = vmatpush1.msra.mxu0 0.0
      %6618 = vmatprep.subr.mxu0 0.0
      %6619 = vmatpush1.msra.mxu0 0.0
      %6620 = vmatprep.subr.mxu0 0.0
      %6621 = vmatpush1.msra.mxu0 0.0
      %6622 = vmatprep.subr.mxu0 0.0
      %6623 = vmatpush1.msra.mxu0 0.0
      %6624 = vmatprep.subr.mxu0 0.0
      %6625 = vmatpush1.msra.mxu0 0.0
      %6626 = vmatprep.subr.mxu0 0.0
      %6627 = vmatpush1.msra.mxu0 0.0
      %6628 = vmatprep.subr.mxu0 0.0
      %6629 = vmatpush1.msra.mxu0 0.0
      %6630 = vmatprep.subr.mxu0 0.0
      %6631 = vmatpush1.msra.mxu0 0.0
      %6632 = vmatprep.subr.mxu0 0.0
      %6633 = vmatpush1.msra.mxu0 0.0
      %6634 = vmatprep.subr.mxu0 0.0
      %6635 = vmatpush1.msra.mxu0 0.0
      %6636 = vmatprep.subr.mxu0 0.0
      %6637 = vmatpush1.msra.mxu0 0.0
      %6638 = vmatprep.subr.mxu0 0.0
      %6639 = vmatpush1.msra.mxu0 0.0
      %6640 = vmatprep.subr.mxu0 0.0
      %6641 = vmatpush1.msra.mxu0 0.0
      %6642 = vmatprep.subr.mxu0 0.0
      %6643 = vmatpush1.msra.mxu0 0.0
      %6644 = vmatprep.subr.mxu0 0.0
      %6645 = vmatpush1.msra.mxu0 0.0
      %6646 = vmatprep.subr.mxu0 0.0
      %6647 = vmatpush1.msra.mxu0 0.0
      %6648 = vmatprep.subr.mxu0 0.0
      %6649 = vmatpush1.msra.mxu0 0.0
      %6650 = vmatprep.subr.mxu0 0.0
      %6651 = vmatpush1.msra.mxu0 0.0
      %6652 = vmatprep.subr.mxu0 0.0
      %6653 = vmatpush1.msra.mxu0 0.0
      %6654 = vmatprep.subr.mxu0 0.0
      %6655 = vmatpush1.msra.mxu0 0.0
      %6656 = vmatprep.subr.mxu0 0.0
      %6657 = vmatpush1.msra.mxu0 0.0
      %6658 = vmatprep.subr.mxu0 0.0
      %6659 = vmatpush1.msra.mxu0 0.0
      %6660 = vmatprep.subr.mxu0 0.0
      %6661 = vmatpush1.msra.mxu0 0.0
      %6662 = vmatprep.subr.mxu0 0.0
      %6663 = vmatpush1.msra.mxu0 0.0
      %6664 = vmatprep.subr.mxu0 0.0
      %6665 = vmatpush1.msra.mxu0 0.0
      %6666 = vmatprep.subr.mxu0 0.0
      %6667 = vmatpush1.msra.mxu0 0.0
      %6668 = vmatprep.subr.mxu0 0.0
      %6669 = vmatpush1.msra.mxu0 0.0
      %6670 = vmatprep.subr.mxu0 0.0
      %6671 = vmatpush1.msra.mxu0 0.0
      %6672 = vmatprep.mubr.f32.mxu0 0.0
      %6673 = vmatmul.mubr.f32.gmra.mrb[0].mxu0 %v6498
      %v6674 = vpop.f32.mrb[0].mxu0
      %v6675 = vadd.f32 %v6319, %v6674
      %v6676 = vpop.f32.mrb[0].mxu0
      %6677 = vmatprep.mubr.f32.mxu0 0.0
      %6678 = vmatmul.mubr.f32.gmra.mrb[0].mxu0 %v6501
      %v6679 = vpop.f32.mrb[0].mxu0
      %v6680 = vadd.f32 %v6324, %v6679
      %v6681 = vpop.f32.mrb[0].mxu0
      %6682 = vmatprep.mubr.f32.mxu0 0.0
      %6683 = vmatmul.mubr.f32.gmra.mrb[0].mxu0 %v6504
      %v6684 = vpop.f32.mrb[0].mxu0
      %v6685 = vadd.f32 %v6329, %v6684
      %v6686 = vpop.f32.mrb[0].mxu0
      %6687 = vmatprep.mubr.f32.mxu0 0.0
      %6688 = vmatmul.mubr.f32.gmra.mrb[0].mxu0 %v6507
      %v6689 = vpop.f32.mrb[0].mxu0
      %v6690 = vadd.f32 %v6334, %v6689
      %v6691 = vpop.f32.mrb[0].mxu0
      %6692 = vmatprep.mubr.f32.mxu0 0.0
      %6693 = vmatmul.mubr.f32.gmra.mrb[0].mxu0 %v6510
      %v6694 = vpop.f32.mrb[0].mxu0
      %v6695 = vadd.f32 %v6339, %v6694
      %v6696 = vpop.f32.mrb[0].mxu0
      %6697 = vmatprep.mubr.f32.mxu0 0.0
      %6698 = vmatmul.mubr.f32.gmra.mrb[0].mxu0 %v6513
      %v6699 = vpop.f32.mrb[0].mxu0
      %v6700 = vadd.f32 %v6344, %v6699
      %v6701 = vpop.f32.mrb[0].mxu0
      %6702 = vmatprep.mubr.f32.mxu0 0.0
      %6703 = vmatmul.mubr.f32.gmra.mrb[0].mxu0 %v6516
      %v6704 = vpop.f32.mrb[0].mxu0
      %v6705 = vadd.f32 %v6349, %v6704
      %v6706 = vpop.f32.mrb[0].mxu0
      %6707 = vmatprep.mubr.f32.mxu0 0.0
      %6708 = vmatmul.mubr.f32.gmra.mrb[0].mxu0 %v6519
      %v6709 = vpop.f32.mrb[0].mxu0
      %v6710 = vadd.f32 %v6354, %v6709
      %v6711 = vpop.f32.mrb[0].mxu0
      %6712 = vmatprep.mubr.f32.mxu0 0.0
      %6713 = vmatmul.mubr.f32.gmra.mrb[0].mxu0 %v6522
      %v6714 = vpop.f32.mrb[0].mxu0
      %v6715 = vadd.f32 %v6359, %v6714
      %v6716 = vpop.f32.mrb[0].mxu0
      %6717 = vmatprep.mubr.f32.mxu0 0.0
      %6718 = vmatmul.mubr.f32.gmra.mrb[0].mxu0 %v6525
      %v6719 = vpop.f32.mrb[0].mxu0
      %v6720 = vadd.f32 %v6364, %v6719
      %v6721 = vpop.f32.mrb[0].mxu0
      %6722 = vmatprep.mubr.f32.mxu0 0.0
      %6723 = vmatmul.mubr.f32.gmra.mrb[0].mxu0 %v6528
      %v6724 = vpop.f32.mrb[0].mxu0
      %v6725 = vadd.f32 %v6369, %v6724
      %v6726 = vpop.f32.mrb[0].mxu0
      %6727 = vmatprep.mubr.f32.mxu0 0.0
      %6728 = vmatmul.mubr.f32.gmra.mrb[0].mxu0 %v6531
      %v6729 = vpop.f32.mrb[0].mxu0
      %v6730 = vadd.f32 %v6374, %v6729
      %v6731 = vpop.f32.mrb[0].mxu0
      %6732 = vmatprep.mubr.f32.mxu0 0.0
      %6733 = vmatmul.mubr.f32.gmra.mrb[0].mxu0 %v6534
      %v6734 = vpop.f32.mrb[0].mxu0
      %v6735 = vadd.f32 %v6379, %v6734
      %v6736 = vpop.f32.mrb[0].mxu0
      %6737 = vmatprep.mubr.f32.mxu0 0.0
      %6738 = vmatmul.mubr.f32.gmra.mrb[0].mxu0 %v6537
      %v6739 = vpop.f32.mrb[0].mxu0
      %v6740 = vadd.f32 %v6384, %v6739
      %v6741 = vpop.f32.mrb[0].mxu0
      %6742 = vmatprep.mubr.f32.mxu0 0.0
      %6743 = vmatmul.mubr.f32.gmra.mrb[0].mxu0 %v6540
      %v6744 = vpop.f32.mrb[0].mxu0
      %v6745 = vadd.f32 %v6389, %v6744
      %v6746 = vpop.f32.mrb[0].mxu0
      %6747 = vmatprep.mubr.f32.mxu0 0.0
      %6748 = vmatmul.mubr.f32.gmra.mrb[0].mxu0 %v6543
      %v6749 = vpop.f32.mrb[0].mxu0
      %v6750 = vadd.f32 %v6394, %v6749
      %v6751 = vpop.f32.mrb[0].mxu0
      %6752 = vmatprep.mubr.f32.mxu0 0.0
      %6753 = vmatmul.mubr.f32.gmra.mrb[0].mxu0 %v6546
      %v6754 = vpop.f32.mrb[0].mxu0
      %v6755 = vadd.f32 %v6399, %v6754
      %v6756 = vpop.f32.mrb[0].mxu0
      %6757 = vmatprep.mubr.f32.mxu0 0.0
      %6758 = vmatmul.mubr.f32.gmra.mrb[0].mxu0 %v6549
      %v6759 = vpop.f32.mrb[0].mxu0
      %v6760 = vadd.f32 %v6404, %v6759
      %v6761 = vpop.f32.mrb[0].mxu0
      %6762 = vmatprep.mubr.f32.mxu0 0.0
      %6763 = vmatmul.mubr.f32.gmra.mrb[0].mxu0 %v6552
      %v6764 = vpop.f32.mrb[0].mxu0
      %v6765 = vadd.f32 %v6409, %v6764
      %v6766 = vpop.f32.mrb[0].mxu0
      %6767 = vmatprep.mubr.f32.mxu0 0.0
      %6768 = vmatmul.mubr.f32.gmra.mrb[0].mxu0 %v6555
      %v6769 = vpop.f32.mrb[0].mxu0
      %v6770 = vadd.f32 %v6414, %v6769
      %v6771 = vpop.f32.mrb[0].mxu0
      %6772 = vmatprep.mubr.f32.mxu0 0.0
      %6773 = vmatmul.mubr.f32.gmra.mrb[0].mxu0 %v6558
      %v6774 = vpop.f32.mrb[0].mxu0
      %v6775 = vadd.f32 %v6419, %v6774
      %v6776 = vpop.f32.mrb[0].mxu0
      %6777 = vmatprep.mubr.f32.mxu0 0.0
      %6778 = vmatmul.mubr.f32.gmra.mrb[0].mxu0 %v6561
      %v6779 = vpop.f32.mrb[0].mxu0
      %v6780 = vadd.f32 %v6424, %v6779
      %v6781 = vpop.f32.mrb[0].mxu0
      %6782 = vmatprep.mubr.f32.mxu0 0.0
      %6783 = vmatmul.mubr.f32.gmra.mrb[0].mxu0 %v6564
      %v6784 = vpop.f32.mrb[0].mxu0
      %v6785 = vadd.f32 %v6429, %v6784
      %v6786 = vpop.f32.mrb[0].mxu0
      %6787 = vmatprep.mubr.f32.mxu0 0.0
      %6788 = vmatmul.mubr.f32.gmra.mrb[0].mxu0 %v6567
      %v6789 = vpop.f32.mrb[0].mxu0
      %v6790 = vadd.f32 %v6434, %v6789
      %v6791 = vpop.f32.mrb[0].mxu0
      %6792 = vmatprep.mubr.f32.mxu0 0.0
      %6793 = vmatmul.mubr.f32.gmra.mrb[0].mxu0 %v6570
      %v6794 = vpop.f32.mrb[0].mxu0
      %v6795 = vadd.f32 %v6439, %v6794
      %v6796 = vpop.f32.mrb[0].mxu0
      %6797 = vmatprep.mubr.f32.mxu0 0.0
      %6798 = vmatmul.mubr.f32.gmra.mrb[0].mxu0 %v6573
      %v6799 = vpop.f32.mrb[0].mxu0
      %v6800 = vadd.f32 %v6444, %v6799
      %v6801 = vpop.f32.mrb[0].mxu0
      %6802 = vmatprep.mubr.f32.mxu0 0.0
      %6803 = vmatmul.mubr.f32.gmra.mrb[0].mxu0 %v6576
      %v6804 = vpop.f32.mrb[0].mxu0
      %v6805 = vadd.f32 %v6449, %v6804
      %v6806 = vpop.f32.mrb[0].mxu0
      %6807 = vmatprep.mubr.f32.mxu0 0.0
      %6808 = vmatmul.mubr.f32.gmra.mrb[0].mxu0 %v6579
      %v6809 = vpop.f32.mrb[0].mxu0
      %v6810 = vadd.f32 %v6454, %v6809
      %v6811 = vpop.f32.mrb[0].mxu0
      %6812 = vmatprep.mubr.f32.mxu0 0.0
      %6813 = vmatmul.mubr.f32.gmra.mrb[0].mxu0 %v6582
      %v6814 = vpop.f32.mrb[0].mxu0
      %v6815 = vadd.f32 %v6459, %v6814
      %v6816 = vpop.f32.mrb[0].mxu0
      %6817 = vmatprep.mubr.f32.mxu0 0.0
      %6818 = vmatmul.mubr.f32.gmra.mrb[0].mxu0 %v6585
      %v6819 = vpop.f32.mrb[0].mxu0
      %v6820 = vadd.f32 %v6464, %v6819
      %v6821 = vpop.f32.mrb[0].mxu0
      %6822 = vmatprep.mubr.f32.mxu0 0.0
      %6823 = vmatmul.mubr.f32.gmra.mrb[0].mxu0 %v6588
      %v6824 = vpop.f32.mrb[0].mxu0
      %v6825 = vadd.f32 %v6469, %v6824
      %v6826 = vpop.f32.mrb[0].mxu0
      %6827 = vmatprep.mubr.f32.mxu0 0.0
      %6828 = vmatmul.mubr.f32.gmra.mrb[0].mxu0 %v6591
      %v6829 = vpop.f32.mrb[0].mxu0
      %v6830 = vadd.f32 %v6474, %v6829
      %v6831 = vpop.f32.mrb[0].mxu0
      %6832 = vmatprep.mubr.f32.mxu0 0.0
      %6833 = vmatmul.mubr.f32.gmra.mrb[0].mxu0 %v6594
      %v6834 = vpop.f32.mrb[0].mxu0
      %v6835 = vadd.f32 %v6479, %v6834
      %v6836 = vpop.f32.mrb[0].mxu0
      %6837 = vmatprep.mubr.f32.mxu0 0.0
      %6838 = vmatmul.mubr.f32.gmra.mrb[0].mxu0 %v6597
      %v6839 = vpop.f32.mrb[0].mxu0
      %v6840 = vadd.f32 %v6484, %v6839
      %v6841 = vpop.f32.mrb[0].mxu0
      %6842 = vmatprep.mubr.f32.mxu0 0.0
      %6843 = vmatmul.mubr.f32.gmra.mrb[0].mxu0 %v6600
      %v6844 = vpop.f32.mrb[0].mxu0
      %v6845 = vadd.f32 %v6489, %v6844
      %v6846 = vpop.f32.mrb[0].mxu0
      %6847 = vmatprep.mubr.f32.mxu0 0.0
      %6848 = vmatmul.mubr.f32.gmra.mrb[0].mxu0 %v6603
      %v6849 = vpop.f32.mrb[0].mxu0
      %v6850 = vadd.f32 %v6494, %v6849
      %v6851 = vpop.f32.mrb[0].mxu0
      %6852 = vdwg.mxu0
      %v6853 = vld [vmem:[#allocation3 + $0x7] sm:$0xff]
      %v6854 = vld [vmem:[#allocation3 + $0xf] sm:$0xff]
      %v6855 = vld [vmem:[#allocation3 + $0x17] sm:$0xff]
      %v6856 = vld [vmem:[#allocation3 + $0x1f] sm:$0xff]
      %v6857 = vld [vmem:[#allocation3 + $0x27] sm:$0xff]
      %v6858 = vld [vmem:[#allocation3 + $0x2f] sm:$0xff]
      %v6859 = vld [vmem:[#allocation3 + $0x37] sm:$0xff]
      %v6860 = vld [vmem:[#allocation3 + $0x3f] sm:$0xff]
      %v6861 = vld [vmem:[#allocation3 + $0x47] sm:$0xff]
      %v6862 = vld [vmem:[#allocation3 + $0x4f] sm:$0xff]
      %v6863 = vld [vmem:[#allocation3 + $0x57] sm:$0xff]
      %v6864 = vld [vmem:[#allocation3 + $0x5f] sm:$0xff]
      %v6865 = vld [vmem:[#allocation3 + $0x67] sm:$0xff]
      %v6866 = vld [vmem:[#allocation3 + $0x6f] sm:$0xff]
      %v6867 = vld [vmem:[#allocation3 + $0x77] sm:$0xff]
      %v6868 = vld [vmem:[#allocation3 + $0x7f] sm:$0xff]
      %v6869 = vld [vmem:[#allocation3 + $0x87] sm:$0xff]
      %v6870 = vld [vmem:[#allocation3 + $0x8f] sm:$0xff]
      %v6871 = vld [vmem:[#allocation3 + $0x97] sm:$0xff]
      %v6872 = vld [vmem:[#allocation3 + $0x9f] sm:$0xff]
      %v6873 = vld [vmem:[#allocation3 + $0xa7] sm:$0xff]
      %v6874 = vld [vmem:[#allocation3 + $0xaf] sm:$0xff]
      %v6875 = vld [vmem:[#allocation3 + $0xb7] sm:$0xff]
      %v6876 = vld [vmem:[#allocation3 + $0xbf] sm:$0xff]
      %v6877 = vld [vmem:[#allocation3 + $0xc7] sm:$0xff]
      %v6878 = vld [vmem:[#allocation3 + $0xcf] sm:$0xff]
      %v6879 = vld [vmem:[#allocation3 + $0xd7] sm:$0xff]
      %v6880 = vld [vmem:[#allocation3 + $0xdf] sm:$0xff]
      %v6881 = vld [vmem:[#allocation3 + $0xe7] sm:$0xff]
      %v6882 = vld [vmem:[#allocation3 + $0xef] sm:$0xff]
      %v6883 = vld [vmem:[#allocation3 + $0xf7] sm:$0xff]
      %v6884 = vld [vmem:[#allocation3 + $0xff] sm:$0xff]
      %v6885 = vld [vmem:[#allocation3 + $0x107] sm:$0xff]
      %v6886 = vld [vmem:[#allocation3 + $0x10f] sm:$0xff]
      %v6887 = vld [vmem:[#allocation3 + $0x117] sm:$0xff]
      %v6888 = vld [vmem:[#allocation3 + $0x11f] sm:$0xff]
      %s6889 = scalar_lea.vmem %s8, 8
      %v6890 = vld [vmem:[%s6889] sm:$0xf]
      %v6892 = vsel %vm1025, %v6853, 0
      %v6895 = vsel %vm1025, %v6854, 0
      %v6898 = vsel %vm1025, %v6855, 0
      %v6901 = vsel %vm1025, %v6856, 0
      %v6904 = vsel %vm1025, %v6857, 0
      %v6907 = vsel %vm1025, %v6858, 0
      %v6910 = vsel %vm1025, %v6859, 0
      %v6913 = vsel %vm1025, %v6860, 0
      %v6916 = vsel %vm1025, %v6861, 0
      %v6919 = vsel %vm1025, %v6862, 0
      %v6922 = vsel %vm1025, %v6863, 0
      %v6925 = vsel %vm1025, %v6864, 0
      %v6928 = vsel %vm1025, %v6865, 0
      %v6931 = vsel %vm1025, %v6866, 0
      %v6934 = vsel %vm1025, %v6867, 0
      %v6937 = vsel %vm1025, %v6868, 0
      %v6940 = vsel %vm1025, %v6869, 0
      %v6943 = vsel %vm1025, %v6870, 0
      %v6946 = vsel %vm1025, %v6871, 0
      %v6949 = vsel %vm1025, %v6872, 0
      %v6952 = vsel %vm1025, %v6873, 0
      %v6955 = vsel %vm1025, %v6874, 0
      %v6958 = vsel %vm1025, %v6875, 0
      %v6961 = vsel %vm1025, %v6876, 0
      %v6964 = vsel %vm1025, %v6877, 0
      %v6967 = vsel %vm1025, %v6878, 0
      %v6970 = vsel %vm1025, %v6879, 0
      %v6973 = vsel %vm1025, %v6880, 0
      %v6976 = vsel %vm1025, %v6881, 0
      %v6979 = vsel %vm1025, %v6882, 0
      %v6982 = vsel %vm1025, %v6883, 0
      %v6985 = vsel %vm1025, %v6884, 0
      %v6988 = vsel %vm1025, %v6885, 0
      %v6991 = vsel %vm1025, %v6886, 0
      %v6994 = vsel %vm1025, %v6887, 0
      %v6997 = vsel %vm1025, %v6888, 0
      %v7000 = vsel %vm1287, %v6890, 0
      %7002 = vmatprep.subr.mxu0 0.0
      %7003 = vmatpush1.msra.mxu0 %v7000
      %7004 = vmatprep.subr.mxu0 0.0
      %7005 = vmatpush1.msra.mxu0 0.0
      %7006 = vmatprep.subr.mxu0 0.0
      %7007 = vmatpush1.msra.mxu0 0.0
      %7008 = vmatprep.subr.mxu0 0.0
      %7009 = vmatpush1.msra.mxu0 0.0
      %7010 = vmatprep.subr.mxu0 0.0
      %7011 = vmatpush1.msra.mxu0 0.0
      %7012 = vmatprep.subr.mxu0 0.0
      %7013 = vmatpush1.msra.mxu0 0.0
      %7014 = vmatprep.subr.mxu0 0.0
      %7015 = vmatpush1.msra.mxu0 0.0
      %7016 = vmatprep.subr.mxu0 0.0
      %7017 = vmatpush1.msra.mxu0 0.0
      %7018 = vmatprep.subr.mxu0 0.0
      %7019 = vmatpush1.msra.mxu0 0.0
      %7020 = vmatprep.subr.mxu0 0.0
      %7021 = vmatpush1.msra.mxu0 0.0
      %7022 = vmatprep.subr.mxu0 0.0
      %7023 = vmatpush1.msra.mxu0 0.0
      %7024 = vmatprep.subr.mxu0 0.0
      %7025 = vmatpush1.msra.mxu0 0.0
      %7026 = vmatprep.subr.mxu0 0.0
      %7027 = vmatpush1.msra.mxu0 0.0
      %7028 = vmatprep.subr.mxu0 0.0
      %7029 = vmatpush1.msra.mxu0 0.0
      %7030 = vmatprep.subr.mxu0 0.0
      %7031 = vmatpush1.msra.mxu0 0.0
      %7032 = vmatprep.subr.mxu0 0.0
      %7033 = vmatpush1.msra.mxu0 0.0
      %7034 = vmatprep.subr.mxu0 0.0
      %7035 = vmatpush1.msra.mxu0 0.0
      %7036 = vmatprep.subr.mxu0 0.0
      %7037 = vmatpush1.msra.mxu0 0.0
      %7038 = vmatprep.subr.mxu0 0.0
      %7039 = vmatpush1.msra.mxu0 0.0
      %7040 = vmatprep.subr.mxu0 0.0
      %7041 = vmatpush1.msra.mxu0 0.0
      %7042 = vmatprep.subr.mxu0 0.0
      %7043 = vmatpush1.msra.mxu0 0.0
      %7044 = vmatprep.subr.mxu0 0.0
      %7045 = vmatpush1.msra.mxu0 0.0
      %7046 = vmatprep.subr.mxu0 0.0
      %7047 = vmatpush1.msra.mxu0 0.0
      %7048 = vmatprep.subr.mxu0 0.0
      %7049 = vmatpush1.msra.mxu0 0.0
      %7050 = vmatprep.subr.mxu0 0.0
      %7051 = vmatpush1.msra.mxu0 0.0
      %7052 = vmatprep.subr.mxu0 0.0
      %7053 = vmatpush1.msra.mxu0 0.0
      %7054 = vmatprep.subr.mxu0 0.0
      %7055 = vmatpush1.msra.mxu0 0.0
      %7056 = vmatprep.subr.mxu0 0.0
      %7057 = vmatpush1.msra.mxu0 0.0
      %7058 = vmatprep.subr.mxu0 0.0
      %7059 = vmatpush1.msra.mxu0 0.0
      %7060 = vmatprep.subr.mxu0 0.0
      %7061 = vmatpush1.msra.mxu0 0.0
      %7062 = vmatprep.subr.mxu0 0.0
      %7063 = vmatpush1.msra.mxu0 0.0
      %7064 = vmatprep.subr.mxu0 0.0
      %7065 = vmatpush1.msra.mxu0 0.0
      %7066 = vmatprep.mubr.f32.mxu0 0.0
      %7067 = vmatmul.mubr.f32.gmra.mrb[0].mxu0 %v6892
      %v7068 = vpop.f32.mrb[0].mxu0
      %v7069 = vadd.f32 0.0, %v7068
      %v7070 = vpop.f32.mrb[0].mxu0
      %7071 = vmatprep.mubr.f32.mxu0 0.0
      %7072 = vmatmul.mubr.f32.gmra.mrb[0].mxu0 %v6895
      %v7073 = vpop.f32.mrb[0].mxu0
      %v7074 = vadd.f32 0.0, %v7073
      %v7075 = vpop.f32.mrb[0].mxu0
      %7076 = vmatprep.mubr.f32.mxu0 0.0
      %7077 = vmatmul.mubr.f32.gmra.mrb[0].mxu0 %v6898
      %v7078 = vpop.f32.mrb[0].mxu0
      %v7079 = vadd.f32 0.0, %v7078
      %v7080 = vpop.f32.mrb[0].mxu0
      %7081 = vmatprep.mubr.f32.mxu0 0.0
      %7082 = vmatmul.mubr.f32.gmra.mrb[0].mxu0 %v6901
      %v7083 = vpop.f32.mrb[0].mxu0
      %v7084 = vadd.f32 0.0, %v7083
      %v7085 = vpop.f32.mrb[0].mxu0
      %7086 = vmatprep.mubr.f32.mxu0 0.0
      %7087 = vmatmul.mubr.f32.gmra.mrb[0].mxu0 %v6904
      %v7088 = vpop.f32.mrb[0].mxu0
      %v7089 = vadd.f32 0.0, %v7088
      %v7090 = vpop.f32.mrb[0].mxu0
      %7091 = vmatprep.mubr.f32.mxu0 0.0
      %7092 = vmatmul.mubr.f32.gmra.mrb[0].mxu0 %v6907
      %v7093 = vpop.f32.mrb[0].mxu0
      %v7094 = vadd.f32 0.0, %v7093
      %v7095 = vpop.f32.mrb[0].mxu0
      %7096 = vmatprep.mubr.f32.mxu0 0.0
      %7097 = vmatmul.mubr.f32.gmra.mrb[0].mxu0 %v6910
      %v7098 = vpop.f32.mrb[0].mxu0
      %v7099 = vadd.f32 0.0, %v7098
      %v7100 = vpop.f32.mrb[0].mxu0
      %7101 = vmatprep.mubr.f32.mxu0 0.0
      %7102 = vmatmul.mubr.f32.gmra.mrb[0].mxu0 %v6913
      %v7103 = vpop.f32.mrb[0].mxu0
      %v7104 = vadd.f32 0.0, %v7103
      %v7105 = vpop.f32.mrb[0].mxu0
      %7106 = vmatprep.mubr.f32.mxu0 0.0
      %7107 = vmatmul.mubr.f32.gmra.mrb[0].mxu0 %v6916
      %v7108 = vpop.f32.mrb[0].mxu0
      %v7109 = vadd.f32 0.0, %v7108
      %v7110 = vpop.f32.mrb[0].mxu0
      %7111 = vmatprep.mubr.f32.mxu0 0.0
      %7112 = vmatmul.mubr.f32.gmra.mrb[0].mxu0 %v6919
      %v7113 = vpop.f32.mrb[0].mxu0
      %v7114 = vadd.f32 0.0, %v7113
      %v7115 = vpop.f32.mrb[0].mxu0
      %7116 = vmatprep.mubr.f32.mxu0 0.0
      %7117 = vmatmul.mubr.f32.gmra.mrb[0].mxu0 %v6922
      %v7118 = vpop.f32.mrb[0].mxu0
      %v7119 = vadd.f32 0.0, %v7118
      %v7120 = vpop.f32.mrb[0].mxu0
      %7121 = vmatprep.mubr.f32.mxu0 0.0
      %7122 = vmatmul.mubr.f32.gmra.mrb[0].mxu0 %v6925
      %v7123 = vpop.f32.mrb[0].mxu0
      %v7124 = vadd.f32 0.0, %v7123
      %v7125 = vpop.f32.mrb[0].mxu0
      %7126 = vmatprep.mubr.f32.mxu0 0.0
      %7127 = vmatmul.mubr.f32.gmra.mrb[0].mxu0 %v6928
      %v7128 = vpop.f32.mrb[0].mxu0
      %v7129 = vadd.f32 0.0, %v7128
      %v7130 = vpop.f32.mrb[0].mxu0
      %7131 = vmatprep.mubr.f32.mxu0 0.0
      %7132 = vmatmul.mubr.f32.gmra.mrb[0].mxu0 %v6931
      %v7133 = vpop.f32.mrb[0].mxu0
      %v7134 = vadd.f32 0.0, %v7133
      %v7135 = vpop.f32.mrb[0].mxu0
      %7136 = vmatprep.mubr.f32.mxu0 0.0
      %7137 = vmatmul.mubr.f32.gmra.mrb[0].mxu0 %v6934
      %v7138 = vpop.f32.mrb[0].mxu0
      %v7139 = vadd.f32 0.0, %v7138
      %v7140 = vpop.f32.mrb[0].mxu0
      %7141 = vmatprep.mubr.f32.mxu0 0.0
      %7142 = vmatmul.mubr.f32.gmra.mrb[0].mxu0 %v6937
      %v7143 = vpop.f32.mrb[0].mxu0
      %v7144 = vadd.f32 0.0, %v7143
      %v7145 = vpop.f32.mrb[0].mxu0
      %7146 = vmatprep.mubr.f32.mxu0 0.0
      %7147 = vmatmul.mubr.f32.gmra.mrb[0].mxu0 %v6940
      %v7148 = vpop.f32.mrb[0].mxu0
      %v7149 = vadd.f32 0.0, %v7148
      %v7150 = vpop.f32.mrb[0].mxu0
      %7151 = vmatprep.mubr.f32.mxu0 0.0
      %7152 = vmatmul.mubr.f32.gmra.mrb[0].mxu0 %v6943
      %v7153 = vpop.f32.mrb[0].mxu0
      %v7154 = vadd.f32 0.0, %v7153
      %v7155 = vpop.f32.mrb[0].mxu0
      %7156 = vmatprep.mubr.f32.mxu0 0.0
      %7157 = vmatmul.mubr.f32.gmra.mrb[0].mxu0 %v6946
      %v7158 = vpop.f32.mrb[0].mxu0
      %v7159 = vadd.f32 0.0, %v7158
      %v7160 = vpop.f32.mrb[0].mxu0
      %7161 = vmatprep.mubr.f32.mxu0 0.0
      %7162 = vmatmul.mubr.f32.gmra.mrb[0].mxu0 %v6949
      %v7163 = vpop.f32.mrb[0].mxu0
      %v7164 = vadd.f32 0.0, %v7163
      %v7165 = vpop.f32.mrb[0].mxu0
      %7166 = vmatprep.mubr.f32.mxu0 0.0
      %7167 = vmatmul.mubr.f32.gmra.mrb[0].mxu0 %v6952
      %v7168 = vpop.f32.mrb[0].mxu0
      %v7169 = vadd.f32 0.0, %v7168
      %v7170 = vpop.f32.mrb[0].mxu0
      %7171 = vmatprep.mubr.f32.mxu0 0.0
      %7172 = vmatmul.mubr.f32.gmra.mrb[0].mxu0 %v6955
      %v7173 = vpop.f32.mrb[0].mxu0
      %v7174 = vadd.f32 0.0, %v7173
      %v7175 = vpop.f32.mrb[0].mxu0
      %7176 = vmatprep.mubr.f32.mxu0 0.0
      %7177 = vmatmul.mubr.f32.gmra.mrb[0].mxu0 %v6958
      %v7178 = vpop.f32.mrb[0].mxu0
      %v7179 = vadd.f32 0.0, %v7178
      %v7180 = vpop.f32.mrb[0].mxu0
      %7181 = vmatprep.mubr.f32.mxu0 0.0
      %7182 = vmatmul.mubr.f32.gmra.mrb[0].mxu0 %v6961
      %v7183 = vpop.f32.mrb[0].mxu0
      %v7184 = vadd.f32 0.0, %v7183
      %v7185 = vpop.f32.mrb[0].mxu0
      %7186 = vmatprep.mubr.f32.mxu0 0.0
      %7187 = vmatmul.mubr.f32.gmra.mrb[0].mxu0 %v6964
      %v7188 = vpop.f32.mrb[0].mxu0
      %v7189 = vadd.f32 0.0, %v7188
      %v7190 = vpop.f32.mrb[0].mxu0
      %7191 = vmatprep.mubr.f32.mxu0 0.0
      %7192 = vmatmul.mubr.f32.gmra.mrb[0].mxu0 %v6967
      %v7193 = vpop.f32.mrb[0].mxu0
      %v7194 = vadd.f32 0.0, %v7193
      %v7195 = vpop.f32.mrb[0].mxu0
      %7196 = vmatprep.mubr.f32.mxu0 0.0
      %7197 = vmatmul.mubr.f32.gmra.mrb[0].mxu0 %v6970
      %v7198 = vpop.f32.mrb[0].mxu0
      %v7199 = vadd.f32 0.0, %v7198
      %v7200 = vpop.f32.mrb[0].mxu0
      %7201 = vmatprep.mubr.f32.mxu0 0.0
      %7202 = vmatmul.mubr.f32.gmra.mrb[0].mxu0 %v6973
      %v7203 = vpop.f32.mrb[0].mxu0
      %v7204 = vadd.f32 0.0, %v7203
      %v7205 = vpop.f32.mrb[0].mxu0
      %7206 = vmatprep.mubr.f32.mxu0 0.0
      %7207 = vmatmul.mubr.f32.gmra.mrb[0].mxu0 %v6976
      %v7208 = vpop.f32.mrb[0].mxu0
      %v7209 = vadd.f32 0.0, %v7208
      %v7210 = vpop.f32.mrb[0].mxu0
      %7211 = vmatprep.mubr.f32.mxu0 0.0
      %7212 = vmatmul.mubr.f32.gmra.mrb[0].mxu0 %v6979
      %v7213 = vpop.f32.mrb[0].mxu0
      %v7214 = vadd.f32 0.0, %v7213
      %v7215 = vpop.f32.mrb[0].mxu0
      %7216 = vmatprep.mubr.f32.mxu0 0.0
      %7217 = vmatmul.mubr.f32.gmra.mrb[0].mxu0 %v6982
      %v7218 = vpop.f32.mrb[0].mxu0
      %v7219 = vadd.f32 0.0, %v7218
      %v7220 = vpop.f32.mrb[0].mxu0
      %7221 = vmatprep.mubr.f32.mxu0 0.0
      %7222 = vmatmul.mubr.f32.gmra.mrb[0].mxu0 %v6985
      %v7223 = vpop.f32.mrb[0].mxu0
      %v7224 = vadd.f32 0.0, %v7223
      %v7225 = vpop.f32.mrb[0].mxu0
      %7226 = vmatprep.mubr.f32.mxu0 0.0
      %7227 = vmatmul.mubr.f32.gmra.mrb[0].mxu0 %v6988
      %v7228 = vpop.f32.mrb[0].mxu0
      %v7229 = vadd.f32 0.0, %v7228
      %v7230 = vpop.f32.mrb[0].mxu0
      %7231 = vmatprep.mubr.f32.mxu0 0.0
      %7232 = vmatmul.mubr.f32.gmra.mrb[0].mxu0 %v6991
      %v7233 = vpop.f32.mrb[0].mxu0
      %v7234 = vadd.f32 0.0, %v7233
      %v7235 = vpop.f32.mrb[0].mxu0
      %7236 = vmatprep.mubr.f32.mxu0 0.0
      %7237 = vmatmul.mubr.f32.gmra.mrb[0].mxu0 %v6994
      %v7238 = vpop.f32.mrb[0].mxu0
      %v7239 = vadd.f32 0.0, %v7238
      %v7240 = vpop.f32.mrb[0].mxu0
      %7241 = vmatprep.mubr.f32.mxu0 0.0
      %7242 = vmatmul.mubr.f32.gmra.mrb[0].mxu0 %v6997
      %v7243 = vpop.f32.mrb[0].mxu0
      %v7244 = vadd.f32 0.0, %v7243
      %v7245 = vpop.f32.mrb[0].mxu0
      %7246 = vdwg.mxu0
      %v7247 = vadd.f32 %v6675, %v7069
      %v7248 = vadd.f32 %v6680, %v7074
      %v7249 = vadd.f32 %v6685, %v7079
      %v7250 = vadd.f32 %v6690, %v7084
      %v7251 = vadd.f32 %v6695, %v7089
      %v7252 = vadd.f32 %v6700, %v7094
      %v7253 = vadd.f32 %v6705, %v7099
      %v7254 = vadd.f32 %v6710, %v7104
      %v7255 = vadd.f32 %v6715, %v7109
      %v7256 = vadd.f32 %v6720, %v7114
      %v7257 = vadd.f32 %v6725, %v7119
      %v7258 = vadd.f32 %v6730, %v7124
      %v7259 = vadd.f32 %v6735, %v7129
      %v7260 = vadd.f32 %v6740, %v7134
      %v7261 = vadd.f32 %v6745, %v7139
      %v7262 = vadd.f32 %v6750, %v7144
      %v7263 = vadd.f32 %v6755, %v7149
      %v7264 = vadd.f32 %v6760, %v7154
      %v7265 = vadd.f32 %v6765, %v7159
      %v7266 = vadd.f32 %v6770, %v7164
      %v7267 = vadd.f32 %v6775, %v7169
      %v7268 = vadd.f32 %v6780, %v7174
      %v7269 = vadd.f32 %v6785, %v7179
      %v7270 = vadd.f32 %v6790, %v7184
      %v7271 = vadd.f32 %v6795, %v7189
      %v7272 = vadd.f32 %v6800, %v7194
      %v7273 = vadd.f32 %v6805, %v7199
      %v7274 = vadd.f32 %v6810, %v7204
      %v7275 = vadd.f32 %v6815, %v7209
      %v7276 = vadd.f32 %v6820, %v7214
      %v7277 = vadd.f32 %v6825, %v7219
      %v7278 = vadd.f32 %v6830, %v7224
      %v7279 = vadd.f32 %v6835, %v7229
      %v7280 = vadd.f32 %v6840, %v7234
      %v7281 = vadd.f32 %v6845, %v7239
      %v7282 = vadd.f32 %v6850, %v7244
      %v7283 = vld [vmem:[#allocation3 + $0x17] sm:$0xff]
      %v7284 = vld [vmem:[#allocation3 + $0x1f] sm:$0xff]
      %v7285 = vld [vmem:[#allocation3 + $0x27] sm:$0xff]
      %v7286 = vld [vmem:[#allocation3 + $0x2f] sm:$0xff]
      %v7287 = vld [vmem:[#allocation3 + $0x37] sm:$0xff]
      %v7288 = vld [vmem:[#allocation3 + $0x3f] sm:$0xff]
      %v7289 = vld [vmem:[#allocation3 + $0x47] sm:$0xff]
      %v7290 = vld [vmem:[#allocation3 + $0x4f] sm:$0xff]
      %v7291 = vld [vmem:[#allocation3 + $0x57] sm:$0xff]
      %v7292 = vld [vmem:[#allocation3 + $0x5f] sm:$0xff]
      %v7293 = vld [vmem:[#allocation3 + $0x67] sm:$0xff]
      %v7294 = vld [vmem:[#allocation3 + $0x6f] sm:$0xff]
      %v7295 = vld [vmem:[#allocation3 + $0x77] sm:$0xff]
      %v7296 = vld [vmem:[#allocation3 + $0x7f] sm:$0xff]
      %v7297 = vld [vmem:[#allocation3 + $0x87] sm:$0xff]
      %v7298 = vld [vmem:[#allocation3 + $0x8f] sm:$0xff]
      %v7299 = vld [vmem:[#allocation3 + $0x97] sm:$0xff]
      %v7300 = vld [vmem:[#allocation3 + $0x9f] sm:$0xff]
      %v7301 = vld [vmem:[#allocation3 + $0xa7] sm:$0xff]
      %v7302 = vld [vmem:[#allocation3 + $0xaf] sm:$0xff]
      %v7303 = vld [vmem:[#allocation3 + $0xb7] sm:$0xff]
      %v7304 = vld [vmem:[#allocation3 + $0xbf] sm:$0xff]
      %v7305 = vld [vmem:[#allocation3 + $0xc7] sm:$0xff]
      %v7306 = vld [vmem:[#allocation3 + $0xcf] sm:$0xff]
      %v7307 = vld [vmem:[#allocation3 + $0xd7] sm:$0xff]
      %v7308 = vld [vmem:[#allocation3 + $0xdf] sm:$0xff]
      %v7309 = vld [vmem:[#allocation3 + $0xe7] sm:$0xff]
      %v7310 = vld [vmem:[#allocation3 + $0xef] sm:$0xff]
      %v7311 = vld [vmem:[#allocation3 + $0xf7] sm:$0xff]
      %v7312 = vld [vmem:[#allocation3 + $0xff] sm:$0xff]
      %v7313 = vld [vmem:[#allocation3 + $0x107] sm:$0xff]
      %v7314 = vld [vmem:[#allocation3 + $0x10f] sm:$0xff]
      %v7315 = vld [vmem:[#allocation3 + $0x117] sm:$0xff]
      %v7316 = vld [vmem:[#allocation3 + $0x11f] sm:$0xff]
      %v7317 = vld [vmem:[#allocation3 + $0x127] sm:$0xff]
      %v7318 = vld [vmem:[#allocation3 + $0x12f] sm:$0xff]
      %s7319 = scalar_lea.vmem %s8, 12
      %v7320 = vld [vmem:[%s7319] sm:$0xf]
      %v7322 = vsel %vm1025, %v7283, 0
      %v7325 = vsel %vm1025, %v7284, 0
      %v7328 = vsel %vm1025, %v7285, 0
      %v7331 = vsel %vm1025, %v7286, 0
      %v7334 = vsel %vm1025, %v7287, 0
      %v7337 = vsel %vm1025, %v7288, 0
      %v7340 = vsel %vm1025, %v7289, 0
      %v7343 = vsel %vm1025, %v7290, 0
      %v7346 = vsel %vm1025, %v7291, 0
      %v7349 = vsel %vm1025, %v7292, 0
      %v7352 = vsel %vm1025, %v7293, 0
      %v7355 = vsel %vm1025, %v7294, 0
      %v7358 = vsel %vm1025, %v7295, 0
      %v7361 = vsel %vm1025, %v7296, 0
      %v7364 = vsel %vm1025, %v7297, 0
      %v7367 = vsel %vm1025, %v7298, 0
      %v7370 = vsel %vm1025, %v7299, 0
      %v7373 = vsel %vm1025, %v7300, 0
      %v7376 = vsel %vm1025, %v7301, 0
      %v7379 = vsel %vm1025, %v7302, 0
      %v7382 = vsel %vm1025, %v7303, 0
      %v7385 = vsel %vm1025, %v7304, 0
      %v7388 = vsel %vm1025, %v7305, 0
      %v7391 = vsel %vm1025, %v7306, 0
      %v7394 = vsel %vm1025, %v7307, 0
      %v7397 = vsel %vm1025, %v7308, 0
      %v7400 = vsel %vm1025, %v7309, 0
      %v7403 = vsel %vm1025, %v7310, 0
      %v7406 = vsel %vm1025, %v7311, 0
      %v7409 = vsel %vm1025, %v7312, 0
      %v7412 = vsel %vm1025, %v7313, 0
      %v7415 = vsel %vm1025, %v7314, 0
      %v7418 = vsel %vm1025, %v7315, 0
      %v7421 = vsel %vm1025, %v7316, 0
      %v7424 = vsel %vm1025, %v7317, 0
      %v7427 = vsel %vm1025, %v7318, 0
      %v7430 = vsel %vm1287, %v7320, 0
      %7432 = vmatprep.subr.mxu0 0.0
      %7433 = vmatpush1.msra.mxu0 %v7430
      %7434 = vmatprep.subr.mxu0 0.0
      %7435 = vmatpush1.msra.mxu0 0.0
      %7436 = vmatprep.subr.mxu0 0.0
      %7437 = vmatpush1.msra.mxu0 0.0
      %7438 = vmatprep.subr.mxu0 0.0
      %7439 = vmatpush1.msra.mxu0 0.0
      %7440 = vmatprep.subr.mxu0 0.0
      %7441 = vmatpush1.msra.mxu0 0.0
      %7442 = vmatprep.subr.mxu0 0.0
      %7443 = vmatpush1.msra.mxu0 0.0
      %7444 = vmatprep.subr.mxu0 0.0
      %7445 = vmatpush1.msra.mxu0 0.0
      %7446 = vmatprep.subr.mxu0 0.0
      %7447 = vmatpush1.msra.mxu0 0.0
      %7448 = vmatprep.subr.mxu0 0.0
      %7449 = vmatpush1.msra.mxu0 0.0
      %7450 = vmatprep.subr.mxu0 0.0
      %7451 = vmatpush1.msra.mxu0 0.0
      %7452 = vmatprep.subr.mxu0 0.0
      %7453 = vmatpush1.msra.mxu0 0.0
      %7454 = vmatprep.subr.mxu0 0.0
      %7455 = vmatpush1.msra.mxu0 0.0
      %7456 = vmatprep.subr.mxu0 0.0
      %7457 = vmatpush1.msra.mxu0 0.0
      %7458 = vmatprep.subr.mxu0 0.0
      %7459 = vmatpush1.msra.mxu0 0.0
      %7460 = vmatprep.subr.mxu0 0.0
      %7461 = vmatpush1.msra.mxu0 0.0
      %7462 = vmatprep.subr.mxu0 0.0
      %7463 = vmatpush1.msra.mxu0 0.0
      %7464 = vmatprep.subr.mxu0 0.0
      %7465 = vmatpush1.msra.mxu0 0.0
      %7466 = vmatprep.subr.mxu0 0.0
      %7467 = vmatpush1.msra.mxu0 0.0
      %7468 = vmatprep.subr.mxu0 0.0
      %7469 = vmatpush1.msra.mxu0 0.0
      %7470 = vmatprep.subr.mxu0 0.0
      %7471 = vmatpush1.msra.mxu0 0.0
      %7472 = vmatprep.subr.mxu0 0.0
      %7473 = vmatpush1.msra.mxu0 0.0
      %7474 = vmatprep.subr.mxu0 0.0
      %7475 = vmatpush1.msra.mxu0 0.0
      %7476 = vmatprep.subr.mxu0 0.0
      %7477 = vmatpush1.msra.mxu0 0.0
      %7478 = vmatprep.subr.mxu0 0.0
      %7479 = vmatpush1.msra.mxu0 0.0
      %7480 = vmatprep.subr.mxu0 0.0
      %7481 = vmatpush1.msra.mxu0 0.0
      %7482 = vmatprep.subr.mxu0 0.0
      %7483 = vmatpush1.msra.mxu0 0.0
      %7484 = vmatprep.subr.mxu0 0.0
      %7485 = vmatpush1.msra.mxu0 0.0
      %7486 = vmatprep.subr.mxu0 0.0
      %7487 = vmatpush1.msra.mxu0 0.0
      %7488 = vmatprep.subr.mxu0 0.0
      %7489 = vmatpush1.msra.mxu0 0.0
      %7490 = vmatprep.subr.mxu0 0.0
      %7491 = vmatpush1.msra.mxu0 0.0
      %7492 = vmatprep.subr.mxu0 0.0
      %7493 = vmatpush1.msra.mxu0 0.0
      %7494 = vmatprep.subr.mxu0 0.0
      %7495 = vmatpush1.msra.mxu0 0.0
      %7496 = vmatprep.mubr.f32.mxu0 0.0
      %7497 = vmatmul.mubr.f32.gmra.mrb[0].mxu0 %v7322
      %v7498 = vpop.f32.mrb[0].mxu0
      %v7499 = vadd.f32 0.0, %v7498
      %v7500 = vpop.f32.mrb[0].mxu0
      %7501 = vmatprep.mubr.f32.mxu0 0.0
      %7502 = vmatmul.mubr.f32.gmra.mrb[0].mxu0 %v7325
      %v7503 = vpop.f32.mrb[0].mxu0
      %v7504 = vadd.f32 0.0, %v7503
      %v7505 = vpop.f32.mrb[0].mxu0
      %7506 = vmatprep.mubr.f32.mxu0 0.0
      %7507 = vmatmul.mubr.f32.gmra.mrb[0].mxu0 %v7328
      %v7508 = vpop.f32.mrb[0].mxu0
      %v7509 = vadd.f32 0.0, %v7508
      %v7510 = vpop.f32.mrb[0].mxu0
      %7511 = vmatprep.mubr.f32.mxu0 0.0
      %7512 = vmatmul.mubr.f32.gmra.mrb[0].mxu0 %v7331
      %v7513 = vpop.f32.mrb[0].mxu0
      %v7514 = vadd.f32 0.0, %v7513
      %v7515 = vpop.f32.mrb[0].mxu0
      %7516 = vmatprep.mubr.f32.mxu0 0.0
      %7517 = vmatmul.mubr.f32.gmra.mrb[0].mxu0 %v7334
      %v7518 = vpop.f32.mrb[0].mxu0
      %v7519 = vadd.f32 0.0, %v7518
      %v7520 = vpop.f32.mrb[0].mxu0
      %7521 = vmatprep.mubr.f32.mxu0 0.0
      %7522 = vmatmul.mubr.f32.gmra.mrb[0].mxu0 %v7337
      %v7523 = vpop.f32.mrb[0].mxu0
      %v7524 = vadd.f32 0.0, %v7523
      %v7525 = vpop.f32.mrb[0].mxu0
      %7526 = vmatprep.mubr.f32.mxu0 0.0
      %7527 = vmatmul.mubr.f32.gmra.mrb[0].mxu0 %v7340
      %v7528 = vpop.f32.mrb[0].mxu0
      %v7529 = vadd.f32 0.0, %v7528
      %v7530 = vpop.f32.mrb[0].mxu0
      %7531 = vmatprep.mubr.f32.mxu0 0.0
      %7532 = vmatmul.mubr.f32.gmra.mrb[0].mxu0 %v7343
      %v7533 = vpop.f32.mrb[0].mxu0
      %v7534 = vadd.f32 0.0, %v7533
      %v7535 = vpop.f32.mrb[0].mxu0
      %7536 = vmatprep.mubr.f32.mxu0 0.0
      %7537 = vmatmul.mubr.f32.gmra.mrb[0].mxu0 %v7346
      %v7538 = vpop.f32.mrb[0].mxu0
      %v7539 = vadd.f32 0.0, %v7538
      %v7540 = vpop.f32.mrb[0].mxu0
      %7541 = vmatprep.mubr.f32.mxu0 0.0
      %7542 = vmatmul.mubr.f32.gmra.mrb[0].mxu0 %v7349
      %v7543 = vpop.f32.mrb[0].mxu0
      %v7544 = vadd.f32 0.0, %v7543
      %v7545 = vpop.f32.mrb[0].mxu0
      %7546 = vmatprep.mubr.f32.mxu0 0.0
      %7547 = vmatmul.mubr.f32.gmra.mrb[0].mxu0 %v7352
      %v7548 = vpop.f32.mrb[0].mxu0
      %v7549 = vadd.f32 0.0, %v7548
      %v7550 = vpop.f32.mrb[0].mxu0
      %7551 = vmatprep.mubr.f32.mxu0 0.0
      %7552 = vmatmul.mubr.f32.gmra.mrb[0].mxu0 %v7355
      %v7553 = vpop.f32.mrb[0].mxu0
      %v7554 = vadd.f32 0.0, %v7553
      %v7555 = vpop.f32.mrb[0].mxu0
      %7556 = vmatprep.mubr.f32.mxu0 0.0
      %7557 = vmatmul.mubr.f32.gmra.mrb[0].mxu0 %v7358
      %v7558 = vpop.f32.mrb[0].mxu0
      %v7559 = vadd.f32 0.0, %v7558
      %v7560 = vpop.f32.mrb[0].mxu0
      %7561 = vmatprep.mubr.f32.mxu0 0.0
      %7562 = vmatmul.mubr.f32.gmra.mrb[0].mxu0 %v7361
      %v7563 = vpop.f32.mrb[0].mxu0
      %v7564 = vadd.f32 0.0, %v7563
      %v7565 = vpop.f32.mrb[0].mxu0
      %7566 = vmatprep.mubr.f32.mxu0 0.0
      %7567 = vmatmul.mubr.f32.gmra.mrb[0].mxu0 %v7364
      %v7568 = vpop.f32.mrb[0].mxu0
      %v7569 = vadd.f32 0.0, %v7568
      %v7570 = vpop.f32.mrb[0].mxu0
      %7571 = vmatprep.mubr.f32.mxu0 0.0
      %7572 = vmatmul.mubr.f32.gmra.mrb[0].mxu0 %v7367
      %v7573 = vpop.f32.mrb[0].mxu0
      %v7574 = vadd.f32 0.0, %v7573
      %v7575 = vpop.f32.mrb[0].mxu0
      %7576 = vmatprep.mubr.f32.mxu0 0.0
      %7577 = vmatmul.mubr.f32.gmra.mrb[0].mxu0 %v7370
      %v7578 = vpop.f32.mrb[0].mxu0
      %v7579 = vadd.f32 0.0, %v7578
      %v7580 = vpop.f32.mrb[0].mxu0
      %7581 = vmatprep.mubr.f32.mxu0 0.0
      %7582 = vmatmul.mubr.f32.gmra.mrb[0].mxu0 %v7373
      %v7583 = vpop.f32.mrb[0].mxu0
      %v7584 = vadd.f32 0.0, %v7583
      %v7585 = vpop.f32.mrb[0].mxu0
      %7586 = vmatprep.mubr.f32.mxu0 0.0
      %7587 = vmatmul.mubr.f32.gmra.mrb[0].mxu0 %v7376
      %v7588 = vpop.f32.mrb[0].mxu0
      %v7589 = vadd.f32 0.0, %v7588
      %v7590 = vpop.f32.mrb[0].mxu0
      %7591 = vmatprep.mubr.f32.mxu0 0.0
      %7592 = vmatmul.mubr.f32.gmra.mrb[0].mxu0 %v7379
      %v7593 = vpop.f32.mrb[0].mxu0
      %v7594 = vadd.f32 0.0, %v7593
      %v7595 = vpop.f32.mrb[0].mxu0
      %7596 = vmatprep.mubr.f32.mxu0 0.0
      %7597 = vmatmul.mubr.f32.gmra.mrb[0].mxu0 %v7382
      %v7598 = vpop.f32.mrb[0].mxu0
      %v7599 = vadd.f32 0.0, %v7598
      %v7600 = vpop.f32.mrb[0].mxu0
      %7601 = vmatprep.mubr.f32.mxu0 0.0
      %7602 = vmatmul.mubr.f32.gmra.mrb[0].mxu0 %v7385
      %v7603 = vpop.f32.mrb[0].mxu0
      %v7604 = vadd.f32 0.0, %v7603
      %v7605 = vpop.f32.mrb[0].mxu0
      %7606 = vmatprep.mubr.f32.mxu0 0.0
      %7607 = vmatmul.mubr.f32.gmra.mrb[0].mxu0 %v7388
      %v7608 = vpop.f32.mrb[0].mxu0
      %v7609 = vadd.f32 0.0, %v7608
      %v7610 = vpop.f32.mrb[0].mxu0
      %7611 = vmatprep.mubr.f32.mxu0 0.0
      %7612 = vmatmul.mubr.f32.gmra.mrb[0].mxu0 %v7391
      %v7613 = vpop.f32.mrb[0].mxu0
      %v7614 = vadd.f32 0.0, %v7613
      %v7615 = vpop.f32.mrb[0].mxu0
      %7616 = vmatprep.mubr.f32.mxu0 0.0
      %7617 = vmatmul.mubr.f32.gmra.mrb[0].mxu0 %v7394
      %v7618 = vpop.f32.mrb[0].mxu0
      %v7619 = vadd.f32 0.0, %v7618
      %v7620 = vpop.f32.mrb[0].mxu0
      %7621 = vmatprep.mubr.f32.mxu0 0.0
      %7622 = vmatmul.mubr.f32.gmra.mrb[0].mxu0 %v7397
      %v7623 = vpop.f32.mrb[0].mxu0
      %v7624 = vadd.f32 0.0, %v7623
      %v7625 = vpop.f32.mrb[0].mxu0
      %7626 = vmatprep.mubr.f32.mxu0 0.0
      %7627 = vmatmul.mubr.f32.gmra.mrb[0].mxu0 %v7400
      %v7628 = vpop.f32.mrb[0].mxu0
      %v7629 = vadd.f32 0.0, %v7628
      %v7630 = vpop.f32.mrb[0].mxu0
      %7631 = vmatprep.mubr.f32.mxu0 0.0
      %7632 = vmatmul.mubr.f32.gmra.mrb[0].mxu0 %v7403
      %v7633 = vpop.f32.mrb[0].mxu0
      %v7634 = vadd.f32 0.0, %v7633
      %v7635 = vpop.f32.mrb[0].mxu0
      %7636 = vmatprep.mubr.f32.mxu0 0.0
      %7637 = vmatmul.mubr.f32.gmra.mrb[0].mxu0 %v7406
      %v7638 = vpop.f32.mrb[0].mxu0
      %v7639 = vadd.f32 0.0, %v7638
      %v7640 = vpop.f32.mrb[0].mxu0
      %7641 = vmatprep.mubr.f32.mxu0 0.0
      %7642 = vmatmul.mubr.f32.gmra.mrb[0].mxu0 %v7409
      %v7643 = vpop.f32.mrb[0].mxu0
      %v7644 = vadd.f32 0.0, %v7643
      %v7645 = vpop.f32.mrb[0].mxu0
      %7646 = vmatprep.mubr.f32.mxu0 0.0
      %7647 = vmatmul.mubr.f32.gmra.mrb[0].mxu0 %v7412
      %v7648 = vpop.f32.mrb[0].mxu0
      %v7649 = vadd.f32 0.0, %v7648
      %v7650 = vpop.f32.mrb[0].mxu0
      %7651 = vmatprep.mubr.f32.mxu0 0.0
      %7652 = vmatmul.mubr.f32.gmra.mrb[0].mxu0 %v7415
      %v7653 = vpop.f32.mrb[0].mxu0
      %v7654 = vadd.f32 0.0, %v7653
      %v7655 = vpop.f32.mrb[0].mxu0
      %7656 = vmatprep.mubr.f32.mxu0 0.0
      %7657 = vmatmul.mubr.f32.gmra.mrb[0].mxu0 %v7418
      %v7658 = vpop.f32.mrb[0].mxu0
      %v7659 = vadd.f32 0.0, %v7658
      %v7660 = vpop.f32.mrb[0].mxu0
      %7661 = vmatprep.mubr.f32.mxu0 0.0
      %7662 = vmatmul.mubr.f32.gmra.mrb[0].mxu0 %v7421
      %v7663 = vpop.f32.mrb[0].mxu0
      %v7664 = vadd.f32 0.0, %v7663
      %v7665 = vpop.f32.mrb[0].mxu0
      %7666 = vmatprep.mubr.f32.mxu0 0.0
      %7667 = vmatmul.mubr.f32.gmra.mrb[0].mxu0 %v7424
      %v7668 = vpop.f32.mrb[0].mxu0
      %v7669 = vadd.f32 0.0, %v7668
      %v7670 = vpop.f32.mrb[0].mxu0
      %7671 = vmatprep.mubr.f32.mxu0 0.0
      %7672 = vmatmul.mubr.f32.gmra.mrb[0].mxu0 %v7427
      %v7673 = vpop.f32.mrb[0].mxu0
      %v7674 = vadd.f32 0.0, %v7673
      %v7675 = vpop.f32.mrb[0].mxu0
      %7676 = vdwg.mxu0
      %v7677 = vadd.f32 %v7247, %v7499
      %v7678 = vadd.f32 %v7248, %v7504
      %v7679 = vadd.f32 %v7249, %v7509
      %v7680 = vadd.f32 %v7250, %v7514
      %v7681 = vadd.f32 %v7251, %v7519
      %v7682 = vadd.f32 %v7252, %v7524
      %v7683 = vadd.f32 %v7253, %v7529
      %v7684 = vadd.f32 %v7254, %v7534
      %v7685 = vadd.f32 %v7255, %v7539
      %v7686 = vadd.f32 %v7256, %v7544
      %v7687 = vadd.f32 %v7257, %v7549
      %v7688 = vadd.f32 %v7258, %v7554
      %v7689 = vadd.f32 %v7259, %v7559
      %v7690 = vadd.f32 %v7260, %v7564
      %v7691 = vadd.f32 %v7261, %v7569
      %v7692 = vadd.f32 %v7262, %v7574
      %v7693 = vadd.f32 %v7263, %v7579
      %v7694 = vadd.f32 %v7264, %v7584
      %v7695 = vadd.f32 %v7265, %v7589
      %v7696 = vadd.f32 %v7266, %v7594
      %v7697 = vadd.f32 %v7267, %v7599
      %v7698 = vadd.f32 %v7268, %v7604
      %v7699 = vadd.f32 %v7269, %v7609
      %v7700 = vadd.f32 %v7270, %v7614
      %v7701 = vadd.f32 %v7271, %v7619
      %v7702 = vadd.f32 %v7272, %v7624
      %v7703 = vadd.f32 %v7273, %v7629
      %v7704 = vadd.f32 %v7274, %v7634
      %v7705 = vadd.f32 %v7275, %v7639
      %v7706 = vadd.f32 %v7276, %v7644
      %v7707 = vadd.f32 %v7277, %v7649
      %v7708 = vadd.f32 %v7278, %v7654
      %v7709 = vadd.f32 %v7279, %v7659
      %v7710 = vadd.f32 %v7280, %v7664
      %v7711 = vadd.f32 %v7281, %v7669
      %v7712 = vadd.f32 %v7282, %v7674
      %v7713 = vld [vmem:[#allocation3 + $0x18] sm:$0xff]
      %v7714 = vld [vmem:[#allocation3 + $0x20] sm:$0xff]
      %v7715 = vld [vmem:[#allocation3 + $0x28] sm:$0xff]
      %v7716 = vld [vmem:[#allocation3 + $0x30] sm:$0xff]
      %v7717 = vld [vmem:[#allocation3 + $0x38] sm:$0xff]
      %v7718 = vld [vmem:[#allocation3 + $0x40] sm:$0xff]
      %v7719 = vld [vmem:[#allocation3 + $0x48] sm:$0xff]
      %v7720 = vld [vmem:[#allocation3 + $0x50] sm:$0xff]
      %v7721 = vld [vmem:[#allocation3 + $0x58] sm:$0xff]
      %v7722 = vld [vmem:[#allocation3 + $0x60] sm:$0xff]
      %v7723 = vld [vmem:[#allocation3 + $0x68] sm:$0xff]
      %v7724 = vld [vmem:[#allocation3 + $0x70] sm:$0xff]
      %v7725 = vld [vmem:[#allocation3 + $0x78] sm:$0xff]
      %v7726 = vld [vmem:[#allocation3 + $0x80] sm:$0xff]
      %v7727 = vld [vmem:[#allocation3 + $0x88] sm:$0xff]
      %v7728 = vld [vmem:[#allocation3 + $0x90] sm:$0xff]
      %v7729 = vld [vmem:[#allocation3 + $0x98] sm:$0xff]
      %v7730 = vld [vmem:[#allocation3 + $0xa0] sm:$0xff]
      %v7731 = vld [vmem:[#allocation3 + $0xa8] sm:$0xff]
      %v7732 = vld [vmem:[#allocation3 + $0xb0] sm:$0xff]
      %v7733 = vld [vmem:[#allocation3 + $0xb8] sm:$0xff]
      %v7734 = vld [vmem:[#allocation3 + $0xc0] sm:$0xff]
      %v7735 = vld [vmem:[#allocation3 + $0xc8] sm:$0xff]
      %v7736 = vld [vmem:[#allocation3 + $0xd0] sm:$0xff]
      %v7737 = vld [vmem:[#allocation3 + $0xd8] sm:$0xff]
      %v7738 = vld [vmem:[#allocation3 + $0xe0] sm:$0xff]
      %v7739 = vld [vmem:[#allocation3 + $0xe8] sm:$0xff]
      %v7740 = vld [vmem:[#allocation3 + $0xf0] sm:$0xff]
      %v7741 = vld [vmem:[#allocation3 + $0xf8] sm:$0xff]
      %v7742 = vld [vmem:[#allocation3 + $0x100] sm:$0xff]
      %v7743 = vld [vmem:[#allocation3 + $0x108] sm:$0xff]
      %v7744 = vld [vmem:[#allocation3 + $0x110] sm:$0xff]
      %v7745 = vld [vmem:[#allocation3 + $0x118] sm:$0xff]
      %v7746 = vld [vmem:[#allocation3 + $0x120] sm:$0xff]
      %v7747 = vld [vmem:[#allocation3 + $0x128] sm:$0xff]
      %v7748 = vld [vmem:[#allocation3 + $0x130] sm:$0xff]
      %s7749 = scalar_lea.vmem %s8, 16
      %v7750 = vld [vmem:[%s7749] sm:$0xf]
      %v7752 = vsel %vm1025, %v7713, 0
      %v7755 = vsel %vm1025, %v7714, 0
      %v7758 = vsel %vm1025, %v7715, 0
      %v7761 = vsel %vm1025, %v7716, 0
      %v7764 = vsel %vm1025, %v7717, 0
      %v7767 = vsel %vm1025, %v7718, 0
      %v7770 = vsel %vm1025, %v7719, 0
      %v7773 = vsel %vm1025, %v7720, 0
      %v7776 = vsel %vm1025, %v7721, 0
      %v7779 = vsel %vm1025, %v7722, 0
      %v7782 = vsel %vm1025, %v7723, 0
      %v7785 = vsel %vm1025, %v7724, 0
      %v7788 = vsel %vm1025, %v7725, 0
      %v7791 = vsel %vm1025, %v7726, 0
      %v7794 = vsel %vm1025, %v7727, 0
      %v7797 = vsel %vm1025, %v7728, 0
      %v7800 = vsel %vm1025, %v7729, 0
      %v7803 = vsel %vm1025, %v7730, 0
      %v7806 = vsel %vm1025, %v7731, 0
      %v7809 = vsel %vm1025, %v7732, 0
      %v7812 = vsel %vm1025, %v7733, 0
      %v7815 = vsel %vm1025, %v7734, 0
      %v7818 = vsel %vm1025, %v7735, 0
      %v7821 = vsel %vm1025, %v7736, 0
      %v7824 = vsel %vm1025, %v7737, 0
      %v7827 = vsel %vm1025, %v7738, 0
      %v7830 = vsel %vm1025, %v7739, 0
      %v7833 = vsel %vm1025, %v7740, 0
      %v7836 = vsel %vm1025, %v7741, 0
      %v7839 = vsel %vm1025, %v7742, 0
      %v7842 = vsel %vm1025, %v7743, 0
      %v7845 = vsel %vm1025, %v7744, 0
      %v7848 = vsel %vm1025, %v7745, 0
      %v7851 = vsel %vm1025, %v7746, 0
      %v7854 = vsel %vm1025, %v7747, 0
      %v7857 = vsel %vm1025, %v7748, 0
      %v7860 = vsel %vm1287, %v7750, 0
      %7862 = vmatprep.subr.mxu0 0.0
      %7863 = vmatpush1.msra.mxu0 %v7860
      %7864 = vmatprep.subr.mxu0 0.0
      %7865 = vmatpush1.msra.mxu0 0.0
      %7866 = vmatprep.subr.mxu0 0.0
      %7867 = vmatpush1.msra.mxu0 0.0
      %7868 = vmatprep.subr.mxu0 0.0
      %7869 = vmatpush1.msra.mxu0 0.0
      %7870 = vmatprep.subr.mxu0 0.0
      %7871 = vmatpush1.msra.mxu0 0.0
      %7872 = vmatprep.subr.mxu0 0.0
      %7873 = vmatpush1.msra.mxu0 0.0
      %7874 = vmatprep.subr.mxu0 0.0
      %7875 = vmatpush1.msra.mxu0 0.0
      %7876 = vmatprep.subr.mxu0 0.0
      %7877 = vmatpush1.msra.mxu0 0.0
      %7878 = vmatprep.subr.mxu0 0.0
      %7879 = vmatpush1.msra.mxu0 0.0
      %7880 = vmatprep.subr.mxu0 0.0
      %7881 = vmatpush1.msra.mxu0 0.0
      %7882 = vmatprep.subr.mxu0 0.0
      %7883 = vmatpush1.msra.mxu0 0.0
      %7884 = vmatprep.subr.mxu0 0.0
      %7885 = vmatpush1.msra.mxu0 0.0
      %7886 = vmatprep.subr.mxu0 0.0
      %7887 = vmatpush1.msra.mxu0 0.0
      %7888 = vmatprep.subr.mxu0 0.0
      %7889 = vmatpush1.msra.mxu0 0.0
      %7890 = vmatprep.subr.mxu0 0.0
      %7891 = vmatpush1.msra.mxu0 0.0
      %7892 = vmatprep.subr.mxu0 0.0
      %7893 = vmatpush1.msra.mxu0 0.0
      %7894 = vmatprep.subr.mxu0 0.0
      %7895 = vmatpush1.msra.mxu0 0.0
      %7896 = vmatprep.subr.mxu0 0.0
      %7897 = vmatpush1.msra.mxu0 0.0
      %7898 = vmatprep.subr.mxu0 0.0
      %7899 = vmatpush1.msra.mxu0 0.0
      %7900 = vmatprep.subr.mxu0 0.0
      %7901 = vmatpush1.msra.mxu0 0.0
      %7902 = vmatprep.subr.mxu0 0.0
      %7903 = vmatpush1.msra.mxu0 0.0
      %7904 = vmatprep.subr.mxu0 0.0
      %7905 = vmatpush1.msra.mxu0 0.0
      %7906 = vmatprep.subr.mxu0 0.0
      %7907 = vmatpush1.msra.mxu0 0.0
      %7908 = vmatprep.subr.mxu0 0.0
      %7909 = vmatpush1.msra.mxu0 0.0
      %7910 = vmatprep.subr.mxu0 0.0
      %7911 = vmatpush1.msra.mxu0 0.0
      %7912 = vmatprep.subr.mxu0 0.0
      %7913 = vmatpush1.msra.mxu0 0.0
      %7914 = vmatprep.subr.mxu0 0.0
      %7915 = vmatpush1.msra.mxu0 0.0
      %7916 = vmatprep.subr.mxu0 0.0
      %7917 = vmatpush1.msra.mxu0 0.0
      %7918 = vmatprep.subr.mxu0 0.0
      %7919 = vmatpush1.msra.mxu0 0.0
      %7920 = vmatprep.subr.mxu0 0.0
      %7921 = vmatpush1.msra.mxu0 0.0
      %7922 = vmatprep.subr.mxu0 0.0
      %7923 = vmatpush1.msra.mxu0 0.0
      %7924 = vmatprep.subr.mxu0 0.0
      %7925 = vmatpush1.msra.mxu0 0.0
      %7926 = vmatprep.mubr.f32.mxu0 0.0
      %7927 = vmatmul.mubr.f32.gmra.mrb[0].mxu0 %v7752
      %v7928 = vpop.f32.mrb[0].mxu0
      %v7929 = vadd.f32 0.0, %v7928
      %v7930 = vpop.f32.mrb[0].mxu0
      %7931 = vmatprep.mubr.f32.mxu0 0.0
      %7932 = vmatmul.mubr.f32.gmra.mrb[0].mxu0 %v7755
      %v7933 = vpop.f32.mrb[0].mxu0
      %v7934 = vadd.f32 0.0, %v7933
      %v7935 = vpop.f32.mrb[0].mxu0
      %7936 = vmatprep.mubr.f32.mxu0 0.0
      %7937 = vmatmul.mubr.f32.gmra.mrb[0].mxu0 %v7758
      %v7938 = vpop.f32.mrb[0].mxu0
      %v7939 = vadd.f32 0.0, %v7938
      %v7940 = vpop.f32.mrb[0].mxu0
      %7941 = vmatprep.mubr.f32.mxu0 0.0
      %7942 = vmatmul.mubr.f32.gmra.mrb[0].mxu0 %v7761
      %v7943 = vpop.f32.mrb[0].mxu0
      %v7944 = vadd.f32 0.0, %v7943
      %v7945 = vpop.f32.mrb[0].mxu0
      %7946 = vmatprep.mubr.f32.mxu0 0.0
      %7947 = vmatmul.mubr.f32.gmra.mrb[0].mxu0 %v7764
      %v7948 = vpop.f32.mrb[0].mxu0
      %v7949 = vadd.f32 0.0, %v7948
      %v7950 = vpop.f32.mrb[0].mxu0
      %7951 = vmatprep.mubr.f32.mxu0 0.0
      %7952 = vmatmul.mubr.f32.gmra.mrb[0].mxu0 %v7767
      %v7953 = vpop.f32.mrb[0].mxu0
      %v7954 = vadd.f32 0.0, %v7953
      %v7955 = vpop.f32.mrb[0].mxu0
      %7956 = vmatprep.mubr.f32.mxu0 0.0
      %7957 = vmatmul.mubr.f32.gmra.mrb[0].mxu0 %v7770
      %v7958 = vpop.f32.mrb[0].mxu0
      %v7959 = vadd.f32 0.0, %v7958
      %v7960 = vpop.f32.mrb[0].mxu0
      %7961 = vmatprep.mubr.f32.mxu0 0.0
      %7962 = vmatmul.mubr.f32.gmra.mrb[0].mxu0 %v7773
      %v7963 = vpop.f32.mrb[0].mxu0
      %v7964 = vadd.f32 0.0, %v7963
      %v7965 = vpop.f32.mrb[0].mxu0
      %7966 = vmatprep.mubr.f32.mxu0 0.0
      %7967 = vmatmul.mubr.f32.gmra.mrb[0].mxu0 %v7776
      %v7968 = vpop.f32.mrb[0].mxu0
      %v7969 = vadd.f32 0.0, %v7968
      %v7970 = vpop.f32.mrb[0].mxu0
      %7971 = vmatprep.mubr.f32.mxu0 0.0
      %7972 = vmatmul.mubr.f32.gmra.mrb[0].mxu0 %v7779
      %v7973 = vpop.f32.mrb[0].mxu0
      %v7974 = vadd.f32 0.0, %v7973
      %v7975 = vpop.f32.mrb[0].mxu0
      %7976 = vmatprep.mubr.f32.mxu0 0.0
      %7977 = vmatmul.mubr.f32.gmra.mrb[0].mxu0 %v7782
      %v7978 = vpop.f32.mrb[0].mxu0
      %v7979 = vadd.f32 0.0, %v7978
      %v7980 = vpop.f32.mrb[0].mxu0
      %7981 = vmatprep.mubr.f32.mxu0 0.0
      %7982 = vmatmul.mubr.f32.gmra.mrb[0].mxu0 %v7785
      %v7983 = vpop.f32.mrb[0].mxu0
      %v7984 = vadd.f32 0.0, %v7983
      %v7985 = vpop.f32.mrb[0].mxu0
      %7986 = vmatprep.mubr.f32.mxu0 0.0
      %7987 = vmatmul.mubr.f32.gmra.mrb[0].mxu0 %v7788
      %v7988 = vpop.f32.mrb[0].mxu0
      %v7989 = vadd.f32 0.0, %v7988
      %v7990 = vpop.f32.mrb[0].mxu0
      %7991 = vmatprep.mubr.f32.mxu0 0.0
      %7992 = vmatmul.mubr.f32.gmra.mrb[0].mxu0 %v7791
      %v7993 = vpop.f32.mrb[0].mxu0
      %v7994 = vadd.f32 0.0, %v7993
      %v7995 = vpop.f32.mrb[0].mxu0
      %7996 = vmatprep.mubr.f32.mxu0 0.0
      %7997 = vmatmul.mubr.f32.gmra.mrb[0].mxu0 %v7794
      %v7998 = vpop.f32.mrb[0].mxu0
      %v7999 = vadd.f32 0.0, %v7998
      %v8000 = vpop.f32.mrb[0].mxu0
      %8001 = vmatprep.mubr.f32.mxu0 0.0
      %8002 = vmatmul.mubr.f32.gmra.mrb[0].mxu0 %v7797
      %v8003 = vpop.f32.mrb[0].mxu0
      %v8004 = vadd.f32 0.0, %v8003
      %v8005 = vpop.f32.mrb[0].mxu0
      %8006 = vmatprep.mubr.f32.mxu0 0.0
      %8007 = vmatmul.mubr.f32.gmra.mrb[0].mxu0 %v7800
      %v8008 = vpop.f32.mrb[0].mxu0
      %v8009 = vadd.f32 0.0, %v8008
      %v8010 = vpop.f32.mrb[0].mxu0
      %8011 = vmatprep.mubr.f32.mxu0 0.0
      %8012 = vmatmul.mubr.f32.gmra.mrb[0].mxu0 %v7803
      %v8013 = vpop.f32.mrb[0].mxu0
      %v8014 = vadd.f32 0.0, %v8013
      %v8015 = vpop.f32.mrb[0].mxu0
      %8016 = vmatprep.mubr.f32.mxu0 0.0
      %8017 = vmatmul.mubr.f32.gmra.mrb[0].mxu0 %v7806
      %v8018 = vpop.f32.mrb[0].mxu0
      %v8019 = vadd.f32 0.0, %v8018
      %v8020 = vpop.f32.mrb[0].mxu0
      %8021 = vmatprep.mubr.f32.mxu0 0.0
      %8022 = vmatmul.mubr.f32.gmra.mrb[0].mxu0 %v7809
      %v8023 = vpop.f32.mrb[0].mxu0
      %v8024 = vadd.f32 0.0, %v8023
      %v8025 = vpop.f32.mrb[0].mxu0
      %8026 = vmatprep.mubr.f32.mxu0 0.0
      %8027 = vmatmul.mubr.f32.gmra.mrb[0].mxu0 %v7812
      %v8028 = vpop.f32.mrb[0].mxu0
      %v8029 = vadd.f32 0.0, %v8028
      %v8030 = vpop.f32.mrb[0].mxu0
      %8031 = vmatprep.mubr.f32.mxu0 0.0
      %8032 = vmatmul.mubr.f32.gmra.mrb[0].mxu0 %v7815
      %v8033 = vpop.f32.mrb[0].mxu0
      %v8034 = vadd.f32 0.0, %v8033
      %v8035 = vpop.f32.mrb[0].mxu0
      %8036 = vmatprep.mubr.f32.mxu0 0.0
      %8037 = vmatmul.mubr.f32.gmra.mrb[0].mxu0 %v7818
      %v8038 = vpop.f32.mrb[0].mxu0
      %v8039 = vadd.f32 0.0, %v8038
      %v8040 = vpop.f32.mrb[0].mxu0
      %8041 = vmatprep.mubr.f32.mxu0 0.0
      %8042 = vmatmul.mubr.f32.gmra.mrb[0].mxu0 %v7821
      %v8043 = vpop.f32.mrb[0].mxu0
      %v8044 = vadd.f32 0.0, %v8043
      %v8045 = vpop.f32.mrb[0].mxu0
      %8046 = vmatprep.mubr.f32.mxu0 0.0
      %8047 = vmatmul.mubr.f32.gmra.mrb[0].mxu0 %v7824
      %v8048 = vpop.f32.mrb[0].mxu0
      %v8049 = vadd.f32 0.0, %v8048
      %v8050 = vpop.f32.mrb[0].mxu0
      %8051 = vmatprep.mubr.f32.mxu0 0.0
      %8052 = vmatmul.mubr.f32.gmra.mrb[0].mxu0 %v7827
      %v8053 = vpop.f32.mrb[0].mxu0
      %v8054 = vadd.f32 0.0, %v8053
      %v8055 = vpop.f32.mrb[0].mxu0
      %8056 = vmatprep.mubr.f32.mxu0 0.0
      %8057 = vmatmul.mubr.f32.gmra.mrb[0].mxu0 %v7830
      %v8058 = vpop.f32.mrb[0].mxu0
      %v8059 = vadd.f32 0.0, %v8058
      %v8060 = vpop.f32.mrb[0].mxu0
      %8061 = vmatprep.mubr.f32.mxu0 0.0
      %8062 = vmatmul.mubr.f32.gmra.mrb[0].mxu0 %v7833
      %v8063 = vpop.f32.mrb[0].mxu0
      %v8064 = vadd.f32 0.0, %v8063
      %v8065 = vpop.f32.mrb[0].mxu0
      %8066 = vmatprep.mubr.f32.mxu0 0.0
      %8067 = vmatmul.mubr.f32.gmra.mrb[0].mxu0 %v7836
      %v8068 = vpop.f32.mrb[0].mxu0
      %v8069 = vadd.f32 0.0, %v8068
      %v8070 = vpop.f32.mrb[0].mxu0
      %8071 = vmatprep.mubr.f32.mxu0 0.0
      %8072 = vmatmul.mubr.f32.gmra.mrb[0].mxu0 %v7839
      %v8073 = vpop.f32.mrb[0].mxu0
      %v8074 = vadd.f32 0.0, %v8073
      %v8075 = vpop.f32.mrb[0].mxu0
      %8076 = vmatprep.mubr.f32.mxu0 0.0
      %8077 = vmatmul.mubr.f32.gmra.mrb[0].mxu0 %v7842
      %v8078 = vpop.f32.mrb[0].mxu0
      %v8079 = vadd.f32 0.0, %v8078
      %v8080 = vpop.f32.mrb[0].mxu0
      %8081 = vmatprep.mubr.f32.mxu0 0.0
      %8082 = vmatmul.mubr.f32.gmra.mrb[0].mxu0 %v7845
      %v8083 = vpop.f32.mrb[0].mxu0
      %v8084 = vadd.f32 0.0, %v8083
      %v8085 = vpop.f32.mrb[0].mxu0
      %8086 = vmatprep.mubr.f32.mxu0 0.0
      %8087 = vmatmul.mubr.f32.gmra.mrb[0].mxu0 %v7848
      %v8088 = vpop.f32.mrb[0].mxu0
      %v8089 = vadd.f32 0.0, %v8088
      %v8090 = vpop.f32.mrb[0].mxu0
      %8091 = vmatprep.mubr.f32.mxu0 0.0
      %8092 = vmatmul.mubr.f32.gmra.mrb[0].mxu0 %v7851
      %v8093 = vpop.f32.mrb[0].mxu0
      %v8094 = vadd.f32 0.0, %v8093
      %v8095 = vpop.f32.mrb[0].mxu0
      %8096 = vmatprep.mubr.f32.mxu0 0.0
      %8097 = vmatmul.mubr.f32.gmra.mrb[0].mxu0 %v7854
      %v8098 = vpop.f32.mrb[0].mxu0
      %v8099 = vadd.f32 0.0, %v8098
      %v8100 = vpop.f32.mrb[0].mxu0
      %8101 = vmatprep.mubr.f32.mxu0 0.0
      %8102 = vmatmul.mubr.f32.gmra.mrb[0].mxu0 %v7857
      %v8103 = vpop.f32.mrb[0].mxu0
      %v8104 = vadd.f32 0.0, %v8103
      %v8105 = vpop.f32.mrb[0].mxu0
      %8106 = vdwg.mxu0
      %v8107 = vadd.f32 %v7677, %v7929
      %v8108 = vadd.f32 %v7678, %v7934
      %v8109 = vadd.f32 %v7679, %v7939
      %v8110 = vadd.f32 %v7680, %v7944
      %v8111 = vadd.f32 %v7681, %v7949
      %v8112 = vadd.f32 %v7682, %v7954
      %v8113 = vadd.f32 %v7683, %v7959
      %v8114 = vadd.f32 %v7684, %v7964
      %v8115 = vadd.f32 %v7685, %v7969
      %v8116 = vadd.f32 %v7686, %v7974
      %v8117 = vadd.f32 %v7687, %v7979
      %v8118 = vadd.f32 %v7688, %v7984
      %v8119 = vadd.f32 %v7689, %v7989
      %v8120 = vadd.f32 %v7690, %v7994
      %v8121 = vadd.f32 %v7691, %v7999
      %v8122 = vadd.f32 %v7692, %v8004
      %v8123 = vadd.f32 %v7693, %v8009
      %v8124 = vadd.f32 %v7694, %v8014
      %v8125 = vadd.f32 %v7695, %v8019
      %v8126 = vadd.f32 %v7696, %v8024
      %v8127 = vadd.f32 %v7697, %v8029
      %v8128 = vadd.f32 %v7698, %v8034
      %v8129 = vadd.f32 %v7699, %v8039
      %v8130 = vadd.f32 %v7700, %v8044
      %v8131 = vadd.f32 %v7701, %v8049
      %v8132 = vadd.f32 %v7702, %v8054
      %v8133 = vadd.f32 %v7703, %v8059
      %v8134 = vadd.f32 %v7704, %v8064
      %v8135 = vadd.f32 %v7705, %v8069
      %v8136 = vadd.f32 %v7706, %v8074
      %v8137 = vadd.f32 %v7707, %v8079
      %v8138 = vadd.f32 %v7708, %v8084
      %v8139 = vadd.f32 %v7709, %v8089
      %v8140 = vadd.f32 %v7710, %v8094
      %v8141 = vadd.f32 %v7711, %v8099
      %v8142 = vadd.f32 %v7712, %v8104
      %v8143 = vld [vmem:[#allocation3 + $0x19] sm:$0xff]
      %v8144 = vld [vmem:[#allocation3 + $0x21] sm:$0xff]
      %v8145 = vld [vmem:[#allocation3 + $0x29] sm:$0xff]
      %v8146 = vld [vmem:[#allocation3 + $0x31] sm:$0xff]
      %v8147 = vld [vmem:[#allocation3 + $0x39] sm:$0xff]
      %v8148 = vld [vmem:[#allocation3 + $0x41] sm:$0xff]
      %v8149 = vld [vmem:[#allocation3 + $0x49] sm:$0xff]
      %v8150 = vld [vmem:[#allocation3 + $0x51] sm:$0xff]
      %v8151 = vld [vmem:[#allocation3 + $0x59] sm:$0xff]
      %v8152 = vld [vmem:[#allocation3 + $0x61] sm:$0xff]
      %v8153 = vld [vmem:[#allocation3 + $0x69] sm:$0xff]
      %v8154 = vld [vmem:[#allocation3 + $0x71] sm:$0xff]
      %v8155 = vld [vmem:[#allocation3 + $0x79] sm:$0xff]
      %v8156 = vld [vmem:[#allocation3 + $0x81] sm:$0xff]
      %v8157 = vld [vmem:[#allocation3 + $0x89] sm:$0xff]
      %v8158 = vld [vmem:[#allocation3 + $0x91] sm:$0xff]
      %v8159 = vld [vmem:[#allocation3 + $0x99] sm:$0xff]
      %v8160 = vld [vmem:[#allocation3 + $0xa1] sm:$0xff]
      %v8161 = vld [vmem:[#allocation3 + $0xa9] sm:$0xff]
      %v8162 = vld [vmem:[#allocation3 + $0xb1] sm:$0xff]
      %v8163 = vld [vmem:[#allocation3 + $0xb9] sm:$0xff]
      %v8164 = vld [vmem:[#allocation3 + $0xc1] sm:$0xff]
      %v8165 = vld [vmem:[#allocation3 + $0xc9] sm:$0xff]
      %v8166 = vld [vmem:[#allocation3 + $0xd1] sm:$0xff]
      %v8167 = vld [vmem:[#allocation3 + $0xd9] sm:$0xff]
      %v8168 = vld [vmem:[#allocation3 + $0xe1] sm:$0xff]
      %v8169 = vld [vmem:[#allocation3 + $0xe9] sm:$0xff]
      %v8170 = vld [vmem:[#allocation3 + $0xf1] sm:$0xff]
      %v8171 = vld [vmem:[#allocation3 + $0xf9] sm:$0xff]
      %v8172 = vld [vmem:[#allocation3 + $0x101] sm:$0xff]
      %v8173 = vld [vmem:[#allocation3 + $0x109] sm:$0xff]
      %v8174 = vld [vmem:[#allocation3 + $0x111] sm:$0xff]
      %v8175 = vld [vmem:[#allocation3 + $0x119] sm:$0xff]
      %v8176 = vld [vmem:[#allocation3 + $0x121] sm:$0xff]
      %v8177 = vld [vmem:[#allocation3 + $0x129] sm:$0xff]
      %v8178 = vld [vmem:[#allocation3 + $0x131] sm:$0xff]
      %s8179 = scalar_lea.vmem %s8, 20
      %v8180 = vld [vmem:[%s8179] sm:$0xf]
      %v8182 = vsel %vm1025, %v8143, 0
      %v8185 = vsel %vm1025, %v8144, 0
      %v8188 = vsel %vm1025, %v8145, 0
      %v8191 = vsel %vm1025, %v8146, 0
      %v8194 = vsel %vm1025, %v8147, 0
      %v8197 = vsel %vm1025, %v8148, 0
      %v8200 = vsel %vm1025, %v8149, 0
      %v8203 = vsel %vm1025, %v8150, 0
      %v8206 = vsel %vm1025, %v8151, 0
      %v8209 = vsel %vm1025, %v8152, 0
      %v8212 = vsel %vm1025, %v8153, 0
      %v8215 = vsel %vm1025, %v8154, 0
      %v8218 = vsel %vm1025, %v8155, 0
      %v8221 = vsel %vm1025, %v8156, 0
      %v8224 = vsel %vm1025, %v8157, 0
      %v8227 = vsel %vm1025, %v8158, 0
      %v8230 = vsel %vm1025, %v8159, 0
      %v8233 = vsel %vm1025, %v8160, 0
      %v8236 = vsel %vm1025, %v8161, 0
      %v8239 = vsel %vm1025, %v8162, 0
      %v8242 = vsel %vm1025, %v8163, 0
      %v8245 = vsel %vm1025, %v8164, 0
      %v8248 = vsel %vm1025, %v8165, 0
      %v8251 = vsel %vm1025, %v8166, 0
      %v8254 = vsel %vm1025, %v8167, 0
      %v8257 = vsel %vm1025, %v8168, 0
      %v8260 = vsel %vm1025, %v8169, 0
      %v8263 = vsel %vm1025, %v8170, 0
      %v8266 = vsel %vm1025, %v8171, 0
      %v8269 = vsel %vm1025, %v8172, 0
      %v8272 = vsel %vm1025, %v8173, 0
      %v8275 = vsel %vm1025, %v8174, 0
      %v8278 = vsel %vm1025, %v8175, 0
      %v8281 = vsel %vm1025, %v8176, 0
      %v8284 = vsel %vm1025, %v8177, 0
      %v8287 = vsel %vm1025, %v8178, 0
      %v8290 = vsel %vm1287, %v8180, 0
      %8292 = vmatprep.subr.mxu0 0.0
      %8293 = vmatpush1.msra.mxu0 %v8290
      %8294 = vmatprep.subr.mxu0 0.0
      %8295 = vmatpush1.msra.mxu0 0.0
      %8296 = vmatprep.subr.mxu0 0.0
      %8297 = vmatpush1.msra.mxu0 0.0
      %8298 = vmatprep.subr.mxu0 0.0
      %8299 = vmatpush1.msra.mxu0 0.0
      %8300 = vmatprep.subr.mxu0 0.0
      %8301 = vmatpush1.msra.mxu0 0.0
      %8302 = vmatprep.subr.mxu0 0.0
      %8303 = vmatpush1.msra.mxu0 0.0
      %8304 = vmatprep.subr.mxu0 0.0
      %8305 = vmatpush1.msra.mxu0 0.0
      %8306 = vmatprep.subr.mxu0 0.0
      %8307 = vmatpush1.msra.mxu0 0.0
      %8308 = vmatprep.subr.mxu0 0.0
      %8309 = vmatpush1.msra.mxu0 0.0
      %8310 = vmatprep.subr.mxu0 0.0
      %8311 = vmatpush1.msra.mxu0 0.0
      %8312 = vmatprep.subr.mxu0 0.0
      %8313 = vmatpush1.msra.mxu0 0.0
      %8314 = vmatprep.subr.mxu0 0.0
      %8315 = vmatpush1.msra.mxu0 0.0
      %8316 = vmatprep.subr.mxu0 0.0
      %8317 = vmatpush1.msra.mxu0 0.0
      %8318 = vmatprep.subr.mxu0 0.0
      %8319 = vmatpush1.msra.mxu0 0.0
      %8320 = vmatprep.subr.mxu0 0.0
      %8321 = vmatpush1.msra.mxu0 0.0
      %8322 = vmatprep.subr.mxu0 0.0
      %8323 = vmatpush1.msra.mxu0 0.0
      %8324 = vmatprep.subr.mxu0 0.0
      %8325 = vmatpush1.msra.mxu0 0.0
      %8326 = vmatprep.subr.mxu0 0.0
      %8327 = vmatpush1.msra.mxu0 0.0
      %8328 = vmatprep.subr.mxu0 0.0
      %8329 = vmatpush1.msra.mxu0 0.0
      %8330 = vmatprep.subr.mxu0 0.0
      %8331 = vmatpush1.msra.mxu0 0.0
      %8332 = vmatprep.subr.mxu0 0.0
      %8333 = vmatpush1.msra.mxu0 0.0
      %8334 = vmatprep.subr.mxu0 0.0
      %8335 = vmatpush1.msra.mxu0 0.0
      %8336 = vmatprep.subr.mxu0 0.0
      %8337 = vmatpush1.msra.mxu0 0.0
      %8338 = vmatprep.subr.mxu0 0.0
      %8339 = vmatpush1.msra.mxu0 0.0
      %8340 = vmatprep.subr.mxu0 0.0
      %8341 = vmatpush1.msra.mxu0 0.0
      %8342 = vmatprep.subr.mxu0 0.0
      %8343 = vmatpush1.msra.mxu0 0.0
      %8344 = vmatprep.subr.mxu0 0.0
      %8345 = vmatpush1.msra.mxu0 0.0
      %8346 = vmatprep.subr.mxu0 0.0
      %8347 = vmatpush1.msra.mxu0 0.0
      %8348 = vmatprep.subr.mxu0 0.0
      %8349 = vmatpush1.msra.mxu0 0.0
      %8350 = vmatprep.subr.mxu0 0.0
      %8351 = vmatpush1.msra.mxu0 0.0
      %8352 = vmatprep.subr.mxu0 0.0
      %8353 = vmatpush1.msra.mxu0 0.0
      %8354 = vmatprep.subr.mxu0 0.0
      %8355 = vmatpush1.msra.mxu0 0.0
      %8356 = vmatprep.mubr.f32.mxu0 0.0
      %8357 = vmatmul.mubr.f32.gmra.mrb[0].mxu0 %v8182
      %v8358 = vpop.f32.mrb[0].mxu0
      %v8359 = vadd.f32 0.0, %v8358
      %v8360 = vpop.f32.mrb[0].mxu0
      %8361 = vmatprep.mubr.f32.mxu0 0.0
      %8362 = vmatmul.mubr.f32.gmra.mrb[0].mxu0 %v8185
      %v8363 = vpop.f32.mrb[0].mxu0
      %v8364 = vadd.f32 0.0, %v8363
      %v8365 = vpop.f32.mrb[0].mxu0
      %8366 = vmatprep.mubr.f32.mxu0 0.0
      %8367 = vmatmul.mubr.f32.gmra.mrb[0].mxu0 %v8188
      %v8368 = vpop.f32.mrb[0].mxu0
      %v8369 = vadd.f32 0.0, %v8368
      %v8370 = vpop.f32.mrb[0].mxu0
      %8371 = vmatprep.mubr.f32.mxu0 0.0
      %8372 = vmatmul.mubr.f32.gmra.mrb[0].mxu0 %v8191
      %v8373 = vpop.f32.mrb[0].mxu0
      %v8374 = vadd.f32 0.0, %v8373
      %v8375 = vpop.f32.mrb[0].mxu0
      %8376 = vmatprep.mubr.f32.mxu0 0.0
      %8377 = vmatmul.mubr.f32.gmra.mrb[0].mxu0 %v8194
      %v8378 = vpop.f32.mrb[0].mxu0
      %v8379 = vadd.f32 0.0, %v8378
      %v8380 = vpop.f32.mrb[0].mxu0
      %8381 = vmatprep.mubr.f32.mxu0 0.0
      %8382 = vmatmul.mubr.f32.gmra.mrb[0].mxu0 %v8197
      %v8383 = vpop.f32.mrb[0].mxu0
      %v8384 = vadd.f32 0.0, %v8383
      %v8385 = vpop.f32.mrb[0].mxu0
      %8386 = vmatprep.mubr.f32.mxu0 0.0
      %8387 = vmatmul.mubr.f32.gmra.mrb[0].mxu0 %v8200
      %v8388 = vpop.f32.mrb[0].mxu0
      %v8389 = vadd.f32 0.0, %v8388
      %v8390 = vpop.f32.mrb[0].mxu0
      %8391 = vmatprep.mubr.f32.mxu0 0.0
      %8392 = vmatmul.mubr.f32.gmra.mrb[0].mxu0 %v8203
      %v8393 = vpop.f32.mrb[0].mxu0
      %v8394 = vadd.f32 0.0, %v8393
      %v8395 = vpop.f32.mrb[0].mxu0
      %8396 = vmatprep.mubr.f32.mxu0 0.0
      %8397 = vmatmul.mubr.f32.gmra.mrb[0].mxu0 %v8206
      %v8398 = vpop.f32.mrb[0].mxu0
      %v8399 = vadd.f32 0.0, %v8398
      %v8400 = vpop.f32.mrb[0].mxu0
      %8401 = vmatprep.mubr.f32.mxu0 0.0
      %8402 = vmatmul.mubr.f32.gmra.mrb[0].mxu0 %v8209
      %v8403 = vpop.f32.mrb[0].mxu0
      %v8404 = vadd.f32 0.0, %v8403
      %v8405 = vpop.f32.mrb[0].mxu0
      %8406 = vmatprep.mubr.f32.mxu0 0.0
      %8407 = vmatmul.mubr.f32.gmra.mrb[0].mxu0 %v8212
      %v8408 = vpop.f32.mrb[0].mxu0
      %v8409 = vadd.f32 0.0, %v8408
      %v8410 = vpop.f32.mrb[0].mxu0
      %8411 = vmatprep.mubr.f32.mxu0 0.0
      %8412 = vmatmul.mubr.f32.gmra.mrb[0].mxu0 %v8215
      %v8413 = vpop.f32.mrb[0].mxu0
      %v8414 = vadd.f32 0.0, %v8413
      %v8415 = vpop.f32.mrb[0].mxu0
      %8416 = vmatprep.mubr.f32.mxu0 0.0
      %8417 = vmatmul.mubr.f32.gmra.mrb[0].mxu0 %v8218
      %v8418 = vpop.f32.mrb[0].mxu0
      %v8419 = vadd.f32 0.0, %v8418
      %v8420 = vpop.f32.mrb[0].mxu0
      %8421 = vmatprep.mubr.f32.mxu0 0.0
      %8422 = vmatmul.mubr.f32.gmra.mrb[0].mxu0 %v8221
      %v8423 = vpop.f32.mrb[0].mxu0
      %v8424 = vadd.f32 0.0, %v8423
      %v8425 = vpop.f32.mrb[0].mxu0
      %8426 = vmatprep.mubr.f32.mxu0 0.0
      %8427 = vmatmul.mubr.f32.gmra.mrb[0].mxu0 %v8224
      %v8428 = vpop.f32.mrb[0].mxu0
      %v8429 = vadd.f32 0.0, %v8428
      %v8430 = vpop.f32.mrb[0].mxu0
      %8431 = vmatprep.mubr.f32.mxu0 0.0
      %8432 = vmatmul.mubr.f32.gmra.mrb[0].mxu0 %v8227
      %v8433 = vpop.f32.mrb[0].mxu0
      %v8434 = vadd.f32 0.0, %v8433
      %v8435 = vpop.f32.mrb[0].mxu0
      %8436 = vmatprep.mubr.f32.mxu0 0.0
      %8437 = vmatmul.mubr.f32.gmra.mrb[0].mxu0 %v8230
      %v8438 = vpop.f32.mrb[0].mxu0
      %v8439 = vadd.f32 0.0, %v8438
      %v8440 = vpop.f32.mrb[0].mxu0
      %8441 = vmatprep.mubr.f32.mxu0 0.0
      %8442 = vmatmul.mubr.f32.gmra.mrb[0].mxu0 %v8233
      %v8443 = vpop.f32.mrb[0].mxu0
      %v8444 = vadd.f32 0.0, %v8443
      %v8445 = vpop.f32.mrb[0].mxu0
      %8446 = vmatprep.mubr.f32.mxu0 0.0
      %8447 = vmatmul.mubr.f32.gmra.mrb[0].mxu0 %v8236
      %v8448 = vpop.f32.mrb[0].mxu0
      %v8449 = vadd.f32 0.0, %v8448
      %v8450 = vpop.f32.mrb[0].mxu0
      %8451 = vmatprep.mubr.f32.mxu0 0.0
      %8452 = vmatmul.mubr.f32.gmra.mrb[0].mxu0 %v8239
      %v8453 = vpop.f32.mrb[0].mxu0
      %v8454 = vadd.f32 0.0, %v8453
      %v8455 = vpop.f32.mrb[0].mxu0
      %8456 = vmatprep.mubr.f32.mxu0 0.0
      %8457 = vmatmul.mubr.f32.gmra.mrb[0].mxu0 %v8242
      %v8458 = vpop.f32.mrb[0].mxu0
      %v8459 = vadd.f32 0.0, %v8458
      %v8460 = vpop.f32.mrb[0].mxu0
      %8461 = vmatprep.mubr.f32.mxu0 0.0
      %8462 = vmatmul.mubr.f32.gmra.mrb[0].mxu0 %v8245
      %v8463 = vpop.f32.mrb[0].mxu0
      %v8464 = vadd.f32 0.0, %v8463
      %v8465 = vpop.f32.mrb[0].mxu0
      %8466 = vmatprep.mubr.f32.mxu0 0.0
      %8467 = vmatmul.mubr.f32.gmra.mrb[0].mxu0 %v8248
      %v8468 = vpop.f32.mrb[0].mxu0
      %v8469 = vadd.f32 0.0, %v8468
      %v8470 = vpop.f32.mrb[0].mxu0
      %8471 = vmatprep.mubr.f32.mxu0 0.0
      %8472 = vmatmul.mubr.f32.gmra.mrb[0].mxu0 %v8251
      %v8473 = vpop.f32.mrb[0].mxu0
      %v8474 = vadd.f32 0.0, %v8473
      %v8475 = vpop.f32.mrb[0].mxu0
      %8476 = vmatprep.mubr.f32.mxu0 0.0
      %8477 = vmatmul.mubr.f32.gmra.mrb[0].mxu0 %v8254
      %v8478 = vpop.f32.mrb[0].mxu0
      %v8479 = vadd.f32 0.0, %v8478
      %v8480 = vpop.f32.mrb[0].mxu0
      %8481 = vmatprep.mubr.f32.mxu0 0.0
      %8482 = vmatmul.mubr.f32.gmra.mrb[0].mxu0 %v8257
      %v8483 = vpop.f32.mrb[0].mxu0
      %v8484 = vadd.f32 0.0, %v8483
      %v8485 = vpop.f32.mrb[0].mxu0
      %8486 = vmatprep.mubr.f32.mxu0 0.0
      %8487 = vmatmul.mubr.f32.gmra.mrb[0].mxu0 %v8260
      %v8488 = vpop.f32.mrb[0].mxu0
      %v8489 = vadd.f32 0.0, %v8488
      %v8490 = vpop.f32.mrb[0].mxu0
      %8491 = vmatprep.mubr.f32.mxu0 0.0
      %8492 = vmatmul.mubr.f32.gmra.mrb[0].mxu0 %v8263
      %v8493 = vpop.f32.mrb[0].mxu0
      %v8494 = vadd.f32 0.0, %v8493
      %v8495 = vpop.f32.mrb[0].mxu0
      %8496 = vmatprep.mubr.f32.mxu0 0.0
      %8497 = vmatmul.mubr.f32.gmra.mrb[0].mxu0 %v8266
      %v8498 = vpop.f32.mrb[0].mxu0
      %v8499 = vadd.f32 0.0, %v8498
      %v8500 = vpop.f32.mrb[0].mxu0
      %8501 = vmatprep.mubr.f32.mxu0 0.0
      %8502 = vmatmul.mubr.f32.gmra.mrb[0].mxu0 %v8269
      %v8503 = vpop.f32.mrb[0].mxu0
      %v8504 = vadd.f32 0.0, %v8503
      %v8505 = vpop.f32.mrb[0].mxu0
      %8506 = vmatprep.mubr.f32.mxu0 0.0
      %8507 = vmatmul.mubr.f32.gmra.mrb[0].mxu0 %v8272
      %v8508 = vpop.f32.mrb[0].mxu0
      %v8509 = vadd.f32 0.0, %v8508
      %v8510 = vpop.f32.mrb[0].mxu0
      %8511 = vmatprep.mubr.f32.mxu0 0.0
      %8512 = vmatmul.mubr.f32.gmra.mrb[0].mxu0 %v8275
      %v8513 = vpop.f32.mrb[0].mxu0
      %v8514 = vadd.f32 0.0, %v8513
      %v8515 = vpop.f32.mrb[0].mxu0
      %8516 = vmatprep.mubr.f32.mxu0 0.0
      %8517 = vmatmul.mubr.f32.gmra.mrb[0].mxu0 %v8278
      %v8518 = vpop.f32.mrb[0].mxu0
      %v8519 = vadd.f32 0.0, %v8518
      %v8520 = vpop.f32.mrb[0].mxu0
      %8521 = vmatprep.mubr.f32.mxu0 0.0
      %8522 = vmatmul.mubr.f32.gmra.mrb[0].mxu0 %v8281
      %v8523 = vpop.f32.mrb[0].mxu0
      %v8524 = vadd.f32 0.0, %v8523
      %v8525 = vpop.f32.mrb[0].mxu0
      %8526 = vmatprep.mubr.f32.mxu0 0.0
      %8527 = vmatmul.mubr.f32.gmra.mrb[0].mxu0 %v8284
      %v8528 = vpop.f32.mrb[0].mxu0
      %v8529 = vadd.f32 0.0, %v8528
      %v8530 = vpop.f32.mrb[0].mxu0
      %8531 = vmatprep.mubr.f32.mxu0 0.0
      %8532 = vmatmul.mubr.f32.gmra.mrb[0].mxu0 %v8287
      %v8533 = vpop.f32.mrb[0].mxu0
      %v8534 = vadd.f32 0.0, %v8533
      %v8535 = vpop.f32.mrb[0].mxu0
      %8536 = vdwg.mxu0
      %v8537 = vadd.f32 %v8107, %v8359
      %v8538 = vadd.f32 %v8108, %v8364
      %v8539 = vadd.f32 %v8109, %v8369
      %v8540 = vadd.f32 %v8110, %v8374
      %v8541 = vadd.f32 %v8111, %v8379
      %v8542 = vadd.f32 %v8112, %v8384
      %v8543 = vadd.f32 %v8113, %v8389
      %v8544 = vadd.f32 %v8114, %v8394
      %v8545 = vadd.f32 %v8115, %v8399
      %v8546 = vadd.f32 %v8116, %v8404
      %v8547 = vadd.f32 %v8117, %v8409
      %v8548 = vadd.f32 %v8118, %v8414
      %v8549 = vadd.f32 %v8119, %v8419
      %v8550 = vadd.f32 %v8120, %v8424
      %v8551 = vadd.f32 %v8121, %v8429
      %v8552 = vadd.f32 %v8122, %v8434
      %v8553 = vadd.f32 %v8123, %v8439
      %v8554 = vadd.f32 %v8124, %v8444
      %v8555 = vadd.f32 %v8125, %v8449
      %v8556 = vadd.f32 %v8126, %v8454
      %v8557 = vadd.f32 %v8127, %v8459
      %v8558 = vadd.f32 %v8128, %v8464
      %v8559 = vadd.f32 %v8129, %v8469
      %v8560 = vadd.f32 %v8130, %v8474
      %v8561 = vadd.f32 %v8131, %v8479
      %v8562 = vadd.f32 %v8132, %v8484
      %v8563 = vadd.f32 %v8133, %v8489
      %v8564 = vadd.f32 %v8134, %v8494
      %v8565 = vadd.f32 %v8135, %v8499
      %v8566 = vadd.f32 %v8136, %v8504
      %v8567 = vadd.f32 %v8137, %v8509
      %v8568 = vadd.f32 %v8138, %v8514
      %v8569 = vadd.f32 %v8139, %v8519
      %v8570 = vadd.f32 %v8140, %v8524
      %v8571 = vadd.f32 %v8141, %v8529
      %v8572 = vadd.f32 %v8142, %v8534
      %v8573 = vld [vmem:[#allocation3 + $0x29] sm:$0xff]
      %v8574 = vld [vmem:[#allocation3 + $0x31] sm:$0xff]
      %v8575 = vld [vmem:[#allocation3 + $0x39] sm:$0xff]
      %v8576 = vld [vmem:[#allocation3 + $0x41] sm:$0xff]
      %v8577 = vld [vmem:[#allocation3 + $0x49] sm:$0xff]
      %v8578 = vld [vmem:[#allocation3 + $0x51] sm:$0xff]
      %v8579 = vld [vmem:[#allocation3 + $0x59] sm:$0xff]
      %v8580 = vld [vmem:[#allocation3 + $0x61] sm:$0xff]
      %v8581 = vld [vmem:[#allocation3 + $0x69] sm:$0xff]
      %v8582 = vld [vmem:[#allocation3 + $0x71] sm:$0xff]
      %v8583 = vld [vmem:[#allocation3 + $0x79] sm:$0xff]
      %v8584 = vld [vmem:[#allocation3 + $0x81] sm:$0xff]
      %v8585 = vld [vmem:[#allocation3 + $0x89] sm:$0xff]
      %v8586 = vld [vmem:[#allocation3 + $0x91] sm:$0xff]
      %v8587 = vld [vmem:[#allocation3 + $0x99] sm:$0xff]
      %v8588 = vld [vmem:[#allocation3 + $0xa1] sm:$0xff]
      %v8589 = vld [vmem:[#allocation3 + $0xa9] sm:$0xff]
      %v8590 = vld [vmem:[#allocation3 + $0xb1] sm:$0xff]
      %v8591 = vld [vmem:[#allocation3 + $0xb9] sm:$0xff]
      %v8592 = vld [vmem:[#allocation3 + $0xc1] sm:$0xff]
      %v8593 = vld [vmem:[#allocation3 + $0xc9] sm:$0xff]
      %v8594 = vld [vmem:[#allocation3 + $0xd1] sm:$0xff]
      %v8595 = vld [vmem:[#allocation3 + $0xd9] sm:$0xff]
      %v8596 = vld [vmem:[#allocation3 + $0xe1] sm:$0xff]
      %v8597 = vld [vmem:[#allocation3 + $0xe9] sm:$0xff]
      %v8598 = vld [vmem:[#allocation3 + $0xf1] sm:$0xff]
      %v8599 = vld [vmem:[#allocation3 + $0xf9] sm:$0xff]
      %v8600 = vld [vmem:[#allocation3 + $0x101] sm:$0xff]
      %v8601 = vld [vmem:[#allocation3 + $0x109] sm:$0xff]
      %v8602 = vld [vmem:[#allocation3 + $0x111] sm:$0xff]
      %v8603 = vld [vmem:[#allocation3 + $0x119] sm:$0xff]
      %v8604 = vld [vmem:[#allocation3 + $0x121] sm:$0xff]
      %v8605 = vld [vmem:[#allocation3 + $0x129] sm:$0xff]
      %v8606 = vld [vmem:[#allocation3 + $0x131] sm:$0xff]
      %v8607 = vld [vmem:[#allocation3 + $0x139] sm:$0xff]
      %v8608 = vld [vmem:[#allocation3 + $0x141] sm:$0xff]
      %s8609 = scalar_lea.vmem %s8, 24
      %v8610 = vld [vmem:[%s8609] sm:$0xf]
      %v8612 = vsel %vm1025, %v8573, 0
      %v8615 = vsel %vm1025, %v8574, 0
      %v8618 = vsel %vm1025, %v8575, 0
      %v8621 = vsel %vm1025, %v8576, 0
      %v8624 = vsel %vm1025, %v8577, 0
      %v8627 = vsel %vm1025, %v8578, 0
      %v8630 = vsel %vm1025, %v8579, 0
      %v8633 = vsel %vm1025, %v8580, 0
      %v8636 = vsel %vm1025, %v8581, 0
      %v8639 = vsel %vm1025, %v8582, 0
      %v8642 = vsel %vm1025, %v8583, 0
      %v8645 = vsel %vm1025, %v8584, 0
      %v8648 = vsel %vm1025, %v8585, 0
      %v8651 = vsel %vm1025, %v8586, 0
      %v8654 = vsel %vm1025, %v8587, 0
      %v8657 = vsel %vm1025, %v8588, 0
      %v8660 = vsel %vm1025, %v8589, 0
      %v8663 = vsel %vm1025, %v8590, 0
      %v8666 = vsel %vm1025, %v8591, 0
      %v8669 = vsel %vm1025, %v8592, 0
      %v8672 = vsel %vm1025, %v8593, 0
      %v8675 = vsel %vm1025, %v8594, 0
      %v8678 = vsel %vm1025, %v8595, 0
      %v8681 = vsel %vm1025, %v8596, 0
      %v8684 = vsel %vm1025, %v8597, 0
      %v8687 = vsel %vm1025, %v8598, 0
      %v8690 = vsel %vm1025, %v8599, 0
      %v8693 = vsel %vm1025, %v8600, 0
      %v8696 = vsel %vm1025, %v8601, 0
      %v8699 = vsel %vm1025, %v8602, 0
      %v8702 = vsel %vm1025, %v8603, 0
      %v8705 = vsel %vm1025, %v8604, 0
      %v8708 = vsel %vm1025, %v8605, 0
      %v8711 = vsel %vm1025, %v8606, 0
      %v8714 = vsel %vm1025, %v8607, 0
      %v8717 = vsel %vm1025, %v8608, 0
      %v8720 = vsel %vm1287, %v8610, 0
      %8722 = vmatprep.subr.mxu0 0.0
      %8723 = vmatpush1.msra.mxu0 %v8720
      %8724 = vmatprep.subr.mxu0 0.0
      %8725 = vmatpush1.msra.mxu0 0.0
      %8726 = vmatprep.subr.mxu0 0.0
      %8727 = vmatpush1.msra.mxu0 0.0
      %8728 = vmatprep.subr.mxu0 0.0
      %8729 = vmatpush1.msra.mxu0 0.0
      %8730 = vmatprep.subr.mxu0 0.0
      %8731 = vmatpush1.msra.mxu0 0.0
      %8732 = vmatprep.subr.mxu0 0.0
      %8733 = vmatpush1.msra.mxu0 0.0
      %8734 = vmatprep.subr.mxu0 0.0
      %8735 = vmatpush1.msra.mxu0 0.0
      %8736 = vmatprep.subr.mxu0 0.0
      %8737 = vmatpush1.msra.mxu0 0.0
      %8738 = vmatprep.subr.mxu0 0.0
      %8739 = vmatpush1.msra.mxu0 0.0
      %8740 = vmatprep.subr.mxu0 0.0
      %8741 = vmatpush1.msra.mxu0 0.0
      %8742 = vmatprep.subr.mxu0 0.0
      %8743 = vmatpush1.msra.mxu0 0.0
      %8744 = vmatprep.subr.mxu0 0.0
      %8745 = vmatpush1.msra.mxu0 0.0
      %8746 = vmatprep.subr.mxu0 0.0
      %8747 = vmatpush1.msra.mxu0 0.0
      %8748 = vmatprep.subr.mxu0 0.0
      %8749 = vmatpush1.msra.mxu0 0.0
      %8750 = vmatprep.subr.mxu0 0.0
      %8751 = vmatpush1.msra.mxu0 0.0
      %8752 = vmatprep.subr.mxu0 0.0
      %8753 = vmatpush1.msra.mxu0 0.0
      %8754 = vmatprep.subr.mxu0 0.0
      %8755 = vmatpush1.msra.mxu0 0.0
      %8756 = vmatprep.subr.mxu0 0.0
      %8757 = vmatpush1.msra.mxu0 0.0
      %8758 = vmatprep.subr.mxu0 0.0
      %8759 = vmatpush1.msra.mxu0 0.0
      %8760 = vmatprep.subr.mxu0 0.0
      %8761 = vmatpush1.msra.mxu0 0.0
      %8762 = vmatprep.subr.mxu0 0.0
      %8763 = vmatpush1.msra.mxu0 0.0
      %8764 = vmatprep.subr.mxu0 0.0
      %8765 = vmatpush1.msra.mxu0 0.0
      %8766 = vmatprep.subr.mxu0 0.0
      %8767 = vmatpush1.msra.mxu0 0.0
      %8768 = vmatprep.subr.mxu0 0.0
      %8769 = vmatpush1.msra.mxu0 0.0
      %8770 = vmatprep.subr.mxu0 0.0
      %8771 = vmatpush1.msra.mxu0 0.0
      %8772 = vmatprep.subr.mxu0 0.0
      %8773 = vmatpush1.msra.mxu0 0.0
      %8774 = vmatprep.subr.mxu0 0.0
      %8775 = vmatpush1.msra.mxu0 0.0
      %8776 = vmatprep.subr.mxu0 0.0
      %8777 = vmatpush1.msra.mxu0 0.0
      %8778 = vmatprep.subr.mxu0 0.0
      %8779 = vmatpush1.msra.mxu0 0.0
      %8780 = vmatprep.subr.mxu0 0.0
      %8781 = vmatpush1.msra.mxu0 0.0
      %8782 = vmatprep.subr.mxu0 0.0
      %8783 = vmatpush1.msra.mxu0 0.0
      %8784 = vmatprep.subr.mxu0 0.0
      %8785 = vmatpush1.msra.mxu0 0.0
      %8786 = vmatprep.mubr.f32.mxu0 0.0
      %8787 = vmatmul.mubr.f32.gmra.mrb[0].mxu0 %v8612
      %v8788 = vpop.f32.mrb[0].mxu0
      %v8789 = vadd.f32 0.0, %v8788
      %v8790 = vpop.f32.mrb[0].mxu0
      %8791 = vmatprep.mubr.f32.mxu0 0.0
      %8792 = vmatmul.mubr.f32.gmra.mrb[0].mxu0 %v8615
      %v8793 = vpop.f32.mrb[0].mxu0
      %v8794 = vadd.f32 0.0, %v8793
      %v8795 = vpop.f32.mrb[0].mxu0
      %8796 = vmatprep.mubr.f32.mxu0 0.0
      %8797 = vmatmul.mubr.f32.gmra.mrb[0].mxu0 %v8618
      %v8798 = vpop.f32.mrb[0].mxu0
      %v8799 = vadd.f32 0.0, %v8798
      %v8800 = vpop.f32.mrb[0].mxu0
      %8801 = vmatprep.mubr.f32.mxu0 0.0
      %8802 = vmatmul.mubr.f32.gmra.mrb[0].mxu0 %v8621
      %v8803 = vpop.f32.mrb[0].mxu0
      %v8804 = vadd.f32 0.0, %v8803
      %v8805 = vpop.f32.mrb[0].mxu0
      %8806 = vmatprep.mubr.f32.mxu0 0.0
      %8807 = vmatmul.mubr.f32.gmra.mrb[0].mxu0 %v8624
      %v8808 = vpop.f32.mrb[0].mxu0
      %v8809 = vadd.f32 0.0, %v8808
      %v8810 = vpop.f32.mrb[0].mxu0
      %8811 = vmatprep.mubr.f32.mxu0 0.0
      %8812 = vmatmul.mubr.f32.gmra.mrb[0].mxu0 %v8627
      %v8813 = vpop.f32.mrb[0].mxu0
      %v8814 = vadd.f32 0.0, %v8813
      %v8815 = vpop.f32.mrb[0].mxu0
      %8816 = vmatprep.mubr.f32.mxu0 0.0
      %8817 = vmatmul.mubr.f32.gmra.mrb[0].mxu0 %v8630
      %v8818 = vpop.f32.mrb[0].mxu0
      %v8819 = vadd.f32 0.0, %v8818
      %v8820 = vpop.f32.mrb[0].mxu0
      %8821 = vmatprep.mubr.f32.mxu0 0.0
      %8822 = vmatmul.mubr.f32.gmra.mrb[0].mxu0 %v8633
      %v8823 = vpop.f32.mrb[0].mxu0
      %v8824 = vadd.f32 0.0, %v8823
      %v8825 = vpop.f32.mrb[0].mxu0
      %8826 = vmatprep.mubr.f32.mxu0 0.0
      %8827 = vmatmul.mubr.f32.gmra.mrb[0].mxu0 %v8636
      %v8828 = vpop.f32.mrb[0].mxu0
      %v8829 = vadd.f32 0.0, %v8828
      %v8830 = vpop.f32.mrb[0].mxu0
      %8831 = vmatprep.mubr.f32.mxu0 0.0
      %8832 = vmatmul.mubr.f32.gmra.mrb[0].mxu0 %v8639
      %v8833 = vpop.f32.mrb[0].mxu0
      %v8834 = vadd.f32 0.0, %v8833
      %v8835 = vpop.f32.mrb[0].mxu0
      %8836 = vmatprep.mubr.f32.mxu0 0.0
      %8837 = vmatmul.mubr.f32.gmra.mrb[0].mxu0 %v8642
      %v8838 = vpop.f32.mrb[0].mxu0
      %v8839 = vadd.f32 0.0, %v8838
      %v8840 = vpop.f32.mrb[0].mxu0
      %8841 = vmatprep.mubr.f32.mxu0 0.0
      %8842 = vmatmul.mubr.f32.gmra.mrb[0].mxu0 %v8645
      %v8843 = vpop.f32.mrb[0].mxu0
      %v8844 = vadd.f32 0.0, %v8843
      %v8845 = vpop.f32.mrb[0].mxu0
      %8846 = vmatprep.mubr.f32.mxu0 0.0
      %8847 = vmatmul.mubr.f32.gmra.mrb[0].mxu0 %v8648
      %v8848 = vpop.f32.mrb[0].mxu0
      %v8849 = vadd.f32 0.0, %v8848
      %v8850 = vpop.f32.mrb[0].mxu0
      %8851 = vmatprep.mubr.f32.mxu0 0.0
      %8852 = vmatmul.mubr.f32.gmra.mrb[0].mxu0 %v8651
      %v8853 = vpop.f32.mrb[0].mxu0
      %v8854 = vadd.f32 0.0, %v8853
      %v8855 = vpop.f32.mrb[0].mxu0
      %8856 = vmatprep.mubr.f32.mxu0 0.0
      %8857 = vmatmul.mubr.f32.gmra.mrb[0].mxu0 %v8654
      %v8858 = vpop.f32.mrb[0].mxu0
      %v8859 = vadd.f32 0.0, %v8858
      %v8860 = vpop.f32.mrb[0].mxu0
      %8861 = vmatprep.mubr.f32.mxu0 0.0
      %8862 = vmatmul.mubr.f32.gmra.mrb[0].mxu0 %v8657
      %v8863 = vpop.f32.mrb[0].mxu0
      %v8864 = vadd.f32 0.0, %v8863
      %v8865 = vpop.f32.mrb[0].mxu0
      %8866 = vmatprep.mubr.f32.mxu0 0.0
      %8867 = vmatmul.mubr.f32.gmra.mrb[0].mxu0 %v8660
      %v8868 = vpop.f32.mrb[0].mxu0
      %v8869 = vadd.f32 0.0, %v8868
      %v8870 = vpop.f32.mrb[0].mxu0
      %8871 = vmatprep.mubr.f32.mxu0 0.0
      %8872 = vmatmul.mubr.f32.gmra.mrb[0].mxu0 %v8663
      %v8873 = vpop.f32.mrb[0].mxu0
      %v8874 = vadd.f32 0.0, %v8873
      %v8875 = vpop.f32.mrb[0].mxu0
      %8876 = vmatprep.mubr.f32.mxu0 0.0
      %8877 = vmatmul.mubr.f32.gmra.mrb[0].mxu0 %v8666
      %v8878 = vpop.f32.mrb[0].mxu0
      %v8879 = vadd.f32 0.0, %v8878
      %v8880 = vpop.f32.mrb[0].mxu0
      %8881 = vmatprep.mubr.f32.mxu0 0.0
      %8882 = vmatmul.mubr.f32.gmra.mrb[0].mxu0 %v8669
      %v8883 = vpop.f32.mrb[0].mxu0
      %v8884 = vadd.f32 0.0, %v8883
      %v8885 = vpop.f32.mrb[0].mxu0
      %8886 = vmatprep.mubr.f32.mxu0 0.0
      %8887 = vmatmul.mubr.f32.gmra.mrb[0].mxu0 %v8672
      %v8888 = vpop.f32.mrb[0].mxu0
      %v8889 = vadd.f32 0.0, %v8888
      %v8890 = vpop.f32.mrb[0].mxu0
      %8891 = vmatprep.mubr.f32.mxu0 0.0
      %8892 = vmatmul.mubr.f32.gmra.mrb[0].mxu0 %v8675
      %v8893 = vpop.f32.mrb[0].mxu0
      %v8894 = vadd.f32 0.0, %v8893
      %v8895 = vpop.f32.mrb[0].mxu0
      %8896 = vmatprep.mubr.f32.mxu0 0.0
      %8897 = vmatmul.mubr.f32.gmra.mrb[0].mxu0 %v8678
      %v8898 = vpop.f32.mrb[0].mxu0
      %v8899 = vadd.f32 0.0, %v8898
      %v8900 = vpop.f32.mrb[0].mxu0
      %8901 = vmatprep.mubr.f32.mxu0 0.0
      %8902 = vmatmul.mubr.f32.gmra.mrb[0].mxu0 %v8681
      %v8903 = vpop.f32.mrb[0].mxu0
      %v8904 = vadd.f32 0.0, %v8903
      %v8905 = vpop.f32.mrb[0].mxu0
      %8906 = vmatprep.mubr.f32.mxu0 0.0
      %8907 = vmatmul.mubr.f32.gmra.mrb[0].mxu0 %v8684
      %v8908 = vpop.f32.mrb[0].mxu0
      %v8909 = vadd.f32 0.0, %v8908
      %v8910 = vpop.f32.mrb[0].mxu0
      %8911 = vmatprep.mubr.f32.mxu0 0.0
      %8912 = vmatmul.mubr.f32.gmra.mrb[0].mxu0 %v8687
      %v8913 = vpop.f32.mrb[0].mxu0
      %v8914 = vadd.f32 0.0, %v8913
      %v8915 = vpop.f32.mrb[0].mxu0
      %8916 = vmatprep.mubr.f32.mxu0 0.0
      %8917 = vmatmul.mubr.f32.gmra.mrb[0].mxu0 %v8690
      %v8918 = vpop.f32.mrb[0].mxu0
      %v8919 = vadd.f32 0.0, %v8918
      %v8920 = vpop.f32.mrb[0].mxu0
      %8921 = vmatprep.mubr.f32.mxu0 0.0
      %8922 = vmatmul.mubr.f32.gmra.mrb[0].mxu0 %v8693
      %v8923 = vpop.f32.mrb[0].mxu0
      %v8924 = vadd.f32 0.0, %v8923
      %v8925 = vpop.f32.mrb[0].mxu0
      %8926 = vmatprep.mubr.f32.mxu0 0.0
      %8927 = vmatmul.mubr.f32.gmra.mrb[0].mxu0 %v8696
      %v8928 = vpop.f32.mrb[0].mxu0
      %v8929 = vadd.f32 0.0, %v8928
      %v8930 = vpop.f32.mrb[0].mxu0
      %8931 = vmatprep.mubr.f32.mxu0 0.0
      %8932 = vmatmul.mubr.f32.gmra.mrb[0].mxu0 %v8699
      %v8933 = vpop.f32.mrb[0].mxu0
      %v8934 = vadd.f32 0.0, %v8933
      %v8935 = vpop.f32.mrb[0].mxu0
      %8936 = vmatprep.mubr.f32.mxu0 0.0
      %8937 = vmatmul.mubr.f32.gmra.mrb[0].mxu0 %v8702
      %v8938 = vpop.f32.mrb[0].mxu0
      %v8939 = vadd.f32 0.0, %v8938
      %v8940 = vpop.f32.mrb[0].mxu0
      %8941 = vmatprep.mubr.f32.mxu0 0.0
      %8942 = vmatmul.mubr.f32.gmra.mrb[0].mxu0 %v8705
      %v8943 = vpop.f32.mrb[0].mxu0
      %v8944 = vadd.f32 0.0, %v8943
      %v8945 = vpop.f32.mrb[0].mxu0
      %8946 = vmatprep.mubr.f32.mxu0 0.0
      %8947 = vmatmul.mubr.f32.gmra.mrb[0].mxu0 %v8708
      %v8948 = vpop.f32.mrb[0].mxu0
      %v8949 = vadd.f32 0.0, %v8948
      %v8950 = vpop.f32.mrb[0].mxu0
      %8951 = vmatprep.mubr.f32.mxu0 0.0
      %8952 = vmatmul.mubr.f32.gmra.mrb[0].mxu0 %v8711
      %v8953 = vpop.f32.mrb[0].mxu0
      %v8954 = vadd.f32 0.0, %v8953
      %v8955 = vpop.f32.mrb[0].mxu0
      %8956 = vmatprep.mubr.f32.mxu0 0.0
      %8957 = vmatmul.mubr.f32.gmra.mrb[0].mxu0 %v8714
      %v8958 = vpop.f32.mrb[0].mxu0
      %v8959 = vadd.f32 0.0, %v8958
      %v8960 = vpop.f32.mrb[0].mxu0
      %8961 = vmatprep.mubr.f32.mxu0 0.0
      %8962 = vmatmul.mubr.f32.gmra.mrb[0].mxu0 %v8717
      %v8963 = vpop.f32.mrb[0].mxu0
      %v8964 = vadd.f32 0.0, %v8963
      %v8965 = vpop.f32.mrb[0].mxu0
      %8966 = vdwg.mxu0
      %v8967 = vadd.f32 %v8537, %v8789
      %v8968 = vadd.f32 %v8538, %v8794
      %v8969 = vadd.f32 %v8539, %v8799
      %v8970 = vadd.f32 %v8540, %v8804
      %v8971 = vadd.f32 %v8541, %v8809
      %v8972 = vadd.f32 %v8542, %v8814
      %v8973 = vadd.f32 %v8543, %v8819
      %v8974 = vadd.f32 %v8544, %v8824
      %v8975 = vadd.f32 %v8545, %v8829
      %v8976 = vadd.f32 %v8546, %v8834
      %v8977 = vadd.f32 %v8547, %v8839
      %v8978 = vadd.f32 %v8548, %v8844
      %v8979 = vadd.f32 %v8549, %v8849
      %v8980 = vadd.f32 %v8550, %v8854
      %v8981 = vadd.f32 %v8551, %v8859
      %v8982 = vadd.f32 %v8552, %v8864
      %v8983 = vadd.f32 %v8553, %v8869
      %v8984 = vadd.f32 %v8554, %v8874
      %v8985 = vadd.f32 %v8555, %v8879
      %v8986 = vadd.f32 %v8556, %v8884
      %v8987 = vadd.f32 %v8557, %v8889
      %v8988 = vadd.f32 %v8558, %v8894
      %v8989 = vadd.f32 %v8559, %v8899
      %v8990 = vadd.f32 %v8560, %v8904
      %v8991 = vadd.f32 %v8561, %v8909
      %v8992 = vadd.f32 %v8562, %v8914
      %v8993 = vadd.f32 %v8563, %v8919
      %v8994 = vadd.f32 %v8564, %v8924
      %v8995 = vadd.f32 %v8565, %v8929
      %v8996 = vadd.f32 %v8566, %v8934
      %v8997 = vadd.f32 %v8567, %v8939
      %v8998 = vadd.f32 %v8568, %v8944
      %v8999 = vadd.f32 %v8569, %v8949
      %v9000 = vadd.f32 %v8570, %v8954
      %v9001 = vadd.f32 %v8571, %v8959
      %v9002 = vadd.f32 %v8572, %v8964
      %v9003 = vld [vmem:[#allocation3 + $0x2a] sm:$0xff]
      %v9004 = vld [vmem:[#allocation3 + $0x32] sm:$0xff]
      %v9005 = vld [vmem:[#allocation3 + $0x3a] sm:$0xff]
      %v9006 = vld [vmem:[#allocation3 + $0x42] sm:$0xff]
      %v9007 = vld [vmem:[#allocation3 + $0x4a] sm:$0xff]
      %v9008 = vld [vmem:[#allocation3 + $0x52] sm:$0xff]
      %v9009 = vld [vmem:[#allocation3 + $0x5a] sm:$0xff]
      %v9010 = vld [vmem:[#allocation3 + $0x62] sm:$0xff]
      %v9011 = vld [vmem:[#allocation3 + $0x6a] sm:$0xff]
      %v9012 = vld [vmem:[#allocation3 + $0x72] sm:$0xff]
      %v9013 = vld [vmem:[#allocation3 + $0x7a] sm:$0xff]
      %v9014 = vld [vmem:[#allocation3 + $0x82] sm:$0xff]
      %v9015 = vld [vmem:[#allocation3 + $0x8a] sm:$0xff]
      %v9016 = vld [vmem:[#allocation3 + $0x92] sm:$0xff]
      %v9017 = vld [vmem:[#allocation3 + $0x9a] sm:$0xff]
      %v9018 = vld [vmem:[#allocation3 + $0xa2] sm:$0xff]
      %v9019 = vld [vmem:[#allocation3 + $0xaa] sm:$0xff]
      %v9020 = vld [vmem:[#allocation3 + $0xb2] sm:$0xff]
      %v9021 = vld [vmem:[#allocation3 + $0xba] sm:$0xff]
      %v9022 = vld [vmem:[#allocation3 + $0xc2] sm:$0xff]
      %v9023 = vld [vmem:[#allocation3 + $0xca] sm:$0xff]
      %v9024 = vld [vmem:[#allocation3 + $0xd2] sm:$0xff]
      %v9025 = vld [vmem:[#allocation3 + $0xda] sm:$0xff]
      %v9026 = vld [vmem:[#allocation3 + $0xe2] sm:$0xff]
      %v9027 = vld [vmem:[#allocation3 + $0xea] sm:$0xff]
      %v9028 = vld [vmem:[#allocation3 + $0xf2] sm:$0xff]
      %v9029 = vld [vmem:[#allocation3 + $0xfa] sm:$0xff]
      %v9030 = vld [vmem:[#allocation3 + $0x102] sm:$0xff]
      %v9031 = vld [vmem:[#allocation3 + $0x10a] sm:$0xff]
      %v9032 = vld [vmem:[#allocation3 + $0x112] sm:$0xff]
      %v9033 = vld [vmem:[#allocation3 + $0x11a] sm:$0xff]
      %v9034 = vld [vmem:[#allocation3 + $0x122] sm:$0xff]
      %v9035 = vld [vmem:[#allocation3 + $0x12a] sm:$0xff]
      %v9036 = vld [vmem:[#allocation3 + $0x132] sm:$0xff]
      %v9037 = vld [vmem:[#allocation3 + $0x13a] sm:$0xff]
      %v9038 = vld [vmem:[#allocation3 + $0x142] sm:$0xff]
      %s9039 = scalar_lea.vmem %s8, 28
      %v9040 = vld [vmem:[%s9039] sm:$0xf]
      %v9042 = vsel %vm1025, %v9003, 0
      %v9045 = vsel %vm1025, %v9004, 0
      %v9048 = vsel %vm1025, %v9005, 0
      %v9051 = vsel %vm1025, %v9006, 0
      %v9054 = vsel %vm1025, %v9007, 0
      %v9057 = vsel %vm1025, %v9008, 0
      %v9060 = vsel %vm1025, %v9009, 0
      %v9063 = vsel %vm1025, %v9010, 0
      %v9066 = vsel %vm1025, %v9011, 0
      %v9069 = vsel %vm1025, %v9012, 0
      %v9072 = vsel %vm1025, %v9013, 0
      %v9075 = vsel %vm1025, %v9014, 0
      %v9078 = vsel %vm1025, %v9015, 0
      %v9081 = vsel %vm1025, %v9016, 0
      %v9084 = vsel %vm1025, %v9017, 0
      %v9087 = vsel %vm1025, %v9018, 0
      %v9090 = vsel %vm1025, %v9019, 0
      %v9093 = vsel %vm1025, %v9020, 0
      %v9096 = vsel %vm1025, %v9021, 0
      %v9099 = vsel %vm1025, %v9022, 0
      %v9102 = vsel %vm1025, %v9023, 0
      %v9105 = vsel %vm1025, %v9024, 0
      %v9108 = vsel %vm1025, %v9025, 0
      %v9111 = vsel %vm1025, %v9026, 0
      %v9114 = vsel %vm1025, %v9027, 0
      %v9117 = vsel %vm1025, %v9028, 0
      %v9120 = vsel %vm1025, %v9029, 0
      %v9123 = vsel %vm1025, %v9030, 0
      %v9126 = vsel %vm1025, %v9031, 0
      %v9129 = vsel %vm1025, %v9032, 0
      %v9132 = vsel %vm1025, %v9033, 0
      %v9135 = vsel %vm1025, %v9034, 0
      %v9138 = vsel %vm1025, %v9035, 0
      %v9141 = vsel %vm1025, %v9036, 0
      %v9144 = vsel %vm1025, %v9037, 0
      %v9147 = vsel %vm1025, %v9038, 0
      %v9150 = vsel %vm1287, %v9040, 0
      %9152 = vmatprep.subr.mxu0 0.0
      %9153 = vmatpush1.msra.mxu0 %v9150
      %9154 = vmatprep.subr.mxu0 0.0
      %9155 = vmatpush1.msra.mxu0 0.0
      %9156 = vmatprep.subr.mxu0 0.0
      %9157 = vmatpush1.msra.mxu0 0.0
      %9158 = vmatprep.subr.mxu0 0.0
      %9159 = vmatpush1.msra.mxu0 0.0
      %9160 = vmatprep.subr.mxu0 0.0
      %9161 = vmatpush1.msra.mxu0 0.0
      %9162 = vmatprep.subr.mxu0 0.0
      %9163 = vmatpush1.msra.mxu0 0.0
      %9164 = vmatprep.subr.mxu0 0.0
      %9165 = vmatpush1.msra.mxu0 0.0
      %9166 = vmatprep.subr.mxu0 0.0
      %9167 = vmatpush1.msra.mxu0 0.0
      %9168 = vmatprep.subr.mxu0 0.0
      %9169 = vmatpush1.msra.mxu0 0.0
      %9170 = vmatprep.subr.mxu0 0.0
      %9171 = vmatpush1.msra.mxu0 0.0
      %9172 = vmatprep.subr.mxu0 0.0
      %9173 = vmatpush1.msra.mxu0 0.0
      %9174 = vmatprep.subr.mxu0 0.0
      %9175 = vmatpush1.msra.mxu0 0.0
      %9176 = vmatprep.subr.mxu0 0.0
      %9177 = vmatpush1.msra.mxu0 0.0
      %9178 = vmatprep.subr.mxu0 0.0
      %9179 = vmatpush1.msra.mxu0 0.0
      %9180 = vmatprep.subr.mxu0 0.0
      %9181 = vmatpush1.msra.mxu0 0.0
      %9182 = vmatprep.subr.mxu0 0.0
      %9183 = vmatpush1.msra.mxu0 0.0
      %9184 = vmatprep.subr.mxu0 0.0
      %9185 = vmatpush1.msra.mxu0 0.0
      %9186 = vmatprep.subr.mxu0 0.0
      %9187 = vmatpush1.msra.mxu0 0.0
      %9188 = vmatprep.subr.mxu0 0.0
      %9189 = vmatpush1.msra.mxu0 0.0
      %9190 = vmatprep.subr.mxu0 0.0
      %9191 = vmatpush1.msra.mxu0 0.0
      %9192 = vmatprep.subr.mxu0 0.0
      %9193 = vmatpush1.msra.mxu0 0.0
      %9194 = vmatprep.subr.mxu0 0.0
      %9195 = vmatpush1.msra.mxu0 0.0
      %9196 = vmatprep.subr.mxu0 0.0
      %9197 = vmatpush1.msra.mxu0 0.0
      %9198 = vmatprep.subr.mxu0 0.0
      %9199 = vmatpush1.msra.mxu0 0.0
      %9200 = vmatprep.subr.mxu0 0.0
      %9201 = vmatpush1.msra.mxu0 0.0
      %9202 = vmatprep.subr.mxu0 0.0
      %9203 = vmatpush1.msra.mxu0 0.0
      %9204 = vmatprep.subr.mxu0 0.0
      %9205 = vmatpush1.msra.mxu0 0.0
      %9206 = vmatprep.subr.mxu0 0.0
      %9207 = vmatpush1.msra.mxu0 0.0
      %9208 = vmatprep.subr.mxu0 0.0
      %9209 = vmatpush1.msra.mxu0 0.0
      %9210 = vmatprep.subr.mxu0 0.0
      %9211 = vmatpush1.msra.mxu0 0.0
      %9212 = vmatprep.subr.mxu0 0.0
      %9213 = vmatpush1.msra.mxu0 0.0
      %9214 = vmatprep.subr.mxu0 0.0
      %9215 = vmatpush1.msra.mxu0 0.0
      %9216 = vmatprep.mubr.f32.mxu0 0.0
      %9217 = vmatmul.mubr.f32.gmra.mrb[0].mxu0 %v9042
      %v9218 = vpop.f32.mrb[0].mxu0
      %v9219 = vadd.f32 0.0, %v9218
      %v9220 = vpop.f32.mrb[0].mxu0
      %9221 = vmatprep.mubr.f32.mxu0 0.0
      %9222 = vmatmul.mubr.f32.gmra.mrb[0].mxu0 %v9045
      %v9223 = vpop.f32.mrb[0].mxu0
      %v9224 = vadd.f32 0.0, %v9223
      %v9225 = vpop.f32.mrb[0].mxu0
      %9226 = vmatprep.mubr.f32.mxu0 0.0
      %9227 = vmatmul.mubr.f32.gmra.mrb[0].mxu0 %v9048
      %v9228 = vpop.f32.mrb[0].mxu0
      %v9229 = vadd.f32 0.0, %v9228
      %v9230 = vpop.f32.mrb[0].mxu0
      %9231 = vmatprep.mubr.f32.mxu0 0.0
      %9232 = vmatmul.mubr.f32.gmra.mrb[0].mxu0 %v9051
      %v9233 = vpop.f32.mrb[0].mxu0
      %v9234 = vadd.f32 0.0, %v9233
      %v9235 = vpop.f32.mrb[0].mxu0
      %9236 = vmatprep.mubr.f32.mxu0 0.0
      %9237 = vmatmul.mubr.f32.gmra.mrb[0].mxu0 %v9054
      %v9238 = vpop.f32.mrb[0].mxu0
      %v9239 = vadd.f32 0.0, %v9238
      %v9240 = vpop.f32.mrb[0].mxu0
      %9241 = vmatprep.mubr.f32.mxu0 0.0
      %9242 = vmatmul.mubr.f32.gmra.mrb[0].mxu0 %v9057
      %v9243 = vpop.f32.mrb[0].mxu0
      %v9244 = vadd.f32 0.0, %v9243
      %v9245 = vpop.f32.mrb[0].mxu0
      %9246 = vmatprep.mubr.f32.mxu0 0.0
      %9247 = vmatmul.mubr.f32.gmra.mrb[0].mxu0 %v9060
      %v9248 = vpop.f32.mrb[0].mxu0
      %v9249 = vadd.f32 0.0, %v9248
      %v9250 = vpop.f32.mrb[0].mxu0
      %9251 = vmatprep.mubr.f32.mxu0 0.0
      %9252 = vmatmul.mubr.f32.gmra.mrb[0].mxu0 %v9063
      %v9253 = vpop.f32.mrb[0].mxu0
      %v9254 = vadd.f32 0.0, %v9253
      %v9255 = vpop.f32.mrb[0].mxu0
      %9256 = vmatprep.mubr.f32.mxu0 0.0
      %9257 = vmatmul.mubr.f32.gmra.mrb[0].mxu0 %v9066
      %v9258 = vpop.f32.mrb[0].mxu0
      %v9259 = vadd.f32 0.0, %v9258
      %v9260 = vpop.f32.mrb[0].mxu0
      %9261 = vmatprep.mubr.f32.mxu0 0.0
      %9262 = vmatmul.mubr.f32.gmra.mrb[0].mxu0 %v9069
      %v9263 = vpop.f32.mrb[0].mxu0
      %v9264 = vadd.f32 0.0, %v9263
      %v9265 = vpop.f32.mrb[0].mxu0
      %9266 = vmatprep.mubr.f32.mxu0 0.0
      %9267 = vmatmul.mubr.f32.gmra.mrb[0].mxu0 %v9072
      %v9268 = vpop.f32.mrb[0].mxu0
      %v9269 = vadd.f32 0.0, %v9268
      %v9270 = vpop.f32.mrb[0].mxu0
      %9271 = vmatprep.mubr.f32.mxu0 0.0
      %9272 = vmatmul.mubr.f32.gmra.mrb[0].mxu0 %v9075
      %v9273 = vpop.f32.mrb[0].mxu0
      %v9274 = vadd.f32 0.0, %v9273
      %v9275 = vpop.f32.mrb[0].mxu0
      %9276 = vmatprep.mubr.f32.mxu0 0.0
      %9277 = vmatmul.mubr.f32.gmra.mrb[0].mxu0 %v9078
      %v9278 = vpop.f32.mrb[0].mxu0
      %v9279 = vadd.f32 0.0, %v9278
      %v9280 = vpop.f32.mrb[0].mxu0
      %9281 = vmatprep.mubr.f32.mxu0 0.0
      %9282 = vmatmul.mubr.f32.gmra.mrb[0].mxu0 %v9081
      %v9283 = vpop.f32.mrb[0].mxu0
      %v9284 = vadd.f32 0.0, %v9283
      %v9285 = vpop.f32.mrb[0].mxu0
      %9286 = vmatprep.mubr.f32.mxu0 0.0
      %9287 = vmatmul.mubr.f32.gmra.mrb[0].mxu0 %v9084
      %v9288 = vpop.f32.mrb[0].mxu0
      %v9289 = vadd.f32 0.0, %v9288
      %v9290 = vpop.f32.mrb[0].mxu0
      %9291 = vmatprep.mubr.f32.mxu0 0.0
      %9292 = vmatmul.mubr.f32.gmra.mrb[0].mxu0 %v9087
      %v9293 = vpop.f32.mrb[0].mxu0
      %v9294 = vadd.f32 0.0, %v9293
      %v9295 = vpop.f32.mrb[0].mxu0
      %9296 = vmatprep.mubr.f32.mxu0 0.0
      %9297 = vmatmul.mubr.f32.gmra.mrb[0].mxu0 %v9090
      %v9298 = vpop.f32.mrb[0].mxu0
      %v9299 = vadd.f32 0.0, %v9298
      %v9300 = vpop.f32.mrb[0].mxu0
      %9301 = vmatprep.mubr.f32.mxu0 0.0
      %9302 = vmatmul.mubr.f32.gmra.mrb[0].mxu0 %v9093
      %v9303 = vpop.f32.mrb[0].mxu0
      %v9304 = vadd.f32 0.0, %v9303
      %v9305 = vpop.f32.mrb[0].mxu0
      %9306 = vmatprep.mubr.f32.mxu0 0.0
      %9307 = vmatmul.mubr.f32.gmra.mrb[0].mxu0 %v9096
      %v9308 = vpop.f32.mrb[0].mxu0
      %v9309 = vadd.f32 0.0, %v9308
      %v9310 = vpop.f32.mrb[0].mxu0
      %9311 = vmatprep.mubr.f32.mxu0 0.0
      %9312 = vmatmul.mubr.f32.gmra.mrb[0].mxu0 %v9099
      %v9313 = vpop.f32.mrb[0].mxu0
      %v9314 = vadd.f32 0.0, %v9313
      %v9315 = vpop.f32.mrb[0].mxu0
      %9316 = vmatprep.mubr.f32.mxu0 0.0
      %9317 = vmatmul.mubr.f32.gmra.mrb[0].mxu0 %v9102
      %v9318 = vpop.f32.mrb[0].mxu0
      %v9319 = vadd.f32 0.0, %v9318
      %v9320 = vpop.f32.mrb[0].mxu0
      %9321 = vmatprep.mubr.f32.mxu0 0.0
      %9322 = vmatmul.mubr.f32.gmra.mrb[0].mxu0 %v9105
      %v9323 = vpop.f32.mrb[0].mxu0
      %v9324 = vadd.f32 0.0, %v9323
      %v9325 = vpop.f32.mrb[0].mxu0
      %9326 = vmatprep.mubr.f32.mxu0 0.0
      %9327 = vmatmul.mubr.f32.gmra.mrb[0].mxu0 %v9108
      %v9328 = vpop.f32.mrb[0].mxu0
      %v9329 = vadd.f32 0.0, %v9328
      %v9330 = vpop.f32.mrb[0].mxu0
      %9331 = vmatprep.mubr.f32.mxu0 0.0
      %9332 = vmatmul.mubr.f32.gmra.mrb[0].mxu0 %v9111
      %v9333 = vpop.f32.mrb[0].mxu0
      %v9334 = vadd.f32 0.0, %v9333
      %v9335 = vpop.f32.mrb[0].mxu0
      %9336 = vmatprep.mubr.f32.mxu0 0.0
      %9337 = vmatmul.mubr.f32.gmra.mrb[0].mxu0 %v9114
      %v9338 = vpop.f32.mrb[0].mxu0
      %v9339 = vadd.f32 0.0, %v9338
      %v9340 = vpop.f32.mrb[0].mxu0
      %9341 = vmatprep.mubr.f32.mxu0 0.0
      %9342 = vmatmul.mubr.f32.gmra.mrb[0].mxu0 %v9117
      %v9343 = vpop.f32.mrb[0].mxu0
      %v9344 = vadd.f32 0.0, %v9343
      %v9345 = vpop.f32.mrb[0].mxu0
      %9346 = vmatprep.mubr.f32.mxu0 0.0
      %9347 = vmatmul.mubr.f32.gmra.mrb[0].mxu0 %v9120
      %v9348 = vpop.f32.mrb[0].mxu0
      %v9349 = vadd.f32 0.0, %v9348
      %v9350 = vpop.f32.mrb[0].mxu0
      %9351 = vmatprep.mubr.f32.mxu0 0.0
      %9352 = vmatmul.mubr.f32.gmra.mrb[0].mxu0 %v9123
      %v9353 = vpop.f32.mrb[0].mxu0
      %v9354 = vadd.f32 0.0, %v9353
      %v9355 = vpop.f32.mrb[0].mxu0
      %9356 = vmatprep.mubr.f32.mxu0 0.0
      %9357 = vmatmul.mubr.f32.gmra.mrb[0].mxu0 %v9126
      %v9358 = vpop.f32.mrb[0].mxu0
      %v9359 = vadd.f32 0.0, %v9358
      %v9360 = vpop.f32.mrb[0].mxu0
      %9361 = vmatprep.mubr.f32.mxu0 0.0
      %9362 = vmatmul.mubr.f32.gmra.mrb[0].mxu0 %v9129
      %v9363 = vpop.f32.mrb[0].mxu0
      %v9364 = vadd.f32 0.0, %v9363
      %v9365 = vpop.f32.mrb[0].mxu0
      %9366 = vmatprep.mubr.f32.mxu0 0.0
      %9367 = vmatmul.mubr.f32.gmra.mrb[0].mxu0 %v9132
      %v9368 = vpop.f32.mrb[0].mxu0
      %v9369 = vadd.f32 0.0, %v9368
      %v9370 = vpop.f32.mrb[0].mxu0
      %9371 = vmatprep.mubr.f32.mxu0 0.0
      %9372 = vmatmul.mubr.f32.gmra.mrb[0].mxu0 %v9135
      %v9373 = vpop.f32.mrb[0].mxu0
      %v9374 = vadd.f32 0.0, %v9373
      %v9375 = vpop.f32.mrb[0].mxu0
      %9376 = vmatprep.mubr.f32.mxu0 0.0
      %9377 = vmatmul.mubr.f32.gmra.mrb[0].mxu0 %v9138
      %v9378 = vpop.f32.mrb[0].mxu0
      %v9379 = vadd.f32 0.0, %v9378
      %v9380 = vpop.f32.mrb[0].mxu0
      %9381 = vmatprep.mubr.f32.mxu0 0.0
      %9382 = vmatmul.mubr.f32.gmra.mrb[0].mxu0 %v9141
      %v9383 = vpop.f32.mrb[0].mxu0
      %v9384 = vadd.f32 0.0, %v9383
      %v9385 = vpop.f32.mrb[0].mxu0
      %9386 = vmatprep.mubr.f32.mxu0 0.0
      %9387 = vmatmul.mubr.f32.gmra.mrb[0].mxu0 %v9144
      %v9388 = vpop.f32.mrb[0].mxu0
      %v9389 = vadd.f32 0.0, %v9388
      %v9390 = vpop.f32.mrb[0].mxu0
      %9391 = vmatprep.mubr.f32.mxu0 0.0
      %9392 = vmatmul.mubr.f32.gmra.mrb[0].mxu0 %v9147
      %v9393 = vpop.f32.mrb[0].mxu0
      %v9394 = vadd.f32 0.0, %v9393
      %v9395 = vpop.f32.mrb[0].mxu0
      %9396 = vdwg.mxu0
      %v9397 = vadd.f32 %v8967, %v9219
      %v9398 = vadd.f32 %v8968, %v9224
      %v9399 = vadd.f32 %v8969, %v9229
      %v9400 = vadd.f32 %v8970, %v9234
      %v9401 = vadd.f32 %v8971, %v9239
      %v9402 = vadd.f32 %v8972, %v9244
      %v9403 = vadd.f32 %v8973, %v9249
      %v9404 = vadd.f32 %v8974, %v9254
      %v9405 = vadd.f32 %v8975, %v9259
      %v9406 = vadd.f32 %v8976, %v9264
      %v9407 = vadd.f32 %v8977, %v9269
      %v9408 = vadd.f32 %v8978, %v9274
      %v9409 = vadd.f32 %v8979, %v9279
      %v9410 = vadd.f32 %v8980, %v9284
      %v9411 = vadd.f32 %v8981, %v9289
      %v9412 = vadd.f32 %v8982, %v9294
      %v9413 = vadd.f32 %v8983, %v9299
      %v9414 = vadd.f32 %v8984, %v9304
      %v9415 = vadd.f32 %v8985, %v9309
      %v9416 = vadd.f32 %v8986, %v9314
      %v9417 = vadd.f32 %v8987, %v9319
      %v9418 = vadd.f32 %v8988, %v9324
      %v9419 = vadd.f32 %v8989, %v9329
      %v9420 = vadd.f32 %v8990, %v9334
      %v9421 = vadd.f32 %v8991, %v9339
      %v9422 = vadd.f32 %v8992, %v9344
      %v9423 = vadd.f32 %v8993, %v9349
      %v9424 = vadd.f32 %v8994, %v9354
      %v9425 = vadd.f32 %v8995, %v9359
      %v9426 = vadd.f32 %v8996, %v9364
      %v9427 = vadd.f32 %v8997, %v9369
      %v9428 = vadd.f32 %v8998, %v9374
      %v9429 = vadd.f32 %v8999, %v9379
      %v9430 = vadd.f32 %v9000, %v9384
      %v9431 = vadd.f32 %v9001, %v9389
      %v9432 = vadd.f32 %v9002, %v9394
      %v9433 = vld [vmem:[#allocation3 + $0x2b] sm:$0xff]
      %v9434 = vld [vmem:[#allocation3 + $0x33] sm:$0xff]
      %v9435 = vld [vmem:[#allocation3 + $0x3b] sm:$0xff]
      %v9436 = vld [vmem:[#allocation3 + $0x43] sm:$0xff]
      %v9437 = vld [vmem:[#allocation3 + $0x4b] sm:$0xff]
      %v9438 = vld [vmem:[#allocation3 + $0x53] sm:$0xff]
      %v9439 = vld [vmem:[#allocation3 + $0x5b] sm:$0xff]
      %v9440 = vld [vmem:[#allocation3 + $0x63] sm:$0xff]
      %v9441 = vld [vmem:[#allocation3 + $0x6b] sm:$0xff]
      %v9442 = vld [vmem:[#allocation3 + $0x73] sm:$0xff]
      %v9443 = vld [vmem:[#allocation3 + $0x7b] sm:$0xff]
      %v9444 = vld [vmem:[#allocation3 + $0x83] sm:$0xff]
      %v9445 = vld [vmem:[#allocation3 + $0x8b] sm:$0xff]
      %v9446 = vld [vmem:[#allocation3 + $0x93] sm:$0xff]
      %v9447 = vld [vmem:[#allocation3 + $0x9b] sm:$0xff]
      %v9448 = vld [vmem:[#allocation3 + $0xa3] sm:$0xff]
      %v9449 = vld [vmem:[#allocation3 + $0xab] sm:$0xff]
      %v9450 = vld [vmem:[#allocation3 + $0xb3] sm:$0xff]
      %v9451 = vld [vmem:[#allocation3 + $0xbb] sm:$0xff]
      %v9452 = vld [vmem:[#allocation3 + $0xc3] sm:$0xff]
      %v9453 = vld [vmem:[#allocation3 + $0xcb] sm:$0xff]
      %v9454 = vld [vmem:[#allocation3 + $0xd3] sm:$0xff]
      %v9455 = vld [vmem:[#allocation3 + $0xdb] sm:$0xff]
      %v9456 = vld [vmem:[#allocation3 + $0xe3] sm:$0xff]
      %v9457 = vld [vmem:[#allocation3 + $0xeb] sm:$0xff]
      %v9458 = vld [vmem:[#allocation3 + $0xf3] sm:$0xff]
      %v9459 = vld [vmem:[#allocation3 + $0xfb] sm:$0xff]
      %v9460 = vld [vmem:[#allocation3 + $0x103] sm:$0xff]
      %v9461 = vld [vmem:[#allocation3 + $0x10b] sm:$0xff]
      %v9462 = vld [vmem:[#allocation3 + $0x113] sm:$0xff]
      %v9463 = vld [vmem:[#allocation3 + $0x11b] sm:$0xff]
      %v9464 = vld [vmem:[#allocation3 + $0x123] sm:$0xff]
      %v9465 = vld [vmem:[#allocation3 + $0x12b] sm:$0xff]
      %v9466 = vld [vmem:[#allocation3 + $0x133] sm:$0xff]
      %v9467 = vld [vmem:[#allocation3 + $0x13b] sm:$0xff]
      %v9468 = vld [vmem:[#allocation3 + $0x143] sm:$0xff]
      %s9469 = scalar_lea.vmem %s8, 32
      %v9470 = vld [vmem:[%s9469] sm:$0xf]
      %v9472 = vsel %vm1025, %v9433, 0
      %v9475 = vsel %vm1025, %v9434, 0
      %v9478 = vsel %vm1025, %v9435, 0
      %v9481 = vsel %vm1025, %v9436, 0
      %v9484 = vsel %vm1025, %v9437, 0
      %v9487 = vsel %vm1025, %v9438, 0
      %v9490 = vsel %vm1025, %v9439, 0
      %v9493 = vsel %vm1025, %v9440, 0
      %v9496 = vsel %vm1025, %v9441, 0
      %v9499 = vsel %vm1025, %v9442, 0
      %v9502 = vsel %vm1025, %v9443, 0
      %v9505 = vsel %vm1025, %v9444, 0
      %v9508 = vsel %vm1025, %v9445, 0
      %v9511 = vsel %vm1025, %v9446, 0
      %v9514 = vsel %vm1025, %v9447, 0
      %v9517 = vsel %vm1025, %v9448, 0
      %v9520 = vsel %vm1025, %v9449, 0
      %v9523 = vsel %vm1025, %v9450, 0
      %v9526 = vsel %vm1025, %v9451, 0
      %v9529 = vsel %vm1025, %v9452, 0
      %v9532 = vsel %vm1025, %v9453, 0
      %v9535 = vsel %vm1025, %v9454, 0
      %v9538 = vsel %vm1025, %v9455, 0
      %v9541 = vsel %vm1025, %v9456, 0
      %v9544 = vsel %vm1025, %v9457, 0
      %v9547 = vsel %vm1025, %v9458, 0
      %v9550 = vsel %vm1025, %v9459, 0
      %v9553 = vsel %vm1025, %v9460, 0
      %v9556 = vsel %vm1025, %v9461, 0
      %v9559 = vsel %vm1025, %v9462, 0
      %v9562 = vsel %vm1025, %v9463, 0
      %v9565 = vsel %vm1025, %v9464, 0
      %v9568 = vsel %vm1025, %v9465, 0
      %v9571 = vsel %vm1025, %v9466, 0
      %v9574 = vsel %vm1025, %v9467, 0
      %v9577 = vsel %vm1025, %v9468, 0
      %v9580 = vsel %vm1287, %v9470, 0
      %9582 = vmatprep.subr.mxu0 0.0
      %9583 = vmatpush1.msra.mxu0 %v9580
      %9584 = vmatprep.subr.mxu0 0.0
      %9585 = vmatpush1.msra.mxu0 0.0
      %9586 = vmatprep.subr.mxu0 0.0
      %9587 = vmatpush1.msra.mxu0 0.0
      %9588 = vmatprep.subr.mxu0 0.0
      %9589 = vmatpush1.msra.mxu0 0.0
      %9590 = vmatprep.subr.mxu0 0.0
      %9591 = vmatpush1.msra.mxu0 0.0
      %9592 = vmatprep.subr.mxu0 0.0
      %9593 = vmatpush1.msra.mxu0 0.0
      %9594 = vmatprep.subr.mxu0 0.0
      %9595 = vmatpush1.msra.mxu0 0.0
      %9596 = vmatprep.subr.mxu0 0.0
      %9597 = vmatpush1.msra.mxu0 0.0
      %9598 = vmatprep.subr.mxu0 0.0
      %9599 = vmatpush1.msra.mxu0 0.0
      %9600 = vmatprep.subr.mxu0 0.0
      %9601 = vmatpush1.msra.mxu0 0.0
      %9602 = vmatprep.subr.mxu0 0.0
      %9603 = vmatpush1.msra.mxu0 0.0
      %9604 = vmatprep.subr.mxu0 0.0
      %9605 = vmatpush1.msra.mxu0 0.0
      %9606 = vmatprep.subr.mxu0 0.0
      %9607 = vmatpush1.msra.mxu0 0.0
      %9608 = vmatprep.subr.mxu0 0.0
      %9609 = vmatpush1.msra.mxu0 0.0
      %9610 = vmatprep.subr.mxu0 0.0
      %9611 = vmatpush1.msra.mxu0 0.0
      %9612 = vmatprep.subr.mxu0 0.0
      %9613 = vmatpush1.msra.mxu0 0.0
      %9614 = vmatprep.subr.mxu0 0.0
      %9615 = vmatpush1.msra.mxu0 0.0
      %9616 = vmatprep.subr.mxu0 0.0
      %9617 = vmatpush1.msra.mxu0 0.0
      %9618 = vmatprep.subr.mxu0 0.0
      %9619 = vmatpush1.msra.mxu0 0.0
      %9620 = vmatprep.subr.mxu0 0.0
      %9621 = vmatpush1.msra.mxu0 0.0
      %9622 = vmatprep.subr.mxu0 0.0
      %9623 = vmatpush1.msra.mxu0 0.0
      %9624 = vmatprep.subr.mxu0 0.0
      %9625 = vmatpush1.msra.mxu0 0.0
      %9626 = vmatprep.subr.mxu0 0.0
      %9627 = vmatpush1.msra.mxu0 0.0
      %9628 = vmatprep.subr.mxu0 0.0
      %9629 = vmatpush1.msra.mxu0 0.0
      %9630 = vmatprep.subr.mxu0 0.0
      %9631 = vmatpush1.msra.mxu0 0.0
      %9632 = vmatprep.subr.mxu0 0.0
      %9633 = vmatpush1.msra.mxu0 0.0
      %9634 = vmatprep.subr.mxu0 0.0
      %9635 = vmatpush1.msra.mxu0 0.0
      %9636 = vmatprep.subr.mxu0 0.0
      %9637 = vmatpush1.msra.mxu0 0.0
      %9638 = vmatprep.subr.mxu0 0.0
      %9639 = vmatpush1.msra.mxu0 0.0
      %9640 = vmatprep.subr.mxu0 0.0
      %9641 = vmatpush1.msra.mxu0 0.0
      %9642 = vmatprep.subr.mxu0 0.0
      %9643 = vmatpush1.msra.mxu0 0.0
      %9644 = vmatprep.subr.mxu0 0.0
      %9645 = vmatpush1.msra.mxu0 0.0
      %9646 = vmatprep.mubr.f32.mxu0 0.0
      %9647 = vmatmul.mubr.f32.gmra.mrb[0].mxu0 %v9472
      %v9648 = vpop.f32.mrb[0].mxu0
      %v9649 = vadd.f32 0.0, %v9648
      %v9650 = vpop.f32.mrb[0].mxu0
      %9651 = vmatprep.mubr.f32.mxu0 0.0
      %9652 = vmatmul.mubr.f32.gmra.mrb[0].mxu0 %v9475
      %v9653 = vpop.f32.mrb[0].mxu0
      %v9654 = vadd.f32 0.0, %v9653
      %v9655 = vpop.f32.mrb[0].mxu0
      %9656 = vmatprep.mubr.f32.mxu0 0.0
      %9657 = vmatmul.mubr.f32.gmra.mrb[0].mxu0 %v9478
      %v9658 = vpop.f32.mrb[0].mxu0
      %v9659 = vadd.f32 0.0, %v9658
      %v9660 = vpop.f32.mrb[0].mxu0
      %9661 = vmatprep.mubr.f32.mxu0 0.0
      %9662 = vmatmul.mubr.f32.gmra.mrb[0].mxu0 %v9481
      %v9663 = vpop.f32.mrb[0].mxu0
      %v9664 = vadd.f32 0.0, %v9663
      %v9665 = vpop.f32.mrb[0].mxu0
      %9666 = vmatprep.mubr.f32.mxu0 0.0
      %9667 = vmatmul.mubr.f32.gmra.mrb[0].mxu0 %v9484
      %v9668 = vpop.f32.mrb[0].mxu0
      %v9669 = vadd.f32 0.0, %v9668
      %v9670 = vpop.f32.mrb[0].mxu0
      %9671 = vmatprep.mubr.f32.mxu0 0.0
      %9672 = vmatmul.mubr.f32.gmra.mrb[0].mxu0 %v9487
      %v9673 = vpop.f32.mrb[0].mxu0
      %v9674 = vadd.f32 0.0, %v9673
      %v9675 = vpop.f32.mrb[0].mxu0
      %9676 = vmatprep.mubr.f32.mxu0 0.0
      %9677 = vmatmul.mubr.f32.gmra.mrb[0].mxu0 %v9490
      %v9678 = vpop.f32.mrb[0].mxu0
      %v9679 = vadd.f32 0.0, %v9678
      %v9680 = vpop.f32.mrb[0].mxu0
      %9681 = vmatprep.mubr.f32.mxu0 0.0
      %9682 = vmatmul.mubr.f32.gmra.mrb[0].mxu0 %v9493
      %v9683 = vpop.f32.mrb[0].mxu0
      %v9684 = vadd.f32 0.0, %v9683
      %v9685 = vpop.f32.mrb[0].mxu0
      %9686 = vmatprep.mubr.f32.mxu0 0.0
      %9687 = vmatmul.mubr.f32.gmra.mrb[0].mxu0 %v9496
      %v9688 = vpop.f32.mrb[0].mxu0
      %v9689 = vadd.f32 0.0, %v9688
      %v9690 = vpop.f32.mrb[0].mxu0
      %9691 = vmatprep.mubr.f32.mxu0 0.0
      %9692 = vmatmul.mubr.f32.gmra.mrb[0].mxu0 %v9499
      %v9693 = vpop.f32.mrb[0].mxu0
      %v9694 = vadd.f32 0.0, %v9693
      %v9695 = vpop.f32.mrb[0].mxu0
      %9696 = vmatprep.mubr.f32.mxu0 0.0
      %9697 = vmatmul.mubr.f32.gmra.mrb[0].mxu0 %v9502
      %v9698 = vpop.f32.mrb[0].mxu0
      %v9699 = vadd.f32 0.0, %v9698
      %v9700 = vpop.f32.mrb[0].mxu0
      %9701 = vmatprep.mubr.f32.mxu0 0.0
      %9702 = vmatmul.mubr.f32.gmra.mrb[0].mxu0 %v9505
      %v9703 = vpop.f32.mrb[0].mxu0
      %v9704 = vadd.f32 0.0, %v9703
      %v9705 = vpop.f32.mrb[0].mxu0
      %9706 = vmatprep.mubr.f32.mxu0 0.0
      %9707 = vmatmul.mubr.f32.gmra.mrb[0].mxu0 %v9508
      %v9708 = vpop.f32.mrb[0].mxu0
      %v9709 = vadd.f32 0.0, %v9708
      %v9710 = vpop.f32.mrb[0].mxu0
      %9711 = vmatprep.mubr.f32.mxu0 0.0
      %9712 = vmatmul.mubr.f32.gmra.mrb[0].mxu0 %v9511
      %v9713 = vpop.f32.mrb[0].mxu0
      %v9714 = vadd.f32 0.0, %v9713
      %v9715 = vpop.f32.mrb[0].mxu0
      %9716 = vmatprep.mubr.f32.mxu0 0.0
      %9717 = vmatmul.mubr.f32.gmra.mrb[0].mxu0 %v9514
      %v9718 = vpop.f32.mrb[0].mxu0
      %v9719 = vadd.f32 0.0, %v9718
      %v9720 = vpop.f32.mrb[0].mxu0
      %9721 = vmatprep.mubr.f32.mxu0 0.0
      %9722 = vmatmul.mubr.f32.gmra.mrb[0].mxu0 %v9517
      %v9723 = vpop.f32.mrb[0].mxu0
      %v9724 = vadd.f32 0.0, %v9723
      %v9725 = vpop.f32.mrb[0].mxu0
      %9726 = vmatprep.mubr.f32.mxu0 0.0
      %9727 = vmatmul.mubr.f32.gmra.mrb[0].mxu0 %v9520
      %v9728 = vpop.f32.mrb[0].mxu0
      %v9729 = vadd.f32 0.0, %v9728
      %v9730 = vpop.f32.mrb[0].mxu0
      %9731 = vmatprep.mubr.f32.mxu0 0.0
      %9732 = vmatmul.mubr.f32.gmra.mrb[0].mxu0 %v9523
      %v9733 = vpop.f32.mrb[0].mxu0
      %v9734 = vadd.f32 0.0, %v9733
      %v9735 = vpop.f32.mrb[0].mxu0
      %9736 = vmatprep.mubr.f32.mxu0 0.0
      %9737 = vmatmul.mubr.f32.gmra.mrb[0].mxu0 %v9526
      %v9738 = vpop.f32.mrb[0].mxu0
      %v9739 = vadd.f32 0.0, %v9738
      %v9740 = vpop.f32.mrb[0].mxu0
      %9741 = vmatprep.mubr.f32.mxu0 0.0
      %9742 = vmatmul.mubr.f32.gmra.mrb[0].mxu0 %v9529
      %v9743 = vpop.f32.mrb[0].mxu0
      %v9744 = vadd.f32 0.0, %v9743
      %v9745 = vpop.f32.mrb[0].mxu0
      %9746 = vmatprep.mubr.f32.mxu0 0.0
      %9747 = vmatmul.mubr.f32.gmra.mrb[0].mxu0 %v9532
      %v9748 = vpop.f32.mrb[0].mxu0
      %v9749 = vadd.f32 0.0, %v9748
      %v9750 = vpop.f32.mrb[0].mxu0
      %9751 = vmatprep.mubr.f32.mxu0 0.0
      %9752 = vmatmul.mubr.f32.gmra.mrb[0].mxu0 %v9535
      %v9753 = vpop.f32.mrb[0].mxu0
      %v9754 = vadd.f32 0.0, %v9753
      %v9755 = vpop.f32.mrb[0].mxu0
      %9756 = vmatprep.mubr.f32.mxu0 0.0
      %9757 = vmatmul.mubr.f32.gmra.mrb[0].mxu0 %v9538
      %v9758 = vpop.f32.mrb[0].mxu0
      %v9759 = vadd.f32 0.0, %v9758
      %v9760 = vpop.f32.mrb[0].mxu0
      %9761 = vmatprep.mubr.f32.mxu0 0.0
      %9762 = vmatmul.mubr.f32.gmra.mrb[0].mxu0 %v9541
      %v9763 = vpop.f32.mrb[0].mxu0
      %v9764 = vadd.f32 0.0, %v9763
      %v9765 = vpop.f32.mrb[0].mxu0
      %9766 = vmatprep.mubr.f32.mxu0 0.0
      %9767 = vmatmul.mubr.f32.gmra.mrb[0].mxu0 %v9544
      %v9768 = vpop.f32.mrb[0].mxu0
      %v9769 = vadd.f32 0.0, %v9768
      %v9770 = vpop.f32.mrb[0].mxu0
      %9771 = vmatprep.mubr.f32.mxu0 0.0
      %9772 = vmatmul.mubr.f32.gmra.mrb[0].mxu0 %v9547
      %v9773 = vpop.f32.mrb[0].mxu0
      %v9774 = vadd.f32 0.0, %v9773
      %v9775 = vpop.f32.mrb[0].mxu0
      %9776 = vmatprep.mubr.f32.mxu0 0.0
      %9777 = vmatmul.mubr.f32.gmra.mrb[0].mxu0 %v9550
      %v9778 = vpop.f32.mrb[0].mxu0
      %v9779 = vadd.f32 0.0, %v9778
      %v9780 = vpop.f32.mrb[0].mxu0
      %9781 = vmatprep.mubr.f32.mxu0 0.0
      %9782 = vmatmul.mubr.f32.gmra.mrb[0].mxu0 %v9553
      %v9783 = vpop.f32.mrb[0].mxu0
      %v9784 = vadd.f32 0.0, %v9783
      %v9785 = vpop.f32.mrb[0].mxu0
      %9786 = vmatprep.mubr.f32.mxu0 0.0
      %9787 = vmatmul.mubr.f32.gmra.mrb[0].mxu0 %v9556
      %v9788 = vpop.f32.mrb[0].mxu0
      %v9789 = vadd.f32 0.0, %v9788
      %v9790 = vpop.f32.mrb[0].mxu0
      %9791 = vmatprep.mubr.f32.mxu0 0.0
      %9792 = vmatmul.mubr.f32.gmra.mrb[0].mxu0 %v9559
      %v9793 = vpop.f32.mrb[0].mxu0
      %v9794 = vadd.f32 0.0, %v9793
      %v9795 = vpop.f32.mrb[0].mxu0
      %9796 = vmatprep.mubr.f32.mxu0 0.0
      %9797 = vmatmul.mubr.f32.gmra.mrb[0].mxu0 %v9562
      %v9798 = vpop.f32.mrb[0].mxu0
      %v9799 = vadd.f32 0.0, %v9798
      %v9800 = vpop.f32.mrb[0].mxu0
      %9801 = vmatprep.mubr.f32.mxu0 0.0
      %9802 = vmatmul.mubr.f32.gmra.mrb[0].mxu0 %v9565
      %v9803 = vpop.f32.mrb[0].mxu0
      %v9804 = vadd.f32 0.0, %v9803
      %v9805 = vpop.f32.mrb[0].mxu0
      %9806 = vmatprep.mubr.f32.mxu0 0.0
      %9807 = vmatmul.mubr.f32.gmra.mrb[0].mxu0 %v9568
      %v9808 = vpop.f32.mrb[0].mxu0
      %v9809 = vadd.f32 0.0, %v9808
      %v9810 = vpop.f32.mrb[0].mxu0
      %9811 = vmatprep.mubr.f32.mxu0 0.0
      %9812 = vmatmul.mubr.f32.gmra.mrb[0].mxu0 %v9571
      %v9813 = vpop.f32.mrb[0].mxu0
      %v9814 = vadd.f32 0.0, %v9813
      %v9815 = vpop.f32.mrb[0].mxu0
      %9816 = vmatprep.mubr.f32.mxu0 0.0
      %9817 = vmatmul.mubr.f32.gmra.mrb[0].mxu0 %v9574
      %v9818 = vpop.f32.mrb[0].mxu0
      %v9819 = vadd.f32 0.0, %v9818
      %v9820 = vpop.f32.mrb[0].mxu0
      %9821 = vmatprep.mubr.f32.mxu0 0.0
      %9822 = vmatmul.mubr.f32.gmra.mrb[0].mxu0 %v9577
      %v9823 = vpop.f32.mrb[0].mxu0
      %v9824 = vadd.f32 0.0, %v9823
      %v9825 = vpop.f32.mrb[0].mxu0
      %9826 = vdwg.mxu0
      %v9827 = vadd.f32 %v9397, %v9649
      %v9828 = vadd.f32 %v9398, %v9654
      %v9829 = vadd.f32 %v9399, %v9659
      %v9830 = vadd.f32 %v9400, %v9664
      %v9831 = vadd.f32 %v9401, %v9669
      %v9832 = vadd.f32 %v9402, %v9674
      %v9833 = vadd.f32 %v9403, %v9679
      %v9834 = vadd.f32 %v9404, %v9684
      %v9835 = vadd.f32 %v9405, %v9689
      %v9836 = vadd.f32 %v9406, %v9694
      %v9837 = vadd.f32 %v9407, %v9699
      %v9838 = vadd.f32 %v9408, %v9704
      %v9839 = vadd.f32 %v9409, %v9709
      %v9840 = vadd.f32 %v9410, %v9714
      %v9841 = vadd.f32 %v9411, %v9719
      %v9842 = vadd.f32 %v9412, %v9724
      %v9843 = vadd.f32 %v9413, %v9729
      %v9844 = vadd.f32 %v9414, %v9734
      %v9845 = vadd.f32 %v9415, %v9739
      %v9846 = vadd.f32 %v9416, %v9744
      %v9847 = vadd.f32 %v9417, %v9749
      %v9848 = vadd.f32 %v9418, %v9754
      %v9849 = vadd.f32 %v9419, %v9759
      %v9850 = vadd.f32 %v9420, %v9764
      %v9851 = vadd.f32 %v9421, %v9769
      %v9852 = vadd.f32 %v9422, %v9774
      %v9853 = vadd.f32 %v9423, %v9779
      %v9854 = vadd.f32 %v9424, %v9784
      %v9855 = vadd.f32 %v9425, %v9789
      %v9856 = vadd.f32 %v9426, %v9794
      %v9857 = vadd.f32 %v9427, %v9799
      %v9858 = vadd.f32 %v9428, %v9804
      %v9859 = vadd.f32 %v9429, %v9809
      %v9860 = vadd.f32 %v9430, %v9814
      %v9861 = vadd.f32 %v9431, %v9819
      %v9862 = vadd.f32 %v9432, %v9824
      %v9863 = vld [vmem:[%s9] sm:$0x1]
      %v9865 = vlaneseq
      %v9866 = vshrl.u32 %v9865, 7
      %v9867 = vsub.s32 0, %v9866
      %v9868 = vrot.slane %v9863, %v9867
      %v9870 = vadd.f32 %v9827, %v9868
      %v9871 = vadd.f32 %v9828, %v9868
      %v9872 = vadd.f32 %v9829, %v9868
      %v9873 = vadd.f32 %v9830, %v9868
      %v9874 = vadd.f32 %v9831, %v9868
      %v9875 = vadd.f32 %v9832, %v9868
      %v9876 = vadd.f32 %v9833, %v9868
      %v9877 = vadd.f32 %v9834, %v9868
      %v9878 = vadd.f32 %v9835, %v9868
      %v9879 = vadd.f32 %v9836, %v9868
      %v9880 = vadd.f32 %v9837, %v9868
      %v9881 = vadd.f32 %v9838, %v9868
      %v9882 = vadd.f32 %v9839, %v9868
      %v9883 = vadd.f32 %v9840, %v9868
      %v9884 = vadd.f32 %v9841, %v9868
      %v9885 = vadd.f32 %v9842, %v9868
      %v9886 = vadd.f32 %v9843, %v9868
      %v9887 = vadd.f32 %v9844, %v9868
      %v9888 = vadd.f32 %v9845, %v9868
      %v9889 = vadd.f32 %v9846, %v9868
      %v9890 = vadd.f32 %v9847, %v9868
      %v9891 = vadd.f32 %v9848, %v9868
      %v9892 = vadd.f32 %v9849, %v9868
      %v9893 = vadd.f32 %v9850, %v9868
      %v9894 = vadd.f32 %v9851, %v9868
      %v9895 = vadd.f32 %v9852, %v9868
      %v9896 = vadd.f32 %v9853, %v9868
      %v9897 = vadd.f32 %v9854, %v9868
      %v9898 = vadd.f32 %v9855, %v9868
      %v9899 = vadd.f32 %v9856, %v9868
      %v9900 = vadd.f32 %v9857, %v9868
      %v9901 = vadd.f32 %v9858, %v9868
      %v9902 = vadd.f32 %v9859, %v9868
      %v9903 = vadd.f32 %v9860, %v9868
      %v9904 = vadd.f32 %v9861, %v9868
      %v9905 = vadd.f32 %v9862, %v9868
      %v9906 = vld [vmem:[%s579] sm:$0xff]
      %v9907 = vld [vmem:[%s579 + $0x8] sm:$0xff]
      %v9908 = vld [vmem:[%s579 + $0x10] sm:$0xff]
      %v9909 = vld [vmem:[%s579 + $0x18] sm:$0xff]
      %v9910 = vld [vmem:[%s579 + $0x20] sm:$0xff]
      %v9911 = vld [vmem:[%s579 + $0x28] sm:$0xff]
      %v9912 = vld [vmem:[%s579 + $0x30] sm:$0xff]
      %v9913 = vld [vmem:[%s579 + $0x38] sm:$0xff]
      %v9914 = vld [vmem:[%s579 + $0x40] sm:$0xff]
      %v9915 = vld [vmem:[%s579 + $0x48] sm:$0xff]
      %v9916 = vld [vmem:[%s579 + $0x50] sm:$0xff]
      %v9917 = vld [vmem:[%s579 + $0x58] sm:$0xff]
      %v9918 = vld [vmem:[%s579 + $0x60] sm:$0xff]
      %v9919 = vld [vmem:[%s579 + $0x68] sm:$0xff]
      %v9920 = vld [vmem:[%s579 + $0x70] sm:$0xff]
      %v9921 = vld [vmem:[%s579 + $0x78] sm:$0xff]
      %v9922 = vld [vmem:[%s579 + $0x80] sm:$0xff]
      %v9923 = vld [vmem:[%s579 + $0x88] sm:$0xff]
      %v9924 = vld [vmem:[%s579 + $0x90] sm:$0xff]
      %v9925 = vld [vmem:[%s579 + $0x98] sm:$0xff]
      %v9926 = vld [vmem:[%s579 + $0xa0] sm:$0xff]
      %v9927 = vld [vmem:[%s579 + $0xa8] sm:$0xff]
      %v9928 = vld [vmem:[%s579 + $0xb0] sm:$0xff]
      %v9929 = vld [vmem:[%s579 + $0xb8] sm:$0xff]
      %v9930 = vld [vmem:[%s579 + $0xc0] sm:$0xff]
      %v9931 = vld [vmem:[%s579 + $0xc8] sm:$0xff]
      %v9932 = vld [vmem:[%s579 + $0xd0] sm:$0xff]
      %v9933 = vld [vmem:[%s579 + $0xd8] sm:$0xff]
      %v9934 = vld [vmem:[%s579 + $0xe0] sm:$0xff]
      %v9935 = vld [vmem:[%s579 + $0xe8] sm:$0xff]
      %v9936 = vld [vmem:[%s579 + $0xf0] sm:$0xff]
      %v9937 = vld [vmem:[%s579 + $0xf8] sm:$0xff]
      %v9938 = vld [vmem:[%s579 + $0x100] sm:$0xff]
      %v9939 = vld [vmem:[%s579 + $0x108] sm:$0xff]
      %v9940 = vld [vmem:[%s579 + $0x110] sm:$0xff]
      %v9941 = vld [vmem:[%s579 + $0x118] sm:$0xff]
      %v9942 = vld [vmem:[%s11] sm:$0x1]
      %v9943 = vld [vmem:[%s582] sm:$0x1]
      %v9944 = vld [vmem:[%s585] sm:$0x1]
      %9946 = vset.pattern.permute.xlu0 0
      %9947 = vperm.xlu0 %9946, %v9906
      %v9948 = vpop.permute.xlu0 %9947
      %9951 = vset.pattern.permute.xlu0 0
      %9952 = vperm.xlu0 %9951, %v9907
      %v9953 = vpop.permute.xlu0 %9952
      %9956 = vset.pattern.permute.xlu0 0
      %9957 = vperm.xlu0 %9956, %v9908
      %v9958 = vpop.permute.xlu0 %9957
      %9961 = vset.pattern.permute.xlu0 0
      %9962 = vperm.xlu0 %9961, %v9909
      %v9963 = vpop.permute.xlu0 %9962
      %9966 = vset.pattern.permute.xlu0 0
      %9967 = vperm.xlu0 %9966, %v9910
      %v9968 = vpop.permute.xlu0 %9967
      %9971 = vset.pattern.permute.xlu0 0
      %9972 = vperm.xlu0 %9971, %v9911
      %v9973 = vpop.permute.xlu0 %9972
      %9976 = vset.pattern.permute.xlu0 0
      %9977 = vperm.xlu0 %9976, %v9912
      %v9978 = vpop.permute.xlu0 %9977
      %9981 = vset.pattern.permute.xlu0 0
      %9982 = vperm.xlu0 %9981, %v9913
      %v9983 = vpop.permute.xlu0 %9982
      %9986 = vset.pattern.permute.xlu0 0
      %9987 = vperm.xlu0 %9986, %v9914
      %v9988 = vpop.permute.xlu0 %9987
      %9991 = vset.pattern.permute.xlu0 0
      %9992 = vperm.xlu0 %9991, %v9915
      %v9993 = vpop.permute.xlu0 %9992
      %9996 = vset.pattern.permute.xlu0 0
      %9997 = vperm.xlu0 %9996, %v9916
      %v9998 = vpop.permute.xlu0 %9997
      %10001 = vset.pattern.permute.xlu0 0
      %10002 = vperm.xlu0 %10001, %v9917
      %v10003 = vpop.permute.xlu0 %10002
      %10006 = vset.pattern.permute.xlu0 0
      %10007 = vperm.xlu0 %10006, %v9918
      %v10008 = vpop.permute.xlu0 %10007
      %10011 = vset.pattern.permute.xlu0 0
      %10012 = vperm.xlu0 %10011, %v9919
      %v10013 = vpop.permute.xlu0 %10012
      %10016 = vset.pattern.permute.xlu0 0
      %10017 = vperm.xlu0 %10016, %v9920
      %v10018 = vpop.permute.xlu0 %10017
      %10021 = vset.pattern.permute.xlu0 0
      %10022 = vperm.xlu0 %10021, %v9921
      %v10023 = vpop.permute.xlu0 %10022
      %10026 = vset.pattern.permute.xlu0 0
      %10027 = vperm.xlu0 %10026, %v9922
      %v10028 = vpop.permute.xlu0 %10027
      %10031 = vset.pattern.permute.xlu0 0
      %10032 = vperm.xlu0 %10031, %v9923
      %v10033 = vpop.permute.xlu0 %10032
      %10036 = vset.pattern.permute.xlu0 0
      %10037 = vperm.xlu0 %10036, %v9924
      %v10038 = vpop.permute.xlu0 %10037
      %10041 = vset.pattern.permute.xlu0 0
      %10042 = vperm.xlu0 %10041, %v9925
      %v10043 = vpop.permute.xlu0 %10042
      %10046 = vset.pattern.permute.xlu0 0
      %10047 = vperm.xlu0 %10046, %v9926
      %v10048 = vpop.permute.xlu0 %10047
      %10051 = vset.pattern.permute.xlu0 0
      %10052 = vperm.xlu0 %10051, %v9927
      %v10053 = vpop.permute.xlu0 %10052
      %10056 = vset.pattern.permute.xlu0 0
      %10057 = vperm.xlu0 %10056, %v9928
      %v10058 = vpop.permute.xlu0 %10057
      %10061 = vset.pattern.permute.xlu0 0
      %10062 = vperm.xlu0 %10061, %v9929
      %v10063 = vpop.permute.xlu0 %10062
      %10066 = vset.pattern.permute.xlu0 0
      %10067 = vperm.xlu0 %10066, %v9930
      %v10068 = vpop.permute.xlu0 %10067
      %10071 = vset.pattern.permute.xlu0 0
      %10072 = vperm.xlu0 %10071, %v9931
      %v10073 = vpop.permute.xlu0 %10072
      %10076 = vset.pattern.permute.xlu0 0
      %10077 = vperm.xlu0 %10076, %v9932
      %v10078 = vpop.permute.xlu0 %10077
      %10081 = vset.pattern.permute.xlu0 0
      %10082 = vperm.xlu0 %10081, %v9933
      %v10083 = vpop.permute.xlu0 %10082
      %10086 = vset.pattern.permute.xlu0 0
      %10087 = vperm.xlu0 %10086, %v9934
      %v10088 = vpop.permute.xlu0 %10087
      %10091 = vset.pattern.permute.xlu0 0
      %10092 = vperm.xlu0 %10091, %v9935
      %v10093 = vpop.permute.xlu0 %10092
      %10096 = vset.pattern.permute.xlu0 0
      %10097 = vperm.xlu0 %10096, %v9936
      %v10098 = vpop.permute.xlu0 %10097
      %10101 = vset.pattern.permute.xlu0 0
      %10102 = vperm.xlu0 %10101, %v9937
      %v10103 = vpop.permute.xlu0 %10102
      %10106 = vset.pattern.permute.xlu0 0
      %10107 = vperm.xlu0 %10106, %v9938
      %v10108 = vpop.permute.xlu0 %10107
      %10111 = vset.pattern.permute.xlu0 0
      %10112 = vperm.xlu0 %10111, %v9939
      %v10113 = vpop.permute.xlu0 %10112
      %10116 = vset.pattern.permute.xlu0 0
      %10117 = vperm.xlu0 %10116, %v9940
      %v10118 = vpop.permute.xlu0 %10117
      %10121 = vset.pattern.permute.xlu0 0
      %10122 = vperm.xlu0 %10121, %v9941
      %v10123 = vpop.permute.xlu0 %10122
      %v10126 = vlaneseq
      %v10127 = vshrl.u32 %v10126, 7
      %v10128 = vsub.s32 0, %v10127
      %v10129 = vrot.slane %v9942, %v10128
      %v10131 = vmul.f32 %v9948, %v10129
      %v10132 = vmul.f32 %v9953, %v10129
      %v10133 = vmul.f32 %v9958, %v10129
      %v10134 = vmul.f32 %v9963, %v10129
      %v10135 = vmul.f32 %v9968, %v10129
      %v10136 = vmul.f32 %v9973, %v10129
      %v10137 = vmul.f32 %v9978, %v10129
      %v10138 = vmul.f32 %v9983, %v10129
      %v10139 = vmul.f32 %v9988, %v10129
      %v10140 = vmul.f32 %v9993, %v10129
      %v10141 = vmul.f32 %v9998, %v10129
      %v10142 = vmul.f32 %v10003, %v10129
      %v10143 = vmul.f32 %v10008, %v10129
      %v10144 = vmul.f32 %v10013, %v10129
      %v10145 = vmul.f32 %v10018, %v10129
      %v10146 = vmul.f32 %v10023, %v10129
      %v10147 = vmul.f32 %v10028, %v10129
      %v10148 = vmul.f32 %v10033, %v10129
      %v10149 = vmul.f32 %v10038, %v10129
      %v10150 = vmul.f32 %v10043, %v10129
      %v10151 = vmul.f32 %v10048, %v10129
      %v10152 = vmul.f32 %v10053, %v10129
      %v10153 = vmul.f32 %v10058, %v10129
      %v10154 = vmul.f32 %v10063, %v10129
      %v10155 = vmul.f32 %v10068, %v10129
      %v10156 = vmul.f32 %v10073, %v10129
      %v10157 = vmul.f32 %v10078, %v10129
      %v10158 = vmul.f32 %v10083, %v10129
      %v10159 = vmul.f32 %v10088, %v10129
      %v10160 = vmul.f32 %v10093, %v10129
      %v10161 = vmul.f32 %v10098, %v10129
      %v10162 = vmul.f32 %v10103, %v10129
      %v10163 = vmul.f32 %v10108, %v10129
      %v10164 = vmul.f32 %v10113, %v10129
      %v10165 = vmul.f32 %v10118, %v10129
      %v10166 = vmul.f32 %v10123, %v10129
      %v10167 = vadd.f32 %v9870, %v10131
      %v10168 = vadd.f32 %v9871, %v10132
      %v10169 = vadd.f32 %v9872, %v10133
      %v10170 = vadd.f32 %v9873, %v10134
      %v10171 = vadd.f32 %v9874, %v10135
      %v10172 = vadd.f32 %v9875, %v10136
      %v10173 = vadd.f32 %v9876, %v10137
      %v10174 = vadd.f32 %v9877, %v10138
      %v10175 = vadd.f32 %v9878, %v10139
      %v10176 = vadd.f32 %v9879, %v10140
      %v10177 = vadd.f32 %v9880, %v10141
      %v10178 = vadd.f32 %v9881, %v10142
      %v10179 = vadd.f32 %v9882, %v10143
      %v10180 = vadd.f32 %v9883, %v10144
      %v10181 = vadd.f32 %v9884, %v10145
      %v10182 = vadd.f32 %v9885, %v10146
      %v10183 = vadd.f32 %v9886, %v10147
      %v10184 = vadd.f32 %v9887, %v10148
      %v10185 = vadd.f32 %v9888, %v10149
      %v10186 = vadd.f32 %v9889, %v10150
      %v10187 = vadd.f32 %v9890, %v10151
      %v10188 = vadd.f32 %v9891, %v10152
      %v10189 = vadd.f32 %v9892, %v10153
      %v10190 = vadd.f32 %v9893, %v10154
      %v10191 = vadd.f32 %v9894, %v10155
      %v10192 = vadd.f32 %v9895, %v10156
      %v10193 = vadd.f32 %v9896, %v10157
      %v10194 = vadd.f32 %v9897, %v10158
      %v10195 = vadd.f32 %v9898, %v10159
      %v10196 = vadd.f32 %v9899, %v10160
      %v10197 = vadd.f32 %v9900, %v10161
      %v10198 = vadd.f32 %v9901, %v10162
      %v10199 = vadd.f32 %v9902, %v10163
      %v10200 = vadd.f32 %v9903, %v10164
      %v10201 = vadd.f32 %v9904, %v10165
      %v10202 = vadd.f32 %v9905, %v10166
      %v10203 = vmul.f32 %v10167, %v5245
      %v10204 = vmul.f32 %v10168, %v5250
      %v10205 = vmul.f32 %v10169, %v5255
      %v10206 = vmul.f32 %v10170, %v5260
      %v10207 = vmul.f32 %v10171, %v5265
      %v10208 = vmul.f32 %v10172, %v5270
      %v10209 = vmul.f32 %v10173, %v5275
      %v10210 = vmul.f32 %v10174, %v5280
      %v10211 = vmul.f32 %v10175, %v5285
      %v10212 = vmul.f32 %v10176, %v5290
      %v10213 = vmul.f32 %v10177, %v5295
      %v10214 = vmul.f32 %v10178, %v5300
      %v10215 = vmul.f32 %v10179, %v5305
      %v10216 = vmul.f32 %v10180, %v5310
      %v10217 = vmul.f32 %v10181, %v5315
      %v10218 = vmul.f32 %v10182, %v5320
      %v10219 = vmul.f32 %v10183, %v5325
      %v10220 = vmul.f32 %v10184, %v5330
      %v10221 = vmul.f32 %v10185, %v5335
      %v10222 = vmul.f32 %v10186, %v5340
      %v10223 = vmul.f32 %v10187, %v5345
      %v10224 = vmul.f32 %v10188, %v5350
      %v10225 = vmul.f32 %v10189, %v5355
      %v10226 = vmul.f32 %v10190, %v5360
      %v10227 = vmul.f32 %v10191, %v5365
      %v10228 = vmul.f32 %v10192, %v5370
      %v10229 = vmul.f32 %v10193, %v5375
      %v10230 = vmul.f32 %v10194, %v5380
      %v10231 = vmul.f32 %v10195, %v5385
      %v10232 = vmul.f32 %v10196, %v5390
      %v10233 = vmul.f32 %v10197, %v5395
      %v10234 = vmul.f32 %v10198, %v5400
      %v10235 = vmul.f32 %v10199, %v5405
      %v10236 = vmul.f32 %v10200, %v5410
      %v10237 = vmul.f32 %v10201, %v5415
      %v10238 = vmul.f32 %v10202, %v5420
      %v10239 = vsel %vm1025, %v10203, 0.0
      %v10240 = vsel %vm1025, %v10204, 0.0
      %v10241 = vadd.f32 %v10239, %v10240
      %v10242 = vsel %vm1025, %v10205, 0.0
      %v10243 = vadd.f32 %v10241, %v10242
      %v10244 = vsel %vm1025, %v10206, 0.0
      %v10245 = vadd.f32 %v10243, %v10244
      %v10246 = vsel %vm1025, %v10207, 0.0
      %v10247 = vadd.f32 %v10245, %v10246
      %v10248 = vsel %vm1025, %v10208, 0.0
      %v10249 = vadd.f32 %v10247, %v10248
      %v10250 = vsel %vm1025, %v10209, 0.0
      %v10251 = vadd.f32 %v10249, %v10250
      %v10252 = vsel %vm1025, %v10210, 0.0
      %v10253 = vadd.f32 %v10251, %v10252
      %v10254 = vsel %vm1025, %v10211, 0.0
      %v10255 = vadd.f32 %v10253, %v10254
      %v10256 = vsel %vm1025, %v10212, 0.0
      %v10257 = vadd.f32 %v10255, %v10256
      %v10258 = vsel %vm1025, %v10213, 0.0
      %v10259 = vadd.f32 %v10257, %v10258
      %v10260 = vsel %vm1025, %v10214, 0.0
      %v10261 = vadd.f32 %v10259, %v10260
      %v10262 = vsel %vm1025, %v10215, 0.0
      %v10263 = vadd.f32 %v10261, %v10262
      %v10264 = vsel %vm1025, %v10216, 0.0
      %v10265 = vadd.f32 %v10263, %v10264
      %v10266 = vsel %vm1025, %v10217, 0.0
      %v10267 = vadd.f32 %v10265, %v10266
      %v10268 = vsel %vm1025, %v10218, 0.0
      %v10269 = vadd.f32 %v10267, %v10268
      %v10270 = vsel %vm1025, %v10219, 0.0
      %v10271 = vadd.f32 %v10269, %v10270
      %v10272 = vsel %vm1025, %v10220, 0.0
      %v10273 = vadd.f32 %v10271, %v10272
      %v10274 = vsel %vm1025, %v10221, 0.0
      %v10275 = vadd.f32 %v10273, %v10274
      %v10276 = vsel %vm1025, %v10222, 0.0
      %v10277 = vadd.f32 %v10275, %v10276
      %v10278 = vsel %vm1025, %v10223, 0.0
      %v10279 = vadd.f32 %v10277, %v10278
      %v10280 = vsel %vm1025, %v10224, 0.0
      %v10281 = vadd.f32 %v10279, %v10280
      %v10282 = vsel %vm1025, %v10225, 0.0
      %v10283 = vadd.f32 %v10281, %v10282
      %v10284 = vsel %vm1025, %v10226, 0.0
      %v10285 = vadd.f32 %v10283, %v10284
      %v10286 = vsel %vm1025, %v10227, 0.0
      %v10287 = vadd.f32 %v10285, %v10286
      %v10288 = vsel %vm1025, %v10228, 0.0
      %v10289 = vadd.f32 %v10287, %v10288
      %v10290 = vsel %vm1025, %v10229, 0.0
      %v10291 = vadd.f32 %v10289, %v10290
      %v10292 = vsel %vm1025, %v10230, 0.0
      %v10293 = vadd.f32 %v10291, %v10292
      %v10294 = vsel %vm1025, %v10231, 0.0
      %v10295 = vadd.f32 %v10293, %v10294
      %v10296 = vsel %vm1025, %v10232, 0.0
      %v10297 = vadd.f32 %v10295, %v10296
      %v10298 = vsel %vm1025, %v10233, 0.0
      %v10299 = vadd.f32 %v10297, %v10298
      %v10300 = vsel %vm1025, %v10234, 0.0
      %v10301 = vadd.f32 %v10299, %v10300
      %v10302 = vsel %vm1025, %v10235, 0.0
      %v10303 = vadd.f32 %v10301, %v10302
      %v10304 = vsel %vm1025, %v10236, 0.0
      %v10305 = vadd.f32 %v10303, %v10304
      %v10306 = vsel %vm1025, %v10237, 0.0
      %v10307 = vadd.f32 %v10305, %v10306
      %v10308 = vsel %vm1025, %v10238, 0.0
      %v10309 = vadd.f32 %v10307, %v10308
      %v10310 = vrot.slane %v10309, 4
      %v10311 = vadd.f32 %v10309, %v10310
      %v10312 = vrot.slane %v10311, 2
      %v10313 = vadd.f32 %v10311, %v10312
      %v10314 = vrot.slane %v10313, 1
      %v10315 = vadd.f32 %v10313, %v10314
      %v10316 = vmul.f32 %v10315, 0.00390625
      %v10317 = vsub.f32 %v10167, %v10316
      %v10318 = vsub.f32 %v10168, %v10316
      %v10319 = vsub.f32 %v10169, %v10316
      %v10320 = vsub.f32 %v10170, %v10316
      %v10321 = vsub.f32 %v10171, %v10316
      %v10322 = vsub.f32 %v10172, %v10316
      %v10323 = vsub.f32 %v10173, %v10316
      %v10324 = vsub.f32 %v10174, %v10316
      %v10325 = vsub.f32 %v10175, %v10316
      %v10326 = vsub.f32 %v10176, %v10316
      %v10327 = vsub.f32 %v10177, %v10316
      %v10328 = vsub.f32 %v10178, %v10316
      %v10329 = vsub.f32 %v10179, %v10316
      %v10330 = vsub.f32 %v10180, %v10316
      %v10331 = vsub.f32 %v10181, %v10316
      %v10332 = vsub.f32 %v10182, %v10316
      %v10333 = vsub.f32 %v10183, %v10316
      %v10334 = vsub.f32 %v10184, %v10316
      %v10335 = vsub.f32 %v10185, %v10316
      %v10336 = vsub.f32 %v10186, %v10316
      %v10337 = vsub.f32 %v10187, %v10316
      %v10338 = vsub.f32 %v10188, %v10316
      %v10339 = vsub.f32 %v10189, %v10316
      %v10340 = vsub.f32 %v10190, %v10316
      %v10341 = vsub.f32 %v10191, %v10316
      %v10342 = vsub.f32 %v10192, %v10316
      %v10343 = vsub.f32 %v10193, %v10316
      %v10344 = vsub.f32 %v10194, %v10316
      %v10345 = vsub.f32 %v10195, %v10316
      %v10346 = vsub.f32 %v10196, %v10316
      %v10347 = vsub.f32 %v10197, %v10316
      %v10348 = vsub.f32 %v10198, %v10316
      %v10349 = vsub.f32 %v10199, %v10316
      %v10350 = vsub.f32 %v10200, %v10316
      %v10351 = vsub.f32 %v10201, %v10316
      %v10352 = vsub.f32 %v10202, %v10316
      %v10353 = vmul.f32 %v10317, %v5245
      %v10354 = vmul.f32 %v10318, %v5250
      %v10355 = vmul.f32 %v10319, %v5255
      %v10356 = vmul.f32 %v10320, %v5260
      %v10357 = vmul.f32 %v10321, %v5265
      %v10358 = vmul.f32 %v10322, %v5270
      %v10359 = vmul.f32 %v10323, %v5275
      %v10360 = vmul.f32 %v10324, %v5280
      %v10361 = vmul.f32 %v10325, %v5285
      %v10362 = vmul.f32 %v10326, %v5290
      %v10363 = vmul.f32 %v10327, %v5295
      %v10364 = vmul.f32 %v10328, %v5300
      %v10365 = vmul.f32 %v10329, %v5305
      %v10366 = vmul.f32 %v10330, %v5310
      %v10367 = vmul.f32 %v10331, %v5315
      %v10368 = vmul.f32 %v10332, %v5320
      %v10369 = vmul.f32 %v10333, %v5325
      %v10370 = vmul.f32 %v10334, %v5330
      %v10371 = vmul.f32 %v10335, %v5335
      %v10372 = vmul.f32 %v10336, %v5340
      %v10373 = vmul.f32 %v10337, %v5345
      %v10374 = vmul.f32 %v10338, %v5350
      %v10375 = vmul.f32 %v10339, %v5355
      %v10376 = vmul.f32 %v10340, %v5360
      %v10377 = vmul.f32 %v10341, %v5365
      %v10378 = vmul.f32 %v10342, %v5370
      %v10379 = vmul.f32 %v10343, %v5375
      %v10380 = vmul.f32 %v10344, %v5380
      %v10381 = vmul.f32 %v10345, %v5385
      %v10382 = vmul.f32 %v10346, %v5390
      %v10383 = vmul.f32 %v10347, %v5395
      %v10384 = vmul.f32 %v10348, %v5400
      %v10385 = vmul.f32 %v10349, %v5405
      %v10386 = vmul.f32 %v10350, %v5410
      %v10387 = vmul.f32 %v10351, %v5415
      %v10388 = vmul.f32 %v10352, %v5420
      %v10389 = vmul.f32 %v10353, %v10353
      %v10390 = vmul.f32 %v10354, %v10354
      %v10391 = vmul.f32 %v10355, %v10355
      %v10392 = vmul.f32 %v10356, %v10356
      %v10393 = vmul.f32 %v10357, %v10357
      %v10394 = vmul.f32 %v10358, %v10358
      %v10395 = vmul.f32 %v10359, %v10359
      %v10396 = vmul.f32 %v10360, %v10360
      %v10397 = vmul.f32 %v10361, %v10361
      %v10398 = vmul.f32 %v10362, %v10362
      %v10399 = vmul.f32 %v10363, %v10363
      %v10400 = vmul.f32 %v10364, %v10364
      %v10401 = vmul.f32 %v10365, %v10365
      %v10402 = vmul.f32 %v10366, %v10366
      %v10403 = vmul.f32 %v10367, %v10367
      %v10404 = vmul.f32 %v10368, %v10368
      %v10405 = vmul.f32 %v10369, %v10369
      %v10406 = vmul.f32 %v10370, %v10370
      %v10407 = vmul.f32 %v10371, %v10371
      %v10408 = vmul.f32 %v10372, %v10372
      %v10409 = vmul.f32 %v10373, %v10373
      %v10410 = vmul.f32 %v10374, %v10374
      %v10411 = vmul.f32 %v10375, %v10375
      %v10412 = vmul.f32 %v10376, %v10376
      %v10413 = vmul.f32 %v10377, %v10377
      %v10414 = vmul.f32 %v10378, %v10378
      %v10415 = vmul.f32 %v10379, %v10379
      %v10416 = vmul.f32 %v10380, %v10380
      %v10417 = vmul.f32 %v10381, %v10381
      %v10418 = vmul.f32 %v10382, %v10382
      %v10419 = vmul.f32 %v10383, %v10383
      %v10420 = vmul.f32 %v10384, %v10384
      %v10421 = vmul.f32 %v10385, %v10385
      %v10422 = vmul.f32 %v10386, %v10386
      %v10423 = vmul.f32 %v10387, %v10387
      %v10424 = vmul.f32 %v10388, %v10388
      %v10425 = vsel %vm1025, %v10389, 0.0
      %v10426 = vsel %vm1025, %v10390, 0.0
      %v10427 = vadd.f32 %v10425, %v10426
      %v10428 = vsel %vm1025, %v10391, 0.0
      %v10429 = vadd.f32 %v10427, %v10428
      %v10430 = vsel %vm1025, %v10392, 0.0
      %v10431 = vadd.f32 %v10429, %v10430
      %v10432 = vsel %vm1025, %v10393, 0.0
      %v10433 = vadd.f32 %v10431, %v10432
      %v10434 = vsel %vm1025, %v10394, 0.0
      %v10435 = vadd.f32 %v10433, %v10434
      %v10436 = vsel %vm1025, %v10395, 0.0
      %v10437 = vadd.f32 %v10435, %v10436
      %v10438 = vsel %vm1025, %v10396, 0.0
      %v10439 = vadd.f32 %v10437, %v10438
      %v10440 = vsel %vm1025, %v10397, 0.0
      %v10441 = vadd.f32 %v10439, %v10440
      %v10442 = vsel %vm1025, %v10398, 0.0
      %v10443 = vadd.f32 %v10441, %v10442
      %v10444 = vsel %vm1025, %v10399, 0.0
      %v10445 = vadd.f32 %v10443, %v10444
      %v10446 = vsel %vm1025, %v10400, 0.0
      %v10447 = vadd.f32 %v10445, %v10446
      %v10448 = vsel %vm1025, %v10401, 0.0
      %v10449 = vadd.f32 %v10447, %v10448
      %v10450 = vsel %vm1025, %v10402, 0.0
      %v10451 = vadd.f32 %v10449, %v10450
      %v10452 = vsel %vm1025, %v10403, 0.0
      %v10453 = vadd.f32 %v10451, %v10452
      %v10454 = vsel %vm1025, %v10404, 0.0
      %v10455 = vadd.f32 %v10453, %v10454
      %v10456 = vsel %vm1025, %v10405, 0.0
      %v10457 = vadd.f32 %v10455, %v10456
      %v10458 = vsel %vm1025, %v10406, 0.0
      %v10459 = vadd.f32 %v10457, %v10458
      %v10460 = vsel %vm1025, %v10407, 0.0
      %v10461 = vadd.f32 %v10459, %v10460
      %v10462 = vsel %vm1025, %v10408, 0.0
      %v10463 = vadd.f32 %v10461, %v10462
      %v10464 = vsel %vm1025, %v10409, 0.0
      %v10465 = vadd.f32 %v10463, %v10464
      %v10466 = vsel %vm1025, %v10410, 0.0
      %v10467 = vadd.f32 %v10465, %v10466
      %v10468 = vsel %vm1025, %v10411, 0.0
      %v10469 = vadd.f32 %v10467, %v10468
      %v10470 = vsel %vm1025, %v10412, 0.0
      %v10471 = vadd.f32 %v10469, %v10470
      %v10472 = vsel %vm1025, %v10413, 0.0
      %v10473 = vadd.f32 %v10471, %v10472
      %v10474 = vsel %vm1025, %v10414, 0.0
      %v10475 = vadd.f32 %v10473, %v10474
      %v10476 = vsel %vm1025, %v10415, 0.0
      %v10477 = vadd.f32 %v10475, %v10476
      %v10478 = vsel %vm1025, %v10416, 0.0
      %v10479 = vadd.f32 %v10477, %v10478
      %v10480 = vsel %vm1025, %v10417, 0.0
      %v10481 = vadd.f32 %v10479, %v10480
      %v10482 = vsel %vm1025, %v10418, 0.0
      %v10483 = vadd.f32 %v10481, %v10482
      %v10484 = vsel %vm1025, %v10419, 0.0
      %v10485 = vadd.f32 %v10483, %v10484
      %v10486 = vsel %vm1025, %v10420, 0.0
      %v10487 = vadd.f32 %v10485, %v10486
      %v10488 = vsel %vm1025, %v10421, 0.0
      %v10489 = vadd.f32 %v10487, %v10488
      %v10490 = vsel %vm1025, %v10422, 0.0
      %v10491 = vadd.f32 %v10489, %v10490
      %v10492 = vsel %vm1025, %v10423, 0.0
      %v10493 = vadd.f32 %v10491, %v10492
      %v10494 = vsel %vm1025, %v10424, 0.0
      %v10495 = vadd.f32 %v10493, %v10494
      %v10496 = vrot.slane %v10495, 4
      %v10497 = vadd.f32 %v10495, %v10496
      %v10498 = vrot.slane %v10497, 2
      %v10499 = vadd.f32 %v10497, %v10498
      %v10500 = vrot.slane %v10499, 1
      %v10501 = vadd.f32 %v10499, %v10500
      %v10502 = vmul.f32 %v10501, 0.00390625
      %v10503 = vadd.f32 %v10502, 1e-05
      %v10504 = vrsqrt.pop %v10503
      %v10505 = vmul.f32 %v10317, %v10504
      %v10506 = vmul.f32 %v10318, %v10504
      %v10507 = vmul.f32 %v10319, %v10504
      %v10508 = vmul.f32 %v10320, %v10504
      %v10509 = vmul.f32 %v10321, %v10504
      %v10510 = vmul.f32 %v10322, %v10504
      %v10511 = vmul.f32 %v10323, %v10504
      %v10512 = vmul.f32 %v10324, %v10504
      %v10513 = vmul.f32 %v10325, %v10504
      %v10514 = vmul.f32 %v10326, %v10504
      %v10515 = vmul.f32 %v10327, %v10504
      %v10516 = vmul.f32 %v10328, %v10504
      %v10517 = vmul.f32 %v10329, %v10504
      %v10518 = vmul.f32 %v10330, %v10504
      %v10519 = vmul.f32 %v10331, %v10504
      %v10520 = vmul.f32 %v10332, %v10504
      %v10521 = vmul.f32 %v10333, %v10504
      %v10522 = vmul.f32 %v10334, %v10504
      %v10523 = vmul.f32 %v10335, %v10504
      %v10524 = vmul.f32 %v10336, %v10504
      %v10525 = vmul.f32 %v10337, %v10504
      %v10526 = vmul.f32 %v10338, %v10504
      %v10527 = vmul.f32 %v10339, %v10504
      %v10528 = vmul.f32 %v10340, %v10504
      %v10529 = vmul.f32 %v10341, %v10504
      %v10530 = vmul.f32 %v10342, %v10504
      %v10531 = vmul.f32 %v10343, %v10504
      %v10532 = vmul.f32 %v10344, %v10504
      %v10533 = vmul.f32 %v10345, %v10504
      %v10534 = vmul.f32 %v10346, %v10504
      %v10535 = vmul.f32 %v10347, %v10504
      %v10536 = vmul.f32 %v10348, %v10504
      %v10537 = vmul.f32 %v10349, %v10504
      %v10538 = vmul.f32 %v10350, %v10504
      %v10539 = vmul.f32 %v10351, %v10504
      %v10540 = vmul.f32 %v10352, %v10504
      %v10542 = vlaneseq
      %v10543 = vshrl.u32 %v10542, 7
      %v10544 = vsub.s32 0, %v10543
      %v10545 = vrot.slane %v9943, %v10544
      %v10547 = vmul.f32 %v10545, %v10505
      %v10548 = vmul.f32 %v10545, %v10506
      %v10549 = vmul.f32 %v10545, %v10507
      %v10550 = vmul.f32 %v10545, %v10508
      %v10551 = vmul.f32 %v10545, %v10509
      %v10552 = vmul.f32 %v10545, %v10510
      %v10553 = vmul.f32 %v10545, %v10511
      %v10554 = vmul.f32 %v10545, %v10512
      %v10555 = vmul.f32 %v10545, %v10513
      %v10556 = vmul.f32 %v10545, %v10514
      %v10557 = vmul.f32 %v10545, %v10515
      %v10558 = vmul.f32 %v10545, %v10516
      %v10559 = vmul.f32 %v10545, %v10517
      %v10560 = vmul.f32 %v10545, %v10518
      %v10561 = vmul.f32 %v10545, %v10519
      %v10562 = vmul.f32 %v10545, %v10520
      %v10563 = vmul.f32 %v10545, %v10521
      %v10564 = vmul.f32 %v10545, %v10522
      %v10565 = vmul.f32 %v10545, %v10523
      %v10566 = vmul.f32 %v10545, %v10524
      %v10567 = vmul.f32 %v10545, %v10525
      %v10568 = vmul.f32 %v10545, %v10526
      %v10569 = vmul.f32 %v10545, %v10527
      %v10570 = vmul.f32 %v10545, %v10528
      %v10571 = vmul.f32 %v10545, %v10529
      %v10572 = vmul.f32 %v10545, %v10530
      %v10573 = vmul.f32 %v10545, %v10531
      %v10574 = vmul.f32 %v10545, %v10532
      %v10575 = vmul.f32 %v10545, %v10533
      %v10576 = vmul.f32 %v10545, %v10534
      %v10577 = vmul.f32 %v10545, %v10535
      %v10578 = vmul.f32 %v10545, %v10536
      %v10579 = vmul.f32 %v10545, %v10537
      %v10580 = vmul.f32 %v10545, %v10538
      %v10581 = vmul.f32 %v10545, %v10539
      %v10582 = vmul.f32 %v10545, %v10540
      %v10584 = vlaneseq
      %v10585 = vshrl.u32 %v10584, 7
      %v10586 = vsub.s32 0, %v10585
      %v10587 = vrot.slane %v9944, %v10586
      %v10589 = vadd.f32 %v10547, %v10587
      %v10590 = vadd.f32 %v10548, %v10587
      %v10591 = vadd.f32 %v10549, %v10587
      %v10592 = vadd.f32 %v10550, %v10587
      %v10593 = vadd.f32 %v10551, %v10587
      %v10594 = vadd.f32 %v10552, %v10587
      %v10595 = vadd.f32 %v10553, %v10587
      %v10596 = vadd.f32 %v10554, %v10587
      %v10597 = vadd.f32 %v10555, %v10587
      %v10598 = vadd.f32 %v10556, %v10587
      %v10599 = vadd.f32 %v10557, %v10587
      %v10600 = vadd.f32 %v10558, %v10587
      %v10601 = vadd.f32 %v10559, %v10587
      %v10602 = vadd.f32 %v10560, %v10587
      %v10603 = vadd.f32 %v10561, %v10587
      %v10604 = vadd.f32 %v10562, %v10587
      %v10605 = vadd.f32 %v10563, %v10587
      %v10606 = vadd.f32 %v10564, %v10587
      %v10607 = vadd.f32 %v10565, %v10587
      %v10608 = vadd.f32 %v10566, %v10587
      %v10609 = vadd.f32 %v10567, %v10587
      %v10610 = vadd.f32 %v10568, %v10587
      %v10611 = vadd.f32 %v10569, %v10587
      %v10612 = vadd.f32 %v10570, %v10587
      %v10613 = vadd.f32 %v10571, %v10587
      %v10614 = vadd.f32 %v10572, %v10587
      %v10615 = vadd.f32 %v10573, %v10587
      %v10616 = vadd.f32 %v10574, %v10587
      %v10617 = vadd.f32 %v10575, %v10587
      %v10618 = vadd.f32 %v10576, %v10587
      %v10619 = vadd.f32 %v10577, %v10587
      %v10620 = vadd.f32 %v10578, %v10587
      %v10621 = vadd.f32 %v10579, %v10587
      %v10622 = vadd.f32 %v10580, %v10587
      %v10623 = vadd.f32 %v10581, %v10587
      %v10624 = vadd.f32 %v10582, %v10587
      %vm10625 = vcmp.ge.f32.partialorder %v10589, 0.0
      %vm10626 = vcmp.ge.f32.partialorder %v10590, 0.0
      %vm10627 = vcmp.ge.f32.partialorder %v10591, 0.0
      %vm10628 = vcmp.ge.f32.partialorder %v10592, 0.0
      %vm10629 = vcmp.ge.f32.partialorder %v10593, 0.0
      %vm10630 = vcmp.ge.f32.partialorder %v10594, 0.0
      %vm10631 = vcmp.ge.f32.partialorder %v10595, 0.0
      %vm10632 = vcmp.ge.f32.partialorder %v10596, 0.0
      %vm10633 = vcmp.ge.f32.partialorder %v10597, 0.0
      %vm10634 = vcmp.ge.f32.partialorder %v10598, 0.0
      %vm10635 = vcmp.ge.f32.partialorder %v10599, 0.0
      %vm10636 = vcmp.ge.f32.partialorder %v10600, 0.0
      %vm10637 = vcmp.ge.f32.partialorder %v10601, 0.0
      %vm10638 = vcmp.ge.f32.partialorder %v10602, 0.0
      %vm10639 = vcmp.ge.f32.partialorder %v10603, 0.0
      %vm10640 = vcmp.ge.f32.partialorder %v10604, 0.0
      %vm10641 = vcmp.ge.f32.partialorder %v10605, 0.0
      %vm10642 = vcmp.ge.f32.partialorder %v10606, 0.0
      %vm10643 = vcmp.ge.f32.partialorder %v10607, 0.0
      %vm10644 = vcmp.ge.f32.partialorder %v10608, 0.0
      %vm10645 = vcmp.ge.f32.partialorder %v10609, 0.0
      %vm10646 = vcmp.ge.f32.partialorder %v10610, 0.0
      %vm10647 = vcmp.ge.f32.partialorder %v10611, 0.0
      %vm10648 = vcmp.ge.f32.partialorder %v10612, 0.0
      %vm10649 = vcmp.ge.f32.partialorder %v10613, 0.0
      %vm10650 = vcmp.ge.f32.partialorder %v10614, 0.0
      %vm10651 = vcmp.ge.f32.partialorder %v10615, 0.0
      %vm10652 = vcmp.ge.f32.partialorder %v10616, 0.0
      %vm10653 = vcmp.ge.f32.partialorder %v10617, 0.0
      %vm10654 = vcmp.ge.f32.partialorder %v10618, 0.0
      %vm10655 = vcmp.ge.f32.partialorder %v10619, 0.0
      %vm10656 = vcmp.ge.f32.partialorder %v10620, 0.0
      %vm10657 = vcmp.ge.f32.partialorder %v10621, 0.0
      %vm10658 = vcmp.ge.f32.partialorder %v10622, 0.0
      %vm10659 = vcmp.ge.f32.partialorder %v10623, 0.0
      %vm10660 = vcmp.ge.f32.partialorder %v10624, 0.0
      %v10661 = vmul.f32 %v10589, 0.2
      %v10662 = vmul.f32 %v10590, 0.2
      %v10663 = vmul.f32 %v10591, 0.2
      %v10664 = vmul.f32 %v10592, 0.2
      %v10665 = vmul.f32 %v10593, 0.2
      %v10666 = vmul.f32 %v10594, 0.2
      %v10667 = vmul.f32 %v10595, 0.2
      %v10668 = vmul.f32 %v10596, 0.2
      %v10669 = vmul.f32 %v10597, 0.2
      %v10670 = vmul.f32 %v10598, 0.2
      %v10671 = vmul.f32 %v10599, 0.2
      %v10672 = vmul.f32 %v10600, 0.2
      %v10673 = vmul.f32 %v10601, 0.2
      %v10674 = vmul.f32 %v10602, 0.2
      %v10675 = vmul.f32 %v10603, 0.2
      %v10676 = vmul.f32 %v10604, 0.2
      %v10677 = vmul.f32 %v10605, 0.2
      %v10678 = vmul.f32 %v10606, 0.2
      %v10679 = vmul.f32 %v10607, 0.2
      %v10680 = vmul.f32 %v10608, 0.2
      %v10681 = vmul.f32 %v10609, 0.2
      %v10682 = vmul.f32 %v10610, 0.2
      %v10683 = vmul.f32 %v10611, 0.2
      %v10684 = vmul.f32 %v10612, 0.2
      %v10685 = vmul.f32 %v10613, 0.2
      %v10686 = vmul.f32 %v10614, 0.2
      %v10687 = vmul.f32 %v10615, 0.2
      %v10688 = vmul.f32 %v10616, 0.2
      %v10689 = vmul.f32 %v10617, 0.2
      %v10690 = vmul.f32 %v10618, 0.2
      %v10691 = vmul.f32 %v10619, 0.2
      %v10692 = vmul.f32 %v10620, 0.2
      %v10693 = vmul.f32 %v10621, 0.2
      %v10694 = vmul.f32 %v10622, 0.2
      %v10695 = vmul.f32 %v10623, 0.2
      %v10696 = vmul.f32 %v10624, 0.2
      %v10697 = vsel %vm10625, %v10589, %v10661
      %v10698 = vsel %vm10626, %v10590, %v10662
      %v10699 = vsel %vm10627, %v10591, %v10663
      %v10700 = vsel %vm10628, %v10592, %v10664
      %v10701 = vsel %vm10629, %v10593, %v10665
      %v10702 = vsel %vm10630, %v10594, %v10666
      %v10703 = vsel %vm10631, %v10595, %v10667
      %v10704 = vsel %vm10632, %v10596, %v10668
      %v10705 = vsel %vm10633, %v10597, %v10669
      %v10706 = vsel %vm10634, %v10598, %v10670
      %v10707 = vsel %vm10635, %v10599, %v10671
      %v10708 = vsel %vm10636, %v10600, %v10672
      %v10709 = vsel %vm10637, %v10601, %v10673
      %v10710 = vsel %vm10638, %v10602, %v10674
      %v10711 = vsel %vm10639, %v10603, %v10675
      %v10712 = vsel %vm10640, %v10604, %v10676
      %v10713 = vsel %vm10641, %v10605, %v10677
      %v10714 = vsel %vm10642, %v10606, %v10678
      %v10715 = vsel %vm10643, %v10607, %v10679
      %v10716 = vsel %vm10644, %v10608, %v10680
      %v10717 = vsel %vm10645, %v10609, %v10681
      %v10718 = vsel %vm10646, %v10610, %v10682
      %v10719 = vsel %vm10647, %v10611, %v10683
      %v10720 = vsel %vm10648, %v10612, %v10684
      %v10721 = vsel %vm10649, %v10613, %v10685
      %v10722 = vsel %vm10650, %v10614, %v10686
      %v10723 = vsel %vm10651, %v10615, %v10687
      %v10724 = vsel %vm10652, %v10616, %v10688
      %v10725 = vsel %vm10653, %v10617, %v10689
      %v10726 = vsel %vm10654, %v10618, %v10690
      %v10727 = vsel %vm10655, %v10619, %v10691
      %v10728 = vsel %vm10656, %v10620, %v10692
      %v10729 = vsel %vm10657, %v10621, %v10693
      %v10730 = vsel %vm10658, %v10622, %v10694
      %v10731 = vsel %vm10659, %v10623, %v10695
      %v10732 = vsel %vm10660, %v10624, %v10696
      %v10733 = vmul.f32 %v10697, %v5245
      %v10734 = vmul.f32 %v10698, %v5250
      %v10735 = vmul.f32 %v10699, %v5255
      %v10736 = vmul.f32 %v10700, %v5260
      %v10737 = vmul.f32 %v10701, %v5265
      %v10738 = vmul.f32 %v10702, %v5270
      %v10739 = vmul.f32 %v10703, %v5275
      %v10740 = vmul.f32 %v10704, %v5280
      %v10741 = vmul.f32 %v10705, %v5285
      %v10742 = vmul.f32 %v10706, %v5290
      %v10743 = vmul.f32 %v10707, %v5295
      %v10744 = vmul.f32 %v10708, %v5300
      %v10745 = vmul.f32 %v10709, %v5305
      %v10746 = vmul.f32 %v10710, %v5310
      %v10747 = vmul.f32 %v10711, %v5315
      %v10748 = vmul.f32 %v10712, %v5320
      %v10749 = vmul.f32 %v10713, %v5325
      %v10750 = vmul.f32 %v10714, %v5330
      %v10751 = vmul.f32 %v10715, %v5335
      %v10752 = vmul.f32 %v10716, %v5340
      %v10753 = vmul.f32 %v10717, %v5345
      %v10754 = vmul.f32 %v10718, %v5350
      %v10755 = vmul.f32 %v10719, %v5355
      %v10756 = vmul.f32 %v10720, %v5360
      %v10757 = vmul.f32 %v10721, %v5365
      %v10758 = vmul.f32 %v10722, %v5370
      %v10759 = vmul.f32 %v10723, %v5375
      %v10760 = vmul.f32 %v10724, %v5380
      %v10761 = vmul.f32 %v10725, %v5385
      %v10762 = vmul.f32 %v10726, %v5390
      %v10763 = vmul.f32 %v10727, %v5395
      %v10764 = vmul.f32 %v10728, %v5400
      %v10765 = vmul.f32 %v10729, %v5405
      %v10766 = vmul.f32 %v10730, %v5410
      %v10767 = vmul.f32 %v10731, %v5415
      %v10768 = vmul.f32 %v10732, %v5420
      %10769 = vst.msk [vmem:[%s590] sm:$0xff] %vm1025, %v10733
      %10770 = vst.msk [vmem:[%s590 + $0x8] sm:$0xff] %vm1025, %v10734
      %10771 = vst.msk [vmem:[%s590 + $0x10] sm:$0xff] %vm1025, %v10735
      %10772 = vst.msk [vmem:[%s590 + $0x18] sm:$0xff] %vm1025, %v10736
      %10773 = vst.msk [vmem:[%s590 + $0x20] sm:$0xff] %vm1025, %v10737
      %10774 = vst.msk [vmem:[%s590 + $0x28] sm:$0xff] %vm1025, %v10738
      %10775 = vst.msk [vmem:[%s590 + $0x30] sm:$0xff] %vm1025, %v10739
      %10776 = vst.msk [vmem:[%s590 + $0x38] sm:$0xff] %vm1025, %v10740
      %10777 = vst.msk [vmem:[%s590 + $0x40] sm:$0xff] %vm1025, %v10741
      %10778 = vst.msk [vmem:[%s590 + $0x48] sm:$0xff] %vm1025, %v10742
      %10779 = vst.msk [vmem:[%s590 + $0x50] sm:$0xff] %vm1025, %v10743
      %10780 = vst.msk [vmem:[%s590 + $0x58] sm:$0xff] %vm1025, %v10744
      %10781 = vst.msk [vmem:[%s590 + $0x60] sm:$0xff] %vm1025, %v10745
      %10782 = vst.msk [vmem:[%s590 + $0x68] sm:$0xff] %vm1025, %v10746
      %10783 = vst.msk [vmem:[%s590 + $0x70] sm:$0xff] %vm1025, %v10747
      %10784 = vst.msk [vmem:[%s590 + $0x78] sm:$0xff] %vm1025, %v10748
      %10785 = vst.msk [vmem:[%s590 + $0x80] sm:$0xff] %vm1025, %v10749
      %10786 = vst.msk [vmem:[%s590 + $0x88] sm:$0xff] %vm1025, %v10750
      %10787 = vst.msk [vmem:[%s590 + $0x90] sm:$0xff] %vm1025, %v10751
      %10788 = vst.msk [vmem:[%s590 + $0x98] sm:$0xff] %vm1025, %v10752
      %10789 = vst.msk [vmem:[%s590 + $0xa0] sm:$0xff] %vm1025, %v10753
      %10790 = vst.msk [vmem:[%s590 + $0xa8] sm:$0xff] %vm1025, %v10754
      %10791 = vst.msk [vmem:[%s590 + $0xb0] sm:$0xff] %vm1025, %v10755
      %10792 = vst.msk [vmem:[%s590 + $0xb8] sm:$0xff] %vm1025, %v10756
      %10793 = vst.msk [vmem:[%s590 + $0xc0] sm:$0xff] %vm1025, %v10757
      %10794 = vst.msk [vmem:[%s590 + $0xc8] sm:$0xff] %vm1025, %v10758
      %10795 = vst.msk [vmem:[%s590 + $0xd0] sm:$0xff] %vm1025, %v10759
      %10796 = vst.msk [vmem:[%s590 + $0xd8] sm:$0xff] %vm1025, %v10760
      %10797 = vst.msk [vmem:[%s590 + $0xe0] sm:$0xff] %vm1025, %v10761
      %10798 = vst.msk [vmem:[%s590 + $0xe8] sm:$0xff] %vm1025, %v10762
      %10799 = vst.msk [vmem:[%s590 + $0xf0] sm:$0xff] %vm1025, %v10763
      %10800 = vst.msk [vmem:[%s590 + $0xf8] sm:$0xff] %vm1025, %v10764
      %10801 = vst.msk [vmem:[%s590 + $0x100] sm:$0xff] %vm1025, %v10765
      %10802 = vst.msk [vmem:[%s590 + $0x108] sm:$0xff] %vm1025, %v10766
      %10803 = vst.msk [vmem:[%s590 + $0x110] sm:$0xff] %vm1025, %v10767
      %10804 = vst.msk [vmem:[%s590 + $0x118] sm:$0xff] %vm1025, %v10768
      %p10805 = scmp.lt.s32.totalorder %s26, 1
      %s10806 = scalar_select %p10805, %s26, 1
      %s10807 = smul.addr %s10806, 36
      %s10808 = smul.addr %s10807, 8
      %s10809 = scalar_lea.vmem %s15, %s10808
      // Predicated region
      $region81: #{tpu_custom_call.1} parent=79 // pred_check
        %p10810 = pneg %p394
      $region82: #{tpu_custom_call.1} parent=79 // pred_check_branch
        %10812 = sbr.rel (%p10810) target = $region84
      $region83: #{tpu_custom_call.1} parent=79 // pred_region
        _
      $region84: #{tpu_custom_call.1} parent=79 // pred_fallthru
        _
    $region80: #{tpu_custom_call.1} parent=5 // pred_fallthru
      _
    %p10813 = scmp.le.s32.totalorder 2, %s21
    // Predicated region
    $region85: #{tpu_custom_call.1} parent=5 // pred_check
      %p10814 = pneg %p10813
    $region86: #{tpu_custom_call.1} parent=5 // pred_check_branch
      %10816 = sbr.rel (%p10814) target = $region88
    $region87: #{tpu_custom_call.1} parent=5 // pred_region
      %s10817 = ssub.s32 %s21, 2
      // Predicated region
      $region89: #{tpu_custom_call.1} parent=87 // pred_check
        %p10818 = pneg %p400
      $region90: #{tpu_custom_call.1} parent=87 // pred_check_branch
        %10820 = sbr.rel (%p10818) target = $region92
      $region91: #{tpu_custom_call.1} parent=87 // pred_region
        %p10821 = scmp.lt.s32.totalorder %s27, 1
        %s10822 = scalar_select %p10821, %s27, 1
        %s10823 = smul.addr %s10822, 36
        %s10824 = smul.addr %s10823, 8
        %s10825 = scalar_lea.vmem %s15, %s10824
      $region92: #{tpu_custom_call.1} parent=87 // pred_fallthru
        _
    $region88: #{tpu_custom_call.1} parent=5 // pred_fallthru
      _
  $region6: #{tpu_custom_call.1} parent=0 // loop_footer
    %s25 = sadd.s32 1, %s21
  $region7: #{tpu_custom_call.1} parent=0 // loop_footer_branch
    %20 = sbr.rel target = $region3
  $region8: #{tpu_custom_call.1} parent=0 // loop_exit
    _

</llo_original>
